<compile_context>
chip_gen: v7x
topology: tpu7x:2x2x1
jax: 0.10.0
libtpu: 0.0.40
codegen_flags: <defaults>
</compile_context>

<pallas_src>
import functools

import jax
import jax.numpy as jnp
from jax.experimental import pallas as pl
from jax.experimental.pallas import tpu as pltpu


def _hybrid_weighting_kernel(n_real_terms, params_ref, q_ref, terms_ref, rs_ref,
                             out_ref):
    """Per-grid-step kernel over a block of `Bb` queries.

    params_ref: SMEM (3,)            f32  [alpha, beta, learnable_expansion_weight]
    q_ref:      VMEM (Bb, D)         bf16/f32  original query embeddings
    terms_ref:  VMEM (Bb, Tp, D)     bf16/f32  expansion-term embeddings (T padded)
    rs_ref:     VMEM (2, Bb, Tp)     f32  [rm_weights ; semantic_scores] (0 in pad)
    out_ref:    VMEM (Bb, D)         f32  enhanced query embeddings
    """
    alpha_s = jax.nn.sigmoid(params_ref[0])          # sigmoid(alpha)
    beta_s = jax.nn.sigmoid(params_ref[1])           # sigmoid(beta)
    exp_w = jax.nn.sigmoid(params_ref[2])            # sigmoid(learnable_expansion_weight)

    rm = rs_ref[0]                                   # [Bb, Tp]
    sem = rs_ref[1]                                  # [Bb, Tp]
    # Hybrid term importance (compute_term_importance); padded rows are 0.
    importance = alpha_s * rm + beta_s * sem         # [Bb, Tp]

    total = jnp.sum(importance, axis=-1, keepdims=True)            # [Bb, 1]
    # Reference: sum/total if total > 1e-8 else mean.  mean == sum / T_real,
    # so fold both branches into a single guarded denominator (no second reduce,
    # no transient inf/NaN).
    denom = jnp.where(total > 1e-8, total, jnp.float32(n_real_terms))  # [Bb, 1]

    terms = terms_ref[...].astype(jnp.float32)       # [Bb, Tp, D] (bf16 -> f32 in-kernel)
    # Importance-weighted sum as a batched [1,T]@[T,D] contraction (MXU path,
    # lane-dense, no [T,D] broadcast intermediate).
    weighted_sum = jnp.einsum(
        "bqt,btd->bqd", importance[:, None, :], terms,
        preferred_element_type=jnp.float32,
        precision=jax.lax.Precision.HIGHEST)[:, 0, :]               # [Bb, D]

    expansion = weighted_sum / denom                 # [Bb, D]
    q = q_ref[...].astype(jnp.float32)               # [Bb, D]
    out_ref[...] = (1.0 - exp_w) * q + exp_w * expansion


def hybrid_expanded_query_embeddings(params, query_embs, term_embs, rm_weights,
                                     semantic_scores, *, block_b=64):
    """Batched enhanced-query computation via one pallas_call.

    params:          (3,)       f32   [alpha, beta, learnable_expansion_weight] (pre-sigmoid)
    query_embs:      (B, D)     bf16 (or f32)  original query embeddings
    term_embs:       (B, T, D)  bf16 (or f32)  expansion-term embeddings
    rm_weights:      (B, T)     f32   RM3 weights per term
    semantic_scores: (B, T)     f32   semantic scores per term
    returns:         (B, D)     f32   enhanced query embeddings
    """
    B, T, D = term_embs.shape
    assert query_embs.shape == (B, D)
    assert rm_weights.shape == (B, T) and semantic_scores.shape == (B, T)

    # Pad T to a multiple of 8 (f32 sublane tile); padded rm/sem stay 0 so the
    # padded rows contribute exactly nothing to the weighted sum.
    T_pad = max(8, ((T + 7) // 8) * 8)
    # Batch block: multiple of 8, capped at (padded) B.  Keep
    # 2 * block_b * (T_pad*D + 2*D) * bytes well under scoped VMEM (v7x: 64 MiB
    # physical); the default block_b=64 with D<=1024 is a few MiB at most.
    block_b = max(8, ((min(block_b, max(B, 1)) + 7) // 8) * 8)
    B_pad = ((B + block_b - 1) // block_b) * block_b

    terms_p = jnp.zeros((B_pad, T_pad, D), term_embs.dtype).at[:B, :T, :].set(term_embs)
    q_p = jnp.zeros((B_pad, D), query_embs.dtype).at[:B, :].set(query_embs)
    rs_p = jnp.zeros((2, B_pad, T_pad), jnp.float32)
    rs_p = rs_p.at[0, :B, :T].set(rm_weights.astype(jnp.float32))
    rs_p = rs_p.at[1, :B, :T].set(semantic_scores.astype(jnp.float32))

    kernel = functools.partial(_hybrid_weighting_kernel, T)

    out = pl.pallas_call(
        kernel,
        out_shape=jax.ShapeDtypeStruct((B_pad, D), jnp.float32),
        grid=(B_pad // block_b,),
        in_specs=[
            pl.BlockSpec(memory_space=pltpu.MemorySpace.SMEM),        # params (scalars)
            pl.BlockSpec((block_b, D), lambda i: (i, 0)),             # query embeddings
            pl.BlockSpec((block_b, T_pad, D), lambda i: (i, 0, 0)),   # term embeddings
            pl.BlockSpec((2, block_b, T_pad), lambda i: (0, i, 0)),   # rm + semantic
        ],
        out_specs=pl.BlockSpec((block_b, D), lambda i: (i, 0)),
        compiler_params=pltpu.CompilerParams(
            dimension_semantics=("parallel",)),                       # megacore / v7x 2 TCs
    )(params.astype(jnp.float32), q_p, terms_p, rs_p)
    return out[:B]


def _reference(params, query_embs, term_embs, rm_weights, semantic_scores):
    """Pure-JAX reference mirroring the PyTorch forward semantics (batched)."""
    alpha_s = jax.nn.sigmoid(params[0])
    beta_s = jax.nn.sigmoid(params[1])
    exp_w = jax.nn.sigmoid(params[2])
    q = query_embs.astype(jnp.float32)
    t = term_embs.astype(jnp.float32)
    importance = alpha_s * rm_weights + beta_s * semantic_scores        # [B, T]
    weighted = t * importance[:, :, None]                               # [B, T, D]
    total = jnp.sum(importance, axis=-1, keepdims=True)                 # [B, 1]
    expansion = jnp.where(total > 1e-8,
                          jnp.sum(weighted, axis=1) / total,
                          jnp.mean(weighted, axis=1))                   # [B, D]
    return (1.0 - exp_w) * q + exp_w * expansion


if __name__ == "__main__":
    # TODO(synk): the SentenceTransformer text encoder has no Pallas equivalent;
    # query/term embeddings are synthesized here in place of encoder outputs.
    key = jax.random.PRNGKey(0)
    k_q, k_t, k_rm, k_sem = jax.random.split(key, 4)

    B = 16    # batch of queries processed in one pallas_call
    T = 15    # expansion terms per query (= max_expansion_terms default)
    D = 384   # embedding dim of all-MiniLM-L6-v2 (multiple of 128)

    # Encoder outputs shipped in bf16 (halves HBM->VMEM DMA bytes).
    query_embs = jax.random.normal(k_q, (B, D), dtype=jnp.float32).astype(jnp.bfloat16)
    term_embs = jax.random.normal(k_t, (B, T, D), dtype=jnp.float32).astype(jnp.bfloat16)
    rm_weights = jax.random.uniform(k_rm, (B, T), dtype=jnp.float32)
    semantic_scores = jax.random.uniform(k_sem, (B, T), dtype=jnp.float32)

    # Parameter init matching the module's __init__:
    # alpha=0.6, beta=0.4, learnable_expansion_weight=expansion_weight=0.3
    params = jnp.array([0.6, 0.4, 0.3], dtype=jnp.float32)

    out = hybrid_expanded_query_embeddings(params, query_embs, term_embs,
                                           rm_weights, semantic_scores,
                                           block_b=8)   # 2 grid steps at B=16
    out = jax.block_until_ready(out)

    ref = _reference(params, query_embs, term_embs, rm_weights, semantic_scores)
    assert out.shape == (B, D)
    assert jnp.allclose(out, ref, atol=1e-2, rtol=1e-2), "mismatch vs reference"

    print("KERNEL_OK")
</pallas_src>

<mosaic_0001>
module attributes {stable_mosaic.version = 11 : i64} {
  func.func @_hybrid_weighting_kernel(%arg0: i32, %arg1: memref<3xf32, #tpu.memory_space<smem>>, %arg2: memref<8x384xbf16, #tpu.memory_space<vmem>>, %arg3: memref<8x16x384xbf16, #tpu.memory_space<vmem>>, %arg4: memref<2x8x16xf32, #tpu.memory_space<vmem>>, %arg5: memref<8x384xf32, #tpu.memory_space<vmem>>) attributes {dimension_semantics = [#tpu.dimension_semantics<parallel>], iteration_bounds = array<i64: 2>, scalar_prefetch = 0 : i64, scratch_operands = 0 : i64, tpu.core_type = #tpu.core_type<tc>, window_params = [{transform_indices = @transform_0, window_bounds = array<i64: 3>}, {transform_indices = @transform_1, window_bounds = array<i64: 8, 384>}, {transform_indices = @transform_2, window_bounds = array<i64: 8, 16, 384>}, {transform_indices = @transform_3, window_bounds = array<i64: 2, 8, 16>}, {transform_indices = @transform_4, window_bounds = array<i64: 8, 384>}]} {
    %c0 = arith.constant 0 : index
    %0 = memref.load %arg1[%c0] : memref<3xf32, #tpu.memory_space<smem>>
    %1 = arith.negf %0 : f32
    %2 = math.exp %1 : f32
    %cst = arith.constant 1.000000e+00 : f32
    %3 = arith.addf %cst, %2 : f32
    %4 = arith.divf %cst, %3 : f32
    %c1 = arith.constant 1 : index
    %5 = memref.load %arg1[%c1] : memref<3xf32, #tpu.memory_space<smem>>
    %6 = arith.negf %5 : f32
    %7 = math.exp %6 : f32
    %cst_0 = arith.constant 1.000000e+00 : f32
    %8 = arith.addf %cst_0, %7 : f32
    %9 = arith.divf %cst_0, %8 : f32
    %c2 = arith.constant 2 : index
    %10 = memref.load %arg1[%c2] : memref<3xf32, #tpu.memory_space<smem>>
    %11 = arith.negf %10 : f32
    %12 = math.exp %11 : f32
    %cst_1 = arith.constant 1.000000e+00 : f32
    %13 = arith.addf %cst_1, %12 : f32
    %14 = arith.divf %cst_1, %13 : f32
    %c0_2 = arith.constant 0 : index
    %c0_3 = arith.constant 0 : index
    %c0_4 = arith.constant 0 : index
    %15 = vector.load %arg4[%c0_2, %c0_3, %c0_4] : memref<2x8x16xf32, #tpu.memory_space<vmem>>, vector<1x8x16xf32>
    %16 = vector.shape_cast %15 : vector<1x8x16xf32> to vector<8x16xf32>
    %c1_5 = arith.constant 1 : index
    %c0_6 = arith.constant 0 : index
    %c0_7 = arith.constant 0 : index
    %17 = vector.load %arg4[%c1_5, %c0_6, %c0_7] : memref<2x8x16xf32, #tpu.memory_space<vmem>>, vector<1x8x16xf32>
    %18 = vector.shape_cast %17 : vector<1x8x16xf32> to vector<8x16xf32>
    %19 = vector.broadcast %4 : f32 to vector<8x16xf32>
    %20 = arith.mulf %19, %16 : vector<8x16xf32>
    %21 = vector.broadcast %9 : f32 to vector<8x16xf32>
    %22 = arith.mulf %21, %18 : vector<8x16xf32>
    %23 = arith.addf %20, %22 : vector<8x16xf32>
    %cst_8 = arith.constant dense<0.000000e+00> : vector<8xf32>
    %24 = vector.multi_reduction <add>, %23, %cst_8 [1] : vector<8x16xf32> to vector<8xf32>
    %25 = vector.shape_cast %24 : vector<8xf32> to vector<8x1xf32>
    %cst_9 = arith.constant 9.99999993E-9 : f32
    %26 = vector.broadcast %cst_9 : f32 to vector<8x1xf32>
    %27 = arith.cmpf ogt, %25, %26 : vector<8x1xf32>
    %cst_10 = arith.constant 1.500000e+01 : f32
    %28 = vector.broadcast %cst_10 : f32 to vector<8x1xf32>
    %29 = arith.select %27, %25, %28 : vector<8x1xi1>, vector<8x1xf32>
    %c0_11 = arith.constant 0 : index
    %c0_12 = arith.constant 0 : index
    %c0_13 = arith.constant 0 : index
    %30 = vector.load %arg3[%c0_11, %c0_12, %c0_13] : memref<8x16x384xbf16, #tpu.memory_space<vmem>>, vector<8x16x384xbf16>
    %31 = arith.extf %30 : vector<8x16x384xbf16> to vector<8x16x384xf32>
    %32 = vector.shape_cast %23 : vector<8x16xf32> to vector<8x1x16xf32>
    "tpu.trace_start"() <{level = 10 : i32, message = "bqt,btd->bqd"}> : () -> ()
    %cst_14 = arith.constant dense<0.000000e+00> : vector<8x1x384xf32>
    %33 = tpu.matmul %32, %31, %cst_14 {dimension_numbers = #tpu.dot_dimension_numbers<[2], [1], [1], [2], [0, 0, 0, 1, 1, 2], [0], [0]>, precision = #tpu.contract_precision<fp32>} : vector<8x1x16xf32>, vector<8x16x384xf32>, vector<8x1x384xf32> -> vector<8x1x384xf32>
    "tpu.trace_stop"() : () -> ()
    %34 = vector.shape_cast %33 : vector<8x1x384xf32> to vector<8x384xf32>
    %35 = vector.broadcast %29 : vector<8x1xf32> to vector<8x384xf32>
    %36 = arith.divf %34, %35 : vector<8x384xf32>
    %c0_15 = arith.constant 0 : index
    %c0_16 = arith.constant 0 : index
    %37 = vector.load %arg2[%c0_15, %c0_16] : memref<8x384xbf16, #tpu.memory_space<vmem>>, vector<8x384xbf16>
    %38 = arith.extf %37 : vector<8x384xbf16> to vector<8x384xf32>
    %cst_17 = arith.constant 1.000000e+00 : f32
    %39 = arith.subf %cst_17, %14 : f32
    %40 = vector.broadcast %39 : f32 to vector<8x384xf32>
    %41 = arith.mulf %40, %38 : vector<8x384xf32>
    %42 = vector.broadcast %14 : f32 to vector<8x384xf32>
    %43 = arith.mulf %42, %36 : vector<8x384xf32>
    %44 = arith.addf %41, %43 : vector<8x384xf32>
    %c0_18 = arith.constant 0 : index
    %c0_19 = arith.constant 0 : index
    %45 = vector.load %arg5[%c0_18, %c0_19] : memref<8x384xf32, #tpu.memory_space<vmem>>, vector<8x384xf32>
    tpu.vector_store %arg5[%c0_18, %c0_19], %44 {strides = array<i32>} : memref<8x384xf32, #tpu.memory_space<vmem>>, vector<8x384xf32>,
    return
  }
  func.func @transform_0(%arg0: i32) -> i32 {
    %c0_i32 = arith.constant 0 : i32
    %c0_i32_0 = arith.constant 0 : i32
    return %c0_i32 : i32
  }
  func.func @transform_1(%arg0: i32) -> (i32, i32) {
    %c0_i32 = arith.constant 0 : i32
    %c0_i32_0 = arith.constant 0 : i32
    return %arg0, %c0_i32 : i32, i32
  }
  func.func @transform_2(%arg0: i32) -> (i32, i32, i32) {
    %c0_i32 = arith.constant 0 : i32
    %c0_i32_0 = arith.constant 0 : i32
    %c0_i32_1 = arith.constant 0 : i32
    return %arg0, %c0_i32, %c0_i32_0 : i32, i32, i32
  }
  func.func @transform_3(%arg0: i32) -> (i32, i32, i32) {
    %c0_i32 = arith.constant 0 : i32
    %c0_i32_0 = arith.constant 0 : i32
    %c0_i32_1 = arith.constant 0 : i32
    return %c0_i32, %arg0, %c0_i32_0 : i32, i32, i32
  }
  func.func @transform_4(%arg0: i32) -> (i32, i32) {
    %c0_i32 = arith.constant 0 : i32
    %c0_i32_0 = arith.constant 0 : i32
    return %arg0, %c0_i32 : i32, i32
  }
}

</mosaic_0001>

<llo_original>
// kernel: tpu_custom_call.1
$region0: #{tpu_custom_call.1}
  #allocation0 [shape = 'u32[]', space=smem, size = 0x4, offset = 0x4, fixed_abs, tag = 'smem constant byte address 0x4 - core index']
  #allocation1 [shape = 'u32[144,128]{1,0:T(1,128)}', space=vmem, size = 0x12000, scoped, tag = 'internal scratch']
  %s0 = inlined_call_operand.hbm [shape: f32[3], index: 0, kind: input, shape index: {}]
  %s1 = inlined_call_operand.hbm [shape: bf16[16,384], index: 1, kind: input, shape index: {}]
  %s2 = inlined_call_operand.hbm [shape: bf16[16,16,384], index: 2, kind: input, shape index: {}]
  %s3 = inlined_call_operand.hbm [shape: f32[2,16,16], index: 3, kind: input, shape index: {}]
  %s4 = inlined_call_operand.hbm [shape: f32[16,384], index: 4, kind: output, shape index: {}]
  %s5 = sld [smem:[#allocation0]]
  $region65: #{tpu_custom_call.1} parent=0
    _
  %s7 = ssub.s32 1, %s5
  %s8 = scalar_select 0, %s7, %s5
  $region1: #{tpu_custom_call.1} parent=0
    #allocation2 [shape = 'u8[512]{0}', space=smem, size = 0x200, scoped, tag = 'input window, operand 0, single buffered']
    #allocation3 [shape = 's32[2]{0}', space=sflag, size = 0x8, scoped, tag = 'scoped memory for tpu_custom_call.1']
    #allocation4 [shape = 's32[2]{0}', space=sflag, size = 0x8, scoped, tag = 'scoped memory for tpu_custom_call.1']
    #allocation5 [shape = 's32[2]{0}', space=sflag, size = 0x8, scoped, tag = 'scoped memory for tpu_custom_call.1']
    #allocation6 [shape = 'u8[12288]{0}', space=vmem, size = 0x3000, scoped, tag = 'input window, operand 1']
    #allocation7 [shape = 'u8[196608]{0}', space=vmem, size = 0x30000, scoped, tag = 'input window, operand 2']
    #allocation8 [shape = 's32[2]{0}', space=sflag, size = 0x8, scoped, tag = 'scoped memory for tpu_custom_call.1']
    #allocation9 [shape = 'u8[16384]{0}', space=vmem, size = 0x4000, scoped, tag = 'input window, operand 3']
    #allocation10 [shape = 'u8[24576]{0}', space=vmem, size = 0x6000, scoped, tag = 'output window, operand 0']
    %9 = vsyncpa [#allocation5], 0
    %10 = vsyncpa [#allocation3], 0
    %s11 = scalar_lea.sflag [#allocation3], 1
    %12 = vsyncpa %s11, 0
    %13 = vsyncpa [#allocation8], 0
    %s14 = scalar_lea.sflag [#allocation8], 1
    %15 = vsyncpa %s14, 0
    %16 = vsyncpa [#allocation4], 0
    %s17 = scalar_lea.sflag [#allocation4], 1
    %18 = vsyncpa %s17, 0
    loop: start=0, step=1, limit=4
    $region2: #{tpu_custom_call.1} parent=1 // loop_pre_header
      _
    $region3: #{tpu_custom_call.1} parent=1 // loop_header
      %s20 = sphi 0, %s24
      %p21 = scmp.ge.s32.totalorder %s20, 4
      %s28 = sphi 0, %s28
      %s30 = sphi 0, %s28
      %s31 = sphi 0, %s30
      %s45 = sphi 0, %s31
      %s51 = sphi 0, %s53
      %s54 = sphi 0, %s51
      %s55 = sphi 0, %s54
      %s71 = sphi 0, %s55
      %s77 = sphi 0, %s79
      %s80 = sphi 0, %s77
      %s81 = sphi 0, %s80
      %s97 = sphi 0, %s81
      %s103 = sphi 0, %s105
      %s106 = sphi 0, %s103
      %s107 = sphi 0, %s106
      %s123 = sphi 0, %s107
      %s129 = sphi 0, %s131
      %s132 = sphi 0, %s129
      %s133 = sphi 0, %s132
      %s149 = sphi 0, %s133
    $region4: #{tpu_custom_call.1} parent=1 // loop_header_branch
      %23 = sbr.rel (%p21) target = $region8
    $region5: #{tpu_custom_call.1} parent=1 // loop_body
      %s25 = ssub.s32 %s20, 1
      %s26 = ssub.s32 %s20, 2
      %s27 = sadd.s32 %s20, 1
      %s29 = sadd.s32 %s28, 1
      %p32 = scmp.eq.s32.totalorder %s20, 1
      %p33 = scmp.ne.s32.totalorder %s28, %s30
      %p34 = scmp.eq.s32.totalorder %s20, 0
      %p35 = por %p33, %p34
      %p36 = scmp.ne.s32.totalorder %s28, %s30
      %p37 = scmp.eq.s32.totalorder %s25, 1
      %p38 = por %p36, %p37
      %p39 = scmp.ne.s32.totalorder %s30, %s31
      %p40 = scmp.eq.s32.totalorder %s25, 0
      %p41 = por %p39, %p40
      %p42 = scmp.ne.s32.totalorder %s30, %s31
      %p43 = scmp.eq.s32.totalorder %s26, 1
      %p44 = por %p42, %p43
      %p46 = scmp.ne.s32.totalorder %s31, %s45
      %p47 = scmp.eq.s32.totalorder %s26, 0
      %p48 = por %p46, %p47
      %s49 = ssub.s32 %s20, %s27
      %p50 = scmp.eq.s32.totalorder %s49, 0
      %s52 = sadd.s32 %s51, 1
      %s53 = scalar_select %p50, %s51, %s52
      %p56 = pneg %p50
      %p57 = scmp.eq.s32.totalorder %s20, 1
      %p58 = por %p56, %p57
      %p59 = scmp.ne.s32.totalorder %s51, %s54
      %p60 = scmp.eq.s32.totalorder %s20, 0
      %p61 = por %p59, %p60
      %p62 = scmp.ne.s32.totalorder %s51, %s54
      %p63 = scmp.eq.s32.totalorder %s25, 1
      %p64 = por %p62, %p63
      %p65 = scmp.ne.s32.totalorder %s54, %s55
      %p66 = scmp.eq.s32.totalorder %s25, 0
      %p67 = por %p65, %p66
      %p68 = scmp.ne.s32.totalorder %s54, %s55
      %p69 = scmp.eq.s32.totalorder %s26, 1
      %p70 = por %p68, %p69
      %p72 = scmp.ne.s32.totalorder %s55, %s71
      %p73 = scmp.eq.s32.totalorder %s26, 0
      %p74 = por %p72, %p73
      %s75 = ssub.s32 %s20, %s27
      %p76 = scmp.eq.s32.totalorder %s75, 0
      %s78 = sadd.s32 %s77, 1
      %s79 = scalar_select %p76, %s77, %s78
      %p82 = pneg %p76
      %p83 = scmp.eq.s32.totalorder %s20, 1
      %p84 = por %p82, %p83
      %p85 = scmp.ne.s32.totalorder %s77, %s80
      %p86 = scmp.eq.s32.totalorder %s20, 0
      %p87 = por %p85, %p86
      %p88 = scmp.ne.s32.totalorder %s77, %s80
      %p89 = scmp.eq.s32.totalorder %s25, 1
      %p90 = por %p88, %p89
      %p91 = scmp.ne.s32.totalorder %s80, %s81
      %p92 = scmp.eq.s32.totalorder %s25, 0
      %p93 = por %p91, %p92
      %p94 = scmp.ne.s32.totalorder %s80, %s81
      %p95 = scmp.eq.s32.totalorder %s26, 1
      %p96 = por %p94, %p95
      %p98 = scmp.ne.s32.totalorder %s81, %s97
      %p99 = scmp.eq.s32.totalorder %s26, 0
      %p100 = por %p98, %p99
      %s101 = ssub.s32 %s20, %s27
      %p102 = scmp.eq.s32.totalorder %s101, 0
      %s104 = sadd.s32 %s103, 1
      %s105 = scalar_select %p102, %s103, %s104
      %p108 = pneg %p102
      %p109 = scmp.eq.s32.totalorder %s20, 1
      %p110 = por %p108, %p109
      %p111 = scmp.ne.s32.totalorder %s103, %s106
      %p112 = scmp.eq.s32.totalorder %s20, 0
      %p113 = por %p111, %p112
      %p114 = scmp.ne.s32.totalorder %s103, %s106
      %p115 = scmp.eq.s32.totalorder %s25, 1
      %p116 = por %p114, %p115
      %p117 = scmp.ne.s32.totalorder %s106, %s107
      %p118 = scmp.eq.s32.totalorder %s25, 0
      %p119 = por %p117, %p118
      %p120 = scmp.ne.s32.totalorder %s106, %s107
      %p121 = scmp.eq.s32.totalorder %s26, 1
      %p122 = por %p120, %p121
      %p124 = scmp.ne.s32.totalorder %s107, %s123
      %p125 = scmp.eq.s32.totalorder %s26, 0
      %p126 = por %p124, %p125
      %s127 = ssub.s32 %s20, %s27
      %p128 = scmp.eq.s32.totalorder %s127, 0
      %s130 = sadd.s32 %s129, 1
      %s131 = scalar_select %p128, %s129, %s130
      %p134 = pneg %p128
      %p135 = scmp.eq.s32.totalorder %s20, 1
      %p136 = por %p134, %p135
      %p137 = scmp.ne.s32.totalorder %s129, %s132
      %p138 = scmp.eq.s32.totalorder %s20, 0
      %p139 = por %p137, %p138
      %p140 = scmp.ne.s32.totalorder %s129, %s132
      %p141 = scmp.eq.s32.totalorder %s25, 1
      %p142 = por %p140, %p141
      %p143 = scmp.ne.s32.totalorder %s132, %s133
      %p144 = scmp.eq.s32.totalorder %s25, 0
      %p145 = por %p143, %p144
      %p146 = scmp.ne.s32.totalorder %s132, %s133
      %p147 = scmp.eq.s32.totalorder %s26, 1
      %p148 = por %p146, %p147
      %p150 = scmp.ne.s32.totalorder %s133, %s149
      %p151 = scmp.eq.s32.totalorder %s26, 0
      %p152 = por %p150, %p151
      %p153 = scmp.le.s32.totalorder 1, %s20
      %p154 = scmp.lt.s32.totalorder %s20, 3
      %p155 = pnand %p153, %p154
      %p156 = pneg %p155
      // Predicated region
      $region9: #{tpu_custom_call.1} parent=5 // pred_check
        _
      $region10: #{tpu_custom_call.1} parent=5 // pred_check_branch
        %158 = sbr.rel (%p155) target = $region12
      $region11: #{tpu_custom_call.1} parent=5 // pred_region
        %s159 = ssub.s32 %s20, 1
        // Predicated region
        $region13: #{tpu_custom_call.1} parent=11 // pred_check
          %p160 = pneg %p41
        $region14: #{tpu_custom_call.1} parent=11 // pred_check_branch
          %162 = sbr.rel (%p160) target = $region16
        $region15: #{tpu_custom_call.1} parent=11 // pred_region
          %s164 = ssub.s32 16, 16
          %165 = vsyncadd [#allocation5], %s164
          %168 = dma.hbm_to_smem %s0, 16, [#allocation2], [#allocation5]
        $region16: #{tpu_custom_call.1} parent=11 // pred_fallthru
          _
      $region12: #{tpu_custom_call.1} parent=5 // pred_fallthru
        _
      %p169 = scmp.lt.s32.totalorder %s20, 2
      // Predicated region
      $region17: #{tpu_custom_call.1} parent=5 // pred_check
        %p170 = pneg %p169
      $region18: #{tpu_custom_call.1} parent=5 // pred_check_branch
        %172 = sbr.rel (%p170) target = $region20
      $region19: #{tpu_custom_call.1} parent=5 // pred_region
        // Predicated region
        $region21: #{tpu_custom_call.1} parent=19 // pred_check
          %p173 = pneg %p61
        $region22: #{tpu_custom_call.1} parent=19 // pred_check_branch
          %175 = sbr.rel (%p173) target = $region24
        $region23: #{tpu_custom_call.1} parent=19 // pred_region
          %s176 = sand.u32 %s51, 1
          %s177 = scalar_lea.sflag [#allocation3], %s176
          %s178 = sand.u32 %s51, 1
          %s179 = smul.addr %s178, 12
          %s180 = scalar_lea.vmem [#allocation6], %s179
          %s182 = ssub.s32 192, 192
          %183 = vsyncadd %s177, %s182
          %s184 = smul.addr %s20, 3
          %s185 = smul.addr %s184, 64
          %s186 = scalar_lea.hbm %s1, %s185
          %s188 = sshll.u32 %s180, 4
          %s189 = int_to_ptr.vmem [resolvable:$true] %s188
          %191 = dma.hbm_to_vmem [thread:$0]  %s186, 192, %s189, %s177
        $region24: #{tpu_custom_call.1} parent=19 // pred_fallthru
          _
        // Predicated region
        $region25: #{tpu_custom_call.1} parent=19 // pred_check
          %p192 = pneg %p87
        $region26: #{tpu_custom_call.1} parent=19 // pred_check_branch
          %194 = sbr.rel (%p192) target = $region28
        $region27: #{tpu_custom_call.1} parent=19 // pred_region
          %s195 = sand.u32 %s20, 1
          %s196 = scalar_lea.sflag [#allocation8], %s195
          %s197 = sand.u32 %s77, 1
          %s198 = smul.addr %s197, 192
          %s199 = scalar_lea.vmem [#allocation7], %s198
          %s200 = smul.u32 8, %s20
          %s202 = ssub.s32 3072, 3072
          %203 = vsyncadd %s196, %s202
          %s204 = smul.addr %s200, 6
          %s205 = smul.addr %s204, 64
          %s206 = scalar_lea.hbm %s2, %s205
          %s207 = sshll.u32 %s199, 4
          %s208 = int_to_ptr.vmem [resolvable:$true] %s207
          %213 = dma.hbm_to_vmem [thread:$0]  %s206, 3072, %s208, %s196, 192, 192, 12
        $region28: #{tpu_custom_call.1} parent=19 // pred_fallthru
          _
        // Predicated region
        $region29: #{tpu_custom_call.1} parent=19 // pred_check
          %p214 = pneg %p113
        $region30: #{tpu_custom_call.1} parent=19 // pred_check_branch
          %216 = sbr.rel (%p214) target = $region32
        $region31: #{tpu_custom_call.1} parent=19 // pred_region
          %s217 = sand.u32 %s20, 1
          %s218 = scalar_lea.sflag [#allocation8], %s217
          %s219 = sand.u32 %s103, 1
          %s220 = smul.addr %s219, 16
          %s221 = scalar_lea.vmem [#allocation9], %s220
          %s223 = ssub.s32 256, 256
          %224 = vsyncadd %s218, %s223
          %s225 = smul.addr %s20, 128
          %s226 = scalar_lea.hbm %s3, %s225
          %s227 = sshll.u32 %s221, 4
          %s228 = int_to_ptr.vmem [resolvable:$true] %s227
          %233 = dma.hbm_to_vmem [thread:$0]  %s226, 256, %s228, %s218, 256, 128, 8
        $region32: #{tpu_custom_call.1} parent=19 // pred_fallthru
          _
      $region20: #{tpu_custom_call.1} parent=5 // pred_fallthru
        _
      %p234 = scmp.le.s32.totalorder 1, %s20
      %p235 = scmp.lt.s32.totalorder %s20, 3
      %p236 = pnand %p234, %p235
      %p237 = pneg %p236
      // Predicated region
      $region33: #{tpu_custom_call.1} parent=5 // pred_check
        _
      $region34: #{tpu_custom_call.1} parent=5 // pred_check_branch
        %239 = sbr.rel (%p236) target = $region36
      $region35: #{tpu_custom_call.1} parent=5 // pred_region
        %s240 = ssub.s32 %s20, 1
        // Predicated region
        $region37: #{tpu_custom_call.1} parent=35 // pred_check
          %p241 = pneg %p41
        $region38: #{tpu_custom_call.1} parent=35 // pred_check_branch
          %243 = sbr.rel (%p241) target = $region40
        $region39: #{tpu_custom_call.1} parent=35 // pred_region
          %244 = dma.done [#allocation5], 16
        $region40: #{tpu_custom_call.1} parent=35 // pred_fallthru
          _
        %s245 = sand.u32 %s54, 1
        %s246 = scalar_lea.sflag [#allocation3], %s245
        %s247 = sand.u32 %s54, 1
        %s248 = smul.addr %s247, 12
        %s249 = scalar_lea.vmem [#allocation6], %s248
        // Predicated region
        $region41: #{tpu_custom_call.1} parent=35 // pred_check
          %p250 = pneg %p67
        $region42: #{tpu_custom_call.1} parent=35 // pred_check_branch
          %252 = sbr.rel (%p250) target = $region44
        $region43: #{tpu_custom_call.1} parent=35 // pred_region
          %253 = dma.done %s246, 192
        $region44: #{tpu_custom_call.1} parent=35 // pred_fallthru
          _
        %s254 = sand.u32 %s25, 1
        %s255 = scalar_lea.sflag [#allocation8], %s254
        %s256 = sand.u32 %s80, 1
        %s257 = smul.addr %s256, 192
        %s258 = scalar_lea.vmem [#allocation7], %s257
        // Predicated region
        $region45: #{tpu_custom_call.1} parent=35 // pred_check
          %p259 = pneg %p93
        $region46: #{tpu_custom_call.1} parent=35 // pred_check_branch
          %261 = sbr.rel (%p259) target = $region48
        $region47: #{tpu_custom_call.1} parent=35 // pred_region
          %262 = dma.done %s255, 3072
        $region48: #{tpu_custom_call.1} parent=35 // pred_fallthru
          _
        %s263 = sand.u32 %s25, 1
        %s264 = scalar_lea.sflag [#allocation8], %s263
        %s265 = sand.u32 %s106, 1
        %s266 = smul.addr %s265, 16
        %s267 = scalar_lea.vmem [#allocation9], %s266
        // Predicated region
        $region49: #{tpu_custom_call.1} parent=35 // pred_check
          %p268 = pneg %p119
        $region50: #{tpu_custom_call.1} parent=35 // pred_check_branch
          %270 = sbr.rel (%p268) target = $region52
        $region51: #{tpu_custom_call.1} parent=35 // pred_region
          %271 = dma.done %s264, 256
        $region52: #{tpu_custom_call.1} parent=35 // pred_fallthru
          _
        %272 = sfence
        %p273 = pneg %p41
        %p274 = pneg %p38
        %s275 = sand.u32 %s54, 1
        %s276 = scalar_lea.sflag [#allocation3], %s275
        %s277 = sand.u32 %s54, 1
        %s278 = smul.addr %s277, 12
        %s279 = scalar_lea.vmem [#allocation6], %s278
        %p280 = pneg %p67
        %p281 = pneg %p64
        %s282 = sand.u32 %s25, 1
        %s283 = scalar_lea.sflag [#allocation8], %s282
        %s284 = sand.u32 %s80, 1
        %s285 = smul.addr %s284, 192
        %s286 = scalar_lea.vmem [#allocation7], %s285
        %p287 = pneg %p93
        %p288 = pneg %p90
        %s289 = sand.u32 %s25, 1
        %s290 = scalar_lea.sflag [#allocation8], %s289
        %s291 = sand.u32 %s106, 1
        %s292 = smul.addr %s291, 16
        %s293 = scalar_lea.vmem [#allocation9], %s292
        %p294 = pneg %p119
        %p295 = pneg %p116
        %p296 = pneg %p145
        %p297 = pneg %p142
        %s298 = sand.u32 %s132, 1
        %s299 = scalar_lea.sflag [#allocation4], %s298
        %s300 = sand.u32 %s132, 1
        %s301 = smul.addr %s300, 24
        %s302 = scalar_lea.vmem [#allocation10], %s301
        %s303 = smul.u32 8, %s25
        %s304 = sld [smem:[#allocation2]]
        %s305 = sxor.u32 %s304, 2147483648
        %v306 = vstv %s305
        %v307 = vmul.f32 %v306, 1.442695
        %v308 = vpow.pop %v307
        %s309 = vtos %v308
        %s310 = sadd.f32 %s309, 1.0
        %v311 = vstv %s310
        %v312 = vrcp.pop %v311
        %s313 = vtos %v312
        %s314 = sld [smem:[#allocation2 + $0x1]]
        %s315 = sxor.u32 %s314, 2147483648
        %v316 = vstv %s315
        %v317 = vmul.f32 %v316, 1.442695
        %v318 = vpow.pop %v317
        %s319 = vtos %v318
        %s320 = sadd.f32 %s319, 1.0
        %v321 = vstv %s320
        %v322 = vrcp.pop %v321
        %s323 = vtos %v322
        %s324 = sld [smem:[#allocation2 + $0x2]]
        %s325 = sxor.u32 %s324, 2147483648
        %v326 = vstv %s325
        %v327 = vmul.f32 %v326, 1.442695
        %v328 = vpow.pop %v327
        %s329 = vtos %v328
        %s330 = sadd.f32 %s329, 1.0
        %v331 = vstv %s330
        %v332 = vrcp.pop %v331
        %s333 = vtos %v332
        %v334 = vld [vmem:[%s267] sm:$0xff]
        %s335 = scalar_lea.vmem %s267, 8 [#allocation9]
        %v336 = vld [vmem:[%s335] sm:$0xff]
        %v337 = vstv %s313
        %v338 = vmul.f32 %v337, %v334
        %v339 = vstv %s323
        %v340 = vmul.f32 %v339, %v336
        %v341 = vadd.f32 %v338, %v340
        %vm342 = vcmask 130048
        %v343 = vsel %vm342, %v341, 0.0
        %344 = vadd.xlane.f32.xlu0 %v343
        %v345 = vpop.xlane.xlu0 %344
        %vm346 = vcmp.gt.f32.partialorder %v345, 1e-08
        %v347 = vsel %vm346, %v345, 15.0
        %v348 = vld [vmem:[%s258] sm:$0xff]
        %v349 = vld [vmem:[%s258 + $0x8] sm:$0xf]
        %v350 = vld [vmem:[%s258 + $0xc] sm:$0xff]
        %v351 = vld [vmem:[%s258 + $0x14] sm:$0xf]
        %v352 = vld [vmem:[%s258 + $0x18] sm:$0xff]
        %v353 = vld [vmem:[%s258 + $0x20] sm:$0xf]
        %v354 = vld [vmem:[%s258 + $0x24] sm:$0xff]
        %v355 = vld [vmem:[%s258 + $0x2c] sm:$0xf]
        %v356 = vld [vmem:[%s258 + $0x30] sm:$0xff]
        %v357 = vld [vmem:[%s258 + $0x38] sm:$0xf]
        %v358 = vld [vmem:[%s258 + $0x3c] sm:$0xff]
        %v359 = vld [vmem:[%s258 + $0x44] sm:$0xf]
        %v360 = vld [vmem:[%s258 + $0x48] sm:$0xff]
        %v361 = vld [vmem:[%s258 + $0x50] sm:$0xf]
        %v362 = vld [vmem:[%s258 + $0x54] sm:$0xff]
        %v363 = vld [vmem:[%s258 + $0x5c] sm:$0xf]
        %v364 = vld [vmem:[%s258 + $0x60] sm:$0xff]
        %v365 = vld [vmem:[%s258 + $0x68] sm:$0xf]
        %v366 = vld [vmem:[%s258 + $0x6c] sm:$0xff]
        %v367 = vld [vmem:[%s258 + $0x74] sm:$0xf]
        %v368 = vld [vmem:[%s258 + $0x78] sm:$0xff]
        %v369 = vld [vmem:[%s258 + $0x80] sm:$0xf]
        %v370 = vld [vmem:[%s258 + $0x84] sm:$0xff]
        %v371 = vld [vmem:[%s258 + $0x8c] sm:$0xf]
        %v372 = vld [vmem:[%s258 + $0x90] sm:$0xff]
        %v373 = vld [vmem:[%s258 + $0x98] sm:$0xf]
        %v374 = vld [vmem:[%s258 + $0x9c] sm:$0xff]
        %v375 = vld [vmem:[%s258 + $0xa4] sm:$0xf]
        %v376 = vld [vmem:[%s258 + $0xa8] sm:$0xff]
        %v377 = vld [vmem:[%s258 + $0xb0] sm:$0xf]
        %v378 = vld [vmem:[%s258 + $0xb4] sm:$0xff]
        %v379 = vld [vmem:[%s258 + $0xbc] sm:$0xf]
        %v380 = vunpack.c.l.bf16 %v348
        %v381 = vunpack.c.h.bf16 %v348
        %v382 = vunpack.c.l.bf16 %v349
        %v383 = vunpack.c.l.bf16 %v350
        %v384 = vunpack.c.h.bf16 %v350
        %v385 = vunpack.c.l.bf16 %v351
        %v386 = vunpack.c.l.bf16 %v352
        %v387 = vunpack.c.h.bf16 %v352
        %v388 = vunpack.c.l.bf16 %v353
        %v389 = vunpack.c.l.bf16 %v354
        %v390 = vunpack.c.h.bf16 %v354
        %v391 = vunpack.c.l.bf16 %v355
        %v392 = vunpack.c.l.bf16 %v356
        %v393 = vunpack.c.h.bf16 %v356
        %v394 = vunpack.c.l.bf16 %v357
        %v395 = vunpack.c.l.bf16 %v358
        %v396 = vunpack.c.h.bf16 %v358
        %v397 = vunpack.c.l.bf16 %v359
        %v398 = vunpack.c.l.bf16 %v360
        %v399 = vunpack.c.h.bf16 %v360
        %v400 = vunpack.c.l.bf16 %v361
        %v401 = vunpack.c.l.bf16 %v362
        %v402 = vunpack.c.h.bf16 %v362
        %v403 = vunpack.c.l.bf16 %v363
        %v404 = vunpack.c.l.bf16 %v364
        %v405 = vunpack.c.h.bf16 %v364
        %v406 = vunpack.c.l.bf16 %v365
        %v407 = vunpack.c.l.bf16 %v366
        %v408 = vunpack.c.h.bf16 %v366
        %v409 = vunpack.c.l.bf16 %v367
        %v410 = vunpack.c.l.bf16 %v368
        %v411 = vunpack.c.h.bf16 %v368
        %v412 = vunpack.c.l.bf16 %v369
        %v413 = vunpack.c.l.bf16 %v370
        %v414 = vunpack.c.h.bf16 %v370
        %v415 = vunpack.c.l.bf16 %v371
        %v416 = vunpack.c.l.bf16 %v372
        %v417 = vunpack.c.h.bf16 %v372
        %v418 = vunpack.c.l.bf16 %v373
        %v419 = vunpack.c.l.bf16 %v374
        %v420 = vunpack.c.h.bf16 %v374
        %v421 = vunpack.c.l.bf16 %v375
        %v422 = vunpack.c.l.bf16 %v376
        %v423 = vunpack.c.h.bf16 %v376
        %v424 = vunpack.c.l.bf16 %v377
        %v425 = vunpack.c.l.bf16 %v378
        %v426 = vunpack.c.h.bf16 %v378
        %v427 = vunpack.c.l.bf16 %v379
        %v429 = vcombine.high %v341, %v341
        %v431 = vunpack.c.l.s4 1966171168
        %v432 = vunpack.c.0.s8 %v431
        %v433 = vlaneseq
        %v434 = vshrl.u32 %v433, 7
        %v435 = vsub.s32 %v432, %v434
        %v436 = vrot.slane %v341, %v435
        %v438 = vunpack.c.l.s4 1966171168
        %v439 = vunpack.c.0.s8 %v438
        %v440 = vlaneseq
        %v441 = vshrl.u32 %v440, 7
        %v442 = vsub.s32 %v439, %v441
        %v443 = vrot.slane %v429, %v442
        %v444 = vcombine.high %v436, %v436
        %v445 = vcombine.high %v443, %v443
        %v447 = vunpack.c.l.s4 1966171168
        %v448 = vunpack.c.0.s8 %v447
        %v449 = vlaneseq
        %v450 = vshrl.u32 %v449, 7
        %v451 = vsub.s32 %v448, %v450
        %v452 = vrot.slane %v436, %v451
        %v454 = vunpack.c.l.s4 1966171168
        %v455 = vunpack.c.0.s8 %v454
        %v456 = vlaneseq
        %v457 = vshrl.u32 %v456, 7
        %v458 = vsub.s32 %v455, %v457
        %v459 = vrot.slane %v443, %v458
        %v461 = vunpack.c.l.s4 1966171168
        %v462 = vunpack.c.0.s8 %v461
        %v463 = vlaneseq
        %v464 = vshrl.u32 %v463, 7
        %v465 = vsub.s32 %v462, %v464
        %v466 = vrot.slane %v444, %v465
        %v468 = vunpack.c.l.s4 1966171168
        %v469 = vunpack.c.0.s8 %v468
        %v470 = vlaneseq
        %v471 = vshrl.u32 %v470, 7
        %v472 = vsub.s32 %v469, %v471
        %v473 = vrot.slane %v445, %v472
        %v474 = vcombine.high %v452, %v452
        %v475 = vcombine.high %v459, %v459
        %v476 = vcombine.high %v466, %v466
        %v477 = vcombine.high %v473, %v473
        %v478 = vsel %vm342, %v452, 0
        %480 = vmatprep.subr.mxu0 %v381
        %481 = vmatpush1.msra.mxu0 %v380
        %482 = vmatprep.subr.mxu0 %v384
        %483 = vmatpush1.msra.mxu0 %v383
        %484 = vmatprep.subr.mxu0 0.0
        %485 = vmatpush1.msra.mxu0 0.0
        %486 = vmatprep.subr.mxu0 0.0
        %487 = vmatpush1.msra.mxu0 0.0
        %488 = vmatprep.subr.mxu0 0.0
        %489 = vmatpush1.msra.mxu0 0.0
        %490 = vmatprep.subr.mxu0 0.0
        %491 = vmatpush1.msra.mxu0 0.0
        %492 = vmatprep.subr.mxu0 0.0
        %493 = vmatpush1.msra.mxu0 0.0
        %494 = vmatprep.subr.mxu0 0.0
        %495 = vmatpush1.msra.mxu0 0.0
        %496 = vmatprep.subr.mxu0 0.0
        %497 = vmatpush1.msra.mxu0 0.0
        %498 = vmatprep.subr.mxu0 0.0
        %499 = vmatpush1.msra.mxu0 0.0
        %500 = vmatprep.subr.mxu0 0.0
        %501 = vmatpush1.msra.mxu0 0.0
        %502 = vmatprep.subr.mxu0 0.0
        %503 = vmatpush1.msra.mxu0 0.0
        %504 = vmatprep.subr.mxu0 0.0
        %505 = vmatpush1.msra.mxu0 0.0
        %506 = vmatprep.subr.mxu0 0.0
        %507 = vmatpush1.msra.mxu0 0.0
        %508 = vmatprep.subr.mxu0 0.0
        %509 = vmatpush1.msra.mxu0 0.0
        %510 = vmatprep.subr.mxu0 0.0
        %511 = vmatpush1.msra.mxu0 0.0
        %512 = vmatprep.subr.mxu0 0.0
        %513 = vmatpush1.msra.mxu0 0.0
        %514 = vmatprep.subr.mxu0 0.0
        %515 = vmatpush1.msra.mxu0 0.0
        %516 = vmatprep.subr.mxu0 0.0
        %517 = vmatpush1.msra.mxu0 0.0
        %518 = vmatprep.subr.mxu0 0.0
        %519 = vmatpush1.msra.mxu0 0.0
        %520 = vmatprep.subr.mxu0 0.0
        %521 = vmatpush1.msra.mxu0 0.0
        %522 = vmatprep.subr.mxu0 0.0
        %523 = vmatpush1.msra.mxu0 0.0
        %524 = vmatprep.subr.mxu0 0.0
        %525 = vmatpush1.msra.mxu0 0.0
        %526 = vmatprep.subr.mxu0 0.0
        %527 = vmatpush1.msra.mxu0 0.0
        %528 = vmatprep.subr.mxu0 0.0
        %529 = vmatpush1.msra.mxu0 0.0
        %530 = vmatprep.subr.mxu0 0.0
        %531 = vmatpush1.msra.mxu0 0.0
        %532 = vmatprep.subr.mxu0 0.0
        %533 = vmatpush1.msra.mxu0 0.0
        %534 = vmatprep.subr.mxu0 0.0
        %535 = vmatpush1.msra.mxu0 0.0
        %536 = vmatprep.subr.mxu0 0.0
        %537 = vmatpush1.msra.mxu0 0.0
        %538 = vmatprep.subr.mxu0 0.0
        %539 = vmatpush1.msra.mxu0 0.0
        %540 = vmatprep.subr.mxu0 0.0
        %541 = vmatpush1.msra.mxu0 0.0
        %542 = vmatprep.subr.mxu0 0.0
        %543 = vmatpush1.msra.mxu0 0.0
        %544 = vmatprep.mubr.f32.mxu0 0.0
        %v545 = vand.u32 %v478, 4294901760
        %v546 = vsub.f32 %v478, %v545
        %v547 = vand.u32 %v546, 4294901760
        %v548 = vsub.f32 %v546, %v547
        %v549 = vand.u32 %v548, 4294901760
        %550 = vmatmul.mubr.f32.gmra.mrb[0].mxu0 %v549
        %v551 = vpop.f32.mrb[0].mxu0
        %v552 = vadd.f32 0.0, %v551
        %v553 = vpop.f32.mrb[0].mxu0
        %v554 = vadd.f32 0.0, %v553
        %555 = vdwg.mxu0
        %v556 = vsub.f32 %v381, %v381
        %v557 = vand.u32 %v556, 4294901760
        %v558 = vsub.f32 %v556, %v557
        %v559 = vand.u32 %v558, 4294901760
        %560 = vmatprep.subr.mxu0 %v559
        %v561 = vsub.f32 %v380, %v380
        %v562 = vand.u32 %v561, 4294901760
        %v563 = vsub.f32 %v561, %v562
        %v564 = vand.u32 %v563, 4294901760
        %565 = vmatpush1.msra.mxu0 %v564
        %v566 = vsub.f32 %v384, %v384
        %v567 = vand.u32 %v566, 4294901760
        %v568 = vsub.f32 %v566, %v567
        %v569 = vand.u32 %v568, 4294901760
        %570 = vmatprep.subr.mxu0 %v569
        %v571 = vsub.f32 %v383, %v383
        %v572 = vand.u32 %v571, 4294901760
        %v573 = vsub.f32 %v571, %v572
        %v574 = vand.u32 %v573, 4294901760
        %575 = vmatpush1.msra.mxu0 %v574
        %576 = vmatprep.subr.mxu0 0.0
        %577 = vmatpush1.msra.mxu0 0.0
        %578 = vmatprep.subr.mxu0 0.0
        %579 = vmatpush1.msra.mxu0 0.0
        %580 = vmatprep.subr.mxu0 0.0
        %581 = vmatpush1.msra.mxu0 0.0
        %582 = vmatprep.subr.mxu0 0.0
        %583 = vmatpush1.msra.mxu0 0.0
        %584 = vmatprep.subr.mxu0 0.0
        %585 = vmatpush1.msra.mxu0 0.0
        %586 = vmatprep.subr.mxu0 0.0
        %587 = vmatpush1.msra.mxu0 0.0
        %588 = vmatprep.subr.mxu0 0.0
        %589 = vmatpush1.msra.mxu0 0.0
        %590 = vmatprep.subr.mxu0 0.0
        %591 = vmatpush1.msra.mxu0 0.0
        %592 = vmatprep.subr.mxu0 0.0
        %593 = vmatpush1.msra.mxu0 0.0
        %594 = vmatprep.subr.mxu0 0.0
        %595 = vmatpush1.msra.mxu0 0.0
        %596 = vmatprep.subr.mxu0 0.0
        %597 = vmatpush1.msra.mxu0 0.0
        %598 = vmatprep.subr.mxu0 0.0
        %599 = vmatpush1.msra.mxu0 0.0
        %600 = vmatprep.subr.mxu0 0.0
        %601 = vmatpush1.msra.mxu0 0.0
        %602 = vmatprep.subr.mxu0 0.0
        %603 = vmatpush1.msra.mxu0 0.0
        %604 = vmatprep.subr.mxu0 0.0
        %605 = vmatpush1.msra.mxu0 0.0
        %606 = vmatprep.subr.mxu0 0.0
        %607 = vmatpush1.msra.mxu0 0.0
        %608 = vmatprep.subr.mxu0 0.0
        %609 = vmatpush1.msra.mxu0 0.0
        %610 = vmatprep.subr.mxu0 0.0
        %611 = vmatpush1.msra.mxu0 0.0
        %612 = vmatprep.subr.mxu0 0.0
        %613 = vmatpush1.msra.mxu0 0.0
        %614 = vmatprep.subr.mxu0 0.0
        %615 = vmatpush1.msra.mxu0 0.0
        %616 = vmatprep.subr.mxu0 0.0
        %617 = vmatpush1.msra.mxu0 0.0
        %618 = vmatprep.subr.mxu0 0.0
        %619 = vmatpush1.msra.mxu0 0.0
        %620 = vmatprep.subr.mxu0 0.0
        %621 = vmatpush1.msra.mxu0 0.0
        %622 = vmatprep.subr.mxu0 0.0
        %623 = vmatpush1.msra.mxu0 0.0
        %624 = vmatprep.subr.mxu0 0.0
        %625 = vmatpush1.msra.mxu0 0.0
        %626 = vmatprep.subr.mxu0 0.0
        %627 = vmatpush1.msra.mxu0 0.0
        %628 = vmatprep.subr.mxu0 0.0
        %629 = vmatpush1.msra.mxu0 0.0
        %630 = vmatprep.subr.mxu0 0.0
        %631 = vmatpush1.msra.mxu0 0.0
        %632 = vmatprep.subr.mxu0 0.0
        %633 = vmatpush1.msra.mxu0 0.0
        %634 = vmatprep.subr.mxu0 0.0
        %635 = vmatpush1.msra.mxu0 0.0
        %636 = vmatprep.mubr.f32.mxu0 0.0
        %v637 = vand.u32 %v478, 4294901760
        %638 = vmatmul.mubr.f32.gmra.mrb[0].mxu0 %v637
        %v639 = vpop.f32.mrb[0].mxu0
        %v640 = vadd.f32 %v552, %v639
        %v641 = vpop.f32.mrb[0].mxu0
        %v642 = vadd.f32 %v554, %v641
        %643 = vdwg.mxu0
        %v644 = vsub.f32 %v381, %v381
        %645 = vmatprep.subr.mxu0 %v644
        %v646 = vsub.f32 %v380, %v380
        %647 = vmatpush1.msra.mxu0 %v646
        %v648 = vsub.f32 %v384, %v384
        %649 = vmatprep.subr.mxu0 %v648
        %v650 = vsub.f32 %v383, %v383
        %651 = vmatpush1.msra.mxu0 %v650
        %652 = vmatprep.subr.mxu0 0.0
        %653 = vmatpush1.msra.mxu0 0.0
        %654 = vmatprep.subr.mxu0 0.0
        %655 = vmatpush1.msra.mxu0 0.0
        %656 = vmatprep.subr.mxu0 0.0
        %657 = vmatpush1.msra.mxu0 0.0
        %658 = vmatprep.subr.mxu0 0.0
        %659 = vmatpush1.msra.mxu0 0.0
        %660 = vmatprep.subr.mxu0 0.0
        %661 = vmatpush1.msra.mxu0 0.0
        %662 = vmatprep.subr.mxu0 0.0
        %663 = vmatpush1.msra.mxu0 0.0
        %664 = vmatprep.subr.mxu0 0.0
        %665 = vmatpush1.msra.mxu0 0.0
        %666 = vmatprep.subr.mxu0 0.0
        %667 = vmatpush1.msra.mxu0 0.0
        %668 = vmatprep.subr.mxu0 0.0
        %669 = vmatpush1.msra.mxu0 0.0
        %670 = vmatprep.subr.mxu0 0.0
        %671 = vmatpush1.msra.mxu0 0.0
        %672 = vmatprep.subr.mxu0 0.0
        %673 = vmatpush1.msra.mxu0 0.0
        %674 = vmatprep.subr.mxu0 0.0
        %675 = vmatpush1.msra.mxu0 0.0
        %676 = vmatprep.subr.mxu0 0.0
        %677 = vmatpush1.msra.mxu0 0.0
        %678 = vmatprep.subr.mxu0 0.0
        %679 = vmatpush1.msra.mxu0 0.0
        %680 = vmatprep.subr.mxu0 0.0
        %681 = vmatpush1.msra.mxu0 0.0
        %682 = vmatprep.subr.mxu0 0.0
        %683 = vmatpush1.msra.mxu0 0.0
        %684 = vmatprep.subr.mxu0 0.0
        %685 = vmatpush1.msra.mxu0 0.0
        %686 = vmatprep.subr.mxu0 0.0
        %687 = vmatpush1.msra.mxu0 0.0
        %688 = vmatprep.subr.mxu0 0.0
        %689 = vmatpush1.msra.mxu0 0.0
        %690 = vmatprep.subr.mxu0 0.0
        %691 = vmatpush1.msra.mxu0 0.0
        %692 = vmatprep.subr.mxu0 0.0
        %693 = vmatpush1.msra.mxu0 0.0
        %694 = vmatprep.subr.mxu0 0.0
        %695 = vmatpush1.msra.mxu0 0.0
        %696 = vmatprep.subr.mxu0 0.0
        %697 = vmatpush1.msra.mxu0 0.0
        %698 = vmatprep.subr.mxu0 0.0
        %699 = vmatpush1.msra.mxu0 0.0
        %700 = vmatprep.subr.mxu0 0.0
        %701 = vmatpush1.msra.mxu0 0.0
        %702 = vmatprep.subr.mxu0 0.0
        %703 = vmatpush1.msra.mxu0 0.0
        %704 = vmatprep.subr.mxu0 0.0
        %705 = vmatpush1.msra.mxu0 0.0
        %706 = vmatprep.subr.mxu0 0.0
        %707 = vmatpush1.msra.mxu0 0.0
        %708 = vmatprep.subr.mxu0 0.0
        %709 = vmatpush1.msra.mxu0 0.0
        %710 = vmatprep.subr.mxu0 0.0
        %711 = vmatpush1.msra.mxu0 0.0
        %712 = vmatprep.mubr.f32.mxu0 0.0
        %v713 = vand.u32 %v478, 4294901760
        %v714 = vsub.f32 %v478, %v713
        %715 = vmatmul.mubr.f32.gmra.mrb[0].mxu0 %v714
        %v716 = vpop.f32.mrb[0].mxu0
        %v717 = vadd.f32 %v640, %v716
        %v718 = vpop.f32.mrb[0].mxu0
        %v719 = vadd.f32 %v642, %v718
        %720 = vdwg.mxu0
        %721 = vmatprep.subr.mxu0 %v381
        %722 = vmatpush1.msra.mxu0 %v380
        %723 = vmatprep.subr.mxu0 %v384
        %724 = vmatpush1.msra.mxu0 %v383
        %725 = vmatprep.subr.mxu0 0.0
        %726 = vmatpush1.msra.mxu0 0.0
        %727 = vmatprep.subr.mxu0 0.0
        %728 = vmatpush1.msra.mxu0 0.0
        %729 = vmatprep.subr.mxu0 0.0
        %730 = vmatpush1.msra.mxu0 0.0
        %731 = vmatprep.subr.mxu0 0.0
        %732 = vmatpush1.msra.mxu0 0.0
        %733 = vmatprep.subr.mxu0 0.0
        %734 = vmatpush1.msra.mxu0 0.0
        %735 = vmatprep.subr.mxu0 0.0
        %736 = vmatpush1.msra.mxu0 0.0
        %737 = vmatprep.subr.mxu0 0.0
        %738 = vmatpush1.msra.mxu0 0.0
        %739 = vmatprep.subr.mxu0 0.0
        %740 = vmatpush1.msra.mxu0 0.0
        %741 = vmatprep.subr.mxu0 0.0
        %742 = vmatpush1.msra.mxu0 0.0
        %743 = vmatprep.subr.mxu0 0.0
        %744 = vmatpush1.msra.mxu0 0.0
        %745 = vmatprep.subr.mxu0 0.0
        %746 = vmatpush1.msra.mxu0 0.0
        %747 = vmatprep.subr.mxu0 0.0
        %748 = vmatpush1.msra.mxu0 0.0
        %749 = vmatprep.subr.mxu0 0.0
        %750 = vmatpush1.msra.mxu0 0.0
        %751 = vmatprep.subr.mxu0 0.0
        %752 = vmatpush1.msra.mxu0 0.0
        %753 = vmatprep.subr.mxu0 0.0
        %754 = vmatpush1.msra.mxu0 0.0
        %755 = vmatprep.subr.mxu0 0.0
        %756 = vmatpush1.msra.mxu0 0.0
        %757 = vmatprep.subr.mxu0 0.0
        %758 = vmatpush1.msra.mxu0 0.0
        %759 = vmatprep.subr.mxu0 0.0
        %760 = vmatpush1.msra.mxu0 0.0
        %761 = vmatprep.subr.mxu0 0.0
        %762 = vmatpush1.msra.mxu0 0.0
        %763 = vmatprep.subr.mxu0 0.0
        %764 = vmatpush1.msra.mxu0 0.0
        %765 = vmatprep.subr.mxu0 0.0
        %766 = vmatpush1.msra.mxu0 0.0
        %767 = vmatprep.subr.mxu0 0.0
        %768 = vmatpush1.msra.mxu0 0.0
        %769 = vmatprep.subr.mxu0 0.0
        %770 = vmatpush1.msra.mxu0 0.0
        %771 = vmatprep.subr.mxu0 0.0
        %772 = vmatpush1.msra.mxu0 0.0
        %773 = vmatprep.subr.mxu0 0.0
        %774 = vmatpush1.msra.mxu0 0.0
        %775 = vmatprep.subr.mxu0 0.0
        %776 = vmatpush1.msra.mxu0 0.0
        %777 = vmatprep.subr.mxu0 0.0
        %778 = vmatpush1.msra.mxu0 0.0
        %779 = vmatprep.subr.mxu0 0.0
        %780 = vmatpush1.msra.mxu0 0.0
        %781 = vmatprep.subr.mxu0 0.0
        %782 = vmatpush1.msra.mxu0 0.0
        %783 = vmatprep.subr.mxu0 0.0
        %784 = vmatpush1.msra.mxu0 0.0
        %785 = vmatprep.mubr.f32.mxu0 0.0
        %v786 = vand.u32 %v478, 4294901760
        %v787 = vsub.f32 %v478, %v786
        %v788 = vand.u32 %v787, 4294901760
        %789 = vmatmul.mubr.f32.gmra.mrb[0].mxu0 %v788
        %v790 = vpop.f32.mrb[0].mxu0
        %v791 = vadd.f32 %v717, %v790
        %v792 = vpop.f32.mrb[0].mxu0
        %v793 = vadd.f32 %v719, %v792
        %794 = vdwg.mxu0
        %v795 = vsub.f32 %v381, %v381
        %v796 = vand.u32 %v795, 4294901760
        %797 = vmatprep.subr.mxu0 %v796
        %v798 = vsub.f32 %v380, %v380
        %v799 = vand.u32 %v798, 4294901760
        %800 = vmatpush1.msra.mxu0 %v799
        %v801 = vsub.f32 %v384, %v384
        %v802 = vand.u32 %v801, 4294901760
        %803 = vmatprep.subr.mxu0 %v802
        %v804 = vsub.f32 %v383, %v383
        %v805 = vand.u32 %v804, 4294901760
        %806 = vmatpush1.msra.mxu0 %v805
        %807 = vmatprep.subr.mxu0 0.0
        %808 = vmatpush1.msra.mxu0 0.0
        %809 = vmatprep.subr.mxu0 0.0
        %810 = vmatpush1.msra.mxu0 0.0
        %811 = vmatprep.subr.mxu0 0.0
        %812 = vmatpush1.msra.mxu0 0.0
        %813 = vmatprep.subr.mxu0 0.0
        %814 = vmatpush1.msra.mxu0 0.0
        %815 = vmatprep.subr.mxu0 0.0
        %816 = vmatpush1.msra.mxu0 0.0
        %817 = vmatprep.subr.mxu0 0.0
        %818 = vmatpush1.msra.mxu0 0.0
        %819 = vmatprep.subr.mxu0 0.0
        %820 = vmatpush1.msra.mxu0 0.0
        %821 = vmatprep.subr.mxu0 0.0
        %822 = vmatpush1.msra.mxu0 0.0
        %823 = vmatprep.subr.mxu0 0.0
        %824 = vmatpush1.msra.mxu0 0.0
        %825 = vmatprep.subr.mxu0 0.0
        %826 = vmatpush1.msra.mxu0 0.0
        %827 = vmatprep.subr.mxu0 0.0
        %828 = vmatpush1.msra.mxu0 0.0
        %829 = vmatprep.subr.mxu0 0.0
        %830 = vmatpush1.msra.mxu0 0.0
        %831 = vmatprep.subr.mxu0 0.0
        %832 = vmatpush1.msra.mxu0 0.0
        %833 = vmatprep.subr.mxu0 0.0
        %834 = vmatpush1.msra.mxu0 0.0
        %835 = vmatprep.subr.mxu0 0.0
        %836 = vmatpush1.msra.mxu0 0.0
        %837 = vmatprep.subr.mxu0 0.0
        %838 = vmatpush1.msra.mxu0 0.0
        %839 = vmatprep.subr.mxu0 0.0
        %840 = vmatpush1.msra.mxu0 0.0
        %841 = vmatprep.subr.mxu0 0.0
        %842 = vmatpush1.msra.mxu0 0.0
        %843 = vmatprep.subr.mxu0 0.0
        %844 = vmatpush1.msra.mxu0 0.0
        %845 = vmatprep.subr.mxu0 0.0
        %846 = vmatpush1.msra.mxu0 0.0
        %847 = vmatprep.subr.mxu0 0.0
        %848 = vmatpush1.msra.mxu0 0.0
        %849 = vmatprep.subr.mxu0 0.0
        %850 = vmatpush1.msra.mxu0 0.0
        %851 = vmatprep.subr.mxu0 0.0
        %852 = vmatpush1.msra.mxu0 0.0
        %853 = vmatprep.subr.mxu0 0.0
        %854 = vmatpush1.msra.mxu0 0.0
        %855 = vmatprep.subr.mxu0 0.0
        %856 = vmatpush1.msra.mxu0 0.0
        %857 = vmatprep.subr.mxu0 0.0
        %858 = vmatpush1.msra.mxu0 0.0
        %859 = vmatprep.subr.mxu0 0.0
        %860 = vmatpush1.msra.mxu0 0.0
        %861 = vmatprep.subr.mxu0 0.0
        %862 = vmatpush1.msra.mxu0 0.0
        %863 = vmatprep.subr.mxu0 0.0
        %864 = vmatpush1.msra.mxu0 0.0
        %865 = vmatprep.subr.mxu0 0.0
        %866 = vmatpush1.msra.mxu0 0.0
        %867 = vmatprep.mubr.f32.mxu0 0.0
        %v868 = vand.u32 %v478, 4294901760
        %869 = vmatmul.mubr.f32.gmra.mrb[0].mxu0 %v868
        %v870 = vpop.f32.mrb[0].mxu0
        %v871 = vadd.f32 %v791, %v870
        %v872 = vpop.f32.mrb[0].mxu0
        %v873 = vadd.f32 %v793, %v872
        %874 = vdwg.mxu0
        %875 = vmatprep.subr.mxu0 %v381
        %876 = vmatpush1.msra.mxu0 %v380
        %877 = vmatprep.subr.mxu0 %v384
        %878 = vmatpush1.msra.mxu0 %v383
        %879 = vmatprep.subr.mxu0 0.0
        %880 = vmatpush1.msra.mxu0 0.0
        %881 = vmatprep.subr.mxu0 0.0
        %882 = vmatpush1.msra.mxu0 0.0
        %883 = vmatprep.subr.mxu0 0.0
        %884 = vmatpush1.msra.mxu0 0.0
        %885 = vmatprep.subr.mxu0 0.0
        %886 = vmatpush1.msra.mxu0 0.0
        %887 = vmatprep.subr.mxu0 0.0
        %888 = vmatpush1.msra.mxu0 0.0
        %889 = vmatprep.subr.mxu0 0.0
        %890 = vmatpush1.msra.mxu0 0.0
        %891 = vmatprep.subr.mxu0 0.0
        %892 = vmatpush1.msra.mxu0 0.0
        %893 = vmatprep.subr.mxu0 0.0
        %894 = vmatpush1.msra.mxu0 0.0
        %895 = vmatprep.subr.mxu0 0.0
        %896 = vmatpush1.msra.mxu0 0.0
        %897 = vmatprep.subr.mxu0 0.0
        %898 = vmatpush1.msra.mxu0 0.0
        %899 = vmatprep.subr.mxu0 0.0
        %900 = vmatpush1.msra.mxu0 0.0
        %901 = vmatprep.subr.mxu0 0.0
        %902 = vmatpush1.msra.mxu0 0.0
        %903 = vmatprep.subr.mxu0 0.0
        %904 = vmatpush1.msra.mxu0 0.0
        %905 = vmatprep.subr.mxu0 0.0
        %906 = vmatpush1.msra.mxu0 0.0
        %907 = vmatprep.subr.mxu0 0.0
        %908 = vmatpush1.msra.mxu0 0.0
        %909 = vmatprep.subr.mxu0 0.0
        %910 = vmatpush1.msra.mxu0 0.0
        %911 = vmatprep.subr.mxu0 0.0
        %912 = vmatpush1.msra.mxu0 0.0
        %913 = vmatprep.subr.mxu0 0.0
        %914 = vmatpush1.msra.mxu0 0.0
        %915 = vmatprep.subr.mxu0 0.0
        %916 = vmatpush1.msra.mxu0 0.0
        %917 = vmatprep.subr.mxu0 0.0
        %918 = vmatpush1.msra.mxu0 0.0
        %919 = vmatprep.subr.mxu0 0.0
        %920 = vmatpush1.msra.mxu0 0.0
        %921 = vmatprep.subr.mxu0 0.0
        %922 = vmatpush1.msra.mxu0 0.0
        %923 = vmatprep.subr.mxu0 0.0
        %924 = vmatpush1.msra.mxu0 0.0
        %925 = vmatprep.subr.mxu0 0.0
        %926 = vmatpush1.msra.mxu0 0.0
        %927 = vmatprep.subr.mxu0 0.0
        %928 = vmatpush1.msra.mxu0 0.0
        %929 = vmatprep.subr.mxu0 0.0
        %930 = vmatpush1.msra.mxu0 0.0
        %931 = vmatprep.subr.mxu0 0.0
        %932 = vmatpush1.msra.mxu0 0.0
        %933 = vmatprep.subr.mxu0 0.0
        %934 = vmatpush1.msra.mxu0 0.0
        %935 = vmatprep.subr.mxu0 0.0
        %936 = vmatpush1.msra.mxu0 0.0
        %937 = vmatprep.subr.mxu0 0.0
        %938 = vmatpush1.msra.mxu0 0.0
        %939 = vmatprep.mubr.f32.mxu0 0.0
        %v940 = vand.u32 %v478, 4294901760
        %941 = vmatmul.mubr.f32.gmra.mrb[0].mxu0 %v940
        %v942 = vpop.f32.mrb[0].mxu0
        %v943 = vadd.f32 %v871, %v942
        %v944 = vpop.f32.mrb[0].mxu0
        %v945 = vadd.f32 %v873, %v944
        %946 = vdwg.mxu0
        %947 = vmatprep.subr.mxu0 0.0
        %948 = vmatpush1.msra.mxu0 %v382
        %949 = vmatprep.subr.mxu0 0.0
        %950 = vmatpush1.msra.mxu0 %v385
        %951 = vmatprep.subr.mxu0 0.0
        %952 = vmatpush1.msra.mxu0 0.0
        %953 = vmatprep.subr.mxu0 0.0
        %954 = vmatpush1.msra.mxu0 0.0
        %955 = vmatprep.subr.mxu0 0.0
        %956 = vmatpush1.msra.mxu0 0.0
        %957 = vmatprep.subr.mxu0 0.0
        %958 = vmatpush1.msra.mxu0 0.0
        %959 = vmatprep.subr.mxu0 0.0
        %960 = vmatpush1.msra.mxu0 0.0
        %961 = vmatprep.subr.mxu0 0.0
        %962 = vmatpush1.msra.mxu0 0.0
        %963 = vmatprep.subr.mxu0 0.0
        %964 = vmatpush1.msra.mxu0 0.0
        %965 = vmatprep.subr.mxu0 0.0
        %966 = vmatpush1.msra.mxu0 0.0
        %967 = vmatprep.subr.mxu0 0.0
        %968 = vmatpush1.msra.mxu0 0.0
        %969 = vmatprep.subr.mxu0 0.0
        %970 = vmatpush1.msra.mxu0 0.0
        %971 = vmatprep.subr.mxu0 0.0
        %972 = vmatpush1.msra.mxu0 0.0
        %973 = vmatprep.subr.mxu0 0.0
        %974 = vmatpush1.msra.mxu0 0.0
        %975 = vmatprep.subr.mxu0 0.0
        %976 = vmatpush1.msra.mxu0 0.0
        %977 = vmatprep.subr.mxu0 0.0
        %978 = vmatpush1.msra.mxu0 0.0
        %979 = vmatprep.subr.mxu0 0.0
        %980 = vmatpush1.msra.mxu0 0.0
        %981 = vmatprep.subr.mxu0 0.0
        %982 = vmatpush1.msra.mxu0 0.0
        %983 = vmatprep.subr.mxu0 0.0
        %984 = vmatpush1.msra.mxu0 0.0
        %985 = vmatprep.subr.mxu0 0.0
        %986 = vmatpush1.msra.mxu0 0.0
        %987 = vmatprep.subr.mxu0 0.0
        %988 = vmatpush1.msra.mxu0 0.0
        %989 = vmatprep.subr.mxu0 0.0
        %990 = vmatpush1.msra.mxu0 0.0
        %991 = vmatprep.subr.mxu0 0.0
        %992 = vmatpush1.msra.mxu0 0.0
        %993 = vmatprep.subr.mxu0 0.0
        %994 = vmatpush1.msra.mxu0 0.0
        %995 = vmatprep.subr.mxu0 0.0
        %996 = vmatpush1.msra.mxu0 0.0
        %997 = vmatprep.subr.mxu0 0.0
        %998 = vmatpush1.msra.mxu0 0.0
        %999 = vmatprep.subr.mxu0 0.0
        %1000 = vmatpush1.msra.mxu0 0.0
        %1001 = vmatprep.subr.mxu0 0.0
        %1002 = vmatpush1.msra.mxu0 0.0
        %1003 = vmatprep.subr.mxu0 0.0
        %1004 = vmatpush1.msra.mxu0 0.0
        %1005 = vmatprep.subr.mxu0 0.0
        %1006 = vmatpush1.msra.mxu0 0.0
        %1007 = vmatprep.subr.mxu0 0.0
        %1008 = vmatpush1.msra.mxu0 0.0
        %1009 = vmatprep.subr.mxu0 0.0
        %1010 = vmatpush1.msra.mxu0 0.0
        %1011 = vmatprep.mubr.f32.mxu0 0.0
        %v1012 = vand.u32 %v478, 4294901760
        %v1013 = vsub.f32 %v478, %v1012
        %v1014 = vand.u32 %v1013, 4294901760
        %v1015 = vsub.f32 %v1013, %v1014
        %v1016 = vand.u32 %v1015, 4294901760
        %1017 = vmatmul.mubr.f32.gmra.mrb[0].mxu0 %v1016
        %v1018 = vpop.f32.mrb[0].mxu0
        %v1019 = vadd.f32 0.0, %v1018
        %v1020 = vpop.f32.mrb[0].mxu0
        %1021 = vdwg.mxu0
        %1022 = vmatprep.subr.mxu0 0.0
        %v1023 = vsub.f32 %v382, %v382
        %v1024 = vand.u32 %v1023, 4294901760
        %v1025 = vsub.f32 %v1023, %v1024
        %v1026 = vand.u32 %v1025, 4294901760
        %1027 = vmatpush1.msra.mxu0 %v1026
        %1028 = vmatprep.subr.mxu0 0.0
        %v1029 = vsub.f32 %v385, %v385
        %v1030 = vand.u32 %v1029, 4294901760
        %v1031 = vsub.f32 %v1029, %v1030
        %v1032 = vand.u32 %v1031, 4294901760
        %1033 = vmatpush1.msra.mxu0 %v1032
        %1034 = vmatprep.subr.mxu0 0.0
        %1035 = vmatpush1.msra.mxu0 0.0
        %1036 = vmatprep.subr.mxu0 0.0
        %1037 = vmatpush1.msra.mxu0 0.0
        %1038 = vmatprep.subr.mxu0 0.0
        %1039 = vmatpush1.msra.mxu0 0.0
        %1040 = vmatprep.subr.mxu0 0.0
        %1041 = vmatpush1.msra.mxu0 0.0
        %1042 = vmatprep.subr.mxu0 0.0
        %1043 = vmatpush1.msra.mxu0 0.0
        %1044 = vmatprep.subr.mxu0 0.0
        %1045 = vmatpush1.msra.mxu0 0.0
        %1046 = vmatprep.subr.mxu0 0.0
        %1047 = vmatpush1.msra.mxu0 0.0
        %1048 = vmatprep.subr.mxu0 0.0
        %1049 = vmatpush1.msra.mxu0 0.0
        %1050 = vmatprep.subr.mxu0 0.0
        %1051 = vmatpush1.msra.mxu0 0.0
        %1052 = vmatprep.subr.mxu0 0.0
        %1053 = vmatpush1.msra.mxu0 0.0
        %1054 = vmatprep.subr.mxu0 0.0
        %1055 = vmatpush1.msra.mxu0 0.0
        %1056 = vmatprep.subr.mxu0 0.0
        %1057 = vmatpush1.msra.mxu0 0.0
        %1058 = vmatprep.subr.mxu0 0.0
        %1059 = vmatpush1.msra.mxu0 0.0
        %1060 = vmatprep.subr.mxu0 0.0
        %1061 = vmatpush1.msra.mxu0 0.0
        %1062 = vmatprep.subr.mxu0 0.0
        %1063 = vmatpush1.msra.mxu0 0.0
        %1064 = vmatprep.subr.mxu0 0.0
        %1065 = vmatpush1.msra.mxu0 0.0
        %1066 = vmatprep.subr.mxu0 0.0
        %1067 = vmatpush1.msra.mxu0 0.0
        %1068 = vmatprep.subr.mxu0 0.0
        %1069 = vmatpush1.msra.mxu0 0.0
        %1070 = vmatprep.subr.mxu0 0.0
        %1071 = vmatpush1.msra.mxu0 0.0
        %1072 = vmatprep.subr.mxu0 0.0
        %1073 = vmatpush1.msra.mxu0 0.0
        %1074 = vmatprep.subr.mxu0 0.0
        %1075 = vmatpush1.msra.mxu0 0.0
        %1076 = vmatprep.subr.mxu0 0.0
        %1077 = vmatpush1.msra.mxu0 0.0
        %1078 = vmatprep.subr.mxu0 0.0
        %1079 = vmatpush1.msra.mxu0 0.0
        %1080 = vmatprep.subr.mxu0 0.0
        %1081 = vmatpush1.msra.mxu0 0.0
        %1082 = vmatprep.subr.mxu0 0.0
        %1083 = vmatpush1.msra.mxu0 0.0
        %1084 = vmatprep.subr.mxu0 0.0
        %1085 = vmatpush1.msra.mxu0 0.0
        %1086 = vmatprep.subr.mxu0 0.0
        %1087 = vmatpush1.msra.mxu0 0.0
        %1088 = vmatprep.subr.mxu0 0.0
        %1089 = vmatpush1.msra.mxu0 0.0
        %1090 = vmatprep.subr.mxu0 0.0
        %1091 = vmatpush1.msra.mxu0 0.0
        %1092 = vmatprep.subr.mxu0 0.0
        %1093 = vmatpush1.msra.mxu0 0.0
        %1094 = vmatprep.mubr.f32.mxu0 0.0
        %v1095 = vand.u32 %v478, 4294901760
        %1096 = vmatmul.mubr.f32.gmra.mrb[0].mxu0 %v1095
        %v1097 = vpop.f32.mrb[0].mxu0
        %v1098 = vadd.f32 %v1019, %v1097
        %v1099 = vpop.f32.mrb[0].mxu0
        %1100 = vdwg.mxu0
        %1101 = vmatprep.subr.mxu0 0.0
        %v1102 = vsub.f32 %v382, %v382
        %1103 = vmatpush1.msra.mxu0 %v1102
        %1104 = vmatprep.subr.mxu0 0.0
        %v1105 = vsub.f32 %v385, %v385
        %1106 = vmatpush1.msra.mxu0 %v1105
        %1107 = vmatprep.subr.mxu0 0.0
        %1108 = vmatpush1.msra.mxu0 0.0
        %1109 = vmatprep.subr.mxu0 0.0
        %1110 = vmatpush1.msra.mxu0 0.0
        %1111 = vmatprep.subr.mxu0 0.0
        %1112 = vmatpush1.msra.mxu0 0.0
        %1113 = vmatprep.subr.mxu0 0.0
        %1114 = vmatpush1.msra.mxu0 0.0
        %1115 = vmatprep.subr.mxu0 0.0
        %1116 = vmatpush1.msra.mxu0 0.0
        %1117 = vmatprep.subr.mxu0 0.0
        %1118 = vmatpush1.msra.mxu0 0.0
        %1119 = vmatprep.subr.mxu0 0.0
        %1120 = vmatpush1.msra.mxu0 0.0
        %1121 = vmatprep.subr.mxu0 0.0
        %1122 = vmatpush1.msra.mxu0 0.0
        %1123 = vmatprep.subr.mxu0 0.0
        %1124 = vmatpush1.msra.mxu0 0.0
        %1125 = vmatprep.subr.mxu0 0.0
        %1126 = vmatpush1.msra.mxu0 0.0
        %1127 = vmatprep.subr.mxu0 0.0
        %1128 = vmatpush1.msra.mxu0 0.0
        %1129 = vmatprep.subr.mxu0 0.0
        %1130 = vmatpush1.msra.mxu0 0.0
        %1131 = vmatprep.subr.mxu0 0.0
        %1132 = vmatpush1.msra.mxu0 0.0
        %1133 = vmatprep.subr.mxu0 0.0
        %1134 = vmatpush1.msra.mxu0 0.0
        %1135 = vmatprep.subr.mxu0 0.0
        %1136 = vmatpush1.msra.mxu0 0.0
        %1137 = vmatprep.subr.mxu0 0.0
        %1138 = vmatpush1.msra.mxu0 0.0
        %1139 = vmatprep.subr.mxu0 0.0
        %1140 = vmatpush1.msra.mxu0 0.0
        %1141 = vmatprep.subr.mxu0 0.0
        %1142 = vmatpush1.msra.mxu0 0.0
        %1143 = vmatprep.subr.mxu0 0.0
        %1144 = vmatpush1.msra.mxu0 0.0
        %1145 = vmatprep.subr.mxu0 0.0
        %1146 = vmatpush1.msra.mxu0 0.0
        %1147 = vmatprep.subr.mxu0 0.0
        %1148 = vmatpush1.msra.mxu0 0.0
        %1149 = vmatprep.subr.mxu0 0.0
        %1150 = vmatpush1.msra.mxu0 0.0
        %1151 = vmatprep.subr.mxu0 0.0
        %1152 = vmatpush1.msra.mxu0 0.0
        %1153 = vmatprep.subr.mxu0 0.0
        %1154 = vmatpush1.msra.mxu0 0.0
        %1155 = vmatprep.subr.mxu0 0.0
        %1156 = vmatpush1.msra.mxu0 0.0
        %1157 = vmatprep.subr.mxu0 0.0
        %1158 = vmatpush1.msra.mxu0 0.0
        %1159 = vmatprep.subr.mxu0 0.0
        %1160 = vmatpush1.msra.mxu0 0.0
        %1161 = vmatprep.subr.mxu0 0.0
        %1162 = vmatpush1.msra.mxu0 0.0
        %1163 = vmatprep.subr.mxu0 0.0
        %1164 = vmatpush1.msra.mxu0 0.0
        %1165 = vmatprep.subr.mxu0 0.0
        %1166 = vmatpush1.msra.mxu0 0.0
        %1167 = vmatprep.mubr.f32.mxu0 0.0
        %v1168 = vand.u32 %v478, 4294901760
        %v1169 = vsub.f32 %v478, %v1168
        %1170 = vmatmul.mubr.f32.gmra.mrb[0].mxu0 %v1169
        %v1171 = vpop.f32.mrb[0].mxu0
        %v1172 = vadd.f32 %v1098, %v1171
        %v1173 = vpop.f32.mrb[0].mxu0
        %1174 = vdwg.mxu0
        %1175 = vmatprep.subr.mxu0 0.0
        %1176 = vmatpush1.msra.mxu0 %v382
        %1177 = vmatprep.subr.mxu0 0.0
        %1178 = vmatpush1.msra.mxu0 %v385
        %1179 = vmatprep.subr.mxu0 0.0
        %1180 = vmatpush1.msra.mxu0 0.0
        %1181 = vmatprep.subr.mxu0 0.0
        %1182 = vmatpush1.msra.mxu0 0.0
        %1183 = vmatprep.subr.mxu0 0.0
        %1184 = vmatpush1.msra.mxu0 0.0
        %1185 = vmatprep.subr.mxu0 0.0
        %1186 = vmatpush1.msra.mxu0 0.0
        %1187 = vmatprep.subr.mxu0 0.0
        %1188 = vmatpush1.msra.mxu0 0.0
        %1189 = vmatprep.subr.mxu0 0.0
        %1190 = vmatpush1.msra.mxu0 0.0
        %1191 = vmatprep.subr.mxu0 0.0
        %1192 = vmatpush1.msra.mxu0 0.0
        %1193 = vmatprep.subr.mxu0 0.0
        %1194 = vmatpush1.msra.mxu0 0.0
        %1195 = vmatprep.subr.mxu0 0.0
        %1196 = vmatpush1.msra.mxu0 0.0
        %1197 = vmatprep.subr.mxu0 0.0
        %1198 = vmatpush1.msra.mxu0 0.0
        %1199 = vmatprep.subr.mxu0 0.0
        %1200 = vmatpush1.msra.mxu0 0.0
        %1201 = vmatprep.subr.mxu0 0.0
        %1202 = vmatpush1.msra.mxu0 0.0
        %1203 = vmatprep.subr.mxu0 0.0
        %1204 = vmatpush1.msra.mxu0 0.0
        %1205 = vmatprep.subr.mxu0 0.0
        %1206 = vmatpush1.msra.mxu0 0.0
        %1207 = vmatprep.subr.mxu0 0.0
        %1208 = vmatpush1.msra.mxu0 0.0
        %1209 = vmatprep.subr.mxu0 0.0
        %1210 = vmatpush1.msra.mxu0 0.0
        %1211 = vmatprep.subr.mxu0 0.0
        %1212 = vmatpush1.msra.mxu0 0.0
        %1213 = vmatprep.subr.mxu0 0.0
        %1214 = vmatpush1.msra.mxu0 0.0
        %1215 = vmatprep.subr.mxu0 0.0
        %1216 = vmatpush1.msra.mxu0 0.0
        %1217 = vmatprep.subr.mxu0 0.0
        %1218 = vmatpush1.msra.mxu0 0.0
        %1219 = vmatprep.subr.mxu0 0.0
        %1220 = vmatpush1.msra.mxu0 0.0
        %1221 = vmatprep.subr.mxu0 0.0
        %1222 = vmatpush1.msra.mxu0 0.0
        %1223 = vmatprep.subr.mxu0 0.0
        %1224 = vmatpush1.msra.mxu0 0.0
        %1225 = vmatprep.subr.mxu0 0.0
        %1226 = vmatpush1.msra.mxu0 0.0
        %1227 = vmatprep.subr.mxu0 0.0
        %1228 = vmatpush1.msra.mxu0 0.0
        %1229 = vmatprep.subr.mxu0 0.0
        %1230 = vmatpush1.msra.mxu0 0.0
        %1231 = vmatprep.subr.mxu0 0.0
        %1232 = vmatpush1.msra.mxu0 0.0
        %1233 = vmatprep.subr.mxu0 0.0
        %1234 = vmatpush1.msra.mxu0 0.0
        %1235 = vmatprep.subr.mxu0 0.0
        %1236 = vmatpush1.msra.mxu0 0.0
        %1237 = vmatprep.subr.mxu0 0.0
        %1238 = vmatpush1.msra.mxu0 0.0
        %1239 = vmatprep.mubr.f32.mxu0 0.0
        %v1240 = vand.u32 %v478, 4294901760
        %v1241 = vsub.f32 %v478, %v1240
        %v1242 = vand.u32 %v1241, 4294901760
        %1243 = vmatmul.mubr.f32.gmra.mrb[0].mxu0 %v1242
        %v1244 = vpop.f32.mrb[0].mxu0
        %v1245 = vadd.f32 %v1172, %v1244
        %v1246 = vpop.f32.mrb[0].mxu0
        %1247 = vdwg.mxu0
        %1248 = vmatprep.subr.mxu0 0.0
        %v1249 = vsub.f32 %v382, %v382
        %v1250 = vand.u32 %v1249, 4294901760
        %1251 = vmatpush1.msra.mxu0 %v1250
        %1252 = vmatprep.subr.mxu0 0.0
        %v1253 = vsub.f32 %v385, %v385
        %v1254 = vand.u32 %v1253, 4294901760
        %1255 = vmatpush1.msra.mxu0 %v1254
        %1256 = vmatprep.subr.mxu0 0.0
        %1257 = vmatpush1.msra.mxu0 0.0
        %1258 = vmatprep.subr.mxu0 0.0
        %1259 = vmatpush1.msra.mxu0 0.0
        %1260 = vmatprep.subr.mxu0 0.0
        %1261 = vmatpush1.msra.mxu0 0.0
        %1262 = vmatprep.subr.mxu0 0.0
        %1263 = vmatpush1.msra.mxu0 0.0
        %1264 = vmatprep.subr.mxu0 0.0
        %1265 = vmatpush1.msra.mxu0 0.0
        %1266 = vmatprep.subr.mxu0 0.0
        %1267 = vmatpush1.msra.mxu0 0.0
        %1268 = vmatprep.subr.mxu0 0.0
        %1269 = vmatpush1.msra.mxu0 0.0
        %1270 = vmatprep.subr.mxu0 0.0
        %1271 = vmatpush1.msra.mxu0 0.0
        %1272 = vmatprep.subr.mxu0 0.0
        %1273 = vmatpush1.msra.mxu0 0.0
        %1274 = vmatprep.subr.mxu0 0.0
        %1275 = vmatpush1.msra.mxu0 0.0
        %1276 = vmatprep.subr.mxu0 0.0
        %1277 = vmatpush1.msra.mxu0 0.0
        %1278 = vmatprep.subr.mxu0 0.0
        %1279 = vmatpush1.msra.mxu0 0.0
        %1280 = vmatprep.subr.mxu0 0.0
        %1281 = vmatpush1.msra.mxu0 0.0
        %1282 = vmatprep.subr.mxu0 0.0
        %1283 = vmatpush1.msra.mxu0 0.0
        %1284 = vmatprep.subr.mxu0 0.0
        %1285 = vmatpush1.msra.mxu0 0.0
        %1286 = vmatprep.subr.mxu0 0.0
        %1287 = vmatpush1.msra.mxu0 0.0
        %1288 = vmatprep.subr.mxu0 0.0
        %1289 = vmatpush1.msra.mxu0 0.0
        %1290 = vmatprep.subr.mxu0 0.0
        %1291 = vmatpush1.msra.mxu0 0.0
        %1292 = vmatprep.subr.mxu0 0.0
        %1293 = vmatpush1.msra.mxu0 0.0
        %1294 = vmatprep.subr.mxu0 0.0
        %1295 = vmatpush1.msra.mxu0 0.0
        %1296 = vmatprep.subr.mxu0 0.0
        %1297 = vmatpush1.msra.mxu0 0.0
        %1298 = vmatprep.subr.mxu0 0.0
        %1299 = vmatpush1.msra.mxu0 0.0
        %1300 = vmatprep.subr.mxu0 0.0
        %1301 = vmatpush1.msra.mxu0 0.0
        %1302 = vmatprep.subr.mxu0 0.0
        %1303 = vmatpush1.msra.mxu0 0.0
        %1304 = vmatprep.subr.mxu0 0.0
        %1305 = vmatpush1.msra.mxu0 0.0
        %1306 = vmatprep.subr.mxu0 0.0
        %1307 = vmatpush1.msra.mxu0 0.0
        %1308 = vmatprep.subr.mxu0 0.0
        %1309 = vmatpush1.msra.mxu0 0.0
        %1310 = vmatprep.subr.mxu0 0.0
        %1311 = vmatpush1.msra.mxu0 0.0
        %1312 = vmatprep.subr.mxu0 0.0
        %1313 = vmatpush1.msra.mxu0 0.0
        %1314 = vmatprep.subr.mxu0 0.0
        %1315 = vmatpush1.msra.mxu0 0.0
        %1316 = vmatprep.mubr.f32.mxu0 0.0
        %v1317 = vand.u32 %v478, 4294901760
        %1318 = vmatmul.mubr.f32.gmra.mrb[0].mxu0 %v1317
        %v1319 = vpop.f32.mrb[0].mxu0
        %v1320 = vadd.f32 %v1245, %v1319
        %v1321 = vpop.f32.mrb[0].mxu0
        %1322 = vdwg.mxu0
        %1323 = vmatprep.subr.mxu0 0.0
        %1324 = vmatpush1.msra.mxu0 %v382
        %1325 = vmatprep.subr.mxu0 0.0
        %1326 = vmatpush1.msra.mxu0 %v385
        %1327 = vmatprep.subr.mxu0 0.0
        %1328 = vmatpush1.msra.mxu0 0.0
        %1329 = vmatprep.subr.mxu0 0.0
        %1330 = vmatpush1.msra.mxu0 0.0
        %1331 = vmatprep.subr.mxu0 0.0
        %1332 = vmatpush1.msra.mxu0 0.0
        %1333 = vmatprep.subr.mxu0 0.0
        %1334 = vmatpush1.msra.mxu0 0.0
        %1335 = vmatprep.subr.mxu0 0.0
        %1336 = vmatpush1.msra.mxu0 0.0
        %1337 = vmatprep.subr.mxu0 0.0
        %1338 = vmatpush1.msra.mxu0 0.0
        %1339 = vmatprep.subr.mxu0 0.0
        %1340 = vmatpush1.msra.mxu0 0.0
        %1341 = vmatprep.subr.mxu0 0.0
        %1342 = vmatpush1.msra.mxu0 0.0
        %1343 = vmatprep.subr.mxu0 0.0
        %1344 = vmatpush1.msra.mxu0 0.0
        %1345 = vmatprep.subr.mxu0 0.0
        %1346 = vmatpush1.msra.mxu0 0.0
        %1347 = vmatprep.subr.mxu0 0.0
        %1348 = vmatpush1.msra.mxu0 0.0
        %1349 = vmatprep.subr.mxu0 0.0
        %1350 = vmatpush1.msra.mxu0 0.0
        %1351 = vmatprep.subr.mxu0 0.0
        %1352 = vmatpush1.msra.mxu0 0.0
        %1353 = vmatprep.subr.mxu0 0.0
        %1354 = vmatpush1.msra.mxu0 0.0
        %1355 = vmatprep.subr.mxu0 0.0
        %1356 = vmatpush1.msra.mxu0 0.0
        %1357 = vmatprep.subr.mxu0 0.0
        %1358 = vmatpush1.msra.mxu0 0.0
        %1359 = vmatprep.subr.mxu0 0.0
        %1360 = vmatpush1.msra.mxu0 0.0
        %1361 = vmatprep.subr.mxu0 0.0
        %1362 = vmatpush1.msra.mxu0 0.0
        %1363 = vmatprep.subr.mxu0 0.0
        %1364 = vmatpush1.msra.mxu0 0.0
        %1365 = vmatprep.subr.mxu0 0.0
        %1366 = vmatpush1.msra.mxu0 0.0
        %1367 = vmatprep.subr.mxu0 0.0
        %1368 = vmatpush1.msra.mxu0 0.0
        %1369 = vmatprep.subr.mxu0 0.0
        %1370 = vmatpush1.msra.mxu0 0.0
        %1371 = vmatprep.subr.mxu0 0.0
        %1372 = vmatpush1.msra.mxu0 0.0
        %1373 = vmatprep.subr.mxu0 0.0
        %1374 = vmatpush1.msra.mxu0 0.0
        %1375 = vmatprep.subr.mxu0 0.0
        %1376 = vmatpush1.msra.mxu0 0.0
        %1377 = vmatprep.subr.mxu0 0.0
        %1378 = vmatpush1.msra.mxu0 0.0
        %1379 = vmatprep.subr.mxu0 0.0
        %1380 = vmatpush1.msra.mxu0 0.0
        %1381 = vmatprep.subr.mxu0 0.0
        %1382 = vmatpush1.msra.mxu0 0.0
        %1383 = vmatprep.subr.mxu0 0.0
        %1384 = vmatpush1.msra.mxu0 0.0
        %1385 = vmatprep.subr.mxu0 0.0
        %1386 = vmatpush1.msra.mxu0 0.0
        %1387 = vmatprep.mubr.f32.mxu0 0.0
        %v1388 = vand.u32 %v478, 4294901760
        %1389 = vmatmul.mubr.f32.gmra.mrb[0].mxu0 %v1388
        %v1390 = vpop.f32.mrb[0].mxu0
        %v1391 = vadd.f32 %v1320, %v1390
        %v1392 = vpop.f32.mrb[0].mxu0
        %1393 = vdwg.mxu0
        %v1394 = vsel %vm342, %v466, 0
        %1396 = vmatprep.subr.mxu0 %v387
        %1397 = vmatpush1.msra.mxu0 %v386
        %1398 = vmatprep.subr.mxu0 %v390
        %1399 = vmatpush1.msra.mxu0 %v389
        %1400 = vmatprep.subr.mxu0 0.0
        %1401 = vmatpush1.msra.mxu0 0.0
        %1402 = vmatprep.subr.mxu0 0.0
        %1403 = vmatpush1.msra.mxu0 0.0
        %1404 = vmatprep.subr.mxu0 0.0
        %1405 = vmatpush1.msra.mxu0 0.0
        %1406 = vmatprep.subr.mxu0 0.0
        %1407 = vmatpush1.msra.mxu0 0.0
        %1408 = vmatprep.subr.mxu0 0.0
        %1409 = vmatpush1.msra.mxu0 0.0
        %1410 = vmatprep.subr.mxu0 0.0
        %1411 = vmatpush1.msra.mxu0 0.0
        %1412 = vmatprep.subr.mxu0 0.0
        %1413 = vmatpush1.msra.mxu0 0.0
        %1414 = vmatprep.subr.mxu0 0.0
        %1415 = vmatpush1.msra.mxu0 0.0
        %1416 = vmatprep.subr.mxu0 0.0
        %1417 = vmatpush1.msra.mxu0 0.0
        %1418 = vmatprep.subr.mxu0 0.0
        %1419 = vmatpush1.msra.mxu0 0.0
        %1420 = vmatprep.subr.mxu0 0.0
        %1421 = vmatpush1.msra.mxu0 0.0
        %1422 = vmatprep.subr.mxu0 0.0
        %1423 = vmatpush1.msra.mxu0 0.0
        %1424 = vmatprep.subr.mxu0 0.0
        %1425 = vmatpush1.msra.mxu0 0.0
        %1426 = vmatprep.subr.mxu0 0.0
        %1427 = vmatpush1.msra.mxu0 0.0
        %1428 = vmatprep.subr.mxu0 0.0
        %1429 = vmatpush1.msra.mxu0 0.0
        %1430 = vmatprep.subr.mxu0 0.0
        %1431 = vmatpush1.msra.mxu0 0.0
        %1432 = vmatprep.subr.mxu0 0.0
        %1433 = vmatpush1.msra.mxu0 0.0
        %1434 = vmatprep.subr.mxu0 0.0
        %1435 = vmatpush1.msra.mxu0 0.0
        %1436 = vmatprep.subr.mxu0 0.0
        %1437 = vmatpush1.msra.mxu0 0.0
        %1438 = vmatprep.subr.mxu0 0.0
        %1439 = vmatpush1.msra.mxu0 0.0
        %1440 = vmatprep.subr.mxu0 0.0
        %1441 = vmatpush1.msra.mxu0 0.0
        %1442 = vmatprep.subr.mxu0 0.0
        %1443 = vmatpush1.msra.mxu0 0.0
        %1444 = vmatprep.subr.mxu0 0.0
        %1445 = vmatpush1.msra.mxu0 0.0
        %1446 = vmatprep.subr.mxu0 0.0
        %1447 = vmatpush1.msra.mxu0 0.0
        %1448 = vmatprep.subr.mxu0 0.0
        %1449 = vmatpush1.msra.mxu0 0.0
        %1450 = vmatprep.subr.mxu0 0.0
        %1451 = vmatpush1.msra.mxu0 0.0
        %1452 = vmatprep.subr.mxu0 0.0
        %1453 = vmatpush1.msra.mxu0 0.0
        %1454 = vmatprep.subr.mxu0 0.0
        %1455 = vmatpush1.msra.mxu0 0.0
        %1456 = vmatprep.subr.mxu0 0.0
        %1457 = vmatpush1.msra.mxu0 0.0
        %1458 = vmatprep.subr.mxu0 0.0
        %1459 = vmatpush1.msra.mxu0 0.0
        %1460 = vmatprep.mubr.f32.mxu0 0.0
        %v1461 = vand.u32 %v1394, 4294901760
        %v1462 = vsub.f32 %v1394, %v1461
        %v1463 = vand.u32 %v1462, 4294901760
        %v1464 = vsub.f32 %v1462, %v1463
        %v1465 = vand.u32 %v1464, 4294901760
        %1466 = vmatmul.mubr.f32.gmra.mrb[0].mxu0 %v1465
        %v1467 = vpop.f32.mrb[0].mxu0
        %v1468 = vadd.f32 0.0, %v1467
        %v1469 = vpop.f32.mrb[0].mxu0
        %v1470 = vadd.f32 0.0, %v1469
        %1471 = vdwg.mxu0
        %v1472 = vsub.f32 %v387, %v387
        %v1473 = vand.u32 %v1472, 4294901760
        %v1474 = vsub.f32 %v1472, %v1473
        %v1475 = vand.u32 %v1474, 4294901760
        %1476 = vmatprep.subr.mxu0 %v1475
        %v1477 = vsub.f32 %v386, %v386
        %v1478 = vand.u32 %v1477, 4294901760
        %v1479 = vsub.f32 %v1477, %v1478
        %v1480 = vand.u32 %v1479, 4294901760
        %1481 = vmatpush1.msra.mxu0 %v1480
        %v1482 = vsub.f32 %v390, %v390
        %v1483 = vand.u32 %v1482, 4294901760
        %v1484 = vsub.f32 %v1482, %v1483
        %v1485 = vand.u32 %v1484, 4294901760
        %1486 = vmatprep.subr.mxu0 %v1485
        %v1487 = vsub.f32 %v389, %v389
        %v1488 = vand.u32 %v1487, 4294901760
        %v1489 = vsub.f32 %v1487, %v1488
        %v1490 = vand.u32 %v1489, 4294901760
        %1491 = vmatpush1.msra.mxu0 %v1490
        %1492 = vmatprep.subr.mxu0 0.0
        %1493 = vmatpush1.msra.mxu0 0.0
        %1494 = vmatprep.subr.mxu0 0.0
        %1495 = vmatpush1.msra.mxu0 0.0
        %1496 = vmatprep.subr.mxu0 0.0
        %1497 = vmatpush1.msra.mxu0 0.0
        %1498 = vmatprep.subr.mxu0 0.0
        %1499 = vmatpush1.msra.mxu0 0.0
        %1500 = vmatprep.subr.mxu0 0.0
        %1501 = vmatpush1.msra.mxu0 0.0
        %1502 = vmatprep.subr.mxu0 0.0
        %1503 = vmatpush1.msra.mxu0 0.0
        %1504 = vmatprep.subr.mxu0 0.0
        %1505 = vmatpush1.msra.mxu0 0.0
        %1506 = vmatprep.subr.mxu0 0.0
        %1507 = vmatpush1.msra.mxu0 0.0
        %1508 = vmatprep.subr.mxu0 0.0
        %1509 = vmatpush1.msra.mxu0 0.0
        %1510 = vmatprep.subr.mxu0 0.0
        %1511 = vmatpush1.msra.mxu0 0.0
        %1512 = vmatprep.subr.mxu0 0.0
        %1513 = vmatpush1.msra.mxu0 0.0
        %1514 = vmatprep.subr.mxu0 0.0
        %1515 = vmatpush1.msra.mxu0 0.0
        %1516 = vmatprep.subr.mxu0 0.0
        %1517 = vmatpush1.msra.mxu0 0.0
        %1518 = vmatprep.subr.mxu0 0.0
        %1519 = vmatpush1.msra.mxu0 0.0
        %1520 = vmatprep.subr.mxu0 0.0
        %1521 = vmatpush1.msra.mxu0 0.0
        %1522 = vmatprep.subr.mxu0 0.0
        %1523 = vmatpush1.msra.mxu0 0.0
        %1524 = vmatprep.subr.mxu0 0.0
        %1525 = vmatpush1.msra.mxu0 0.0
        %1526 = vmatprep.subr.mxu0 0.0
        %1527 = vmatpush1.msra.mxu0 0.0
        %1528 = vmatprep.subr.mxu0 0.0
        %1529 = vmatpush1.msra.mxu0 0.0
        %1530 = vmatprep.subr.mxu0 0.0
        %1531 = vmatpush1.msra.mxu0 0.0
        %1532 = vmatprep.subr.mxu0 0.0
        %1533 = vmatpush1.msra.mxu0 0.0
        %1534 = vmatprep.subr.mxu0 0.0
        %1535 = vmatpush1.msra.mxu0 0.0
        %1536 = vmatprep.subr.mxu0 0.0
        %1537 = vmatpush1.msra.mxu0 0.0
        %1538 = vmatprep.subr.mxu0 0.0
        %1539 = vmatpush1.msra.mxu0 0.0
        %1540 = vmatprep.subr.mxu0 0.0
        %1541 = vmatpush1.msra.mxu0 0.0
        %1542 = vmatprep.subr.mxu0 0.0
        %1543 = vmatpush1.msra.mxu0 0.0
        %1544 = vmatprep.subr.mxu0 0.0
        %1545 = vmatpush1.msra.mxu0 0.0
        %1546 = vmatprep.subr.mxu0 0.0
        %1547 = vmatpush1.msra.mxu0 0.0
        %1548 = vmatprep.subr.mxu0 0.0
        %1549 = vmatpush1.msra.mxu0 0.0
        %1550 = vmatprep.subr.mxu0 0.0
        %1551 = vmatpush1.msra.mxu0 0.0
        %1552 = vmatprep.mubr.f32.mxu0 0.0
        %v1553 = vand.u32 %v1394, 4294901760
        %1554 = vmatmul.mubr.f32.gmra.mrb[0].mxu0 %v1553
        %v1555 = vpop.f32.mrb[0].mxu0
        %v1556 = vadd.f32 %v1468, %v1555
        %v1557 = vpop.f32.mrb[0].mxu0
        %v1558 = vadd.f32 %v1470, %v1557
        %1559 = vdwg.mxu0
        %v1560 = vsub.f32 %v387, %v387
        %1561 = vmatprep.subr.mxu0 %v1560
        %v1562 = vsub.f32 %v386, %v386
        %1563 = vmatpush1.msra.mxu0 %v1562
        %v1564 = vsub.f32 %v390, %v390
        %1565 = vmatprep.subr.mxu0 %v1564
        %v1566 = vsub.f32 %v389, %v389
        %1567 = vmatpush1.msra.mxu0 %v1566
        %1568 = vmatprep.subr.mxu0 0.0
        %1569 = vmatpush1.msra.mxu0 0.0
        %1570 = vmatprep.subr.mxu0 0.0
        %1571 = vmatpush1.msra.mxu0 0.0
        %1572 = vmatprep.subr.mxu0 0.0
        %1573 = vmatpush1.msra.mxu0 0.0
        %1574 = vmatprep.subr.mxu0 0.0
        %1575 = vmatpush1.msra.mxu0 0.0
        %1576 = vmatprep.subr.mxu0 0.0
        %1577 = vmatpush1.msra.mxu0 0.0
        %1578 = vmatprep.subr.mxu0 0.0
        %1579 = vmatpush1.msra.mxu0 0.0
        %1580 = vmatprep.subr.mxu0 0.0
        %1581 = vmatpush1.msra.mxu0 0.0
        %1582 = vmatprep.subr.mxu0 0.0
        %1583 = vmatpush1.msra.mxu0 0.0
        %1584 = vmatprep.subr.mxu0 0.0
        %1585 = vmatpush1.msra.mxu0 0.0
        %1586 = vmatprep.subr.mxu0 0.0
        %1587 = vmatpush1.msra.mxu0 0.0
        %1588 = vmatprep.subr.mxu0 0.0
        %1589 = vmatpush1.msra.mxu0 0.0
        %1590 = vmatprep.subr.mxu0 0.0
        %1591 = vmatpush1.msra.mxu0 0.0
        %1592 = vmatprep.subr.mxu0 0.0
        %1593 = vmatpush1.msra.mxu0 0.0
        %1594 = vmatprep.subr.mxu0 0.0
        %1595 = vmatpush1.msra.mxu0 0.0
        %1596 = vmatprep.subr.mxu0 0.0
        %1597 = vmatpush1.msra.mxu0 0.0
        %1598 = vmatprep.subr.mxu0 0.0
        %1599 = vmatpush1.msra.mxu0 0.0
        %1600 = vmatprep.subr.mxu0 0.0
        %1601 = vmatpush1.msra.mxu0 0.0
        %1602 = vmatprep.subr.mxu0 0.0
        %1603 = vmatpush1.msra.mxu0 0.0
        %1604 = vmatprep.subr.mxu0 0.0
        %1605 = vmatpush1.msra.mxu0 0.0
        %1606 = vmatprep.subr.mxu0 0.0
        %1607 = vmatpush1.msra.mxu0 0.0
        %1608 = vmatprep.subr.mxu0 0.0
        %1609 = vmatpush1.msra.mxu0 0.0
        %1610 = vmatprep.subr.mxu0 0.0
        %1611 = vmatpush1.msra.mxu0 0.0
        %1612 = vmatprep.subr.mxu0 0.0
        %1613 = vmatpush1.msra.mxu0 0.0
        %1614 = vmatprep.subr.mxu0 0.0
        %1615 = vmatpush1.msra.mxu0 0.0
        %1616 = vmatprep.subr.mxu0 0.0
        %1617 = vmatpush1.msra.mxu0 0.0
        %1618 = vmatprep.subr.mxu0 0.0
        %1619 = vmatpush1.msra.mxu0 0.0
        %1620 = vmatprep.subr.mxu0 0.0
        %1621 = vmatpush1.msra.mxu0 0.0
        %1622 = vmatprep.subr.mxu0 0.0
        %1623 = vmatpush1.msra.mxu0 0.0
        %1624 = vmatprep.subr.mxu0 0.0
        %1625 = vmatpush1.msra.mxu0 0.0
        %1626 = vmatprep.subr.mxu0 0.0
        %1627 = vmatpush1.msra.mxu0 0.0
        %1628 = vmatprep.mubr.f32.mxu0 0.0
        %v1629 = vand.u32 %v1394, 4294901760
        %v1630 = vsub.f32 %v1394, %v1629
        %1631 = vmatmul.mubr.f32.gmra.mrb[0].mxu0 %v1630
        %v1632 = vpop.f32.mrb[0].mxu0
        %v1633 = vadd.f32 %v1556, %v1632
        %v1634 = vpop.f32.mrb[0].mxu0
        %v1635 = vadd.f32 %v1558, %v1634
        %1636 = vdwg.mxu0
        %1637 = vmatprep.subr.mxu0 %v387
        %1638 = vmatpush1.msra.mxu0 %v386
        %1639 = vmatprep.subr.mxu0 %v390
        %1640 = vmatpush1.msra.mxu0 %v389
        %1641 = vmatprep.subr.mxu0 0.0
        %1642 = vmatpush1.msra.mxu0 0.0
        %1643 = vmatprep.subr.mxu0 0.0
        %1644 = vmatpush1.msra.mxu0 0.0
        %1645 = vmatprep.subr.mxu0 0.0
        %1646 = vmatpush1.msra.mxu0 0.0
        %1647 = vmatprep.subr.mxu0 0.0
        %1648 = vmatpush1.msra.mxu0 0.0
        %1649 = vmatprep.subr.mxu0 0.0
        %1650 = vmatpush1.msra.mxu0 0.0
        %1651 = vmatprep.subr.mxu0 0.0
        %1652 = vmatpush1.msra.mxu0 0.0
        %1653 = vmatprep.subr.mxu0 0.0
        %1654 = vmatpush1.msra.mxu0 0.0
        %1655 = vmatprep.subr.mxu0 0.0
        %1656 = vmatpush1.msra.mxu0 0.0
        %1657 = vmatprep.subr.mxu0 0.0
        %1658 = vmatpush1.msra.mxu0 0.0
        %1659 = vmatprep.subr.mxu0 0.0
        %1660 = vmatpush1.msra.mxu0 0.0
        %1661 = vmatprep.subr.mxu0 0.0
        %1662 = vmatpush1.msra.mxu0 0.0
        %1663 = vmatprep.subr.mxu0 0.0
        %1664 = vmatpush1.msra.mxu0 0.0
        %1665 = vmatprep.subr.mxu0 0.0
        %1666 = vmatpush1.msra.mxu0 0.0
        %1667 = vmatprep.subr.mxu0 0.0
        %1668 = vmatpush1.msra.mxu0 0.0
        %1669 = vmatprep.subr.mxu0 0.0
        %1670 = vmatpush1.msra.mxu0 0.0
        %1671 = vmatprep.subr.mxu0 0.0
        %1672 = vmatpush1.msra.mxu0 0.0
        %1673 = vmatprep.subr.mxu0 0.0
        %1674 = vmatpush1.msra.mxu0 0.0
        %1675 = vmatprep.subr.mxu0 0.0
        %1676 = vmatpush1.msra.mxu0 0.0
        %1677 = vmatprep.subr.mxu0 0.0
        %1678 = vmatpush1.msra.mxu0 0.0
        %1679 = vmatprep.subr.mxu0 0.0
        %1680 = vmatpush1.msra.mxu0 0.0
        %1681 = vmatprep.subr.mxu0 0.0
        %1682 = vmatpush1.msra.mxu0 0.0
        %1683 = vmatprep.subr.mxu0 0.0
        %1684 = vmatpush1.msra.mxu0 0.0
        %1685 = vmatprep.subr.mxu0 0.0
        %1686 = vmatpush1.msra.mxu0 0.0
        %1687 = vmatprep.subr.mxu0 0.0
        %1688 = vmatpush1.msra.mxu0 0.0
        %1689 = vmatprep.subr.mxu0 0.0
        %1690 = vmatpush1.msra.mxu0 0.0
        %1691 = vmatprep.subr.mxu0 0.0
        %1692 = vmatpush1.msra.mxu0 0.0
        %1693 = vmatprep.subr.mxu0 0.0
        %1694 = vmatpush1.msra.mxu0 0.0
        %1695 = vmatprep.subr.mxu0 0.0
        %1696 = vmatpush1.msra.mxu0 0.0
        %1697 = vmatprep.subr.mxu0 0.0
        %1698 = vmatpush1.msra.mxu0 0.0
        %1699 = vmatprep.subr.mxu0 0.0
        %1700 = vmatpush1.msra.mxu0 0.0
        %1701 = vmatprep.mubr.f32.mxu0 0.0
        %v1702 = vand.u32 %v1394, 4294901760
        %v1703 = vsub.f32 %v1394, %v1702
        %v1704 = vand.u32 %v1703, 4294901760
        %1705 = vmatmul.mubr.f32.gmra.mrb[0].mxu0 %v1704
        %v1706 = vpop.f32.mrb[0].mxu0
        %v1707 = vadd.f32 %v1633, %v1706
        %v1708 = vpop.f32.mrb[0].mxu0
        %v1709 = vadd.f32 %v1635, %v1708
        %1710 = vdwg.mxu0
        %v1711 = vsub.f32 %v387, %v387
        %v1712 = vand.u32 %v1711, 4294901760
        %1713 = vmatprep.subr.mxu0 %v1712
        %v1714 = vsub.f32 %v386, %v386
        %v1715 = vand.u32 %v1714, 4294901760
        %1716 = vmatpush1.msra.mxu0 %v1715
        %v1717 = vsub.f32 %v390, %v390
        %v1718 = vand.u32 %v1717, 4294901760
        %1719 = vmatprep.subr.mxu0 %v1718
        %v1720 = vsub.f32 %v389, %v389
        %v1721 = vand.u32 %v1720, 4294901760
        %1722 = vmatpush1.msra.mxu0 %v1721
        %1723 = vmatprep.subr.mxu0 0.0
        %1724 = vmatpush1.msra.mxu0 0.0
        %1725 = vmatprep.subr.mxu0 0.0
        %1726 = vmatpush1.msra.mxu0 0.0
        %1727 = vmatprep.subr.mxu0 0.0
        %1728 = vmatpush1.msra.mxu0 0.0
        %1729 = vmatprep.subr.mxu0 0.0
        %1730 = vmatpush1.msra.mxu0 0.0
        %1731 = vmatprep.subr.mxu0 0.0
        %1732 = vmatpush1.msra.mxu0 0.0
        %1733 = vmatprep.subr.mxu0 0.0
        %1734 = vmatpush1.msra.mxu0 0.0
        %1735 = vmatprep.subr.mxu0 0.0
        %1736 = vmatpush1.msra.mxu0 0.0
        %1737 = vmatprep.subr.mxu0 0.0
        %1738 = vmatpush1.msra.mxu0 0.0
        %1739 = vmatprep.subr.mxu0 0.0
        %1740 = vmatpush1.msra.mxu0 0.0
        %1741 = vmatprep.subr.mxu0 0.0
        %1742 = vmatpush1.msra.mxu0 0.0
        %1743 = vmatprep.subr.mxu0 0.0
        %1744 = vmatpush1.msra.mxu0 0.0
        %1745 = vmatprep.subr.mxu0 0.0
        %1746 = vmatpush1.msra.mxu0 0.0
        %1747 = vmatprep.subr.mxu0 0.0
        %1748 = vmatpush1.msra.mxu0 0.0
        %1749 = vmatprep.subr.mxu0 0.0
        %1750 = vmatpush1.msra.mxu0 0.0
        %1751 = vmatprep.subr.mxu0 0.0
        %1752 = vmatpush1.msra.mxu0 0.0
        %1753 = vmatprep.subr.mxu0 0.0
        %1754 = vmatpush1.msra.mxu0 0.0
        %1755 = vmatprep.subr.mxu0 0.0
        %1756 = vmatpush1.msra.mxu0 0.0
        %1757 = vmatprep.subr.mxu0 0.0
        %1758 = vmatpush1.msra.mxu0 0.0
        %1759 = vmatprep.subr.mxu0 0.0
        %1760 = vmatpush1.msra.mxu0 0.0
        %1761 = vmatprep.subr.mxu0 0.0
        %1762 = vmatpush1.msra.mxu0 0.0
        %1763 = vmatprep.subr.mxu0 0.0
        %1764 = vmatpush1.msra.mxu0 0.0
        %1765 = vmatprep.subr.mxu0 0.0
        %1766 = vmatpush1.msra.mxu0 0.0
        %1767 = vmatprep.subr.mxu0 0.0
        %1768 = vmatpush1.msra.mxu0 0.0
        %1769 = vmatprep.subr.mxu0 0.0
        %1770 = vmatpush1.msra.mxu0 0.0
        %1771 = vmatprep.subr.mxu0 0.0
        %1772 = vmatpush1.msra.mxu0 0.0
        %1773 = vmatprep.subr.mxu0 0.0
        %1774 = vmatpush1.msra.mxu0 0.0
        %1775 = vmatprep.subr.mxu0 0.0
        %1776 = vmatpush1.msra.mxu0 0.0
        %1777 = vmatprep.subr.mxu0 0.0
        %1778 = vmatpush1.msra.mxu0 0.0
        %1779 = vmatprep.subr.mxu0 0.0
        %1780 = vmatpush1.msra.mxu0 0.0
        %1781 = vmatprep.subr.mxu0 0.0
        %1782 = vmatpush1.msra.mxu0 0.0
        %1783 = vmatprep.mubr.f32.mxu0 0.0
        %v1784 = vand.u32 %v1394, 4294901760
        %1785 = vmatmul.mubr.f32.gmra.mrb[0].mxu0 %v1784
        %v1786 = vpop.f32.mrb[0].mxu0
        %v1787 = vadd.f32 %v1707, %v1786
        %v1788 = vpop.f32.mrb[0].mxu0
        %v1789 = vadd.f32 %v1709, %v1788
        %1790 = vdwg.mxu0
        %1791 = vmatprep.subr.mxu0 %v387
        %1792 = vmatpush1.msra.mxu0 %v386
        %1793 = vmatprep.subr.mxu0 %v390
        %1794 = vmatpush1.msra.mxu0 %v389
        %1795 = vmatprep.subr.mxu0 0.0
        %1796 = vmatpush1.msra.mxu0 0.0
        %1797 = vmatprep.subr.mxu0 0.0
        %1798 = vmatpush1.msra.mxu0 0.0
        %1799 = vmatprep.subr.mxu0 0.0
        %1800 = vmatpush1.msra.mxu0 0.0
        %1801 = vmatprep.subr.mxu0 0.0
        %1802 = vmatpush1.msra.mxu0 0.0
        %1803 = vmatprep.subr.mxu0 0.0
        %1804 = vmatpush1.msra.mxu0 0.0
        %1805 = vmatprep.subr.mxu0 0.0
        %1806 = vmatpush1.msra.mxu0 0.0
        %1807 = vmatprep.subr.mxu0 0.0
        %1808 = vmatpush1.msra.mxu0 0.0
        %1809 = vmatprep.subr.mxu0 0.0
        %1810 = vmatpush1.msra.mxu0 0.0
        %1811 = vmatprep.subr.mxu0 0.0
        %1812 = vmatpush1.msra.mxu0 0.0
        %1813 = vmatprep.subr.mxu0 0.0
        %1814 = vmatpush1.msra.mxu0 0.0
        %1815 = vmatprep.subr.mxu0 0.0
        %1816 = vmatpush1.msra.mxu0 0.0
        %1817 = vmatprep.subr.mxu0 0.0
        %1818 = vmatpush1.msra.mxu0 0.0
        %1819 = vmatprep.subr.mxu0 0.0
        %1820 = vmatpush1.msra.mxu0 0.0
        %1821 = vmatprep.subr.mxu0 0.0
        %1822 = vmatpush1.msra.mxu0 0.0
        %1823 = vmatprep.subr.mxu0 0.0
        %1824 = vmatpush1.msra.mxu0 0.0
        %1825 = vmatprep.subr.mxu0 0.0
        %1826 = vmatpush1.msra.mxu0 0.0
        %1827 = vmatprep.subr.mxu0 0.0
        %1828 = vmatpush1.msra.mxu0 0.0
        %1829 = vmatprep.subr.mxu0 0.0
        %1830 = vmatpush1.msra.mxu0 0.0
        %1831 = vmatprep.subr.mxu0 0.0
        %1832 = vmatpush1.msra.mxu0 0.0
        %1833 = vmatprep.subr.mxu0 0.0
        %1834 = vmatpush1.msra.mxu0 0.0
        %1835 = vmatprep.subr.mxu0 0.0
        %1836 = vmatpush1.msra.mxu0 0.0
        %1837 = vmatprep.subr.mxu0 0.0
        %1838 = vmatpush1.msra.mxu0 0.0
        %1839 = vmatprep.subr.mxu0 0.0
        %1840 = vmatpush1.msra.mxu0 0.0
        %1841 = vmatprep.subr.mxu0 0.0
        %1842 = vmatpush1.msra.mxu0 0.0
        %1843 = vmatprep.subr.mxu0 0.0
        %1844 = vmatpush1.msra.mxu0 0.0
        %1845 = vmatprep.subr.mxu0 0.0
        %1846 = vmatpush1.msra.mxu0 0.0
        %1847 = vmatprep.subr.mxu0 0.0
        %1848 = vmatpush1.msra.mxu0 0.0
        %1849 = vmatprep.subr.mxu0 0.0
        %1850 = vmatpush1.msra.mxu0 0.0
        %1851 = vmatprep.subr.mxu0 0.0
        %1852 = vmatpush1.msra.mxu0 0.0
        %1853 = vmatprep.subr.mxu0 0.0
        %1854 = vmatpush1.msra.mxu0 0.0
        %1855 = vmatprep.mubr.f32.mxu0 0.0
        %v1856 = vand.u32 %v1394, 4294901760
        %1857 = vmatmul.mubr.f32.gmra.mrb[0].mxu0 %v1856
        %v1858 = vpop.f32.mrb[0].mxu0
        %v1859 = vadd.f32 %v1787, %v1858
        %v1860 = vpop.f32.mrb[0].mxu0
        %v1861 = vadd.f32 %v1789, %v1860
        %1862 = vdwg.mxu0
        %1863 = vmatprep.subr.mxu0 0.0
        %1864 = vmatpush1.msra.mxu0 %v388
        %1865 = vmatprep.subr.mxu0 0.0
        %1866 = vmatpush1.msra.mxu0 %v391
        %1867 = vmatprep.subr.mxu0 0.0
        %1868 = vmatpush1.msra.mxu0 0.0
        %1869 = vmatprep.subr.mxu0 0.0
        %1870 = vmatpush1.msra.mxu0 0.0
        %1871 = vmatprep.subr.mxu0 0.0
        %1872 = vmatpush1.msra.mxu0 0.0
        %1873 = vmatprep.subr.mxu0 0.0
        %1874 = vmatpush1.msra.mxu0 0.0
        %1875 = vmatprep.subr.mxu0 0.0
        %1876 = vmatpush1.msra.mxu0 0.0
        %1877 = vmatprep.subr.mxu0 0.0
        %1878 = vmatpush1.msra.mxu0 0.0
        %1879 = vmatprep.subr.mxu0 0.0
        %1880 = vmatpush1.msra.mxu0 0.0
        %1881 = vmatprep.subr.mxu0 0.0
        %1882 = vmatpush1.msra.mxu0 0.0
        %1883 = vmatprep.subr.mxu0 0.0
        %1884 = vmatpush1.msra.mxu0 0.0
        %1885 = vmatprep.subr.mxu0 0.0
        %1886 = vmatpush1.msra.mxu0 0.0
        %1887 = vmatprep.subr.mxu0 0.0
        %1888 = vmatpush1.msra.mxu0 0.0
        %1889 = vmatprep.subr.mxu0 0.0
        %1890 = vmatpush1.msra.mxu0 0.0
        %1891 = vmatprep.subr.mxu0 0.0
        %1892 = vmatpush1.msra.mxu0 0.0
        %1893 = vmatprep.subr.mxu0 0.0
        %1894 = vmatpush1.msra.mxu0 0.0
        %1895 = vmatprep.subr.mxu0 0.0
        %1896 = vmatpush1.msra.mxu0 0.0
        %1897 = vmatprep.subr.mxu0 0.0
        %1898 = vmatpush1.msra.mxu0 0.0
        %1899 = vmatprep.subr.mxu0 0.0
        %1900 = vmatpush1.msra.mxu0 0.0
        %1901 = vmatprep.subr.mxu0 0.0
        %1902 = vmatpush1.msra.mxu0 0.0
        %1903 = vmatprep.subr.mxu0 0.0
        %1904 = vmatpush1.msra.mxu0 0.0
        %1905 = vmatprep.subr.mxu0 0.0
        %1906 = vmatpush1.msra.mxu0 0.0
        %1907 = vmatprep.subr.mxu0 0.0
        %1908 = vmatpush1.msra.mxu0 0.0
        %1909 = vmatprep.subr.mxu0 0.0
        %1910 = vmatpush1.msra.mxu0 0.0
        %1911 = vmatprep.subr.mxu0 0.0
        %1912 = vmatpush1.msra.mxu0 0.0
        %1913 = vmatprep.subr.mxu0 0.0
        %1914 = vmatpush1.msra.mxu0 0.0
        %1915 = vmatprep.subr.mxu0 0.0
        %1916 = vmatpush1.msra.mxu0 0.0
        %1917 = vmatprep.subr.mxu0 0.0
        %1918 = vmatpush1.msra.mxu0 0.0
        %1919 = vmatprep.subr.mxu0 0.0
        %1920 = vmatpush1.msra.mxu0 0.0
        %1921 = vmatprep.subr.mxu0 0.0
        %1922 = vmatpush1.msra.mxu0 0.0
        %1923 = vmatprep.subr.mxu0 0.0
        %1924 = vmatpush1.msra.mxu0 0.0
        %1925 = vmatprep.subr.mxu0 0.0
        %1926 = vmatpush1.msra.mxu0 0.0
        %1927 = vmatprep.mubr.f32.mxu0 0.0
        %v1928 = vand.u32 %v1394, 4294901760
        %v1929 = vsub.f32 %v1394, %v1928
        %v1930 = vand.u32 %v1929, 4294901760
        %v1931 = vsub.f32 %v1929, %v1930
        %v1932 = vand.u32 %v1931, 4294901760
        %1933 = vmatmul.mubr.f32.gmra.mrb[0].mxu0 %v1932
        %v1934 = vpop.f32.mrb[0].mxu0
        %v1935 = vadd.f32 0.0, %v1934
        %v1936 = vpop.f32.mrb[0].mxu0
        %1937 = vdwg.mxu0
        %1938 = vmatprep.subr.mxu0 0.0
        %v1939 = vsub.f32 %v388, %v388
        %v1940 = vand.u32 %v1939, 4294901760
        %v1941 = vsub.f32 %v1939, %v1940
        %v1942 = vand.u32 %v1941, 4294901760
        %1943 = vmatpush1.msra.mxu0 %v1942
        %1944 = vmatprep.subr.mxu0 0.0
        %v1945 = vsub.f32 %v391, %v391
        %v1946 = vand.u32 %v1945, 4294901760
        %v1947 = vsub.f32 %v1945, %v1946
        %v1948 = vand.u32 %v1947, 4294901760
        %1949 = vmatpush1.msra.mxu0 %v1948
        %1950 = vmatprep.subr.mxu0 0.0
        %1951 = vmatpush1.msra.mxu0 0.0
        %1952 = vmatprep.subr.mxu0 0.0
        %1953 = vmatpush1.msra.mxu0 0.0
        %1954 = vmatprep.subr.mxu0 0.0
        %1955 = vmatpush1.msra.mxu0 0.0
        %1956 = vmatprep.subr.mxu0 0.0
        %1957 = vmatpush1.msra.mxu0 0.0
        %1958 = vmatprep.subr.mxu0 0.0
        %1959 = vmatpush1.msra.mxu0 0.0
        %1960 = vmatprep.subr.mxu0 0.0
        %1961 = vmatpush1.msra.mxu0 0.0
        %1962 = vmatprep.subr.mxu0 0.0
        %1963 = vmatpush1.msra.mxu0 0.0
        %1964 = vmatprep.subr.mxu0 0.0
        %1965 = vmatpush1.msra.mxu0 0.0
        %1966 = vmatprep.subr.mxu0 0.0
        %1967 = vmatpush1.msra.mxu0 0.0
        %1968 = vmatprep.subr.mxu0 0.0
        %1969 = vmatpush1.msra.mxu0 0.0
        %1970 = vmatprep.subr.mxu0 0.0
        %1971 = vmatpush1.msra.mxu0 0.0
        %1972 = vmatprep.subr.mxu0 0.0
        %1973 = vmatpush1.msra.mxu0 0.0
        %1974 = vmatprep.subr.mxu0 0.0
        %1975 = vmatpush1.msra.mxu0 0.0
        %1976 = vmatprep.subr.mxu0 0.0
        %1977 = vmatpush1.msra.mxu0 0.0
        %1978 = vmatprep.subr.mxu0 0.0
        %1979 = vmatpush1.msra.mxu0 0.0
        %1980 = vmatprep.subr.mxu0 0.0
        %1981 = vmatpush1.msra.mxu0 0.0
        %1982 = vmatprep.subr.mxu0 0.0
        %1983 = vmatpush1.msra.mxu0 0.0
        %1984 = vmatprep.subr.mxu0 0.0
        %1985 = vmatpush1.msra.mxu0 0.0
        %1986 = vmatprep.subr.mxu0 0.0
        %1987 = vmatpush1.msra.mxu0 0.0
        %1988 = vmatprep.subr.mxu0 0.0
        %1989 = vmatpush1.msra.mxu0 0.0
        %1990 = vmatprep.subr.mxu0 0.0
        %1991 = vmatpush1.msra.mxu0 0.0
        %1992 = vmatprep.subr.mxu0 0.0
        %1993 = vmatpush1.msra.mxu0 0.0
        %1994 = vmatprep.subr.mxu0 0.0
        %1995 = vmatpush1.msra.mxu0 0.0
        %1996 = vmatprep.subr.mxu0 0.0
        %1997 = vmatpush1.msra.mxu0 0.0
        %1998 = vmatprep.subr.mxu0 0.0
        %1999 = vmatpush1.msra.mxu0 0.0
        %2000 = vmatprep.subr.mxu0 0.0
        %2001 = vmatpush1.msra.mxu0 0.0
        %2002 = vmatprep.subr.mxu0 0.0
        %2003 = vmatpush1.msra.mxu0 0.0
        %2004 = vmatprep.subr.mxu0 0.0
        %2005 = vmatpush1.msra.mxu0 0.0
        %2006 = vmatprep.subr.mxu0 0.0
        %2007 = vmatpush1.msra.mxu0 0.0
        %2008 = vmatprep.subr.mxu0 0.0
        %2009 = vmatpush1.msra.mxu0 0.0
        %2010 = vmatprep.mubr.f32.mxu0 0.0
        %v2011 = vand.u32 %v1394, 4294901760
        %2012 = vmatmul.mubr.f32.gmra.mrb[0].mxu0 %v2011
        %v2013 = vpop.f32.mrb[0].mxu0
        %v2014 = vadd.f32 %v1935, %v2013
        %v2015 = vpop.f32.mrb[0].mxu0
        %2016 = vdwg.mxu0
        %2017 = vmatprep.subr.mxu0 0.0
        %v2018 = vsub.f32 %v388, %v388
        %2019 = vmatpush1.msra.mxu0 %v2018
        %2020 = vmatprep.subr.mxu0 0.0
        %v2021 = vsub.f32 %v391, %v391
        %2022 = vmatpush1.msra.mxu0 %v2021
        %2023 = vmatprep.subr.mxu0 0.0
        %2024 = vmatpush1.msra.mxu0 0.0
        %2025 = vmatprep.subr.mxu0 0.0
        %2026 = vmatpush1.msra.mxu0 0.0
        %2027 = vmatprep.subr.mxu0 0.0
        %2028 = vmatpush1.msra.mxu0 0.0
        %2029 = vmatprep.subr.mxu0 0.0
        %2030 = vmatpush1.msra.mxu0 0.0
        %2031 = vmatprep.subr.mxu0 0.0
        %2032 = vmatpush1.msra.mxu0 0.0
        %2033 = vmatprep.subr.mxu0 0.0
        %2034 = vmatpush1.msra.mxu0 0.0
        %2035 = vmatprep.subr.mxu0 0.0
        %2036 = vmatpush1.msra.mxu0 0.0
        %2037 = vmatprep.subr.mxu0 0.0
        %2038 = vmatpush1.msra.mxu0 0.0
        %2039 = vmatprep.subr.mxu0 0.0
        %2040 = vmatpush1.msra.mxu0 0.0
        %2041 = vmatprep.subr.mxu0 0.0
        %2042 = vmatpush1.msra.mxu0 0.0
        %2043 = vmatprep.subr.mxu0 0.0
        %2044 = vmatpush1.msra.mxu0 0.0
        %2045 = vmatprep.subr.mxu0 0.0
        %2046 = vmatpush1.msra.mxu0 0.0
        %2047 = vmatprep.subr.mxu0 0.0
        %2048 = vmatpush1.msra.mxu0 0.0
        %2049 = vmatprep.subr.mxu0 0.0
        %2050 = vmatpush1.msra.mxu0 0.0
        %2051 = vmatprep.subr.mxu0 0.0
        %2052 = vmatpush1.msra.mxu0 0.0
        %2053 = vmatprep.subr.mxu0 0.0
        %2054 = vmatpush1.msra.mxu0 0.0
        %2055 = vmatprep.subr.mxu0 0.0
        %2056 = vmatpush1.msra.mxu0 0.0
        %2057 = vmatprep.subr.mxu0 0.0
        %2058 = vmatpush1.msra.mxu0 0.0
        %2059 = vmatprep.subr.mxu0 0.0
        %2060 = vmatpush1.msra.mxu0 0.0
        %2061 = vmatprep.subr.mxu0 0.0
        %2062 = vmatpush1.msra.mxu0 0.0
        %2063 = vmatprep.subr.mxu0 0.0
        %2064 = vmatpush1.msra.mxu0 0.0
        %2065 = vmatprep.subr.mxu0 0.0
        %2066 = vmatpush1.msra.mxu0 0.0
        %2067 = vmatprep.subr.mxu0 0.0
        %2068 = vmatpush1.msra.mxu0 0.0
        %2069 = vmatprep.subr.mxu0 0.0
        %2070 = vmatpush1.msra.mxu0 0.0
        %2071 = vmatprep.subr.mxu0 0.0
        %2072 = vmatpush1.msra.mxu0 0.0
        %2073 = vmatprep.subr.mxu0 0.0
        %2074 = vmatpush1.msra.mxu0 0.0
        %2075 = vmatprep.subr.mxu0 0.0
        %2076 = vmatpush1.msra.mxu0 0.0
        %2077 = vmatprep.subr.mxu0 0.0
        %2078 = vmatpush1.msra.mxu0 0.0
        %2079 = vmatprep.subr.mxu0 0.0
        %2080 = vmatpush1.msra.mxu0 0.0
        %2081 = vmatprep.subr.mxu0 0.0
        %2082 = vmatpush1.msra.mxu0 0.0
        %2083 = vmatprep.mubr.f32.mxu0 0.0
        %v2084 = vand.u32 %v1394, 4294901760
        %v2085 = vsub.f32 %v1394, %v2084
        %2086 = vmatmul.mubr.f32.gmra.mrb[0].mxu0 %v2085
        %v2087 = vpop.f32.mrb[0].mxu0
        %v2088 = vadd.f32 %v2014, %v2087
        %v2089 = vpop.f32.mrb[0].mxu0
        %2090 = vdwg.mxu0
        %2091 = vmatprep.subr.mxu0 0.0
        %2092 = vmatpush1.msra.mxu0 %v388
        %2093 = vmatprep.subr.mxu0 0.0
        %2094 = vmatpush1.msra.mxu0 %v391
        %2095 = vmatprep.subr.mxu0 0.0
        %2096 = vmatpush1.msra.mxu0 0.0
        %2097 = vmatprep.subr.mxu0 0.0
        %2098 = vmatpush1.msra.mxu0 0.0
        %2099 = vmatprep.subr.mxu0 0.0
        %2100 = vmatpush1.msra.mxu0 0.0
        %2101 = vmatprep.subr.mxu0 0.0
        %2102 = vmatpush1.msra.mxu0 0.0
        %2103 = vmatprep.subr.mxu0 0.0
        %2104 = vmatpush1.msra.mxu0 0.0
        %2105 = vmatprep.subr.mxu0 0.0
        %2106 = vmatpush1.msra.mxu0 0.0
        %2107 = vmatprep.subr.mxu0 0.0
        %2108 = vmatpush1.msra.mxu0 0.0
        %2109 = vmatprep.subr.mxu0 0.0
        %2110 = vmatpush1.msra.mxu0 0.0
        %2111 = vmatprep.subr.mxu0 0.0
        %2112 = vmatpush1.msra.mxu0 0.0
        %2113 = vmatprep.subr.mxu0 0.0
        %2114 = vmatpush1.msra.mxu0 0.0
        %2115 = vmatprep.subr.mxu0 0.0
        %2116 = vmatpush1.msra.mxu0 0.0
        %2117 = vmatprep.subr.mxu0 0.0
        %2118 = vmatpush1.msra.mxu0 0.0
        %2119 = vmatprep.subr.mxu0 0.0
        %2120 = vmatpush1.msra.mxu0 0.0
        %2121 = vmatprep.subr.mxu0 0.0
        %2122 = vmatpush1.msra.mxu0 0.0
        %2123 = vmatprep.subr.mxu0 0.0
        %2124 = vmatpush1.msra.mxu0 0.0
        %2125 = vmatprep.subr.mxu0 0.0
        %2126 = vmatpush1.msra.mxu0 0.0
        %2127 = vmatprep.subr.mxu0 0.0
        %2128 = vmatpush1.msra.mxu0 0.0
        %2129 = vmatprep.subr.mxu0 0.0
        %2130 = vmatpush1.msra.mxu0 0.0
        %2131 = vmatprep.subr.mxu0 0.0
        %2132 = vmatpush1.msra.mxu0 0.0
        %2133 = vmatprep.subr.mxu0 0.0
        %2134 = vmatpush1.msra.mxu0 0.0
        %2135 = vmatprep.subr.mxu0 0.0
        %2136 = vmatpush1.msra.mxu0 0.0
        %2137 = vmatprep.subr.mxu0 0.0
        %2138 = vmatpush1.msra.mxu0 0.0
        %2139 = vmatprep.subr.mxu0 0.0
        %2140 = vmatpush1.msra.mxu0 0.0
        %2141 = vmatprep.subr.mxu0 0.0
        %2142 = vmatpush1.msra.mxu0 0.0
        %2143 = vmatprep.subr.mxu0 0.0
        %2144 = vmatpush1.msra.mxu0 0.0
        %2145 = vmatprep.subr.mxu0 0.0
        %2146 = vmatpush1.msra.mxu0 0.0
        %2147 = vmatprep.subr.mxu0 0.0
        %2148 = vmatpush1.msra.mxu0 0.0
        %2149 = vmatprep.subr.mxu0 0.0
        %2150 = vmatpush1.msra.mxu0 0.0
        %2151 = vmatprep.subr.mxu0 0.0
        %2152 = vmatpush1.msra.mxu0 0.0
        %2153 = vmatprep.subr.mxu0 0.0
        %2154 = vmatpush1.msra.mxu0 0.0
        %2155 = vmatprep.mubr.f32.mxu0 0.0
        %v2156 = vand.u32 %v1394, 4294901760
        %v2157 = vsub.f32 %v1394, %v2156
        %v2158 = vand.u32 %v2157, 4294901760
        %2159 = vmatmul.mubr.f32.gmra.mrb[0].mxu0 %v2158
        %v2160 = vpop.f32.mrb[0].mxu0
        %v2161 = vadd.f32 %v2088, %v2160
        %v2162 = vpop.f32.mrb[0].mxu0
        %2163 = vdwg.mxu0
        %2164 = vmatprep.subr.mxu0 0.0
        %v2165 = vsub.f32 %v388, %v388
        %v2166 = vand.u32 %v2165, 4294901760
        %2167 = vmatpush1.msra.mxu0 %v2166
        %2168 = vmatprep.subr.mxu0 0.0
        %v2169 = vsub.f32 %v391, %v391
        %v2170 = vand.u32 %v2169, 4294901760
        %2171 = vmatpush1.msra.mxu0 %v2170
        %2172 = vmatprep.subr.mxu0 0.0
        %2173 = vmatpush1.msra.mxu0 0.0
        %2174 = vmatprep.subr.mxu0 0.0
        %2175 = vmatpush1.msra.mxu0 0.0
        %2176 = vmatprep.subr.mxu0 0.0
        %2177 = vmatpush1.msra.mxu0 0.0
        %2178 = vmatprep.subr.mxu0 0.0
        %2179 = vmatpush1.msra.mxu0 0.0
        %2180 = vmatprep.subr.mxu0 0.0
        %2181 = vmatpush1.msra.mxu0 0.0
        %2182 = vmatprep.subr.mxu0 0.0
        %2183 = vmatpush1.msra.mxu0 0.0
        %2184 = vmatprep.subr.mxu0 0.0
        %2185 = vmatpush1.msra.mxu0 0.0
        %2186 = vmatprep.subr.mxu0 0.0
        %2187 = vmatpush1.msra.mxu0 0.0
        %2188 = vmatprep.subr.mxu0 0.0
        %2189 = vmatpush1.msra.mxu0 0.0
        %2190 = vmatprep.subr.mxu0 0.0
        %2191 = vmatpush1.msra.mxu0 0.0
        %2192 = vmatprep.subr.mxu0 0.0
        %2193 = vmatpush1.msra.mxu0 0.0
        %2194 = vmatprep.subr.mxu0 0.0
        %2195 = vmatpush1.msra.mxu0 0.0
        %2196 = vmatprep.subr.mxu0 0.0
        %2197 = vmatpush1.msra.mxu0 0.0
        %2198 = vmatprep.subr.mxu0 0.0
        %2199 = vmatpush1.msra.mxu0 0.0
        %2200 = vmatprep.subr.mxu0 0.0
        %2201 = vmatpush1.msra.mxu0 0.0
        %2202 = vmatprep.subr.mxu0 0.0
        %2203 = vmatpush1.msra.mxu0 0.0
        %2204 = vmatprep.subr.mxu0 0.0
        %2205 = vmatpush1.msra.mxu0 0.0
        %2206 = vmatprep.subr.mxu0 0.0
        %2207 = vmatpush1.msra.mxu0 0.0
        %2208 = vmatprep.subr.mxu0 0.0
        %2209 = vmatpush1.msra.mxu0 0.0
        %2210 = vmatprep.subr.mxu0 0.0
        %2211 = vmatpush1.msra.mxu0 0.0
        %2212 = vmatprep.subr.mxu0 0.0
        %2213 = vmatpush1.msra.mxu0 0.0
        %2214 = vmatprep.subr.mxu0 0.0
        %2215 = vmatpush1.msra.mxu0 0.0
        %2216 = vmatprep.subr.mxu0 0.0
        %2217 = vmatpush1.msra.mxu0 0.0
        %2218 = vmatprep.subr.mxu0 0.0
        %2219 = vmatpush1.msra.mxu0 0.0
        %2220 = vmatprep.subr.mxu0 0.0
        %2221 = vmatpush1.msra.mxu0 0.0
        %2222 = vmatprep.subr.mxu0 0.0
        %2223 = vmatpush1.msra.mxu0 0.0
        %2224 = vmatprep.subr.mxu0 0.0
        %2225 = vmatpush1.msra.mxu0 0.0
        %2226 = vmatprep.subr.mxu0 0.0
        %2227 = vmatpush1.msra.mxu0 0.0
        %2228 = vmatprep.subr.mxu0 0.0
        %2229 = vmatpush1.msra.mxu0 0.0
        %2230 = vmatprep.subr.mxu0 0.0
        %2231 = vmatpush1.msra.mxu0 0.0
        %2232 = vmatprep.mubr.f32.mxu0 0.0
        %v2233 = vand.u32 %v1394, 4294901760
        %2234 = vmatmul.mubr.f32.gmra.mrb[0].mxu0 %v2233
        %v2235 = vpop.f32.mrb[0].mxu0
        %v2236 = vadd.f32 %v2161, %v2235
        %v2237 = vpop.f32.mrb[0].mxu0
        %2238 = vdwg.mxu0
        %2239 = vmatprep.subr.mxu0 0.0
        %2240 = vmatpush1.msra.mxu0 %v388
        %2241 = vmatprep.subr.mxu0 0.0
        %2242 = vmatpush1.msra.mxu0 %v391
        %2243 = vmatprep.subr.mxu0 0.0
        %2244 = vmatpush1.msra.mxu0 0.0
        %2245 = vmatprep.subr.mxu0 0.0
        %2246 = vmatpush1.msra.mxu0 0.0
        %2247 = vmatprep.subr.mxu0 0.0
        %2248 = vmatpush1.msra.mxu0 0.0
        %2249 = vmatprep.subr.mxu0 0.0
        %2250 = vmatpush1.msra.mxu0 0.0
        %2251 = vmatprep.subr.mxu0 0.0
        %2252 = vmatpush1.msra.mxu0 0.0
        %2253 = vmatprep.subr.mxu0 0.0
        %2254 = vmatpush1.msra.mxu0 0.0
        %2255 = vmatprep.subr.mxu0 0.0
        %2256 = vmatpush1.msra.mxu0 0.0
        %2257 = vmatprep.subr.mxu0 0.0
        %2258 = vmatpush1.msra.mxu0 0.0
        %2259 = vmatprep.subr.mxu0 0.0
        %2260 = vmatpush1.msra.mxu0 0.0
        %2261 = vmatprep.subr.mxu0 0.0
        %2262 = vmatpush1.msra.mxu0 0.0
        %2263 = vmatprep.subr.mxu0 0.0
        %2264 = vmatpush1.msra.mxu0 0.0
        %2265 = vmatprep.subr.mxu0 0.0
        %2266 = vmatpush1.msra.mxu0 0.0
        %2267 = vmatprep.subr.mxu0 0.0
        %2268 = vmatpush1.msra.mxu0 0.0
        %2269 = vmatprep.subr.mxu0 0.0
        %2270 = vmatpush1.msra.mxu0 0.0
        %2271 = vmatprep.subr.mxu0 0.0
        %2272 = vmatpush1.msra.mxu0 0.0
        %2273 = vmatprep.subr.mxu0 0.0
        %2274 = vmatpush1.msra.mxu0 0.0
        %2275 = vmatprep.subr.mxu0 0.0
        %2276 = vmatpush1.msra.mxu0 0.0
        %2277 = vmatprep.subr.mxu0 0.0
        %2278 = vmatpush1.msra.mxu0 0.0
        %2279 = vmatprep.subr.mxu0 0.0
        %2280 = vmatpush1.msra.mxu0 0.0
        %2281 = vmatprep.subr.mxu0 0.0
        %2282 = vmatpush1.msra.mxu0 0.0
        %2283 = vmatprep.subr.mxu0 0.0
        %2284 = vmatpush1.msra.mxu0 0.0
        %2285 = vmatprep.subr.mxu0 0.0
        %2286 = vmatpush1.msra.mxu0 0.0
        %2287 = vmatprep.subr.mxu0 0.0
        %2288 = vmatpush1.msra.mxu0 0.0
        %2289 = vmatprep.subr.mxu0 0.0
        %2290 = vmatpush1.msra.mxu0 0.0
        %2291 = vmatprep.subr.mxu0 0.0
        %2292 = vmatpush1.msra.mxu0 0.0
        %2293 = vmatprep.subr.mxu0 0.0
        %2294 = vmatpush1.msra.mxu0 0.0
        %2295 = vmatprep.subr.mxu0 0.0
        %2296 = vmatpush1.msra.mxu0 0.0
        %2297 = vmatprep.subr.mxu0 0.0
        %2298 = vmatpush1.msra.mxu0 0.0
        %2299 = vmatprep.subr.mxu0 0.0
        %2300 = vmatpush1.msra.mxu0 0.0
        %2301 = vmatprep.subr.mxu0 0.0
        %2302 = vmatpush1.msra.mxu0 0.0
        %2303 = vmatprep.mubr.f32.mxu0 0.0
        %v2304 = vand.u32 %v1394, 4294901760
        %2305 = vmatmul.mubr.f32.gmra.mrb[0].mxu0 %v2304
        %v2306 = vpop.f32.mrb[0].mxu0
        %v2307 = vadd.f32 %v2236, %v2306
        %v2308 = vpop.f32.mrb[0].mxu0
        %2309 = vdwg.mxu0
        %v2310 = vsel %vm342, %v474, 0
        %2312 = vmatprep.subr.mxu0 %v393
        %2313 = vmatpush1.msra.mxu0 %v392
        %2314 = vmatprep.subr.mxu0 %v396
        %2315 = vmatpush1.msra.mxu0 %v395
        %2316 = vmatprep.subr.mxu0 0.0
        %2317 = vmatpush1.msra.mxu0 0.0
        %2318 = vmatprep.subr.mxu0 0.0
        %2319 = vmatpush1.msra.mxu0 0.0
        %2320 = vmatprep.subr.mxu0 0.0
        %2321 = vmatpush1.msra.mxu0 0.0
        %2322 = vmatprep.subr.mxu0 0.0
        %2323 = vmatpush1.msra.mxu0 0.0
        %2324 = vmatprep.subr.mxu0 0.0
        %2325 = vmatpush1.msra.mxu0 0.0
        %2326 = vmatprep.subr.mxu0 0.0
        %2327 = vmatpush1.msra.mxu0 0.0
        %2328 = vmatprep.subr.mxu0 0.0
        %2329 = vmatpush1.msra.mxu0 0.0
        %2330 = vmatprep.subr.mxu0 0.0
        %2331 = vmatpush1.msra.mxu0 0.0
        %2332 = vmatprep.subr.mxu0 0.0
        %2333 = vmatpush1.msra.mxu0 0.0
        %2334 = vmatprep.subr.mxu0 0.0
        %2335 = vmatpush1.msra.mxu0 0.0
        %2336 = vmatprep.subr.mxu0 0.0
        %2337 = vmatpush1.msra.mxu0 0.0
        %2338 = vmatprep.subr.mxu0 0.0
        %2339 = vmatpush1.msra.mxu0 0.0
        %2340 = vmatprep.subr.mxu0 0.0
        %2341 = vmatpush1.msra.mxu0 0.0
        %2342 = vmatprep.subr.mxu0 0.0
        %2343 = vmatpush1.msra.mxu0 0.0
        %2344 = vmatprep.subr.mxu0 0.0
        %2345 = vmatpush1.msra.mxu0 0.0
        %2346 = vmatprep.subr.mxu0 0.0
        %2347 = vmatpush1.msra.mxu0 0.0
        %2348 = vmatprep.subr.mxu0 0.0
        %2349 = vmatpush1.msra.mxu0 0.0
        %2350 = vmatprep.subr.mxu0 0.0
        %2351 = vmatpush1.msra.mxu0 0.0
        %2352 = vmatprep.subr.mxu0 0.0
        %2353 = vmatpush1.msra.mxu0 0.0
        %2354 = vmatprep.subr.mxu0 0.0
        %2355 = vmatpush1.msra.mxu0 0.0
        %2356 = vmatprep.subr.mxu0 0.0
        %2357 = vmatpush1.msra.mxu0 0.0
        %2358 = vmatprep.subr.mxu0 0.0
        %2359 = vmatpush1.msra.mxu0 0.0
        %2360 = vmatprep.subr.mxu0 0.0
        %2361 = vmatpush1.msra.mxu0 0.0
        %2362 = vmatprep.subr.mxu0 0.0
        %2363 = vmatpush1.msra.mxu0 0.0
        %2364 = vmatprep.subr.mxu0 0.0
        %2365 = vmatpush1.msra.mxu0 0.0
        %2366 = vmatprep.subr.mxu0 0.0
        %2367 = vmatpush1.msra.mxu0 0.0
        %2368 = vmatprep.subr.mxu0 0.0
        %2369 = vmatpush1.msra.mxu0 0.0
        %2370 = vmatprep.subr.mxu0 0.0
        %2371 = vmatpush1.msra.mxu0 0.0
        %2372 = vmatprep.subr.mxu0 0.0
        %2373 = vmatpush1.msra.mxu0 0.0
        %2374 = vmatprep.subr.mxu0 0.0
        %2375 = vmatpush1.msra.mxu0 0.0
        %2376 = vmatprep.mubr.f32.mxu0 0.0
        %v2377 = vand.u32 %v2310, 4294901760
        %v2378 = vsub.f32 %v2310, %v2377
        %v2379 = vand.u32 %v2378, 4294901760
        %v2380 = vsub.f32 %v2378, %v2379
        %v2381 = vand.u32 %v2380, 4294901760
        %2382 = vmatmul.mubr.f32.gmra.mrb[0].mxu0 %v2381
        %v2383 = vpop.f32.mrb[0].mxu0
        %v2384 = vadd.f32 0.0, %v2383
        %v2385 = vpop.f32.mrb[0].mxu0
        %v2386 = vadd.f32 0.0, %v2385
        %2387 = vdwg.mxu0
        %v2388 = vsub.f32 %v393, %v393
        %v2389 = vand.u32 %v2388, 4294901760
        %v2390 = vsub.f32 %v2388, %v2389
        %v2391 = vand.u32 %v2390, 4294901760
        %2392 = vmatprep.subr.mxu0 %v2391
        %v2393 = vsub.f32 %v392, %v392
        %v2394 = vand.u32 %v2393, 4294901760
        %v2395 = vsub.f32 %v2393, %v2394
        %v2396 = vand.u32 %v2395, 4294901760
        %2397 = vmatpush1.msra.mxu0 %v2396
        %v2398 = vsub.f32 %v396, %v396
        %v2399 = vand.u32 %v2398, 4294901760
        %v2400 = vsub.f32 %v2398, %v2399
        %v2401 = vand.u32 %v2400, 4294901760
        %2402 = vmatprep.subr.mxu0 %v2401
        %v2403 = vsub.f32 %v395, %v395
        %v2404 = vand.u32 %v2403, 4294901760
        %v2405 = vsub.f32 %v2403, %v2404
        %v2406 = vand.u32 %v2405, 4294901760
        %2407 = vmatpush1.msra.mxu0 %v2406
        %2408 = vmatprep.subr.mxu0 0.0
        %2409 = vmatpush1.msra.mxu0 0.0
        %2410 = vmatprep.subr.mxu0 0.0
        %2411 = vmatpush1.msra.mxu0 0.0
        %2412 = vmatprep.subr.mxu0 0.0
        %2413 = vmatpush1.msra.mxu0 0.0
        %2414 = vmatprep.subr.mxu0 0.0
        %2415 = vmatpush1.msra.mxu0 0.0
        %2416 = vmatprep.subr.mxu0 0.0
        %2417 = vmatpush1.msra.mxu0 0.0
        %2418 = vmatprep.subr.mxu0 0.0
        %2419 = vmatpush1.msra.mxu0 0.0
        %2420 = vmatprep.subr.mxu0 0.0
        %2421 = vmatpush1.msra.mxu0 0.0
        %2422 = vmatprep.subr.mxu0 0.0
        %2423 = vmatpush1.msra.mxu0 0.0
        %2424 = vmatprep.subr.mxu0 0.0
        %2425 = vmatpush1.msra.mxu0 0.0
        %2426 = vmatprep.subr.mxu0 0.0
        %2427 = vmatpush1.msra.mxu0 0.0
        %2428 = vmatprep.subr.mxu0 0.0
        %2429 = vmatpush1.msra.mxu0 0.0
        %2430 = vmatprep.subr.mxu0 0.0
        %2431 = vmatpush1.msra.mxu0 0.0
        %2432 = vmatprep.subr.mxu0 0.0
        %2433 = vmatpush1.msra.mxu0 0.0
        %2434 = vmatprep.subr.mxu0 0.0
        %2435 = vmatpush1.msra.mxu0 0.0
        %2436 = vmatprep.subr.mxu0 0.0
        %2437 = vmatpush1.msra.mxu0 0.0
        %2438 = vmatprep.subr.mxu0 0.0
        %2439 = vmatpush1.msra.mxu0 0.0
        %2440 = vmatprep.subr.mxu0 0.0
        %2441 = vmatpush1.msra.mxu0 0.0
        %2442 = vmatprep.subr.mxu0 0.0
        %2443 = vmatpush1.msra.mxu0 0.0
        %2444 = vmatprep.subr.mxu0 0.0
        %2445 = vmatpush1.msra.mxu0 0.0
        %2446 = vmatprep.subr.mxu0 0.0
        %2447 = vmatpush1.msra.mxu0 0.0
        %2448 = vmatprep.subr.mxu0 0.0
        %2449 = vmatpush1.msra.mxu0 0.0
        %2450 = vmatprep.subr.mxu0 0.0
        %2451 = vmatpush1.msra.mxu0 0.0
        %2452 = vmatprep.subr.mxu0 0.0
        %2453 = vmatpush1.msra.mxu0 0.0
        %2454 = vmatprep.subr.mxu0 0.0
        %2455 = vmatpush1.msra.mxu0 0.0
        %2456 = vmatprep.subr.mxu0 0.0
        %2457 = vmatpush1.msra.mxu0 0.0
        %2458 = vmatprep.subr.mxu0 0.0
        %2459 = vmatpush1.msra.mxu0 0.0
        %2460 = vmatprep.subr.mxu0 0.0
        %2461 = vmatpush1.msra.mxu0 0.0
        %2462 = vmatprep.subr.mxu0 0.0
        %2463 = vmatpush1.msra.mxu0 0.0
        %2464 = vmatprep.subr.mxu0 0.0
        %2465 = vmatpush1.msra.mxu0 0.0
        %2466 = vmatprep.subr.mxu0 0.0
        %2467 = vmatpush1.msra.mxu0 0.0
        %2468 = vmatprep.mubr.f32.mxu0 0.0
        %v2469 = vand.u32 %v2310, 4294901760
        %2470 = vmatmul.mubr.f32.gmra.mrb[0].mxu0 %v2469
        %v2471 = vpop.f32.mrb[0].mxu0
        %v2472 = vadd.f32 %v2384, %v2471
        %v2473 = vpop.f32.mrb[0].mxu0
        %v2474 = vadd.f32 %v2386, %v2473
        %2475 = vdwg.mxu0
        %v2476 = vsub.f32 %v393, %v393
        %2477 = vmatprep.subr.mxu0 %v2476
        %v2478 = vsub.f32 %v392, %v392
        %2479 = vmatpush1.msra.mxu0 %v2478
        %v2480 = vsub.f32 %v396, %v396
        %2481 = vmatprep.subr.mxu0 %v2480
        %v2482 = vsub.f32 %v395, %v395
        %2483 = vmatpush1.msra.mxu0 %v2482
        %2484 = vmatprep.subr.mxu0 0.0
        %2485 = vmatpush1.msra.mxu0 0.0
        %2486 = vmatprep.subr.mxu0 0.0
        %2487 = vmatpush1.msra.mxu0 0.0
        %2488 = vmatprep.subr.mxu0 0.0
        %2489 = vmatpush1.msra.mxu0 0.0
        %2490 = vmatprep.subr.mxu0 0.0
        %2491 = vmatpush1.msra.mxu0 0.0
        %2492 = vmatprep.subr.mxu0 0.0
        %2493 = vmatpush1.msra.mxu0 0.0
        %2494 = vmatprep.subr.mxu0 0.0
        %2495 = vmatpush1.msra.mxu0 0.0
        %2496 = vmatprep.subr.mxu0 0.0
        %2497 = vmatpush1.msra.mxu0 0.0
        %2498 = vmatprep.subr.mxu0 0.0
        %2499 = vmatpush1.msra.mxu0 0.0
        %2500 = vmatprep.subr.mxu0 0.0
        %2501 = vmatpush1.msra.mxu0 0.0
        %2502 = vmatprep.subr.mxu0 0.0
        %2503 = vmatpush1.msra.mxu0 0.0
        %2504 = vmatprep.subr.mxu0 0.0
        %2505 = vmatpush1.msra.mxu0 0.0
        %2506 = vmatprep.subr.mxu0 0.0
        %2507 = vmatpush1.msra.mxu0 0.0
        %2508 = vmatprep.subr.mxu0 0.0
        %2509 = vmatpush1.msra.mxu0 0.0
        %2510 = vmatprep.subr.mxu0 0.0
        %2511 = vmatpush1.msra.mxu0 0.0
        %2512 = vmatprep.subr.mxu0 0.0
        %2513 = vmatpush1.msra.mxu0 0.0
        %2514 = vmatprep.subr.mxu0 0.0
        %2515 = vmatpush1.msra.mxu0 0.0
        %2516 = vmatprep.subr.mxu0 0.0
        %2517 = vmatpush1.msra.mxu0 0.0
        %2518 = vmatprep.subr.mxu0 0.0
        %2519 = vmatpush1.msra.mxu0 0.0
        %2520 = vmatprep.subr.mxu0 0.0
        %2521 = vmatpush1.msra.mxu0 0.0
        %2522 = vmatprep.subr.mxu0 0.0
        %2523 = vmatpush1.msra.mxu0 0.0
        %2524 = vmatprep.subr.mxu0 0.0
        %2525 = vmatpush1.msra.mxu0 0.0
        %2526 = vmatprep.subr.mxu0 0.0
        %2527 = vmatpush1.msra.mxu0 0.0
        %2528 = vmatprep.subr.mxu0 0.0
        %2529 = vmatpush1.msra.mxu0 0.0
        %2530 = vmatprep.subr.mxu0 0.0
        %2531 = vmatpush1.msra.mxu0 0.0
        %2532 = vmatprep.subr.mxu0 0.0
        %2533 = vmatpush1.msra.mxu0 0.0
        %2534 = vmatprep.subr.mxu0 0.0
        %2535 = vmatpush1.msra.mxu0 0.0
        %2536 = vmatprep.subr.mxu0 0.0
        %2537 = vmatpush1.msra.mxu0 0.0
        %2538 = vmatprep.subr.mxu0 0.0
        %2539 = vmatpush1.msra.mxu0 0.0
        %2540 = vmatprep.subr.mxu0 0.0
        %2541 = vmatpush1.msra.mxu0 0.0
        %2542 = vmatprep.subr.mxu0 0.0
        %2543 = vmatpush1.msra.mxu0 0.0
        %2544 = vmatprep.mubr.f32.mxu0 0.0
        %v2545 = vand.u32 %v2310, 4294901760
        %v2546 = vsub.f32 %v2310, %v2545
        %2547 = vmatmul.mubr.f32.gmra.mrb[0].mxu0 %v2546
        %v2548 = vpop.f32.mrb[0].mxu0
        %v2549 = vadd.f32 %v2472, %v2548
        %v2550 = vpop.f32.mrb[0].mxu0
        %v2551 = vadd.f32 %v2474, %v2550
        %2552 = vdwg.mxu0
        %2553 = vmatprep.subr.mxu0 %v393
        %2554 = vmatpush1.msra.mxu0 %v392
        %2555 = vmatprep.subr.mxu0 %v396
        %2556 = vmatpush1.msra.mxu0 %v395
        %2557 = vmatprep.subr.mxu0 0.0
        %2558 = vmatpush1.msra.mxu0 0.0
        %2559 = vmatprep.subr.mxu0 0.0
        %2560 = vmatpush1.msra.mxu0 0.0
        %2561 = vmatprep.subr.mxu0 0.0
        %2562 = vmatpush1.msra.mxu0 0.0
        %2563 = vmatprep.subr.mxu0 0.0
        %2564 = vmatpush1.msra.mxu0 0.0
        %2565 = vmatprep.subr.mxu0 0.0
        %2566 = vmatpush1.msra.mxu0 0.0
        %2567 = vmatprep.subr.mxu0 0.0
        %2568 = vmatpush1.msra.mxu0 0.0
        %2569 = vmatprep.subr.mxu0 0.0
        %2570 = vmatpush1.msra.mxu0 0.0
        %2571 = vmatprep.subr.mxu0 0.0
        %2572 = vmatpush1.msra.mxu0 0.0
        %2573 = vmatprep.subr.mxu0 0.0
        %2574 = vmatpush1.msra.mxu0 0.0
        %2575 = vmatprep.subr.mxu0 0.0
        %2576 = vmatpush1.msra.mxu0 0.0
        %2577 = vmatprep.subr.mxu0 0.0
        %2578 = vmatpush1.msra.mxu0 0.0
        %2579 = vmatprep.subr.mxu0 0.0
        %2580 = vmatpush1.msra.mxu0 0.0
        %2581 = vmatprep.subr.mxu0 0.0
        %2582 = vmatpush1.msra.mxu0 0.0
        %2583 = vmatprep.subr.mxu0 0.0
        %2584 = vmatpush1.msra.mxu0 0.0
        %2585 = vmatprep.subr.mxu0 0.0
        %2586 = vmatpush1.msra.mxu0 0.0
        %2587 = vmatprep.subr.mxu0 0.0
        %2588 = vmatpush1.msra.mxu0 0.0
        %2589 = vmatprep.subr.mxu0 0.0
        %2590 = vmatpush1.msra.mxu0 0.0
        %2591 = vmatprep.subr.mxu0 0.0
        %2592 = vmatpush1.msra.mxu0 0.0
        %2593 = vmatprep.subr.mxu0 0.0
        %2594 = vmatpush1.msra.mxu0 0.0
        %2595 = vmatprep.subr.mxu0 0.0
        %2596 = vmatpush1.msra.mxu0 0.0
        %2597 = vmatprep.subr.mxu0 0.0
        %2598 = vmatpush1.msra.mxu0 0.0
        %2599 = vmatprep.subr.mxu0 0.0
        %2600 = vmatpush1.msra.mxu0 0.0
        %2601 = vmatprep.subr.mxu0 0.0
        %2602 = vmatpush1.msra.mxu0 0.0
        %2603 = vmatprep.subr.mxu0 0.0
        %2604 = vmatpush1.msra.mxu0 0.0
        %2605 = vmatprep.subr.mxu0 0.0
        %2606 = vmatpush1.msra.mxu0 0.0
        %2607 = vmatprep.subr.mxu0 0.0
        %2608 = vmatpush1.msra.mxu0 0.0
        %2609 = vmatprep.subr.mxu0 0.0
        %2610 = vmatpush1.msra.mxu0 0.0
        %2611 = vmatprep.subr.mxu0 0.0
        %2612 = vmatpush1.msra.mxu0 0.0
        %2613 = vmatprep.subr.mxu0 0.0
        %2614 = vmatpush1.msra.mxu0 0.0
        %2615 = vmatprep.subr.mxu0 0.0
        %2616 = vmatpush1.msra.mxu0 0.0
        %2617 = vmatprep.mubr.f32.mxu0 0.0
        %v2618 = vand.u32 %v2310, 4294901760
        %v2619 = vsub.f32 %v2310, %v2618
        %v2620 = vand.u32 %v2619, 4294901760
        %2621 = vmatmul.mubr.f32.gmra.mrb[0].mxu0 %v2620
        %v2622 = vpop.f32.mrb[0].mxu0
        %v2623 = vadd.f32 %v2549, %v2622
        %v2624 = vpop.f32.mrb[0].mxu0
        %v2625 = vadd.f32 %v2551, %v2624
        %2626 = vdwg.mxu0
        %v2627 = vsub.f32 %v393, %v393
        %v2628 = vand.u32 %v2627, 4294901760
        %2629 = vmatprep.subr.mxu0 %v2628
        %v2630 = vsub.f32 %v392, %v392
        %v2631 = vand.u32 %v2630, 4294901760
        %2632 = vmatpush1.msra.mxu0 %v2631
        %v2633 = vsub.f32 %v396, %v396
        %v2634 = vand.u32 %v2633, 4294901760
        %2635 = vmatprep.subr.mxu0 %v2634
        %v2636 = vsub.f32 %v395, %v395
        %v2637 = vand.u32 %v2636, 4294901760
        %2638 = vmatpush1.msra.mxu0 %v2637
        %2639 = vmatprep.subr.mxu0 0.0
        %2640 = vmatpush1.msra.mxu0 0.0
        %2641 = vmatprep.subr.mxu0 0.0
        %2642 = vmatpush1.msra.mxu0 0.0
        %2643 = vmatprep.subr.mxu0 0.0
        %2644 = vmatpush1.msra.mxu0 0.0
        %2645 = vmatprep.subr.mxu0 0.0
        %2646 = vmatpush1.msra.mxu0 0.0
        %2647 = vmatprep.subr.mxu0 0.0
        %2648 = vmatpush1.msra.mxu0 0.0
        %2649 = vmatprep.subr.mxu0 0.0
        %2650 = vmatpush1.msra.mxu0 0.0
        %2651 = vmatprep.subr.mxu0 0.0
        %2652 = vmatpush1.msra.mxu0 0.0
        %2653 = vmatprep.subr.mxu0 0.0
        %2654 = vmatpush1.msra.mxu0 0.0
        %2655 = vmatprep.subr.mxu0 0.0
        %2656 = vmatpush1.msra.mxu0 0.0
        %2657 = vmatprep.subr.mxu0 0.0
        %2658 = vmatpush1.msra.mxu0 0.0
        %2659 = vmatprep.subr.mxu0 0.0
        %2660 = vmatpush1.msra.mxu0 0.0
        %2661 = vmatprep.subr.mxu0 0.0
        %2662 = vmatpush1.msra.mxu0 0.0
        %2663 = vmatprep.subr.mxu0 0.0
        %2664 = vmatpush1.msra.mxu0 0.0
        %2665 = vmatprep.subr.mxu0 0.0
        %2666 = vmatpush1.msra.mxu0 0.0
        %2667 = vmatprep.subr.mxu0 0.0
        %2668 = vmatpush1.msra.mxu0 0.0
        %2669 = vmatprep.subr.mxu0 0.0
        %2670 = vmatpush1.msra.mxu0 0.0
        %2671 = vmatprep.subr.mxu0 0.0
        %2672 = vmatpush1.msra.mxu0 0.0
        %2673 = vmatprep.subr.mxu0 0.0
        %2674 = vmatpush1.msra.mxu0 0.0
        %2675 = vmatprep.subr.mxu0 0.0
        %2676 = vmatpush1.msra.mxu0 0.0
        %2677 = vmatprep.subr.mxu0 0.0
        %2678 = vmatpush1.msra.mxu0 0.0
        %2679 = vmatprep.subr.mxu0 0.0
        %2680 = vmatpush1.msra.mxu0 0.0
        %2681 = vmatprep.subr.mxu0 0.0
        %2682 = vmatpush1.msra.mxu0 0.0
        %2683 = vmatprep.subr.mxu0 0.0
        %2684 = vmatpush1.msra.mxu0 0.0
        %2685 = vmatprep.subr.mxu0 0.0
        %2686 = vmatpush1.msra.mxu0 0.0
        %2687 = vmatprep.subr.mxu0 0.0
        %2688 = vmatpush1.msra.mxu0 0.0
        %2689 = vmatprep.subr.mxu0 0.0
        %2690 = vmatpush1.msra.mxu0 0.0
        %2691 = vmatprep.subr.mxu0 0.0
        %2692 = vmatpush1.msra.mxu0 0.0
        %2693 = vmatprep.subr.mxu0 0.0
        %2694 = vmatpush1.msra.mxu0 0.0
        %2695 = vmatprep.subr.mxu0 0.0
        %2696 = vmatpush1.msra.mxu0 0.0
        %2697 = vmatprep.subr.mxu0 0.0
        %2698 = vmatpush1.msra.mxu0 0.0
        %2699 = vmatprep.mubr.f32.mxu0 0.0
        %v2700 = vand.u32 %v2310, 4294901760
        %2701 = vmatmul.mubr.f32.gmra.mrb[0].mxu0 %v2700
        %v2702 = vpop.f32.mrb[0].mxu0
        %v2703 = vadd.f32 %v2623, %v2702
        %v2704 = vpop.f32.mrb[0].mxu0
        %v2705 = vadd.f32 %v2625, %v2704
        %2706 = vdwg.mxu0
        %2707 = vmatprep.subr.mxu0 %v393
        %2708 = vmatpush1.msra.mxu0 %v392
        %2709 = vmatprep.subr.mxu0 %v396
        %2710 = vmatpush1.msra.mxu0 %v395
        %2711 = vmatprep.subr.mxu0 0.0
        %2712 = vmatpush1.msra.mxu0 0.0
        %2713 = vmatprep.subr.mxu0 0.0
        %2714 = vmatpush1.msra.mxu0 0.0
        %2715 = vmatprep.subr.mxu0 0.0
        %2716 = vmatpush1.msra.mxu0 0.0
        %2717 = vmatprep.subr.mxu0 0.0
        %2718 = vmatpush1.msra.mxu0 0.0
        %2719 = vmatprep.subr.mxu0 0.0
        %2720 = vmatpush1.msra.mxu0 0.0
        %2721 = vmatprep.subr.mxu0 0.0
        %2722 = vmatpush1.msra.mxu0 0.0
        %2723 = vmatprep.subr.mxu0 0.0
        %2724 = vmatpush1.msra.mxu0 0.0
        %2725 = vmatprep.subr.mxu0 0.0
        %2726 = vmatpush1.msra.mxu0 0.0
        %2727 = vmatprep.subr.mxu0 0.0
        %2728 = vmatpush1.msra.mxu0 0.0
        %2729 = vmatprep.subr.mxu0 0.0
        %2730 = vmatpush1.msra.mxu0 0.0
        %2731 = vmatprep.subr.mxu0 0.0
        %2732 = vmatpush1.msra.mxu0 0.0
        %2733 = vmatprep.subr.mxu0 0.0
        %2734 = vmatpush1.msra.mxu0 0.0
        %2735 = vmatprep.subr.mxu0 0.0
        %2736 = vmatpush1.msra.mxu0 0.0
        %2737 = vmatprep.subr.mxu0 0.0
        %2738 = vmatpush1.msra.mxu0 0.0
        %2739 = vmatprep.subr.mxu0 0.0
        %2740 = vmatpush1.msra.mxu0 0.0
        %2741 = vmatprep.subr.mxu0 0.0
        %2742 = vmatpush1.msra.mxu0 0.0
        %2743 = vmatprep.subr.mxu0 0.0
        %2744 = vmatpush1.msra.mxu0 0.0
        %2745 = vmatprep.subr.mxu0 0.0
        %2746 = vmatpush1.msra.mxu0 0.0
        %2747 = vmatprep.subr.mxu0 0.0
        %2748 = vmatpush1.msra.mxu0 0.0
        %2749 = vmatprep.subr.mxu0 0.0
        %2750 = vmatpush1.msra.mxu0 0.0
        %2751 = vmatprep.subr.mxu0 0.0
        %2752 = vmatpush1.msra.mxu0 0.0
        %2753 = vmatprep.subr.mxu0 0.0
        %2754 = vmatpush1.msra.mxu0 0.0
        %2755 = vmatprep.subr.mxu0 0.0
        %2756 = vmatpush1.msra.mxu0 0.0
        %2757 = vmatprep.subr.mxu0 0.0
        %2758 = vmatpush1.msra.mxu0 0.0
        %2759 = vmatprep.subr.mxu0 0.0
        %2760 = vmatpush1.msra.mxu0 0.0
        %2761 = vmatprep.subr.mxu0 0.0
        %2762 = vmatpush1.msra.mxu0 0.0
        %2763 = vmatprep.subr.mxu0 0.0
        %2764 = vmatpush1.msra.mxu0 0.0
        %2765 = vmatprep.subr.mxu0 0.0
        %2766 = vmatpush1.msra.mxu0 0.0
        %2767 = vmatprep.subr.mxu0 0.0
        %2768 = vmatpush1.msra.mxu0 0.0
        %2769 = vmatprep.subr.mxu0 0.0
        %2770 = vmatpush1.msra.mxu0 0.0
        %2771 = vmatprep.mubr.f32.mxu0 0.0
        %v2772 = vand.u32 %v2310, 4294901760
        %2773 = vmatmul.mubr.f32.gmra.mrb[0].mxu0 %v2772
        %v2774 = vpop.f32.mrb[0].mxu0
        %v2775 = vadd.f32 %v2703, %v2774
        %v2776 = vpop.f32.mrb[0].mxu0
        %v2777 = vadd.f32 %v2705, %v2776
        %2778 = vdwg.mxu0
        %2779 = vmatprep.subr.mxu0 0.0
        %2780 = vmatpush1.msra.mxu0 %v394
        %2781 = vmatprep.subr.mxu0 0.0
        %2782 = vmatpush1.msra.mxu0 %v397
        %2783 = vmatprep.subr.mxu0 0.0
        %2784 = vmatpush1.msra.mxu0 0.0
        %2785 = vmatprep.subr.mxu0 0.0
        %2786 = vmatpush1.msra.mxu0 0.0
        %2787 = vmatprep.subr.mxu0 0.0
        %2788 = vmatpush1.msra.mxu0 0.0
        %2789 = vmatprep.subr.mxu0 0.0
        %2790 = vmatpush1.msra.mxu0 0.0
        %2791 = vmatprep.subr.mxu0 0.0
        %2792 = vmatpush1.msra.mxu0 0.0
        %2793 = vmatprep.subr.mxu0 0.0
        %2794 = vmatpush1.msra.mxu0 0.0
        %2795 = vmatprep.subr.mxu0 0.0
        %2796 = vmatpush1.msra.mxu0 0.0
        %2797 = vmatprep.subr.mxu0 0.0
        %2798 = vmatpush1.msra.mxu0 0.0
        %2799 = vmatprep.subr.mxu0 0.0
        %2800 = vmatpush1.msra.mxu0 0.0
        %2801 = vmatprep.subr.mxu0 0.0
        %2802 = vmatpush1.msra.mxu0 0.0
        %2803 = vmatprep.subr.mxu0 0.0
        %2804 = vmatpush1.msra.mxu0 0.0
        %2805 = vmatprep.subr.mxu0 0.0
        %2806 = vmatpush1.msra.mxu0 0.0
        %2807 = vmatprep.subr.mxu0 0.0
        %2808 = vmatpush1.msra.mxu0 0.0
        %2809 = vmatprep.subr.mxu0 0.0
        %2810 = vmatpush1.msra.mxu0 0.0
        %2811 = vmatprep.subr.mxu0 0.0
        %2812 = vmatpush1.msra.mxu0 0.0
        %2813 = vmatprep.subr.mxu0 0.0
        %2814 = vmatpush1.msra.mxu0 0.0
        %2815 = vmatprep.subr.mxu0 0.0
        %2816 = vmatpush1.msra.mxu0 0.0
        %2817 = vmatprep.subr.mxu0 0.0
        %2818 = vmatpush1.msra.mxu0 0.0
        %2819 = vmatprep.subr.mxu0 0.0
        %2820 = vmatpush1.msra.mxu0 0.0
        %2821 = vmatprep.subr.mxu0 0.0
        %2822 = vmatpush1.msra.mxu0 0.0
        %2823 = vmatprep.subr.mxu0 0.0
        %2824 = vmatpush1.msra.mxu0 0.0
        %2825 = vmatprep.subr.mxu0 0.0
        %2826 = vmatpush1.msra.mxu0 0.0
        %2827 = vmatprep.subr.mxu0 0.0
        %2828 = vmatpush1.msra.mxu0 0.0
        %2829 = vmatprep.subr.mxu0 0.0
        %2830 = vmatpush1.msra.mxu0 0.0
        %2831 = vmatprep.subr.mxu0 0.0
        %2832 = vmatpush1.msra.mxu0 0.0
        %2833 = vmatprep.subr.mxu0 0.0
        %2834 = vmatpush1.msra.mxu0 0.0
        %2835 = vmatprep.subr.mxu0 0.0
        %2836 = vmatpush1.msra.mxu0 0.0
        %2837 = vmatprep.subr.mxu0 0.0
        %2838 = vmatpush1.msra.mxu0 0.0
        %2839 = vmatprep.subr.mxu0 0.0
        %2840 = vmatpush1.msra.mxu0 0.0
        %2841 = vmatprep.subr.mxu0 0.0
        %2842 = vmatpush1.msra.mxu0 0.0
        %2843 = vmatprep.mubr.f32.mxu0 0.0
        %v2844 = vand.u32 %v2310, 4294901760
        %v2845 = vsub.f32 %v2310, %v2844
        %v2846 = vand.u32 %v2845, 4294901760
        %v2847 = vsub.f32 %v2845, %v2846
        %v2848 = vand.u32 %v2847, 4294901760
        %2849 = vmatmul.mubr.f32.gmra.mrb[0].mxu0 %v2848
        %v2850 = vpop.f32.mrb[0].mxu0
        %v2851 = vadd.f32 0.0, %v2850
        %v2852 = vpop.f32.mrb[0].mxu0
        %2853 = vdwg.mxu0
        %2854 = vmatprep.subr.mxu0 0.0
        %v2855 = vsub.f32 %v394, %v394
        %v2856 = vand.u32 %v2855, 4294901760
        %v2857 = vsub.f32 %v2855, %v2856
        %v2858 = vand.u32 %v2857, 4294901760
        %2859 = vmatpush1.msra.mxu0 %v2858
        %2860 = vmatprep.subr.mxu0 0.0
        %v2861 = vsub.f32 %v397, %v397
        %v2862 = vand.u32 %v2861, 4294901760
        %v2863 = vsub.f32 %v2861, %v2862
        %v2864 = vand.u32 %v2863, 4294901760
        %2865 = vmatpush1.msra.mxu0 %v2864
        %2866 = vmatprep.subr.mxu0 0.0
        %2867 = vmatpush1.msra.mxu0 0.0
        %2868 = vmatprep.subr.mxu0 0.0
        %2869 = vmatpush1.msra.mxu0 0.0
        %2870 = vmatprep.subr.mxu0 0.0
        %2871 = vmatpush1.msra.mxu0 0.0
        %2872 = vmatprep.subr.mxu0 0.0
        %2873 = vmatpush1.msra.mxu0 0.0
        %2874 = vmatprep.subr.mxu0 0.0
        %2875 = vmatpush1.msra.mxu0 0.0
        %2876 = vmatprep.subr.mxu0 0.0
        %2877 = vmatpush1.msra.mxu0 0.0
        %2878 = vmatprep.subr.mxu0 0.0
        %2879 = vmatpush1.msra.mxu0 0.0
        %2880 = vmatprep.subr.mxu0 0.0
        %2881 = vmatpush1.msra.mxu0 0.0
        %2882 = vmatprep.subr.mxu0 0.0
        %2883 = vmatpush1.msra.mxu0 0.0
        %2884 = vmatprep.subr.mxu0 0.0
        %2885 = vmatpush1.msra.mxu0 0.0
        %2886 = vmatprep.subr.mxu0 0.0
        %2887 = vmatpush1.msra.mxu0 0.0
        %2888 = vmatprep.subr.mxu0 0.0
        %2889 = vmatpush1.msra.mxu0 0.0
        %2890 = vmatprep.subr.mxu0 0.0
        %2891 = vmatpush1.msra.mxu0 0.0
        %2892 = vmatprep.subr.mxu0 0.0
        %2893 = vmatpush1.msra.mxu0 0.0
        %2894 = vmatprep.subr.mxu0 0.0
        %2895 = vmatpush1.msra.mxu0 0.0
        %2896 = vmatprep.subr.mxu0 0.0
        %2897 = vmatpush1.msra.mxu0 0.0
        %2898 = vmatprep.subr.mxu0 0.0
        %2899 = vmatpush1.msra.mxu0 0.0
        %2900 = vmatprep.subr.mxu0 0.0
        %2901 = vmatpush1.msra.mxu0 0.0
        %2902 = vmatprep.subr.mxu0 0.0
        %2903 = vmatpush1.msra.mxu0 0.0
        %2904 = vmatprep.subr.mxu0 0.0
        %2905 = vmatpush1.msra.mxu0 0.0
        %2906 = vmatprep.subr.mxu0 0.0
        %2907 = vmatpush1.msra.mxu0 0.0
        %2908 = vmatprep.subr.mxu0 0.0
        %2909 = vmatpush1.msra.mxu0 0.0
        %2910 = vmatprep.subr.mxu0 0.0
        %2911 = vmatpush1.msra.mxu0 0.0
        %2912 = vmatprep.subr.mxu0 0.0
        %2913 = vmatpush1.msra.mxu0 0.0
        %2914 = vmatprep.subr.mxu0 0.0
        %2915 = vmatpush1.msra.mxu0 0.0
        %2916 = vmatprep.subr.mxu0 0.0
        %2917 = vmatpush1.msra.mxu0 0.0
        %2918 = vmatprep.subr.mxu0 0.0
        %2919 = vmatpush1.msra.mxu0 0.0
        %2920 = vmatprep.subr.mxu0 0.0
        %2921 = vmatpush1.msra.mxu0 0.0
        %2922 = vmatprep.subr.mxu0 0.0
        %2923 = vmatpush1.msra.mxu0 0.0
        %2924 = vmatprep.subr.mxu0 0.0
        %2925 = vmatpush1.msra.mxu0 0.0
        %2926 = vmatprep.mubr.f32.mxu0 0.0
        %v2927 = vand.u32 %v2310, 4294901760
        %2928 = vmatmul.mubr.f32.gmra.mrb[0].mxu0 %v2927
        %v2929 = vpop.f32.mrb[0].mxu0
        %v2930 = vadd.f32 %v2851, %v2929
        %v2931 = vpop.f32.mrb[0].mxu0
        %2932 = vdwg.mxu0
        %2933 = vmatprep.subr.mxu0 0.0
        %v2934 = vsub.f32 %v394, %v394
        %2935 = vmatpush1.msra.mxu0 %v2934
        %2936 = vmatprep.subr.mxu0 0.0
        %v2937 = vsub.f32 %v397, %v397
        %2938 = vmatpush1.msra.mxu0 %v2937
        %2939 = vmatprep.subr.mxu0 0.0
        %2940 = vmatpush1.msra.mxu0 0.0
        %2941 = vmatprep.subr.mxu0 0.0
        %2942 = vmatpush1.msra.mxu0 0.0
        %2943 = vmatprep.subr.mxu0 0.0
        %2944 = vmatpush1.msra.mxu0 0.0
        %2945 = vmatprep.subr.mxu0 0.0
        %2946 = vmatpush1.msra.mxu0 0.0
        %2947 = vmatprep.subr.mxu0 0.0
        %2948 = vmatpush1.msra.mxu0 0.0
        %2949 = vmatprep.subr.mxu0 0.0
        %2950 = vmatpush1.msra.mxu0 0.0
        %2951 = vmatprep.subr.mxu0 0.0
        %2952 = vmatpush1.msra.mxu0 0.0
        %2953 = vmatprep.subr.mxu0 0.0
        %2954 = vmatpush1.msra.mxu0 0.0
        %2955 = vmatprep.subr.mxu0 0.0
        %2956 = vmatpush1.msra.mxu0 0.0
        %2957 = vmatprep.subr.mxu0 0.0
        %2958 = vmatpush1.msra.mxu0 0.0
        %2959 = vmatprep.subr.mxu0 0.0
        %2960 = vmatpush1.msra.mxu0 0.0
        %2961 = vmatprep.subr.mxu0 0.0
        %2962 = vmatpush1.msra.mxu0 0.0
        %2963 = vmatprep.subr.mxu0 0.0
        %2964 = vmatpush1.msra.mxu0 0.0
        %2965 = vmatprep.subr.mxu0 0.0
        %2966 = vmatpush1.msra.mxu0 0.0
        %2967 = vmatprep.subr.mxu0 0.0
        %2968 = vmatpush1.msra.mxu0 0.0
        %2969 = vmatprep.subr.mxu0 0.0
        %2970 = vmatpush1.msra.mxu0 0.0
        %2971 = vmatprep.subr.mxu0 0.0
        %2972 = vmatpush1.msra.mxu0 0.0
        %2973 = vmatprep.subr.mxu0 0.0
        %2974 = vmatpush1.msra.mxu0 0.0
        %2975 = vmatprep.subr.mxu0 0.0
        %2976 = vmatpush1.msra.mxu0 0.0
        %2977 = vmatprep.subr.mxu0 0.0
        %2978 = vmatpush1.msra.mxu0 0.0
        %2979 = vmatprep.subr.mxu0 0.0
        %2980 = vmatpush1.msra.mxu0 0.0
        %2981 = vmatprep.subr.mxu0 0.0
        %2982 = vmatpush1.msra.mxu0 0.0
        %2983 = vmatprep.subr.mxu0 0.0
        %2984 = vmatpush1.msra.mxu0 0.0
        %2985 = vmatprep.subr.mxu0 0.0
        %2986 = vmatpush1.msra.mxu0 0.0
        %2987 = vmatprep.subr.mxu0 0.0
        %2988 = vmatpush1.msra.mxu0 0.0
        %2989 = vmatprep.subr.mxu0 0.0
        %2990 = vmatpush1.msra.mxu0 0.0
        %2991 = vmatprep.subr.mxu0 0.0
        %2992 = vmatpush1.msra.mxu0 0.0
        %2993 = vmatprep.subr.mxu0 0.0
        %2994 = vmatpush1.msra.mxu0 0.0
        %2995 = vmatprep.subr.mxu0 0.0
        %2996 = vmatpush1.msra.mxu0 0.0
        %2997 = vmatprep.subr.mxu0 0.0
        %2998 = vmatpush1.msra.mxu0 0.0
        %2999 = vmatprep.mubr.f32.mxu0 0.0
        %v3000 = vand.u32 %v2310, 4294901760
        %v3001 = vsub.f32 %v2310, %v3000
        %3002 = vmatmul.mubr.f32.gmra.mrb[0].mxu0 %v3001
        %v3003 = vpop.f32.mrb[0].mxu0
        %v3004 = vadd.f32 %v2930, %v3003
        %v3005 = vpop.f32.mrb[0].mxu0
        %3006 = vdwg.mxu0
        %3007 = vmatprep.subr.mxu0 0.0
        %3008 = vmatpush1.msra.mxu0 %v394
        %3009 = vmatprep.subr.mxu0 0.0
        %3010 = vmatpush1.msra.mxu0 %v397
        %3011 = vmatprep.subr.mxu0 0.0
        %3012 = vmatpush1.msra.mxu0 0.0
        %3013 = vmatprep.subr.mxu0 0.0
        %3014 = vmatpush1.msra.mxu0 0.0
        %3015 = vmatprep.subr.mxu0 0.0
        %3016 = vmatpush1.msra.mxu0 0.0
        %3017 = vmatprep.subr.mxu0 0.0
        %3018 = vmatpush1.msra.mxu0 0.0
        %3019 = vmatprep.subr.mxu0 0.0
        %3020 = vmatpush1.msra.mxu0 0.0
        %3021 = vmatprep.subr.mxu0 0.0
        %3022 = vmatpush1.msra.mxu0 0.0
        %3023 = vmatprep.subr.mxu0 0.0
        %3024 = vmatpush1.msra.mxu0 0.0
        %3025 = vmatprep.subr.mxu0 0.0
        %3026 = vmatpush1.msra.mxu0 0.0
        %3027 = vmatprep.subr.mxu0 0.0
        %3028 = vmatpush1.msra.mxu0 0.0
        %3029 = vmatprep.subr.mxu0 0.0
        %3030 = vmatpush1.msra.mxu0 0.0
        %3031 = vmatprep.subr.mxu0 0.0
        %3032 = vmatpush1.msra.mxu0 0.0
        %3033 = vmatprep.subr.mxu0 0.0
        %3034 = vmatpush1.msra.mxu0 0.0
        %3035 = vmatprep.subr.mxu0 0.0
        %3036 = vmatpush1.msra.mxu0 0.0
        %3037 = vmatprep.subr.mxu0 0.0
        %3038 = vmatpush1.msra.mxu0 0.0
        %3039 = vmatprep.subr.mxu0 0.0
        %3040 = vmatpush1.msra.mxu0 0.0
        %3041 = vmatprep.subr.mxu0 0.0
        %3042 = vmatpush1.msra.mxu0 0.0
        %3043 = vmatprep.subr.mxu0 0.0
        %3044 = vmatpush1.msra.mxu0 0.0
        %3045 = vmatprep.subr.mxu0 0.0
        %3046 = vmatpush1.msra.mxu0 0.0
        %3047 = vmatprep.subr.mxu0 0.0
        %3048 = vmatpush1.msra.mxu0 0.0
        %3049 = vmatprep.subr.mxu0 0.0
        %3050 = vmatpush1.msra.mxu0 0.0
        %3051 = vmatprep.subr.mxu0 0.0
        %3052 = vmatpush1.msra.mxu0 0.0
        %3053 = vmatprep.subr.mxu0 0.0
        %3054 = vmatpush1.msra.mxu0 0.0
        %3055 = vmatprep.subr.mxu0 0.0
        %3056 = vmatpush1.msra.mxu0 0.0
        %3057 = vmatprep.subr.mxu0 0.0
        %3058 = vmatpush1.msra.mxu0 0.0
        %3059 = vmatprep.subr.mxu0 0.0
        %3060 = vmatpush1.msra.mxu0 0.0
        %3061 = vmatprep.subr.mxu0 0.0
        %3062 = vmatpush1.msra.mxu0 0.0
        %3063 = vmatprep.subr.mxu0 0.0
        %3064 = vmatpush1.msra.mxu0 0.0
        %3065 = vmatprep.subr.mxu0 0.0
        %3066 = vmatpush1.msra.mxu0 0.0
        %3067 = vmatprep.subr.mxu0 0.0
        %3068 = vmatpush1.msra.mxu0 0.0
        %3069 = vmatprep.subr.mxu0 0.0
        %3070 = vmatpush1.msra.mxu0 0.0
        %3071 = vmatprep.mubr.f32.mxu0 0.0
        %v3072 = vand.u32 %v2310, 4294901760
        %v3073 = vsub.f32 %v2310, %v3072
        %v3074 = vand.u32 %v3073, 4294901760
        %3075 = vmatmul.mubr.f32.gmra.mrb[0].mxu0 %v3074
        %v3076 = vpop.f32.mrb[0].mxu0
        %v3077 = vadd.f32 %v3004, %v3076
        %v3078 = vpop.f32.mrb[0].mxu0
        %3079 = vdwg.mxu0
        %3080 = vmatprep.subr.mxu0 0.0
        %v3081 = vsub.f32 %v394, %v394
        %v3082 = vand.u32 %v3081, 4294901760
        %3083 = vmatpush1.msra.mxu0 %v3082
        %3084 = vmatprep.subr.mxu0 0.0
        %v3085 = vsub.f32 %v397, %v397
        %v3086 = vand.u32 %v3085, 4294901760
        %3087 = vmatpush1.msra.mxu0 %v3086
        %3088 = vmatprep.subr.mxu0 0.0
        %3089 = vmatpush1.msra.mxu0 0.0
        %3090 = vmatprep.subr.mxu0 0.0
        %3091 = vmatpush1.msra.mxu0 0.0
        %3092 = vmatprep.subr.mxu0 0.0
        %3093 = vmatpush1.msra.mxu0 0.0
        %3094 = vmatprep.subr.mxu0 0.0
        %3095 = vmatpush1.msra.mxu0 0.0
        %3096 = vmatprep.subr.mxu0 0.0
        %3097 = vmatpush1.msra.mxu0 0.0
        %3098 = vmatprep.subr.mxu0 0.0
        %3099 = vmatpush1.msra.mxu0 0.0
        %3100 = vmatprep.subr.mxu0 0.0
        %3101 = vmatpush1.msra.mxu0 0.0
        %3102 = vmatprep.subr.mxu0 0.0
        %3103 = vmatpush1.msra.mxu0 0.0
        %3104 = vmatprep.subr.mxu0 0.0
        %3105 = vmatpush1.msra.mxu0 0.0
        %3106 = vmatprep.subr.mxu0 0.0
        %3107 = vmatpush1.msra.mxu0 0.0
        %3108 = vmatprep.subr.mxu0 0.0
        %3109 = vmatpush1.msra.mxu0 0.0
        %3110 = vmatprep.subr.mxu0 0.0
        %3111 = vmatpush1.msra.mxu0 0.0
        %3112 = vmatprep.subr.mxu0 0.0
        %3113 = vmatpush1.msra.mxu0 0.0
        %3114 = vmatprep.subr.mxu0 0.0
        %3115 = vmatpush1.msra.mxu0 0.0
        %3116 = vmatprep.subr.mxu0 0.0
        %3117 = vmatpush1.msra.mxu0 0.0
        %3118 = vmatprep.subr.mxu0 0.0
        %3119 = vmatpush1.msra.mxu0 0.0
        %3120 = vmatprep.subr.mxu0 0.0
        %3121 = vmatpush1.msra.mxu0 0.0
        %3122 = vmatprep.subr.mxu0 0.0
        %3123 = vmatpush1.msra.mxu0 0.0
        %3124 = vmatprep.subr.mxu0 0.0
        %3125 = vmatpush1.msra.mxu0 0.0
        %3126 = vmatprep.subr.mxu0 0.0
        %3127 = vmatpush1.msra.mxu0 0.0
        %3128 = vmatprep.subr.mxu0 0.0
        %3129 = vmatpush1.msra.mxu0 0.0
        %3130 = vmatprep.subr.mxu0 0.0
        %3131 = vmatpush1.msra.mxu0 0.0
        %3132 = vmatprep.subr.mxu0 0.0
        %3133 = vmatpush1.msra.mxu0 0.0
        %3134 = vmatprep.subr.mxu0 0.0
        %3135 = vmatpush1.msra.mxu0 0.0
        %3136 = vmatprep.subr.mxu0 0.0
        %3137 = vmatpush1.msra.mxu0 0.0
        %3138 = vmatprep.subr.mxu0 0.0
        %3139 = vmatpush1.msra.mxu0 0.0
        %3140 = vmatprep.subr.mxu0 0.0
        %3141 = vmatpush1.msra.mxu0 0.0
        %3142 = vmatprep.subr.mxu0 0.0
        %3143 = vmatpush1.msra.mxu0 0.0
        %3144 = vmatprep.subr.mxu0 0.0
        %3145 = vmatpush1.msra.mxu0 0.0
        %3146 = vmatprep.subr.mxu0 0.0
        %3147 = vmatpush1.msra.mxu0 0.0
        %3148 = vmatprep.mubr.f32.mxu0 0.0
        %v3149 = vand.u32 %v2310, 4294901760
        %3150 = vmatmul.mubr.f32.gmra.mrb[0].mxu0 %v3149
        %v3151 = vpop.f32.mrb[0].mxu0
        %v3152 = vadd.f32 %v3077, %v3151
        %v3153 = vpop.f32.mrb[0].mxu0
        %3154 = vdwg.mxu0
        %3155 = vmatprep.subr.mxu0 0.0
        %3156 = vmatpush1.msra.mxu0 %v394
        %3157 = vmatprep.subr.mxu0 0.0
        %3158 = vmatpush1.msra.mxu0 %v397
        %3159 = vmatprep.subr.mxu0 0.0
        %3160 = vmatpush1.msra.mxu0 0.0
        %3161 = vmatprep.subr.mxu0 0.0
        %3162 = vmatpush1.msra.mxu0 0.0
        %3163 = vmatprep.subr.mxu0 0.0
        %3164 = vmatpush1.msra.mxu0 0.0
        %3165 = vmatprep.subr.mxu0 0.0
        %3166 = vmatpush1.msra.mxu0 0.0
        %3167 = vmatprep.subr.mxu0 0.0
        %3168 = vmatpush1.msra.mxu0 0.0
        %3169 = vmatprep.subr.mxu0 0.0
        %3170 = vmatpush1.msra.mxu0 0.0
        %3171 = vmatprep.subr.mxu0 0.0
        %3172 = vmatpush1.msra.mxu0 0.0
        %3173 = vmatprep.subr.mxu0 0.0
        %3174 = vmatpush1.msra.mxu0 0.0
        %3175 = vmatprep.subr.mxu0 0.0
        %3176 = vmatpush1.msra.mxu0 0.0
        %3177 = vmatprep.subr.mxu0 0.0
        %3178 = vmatpush1.msra.mxu0 0.0
        %3179 = vmatprep.subr.mxu0 0.0
        %3180 = vmatpush1.msra.mxu0 0.0
        %3181 = vmatprep.subr.mxu0 0.0
        %3182 = vmatpush1.msra.mxu0 0.0
        %3183 = vmatprep.subr.mxu0 0.0
        %3184 = vmatpush1.msra.mxu0 0.0
        %3185 = vmatprep.subr.mxu0 0.0
        %3186 = vmatpush1.msra.mxu0 0.0
        %3187 = vmatprep.subr.mxu0 0.0
        %3188 = vmatpush1.msra.mxu0 0.0
        %3189 = vmatprep.subr.mxu0 0.0
        %3190 = vmatpush1.msra.mxu0 0.0
        %3191 = vmatprep.subr.mxu0 0.0
        %3192 = vmatpush1.msra.mxu0 0.0
        %3193 = vmatprep.subr.mxu0 0.0
        %3194 = vmatpush1.msra.mxu0 0.0
        %3195 = vmatprep.subr.mxu0 0.0
        %3196 = vmatpush1.msra.mxu0 0.0
        %3197 = vmatprep.subr.mxu0 0.0
        %3198 = vmatpush1.msra.mxu0 0.0
        %3199 = vmatprep.subr.mxu0 0.0
        %3200 = vmatpush1.msra.mxu0 0.0
        %3201 = vmatprep.subr.mxu0 0.0
        %3202 = vmatpush1.msra.mxu0 0.0
        %3203 = vmatprep.subr.mxu0 0.0
        %3204 = vmatpush1.msra.mxu0 0.0
        %3205 = vmatprep.subr.mxu0 0.0
        %3206 = vmatpush1.msra.mxu0 0.0
        %3207 = vmatprep.subr.mxu0 0.0
        %3208 = vmatpush1.msra.mxu0 0.0
        %3209 = vmatprep.subr.mxu0 0.0
        %3210 = vmatpush1.msra.mxu0 0.0
        %3211 = vmatprep.subr.mxu0 0.0
        %3212 = vmatpush1.msra.mxu0 0.0
        %3213 = vmatprep.subr.mxu0 0.0
        %3214 = vmatpush1.msra.mxu0 0.0
        %3215 = vmatprep.subr.mxu0 0.0
        %3216 = vmatpush1.msra.mxu0 0.0
        %3217 = vmatprep.subr.mxu0 0.0
        %3218 = vmatpush1.msra.mxu0 0.0
        %3219 = vmatprep.mubr.f32.mxu0 0.0
        %v3220 = vand.u32 %v2310, 4294901760
        %3221 = vmatmul.mubr.f32.gmra.mrb[0].mxu0 %v3220
        %v3222 = vpop.f32.mrb[0].mxu0
        %v3223 = vadd.f32 %v3152, %v3222
        %v3224 = vpop.f32.mrb[0].mxu0
        %3225 = vdwg.mxu0
        %v3226 = vsel %vm342, %v476, 0
        %3228 = vmatprep.subr.mxu0 %v399
        %3229 = vmatpush1.msra.mxu0 %v398
        %3230 = vmatprep.subr.mxu0 %v402
        %3231 = vmatpush1.msra.mxu0 %v401
        %3232 = vmatprep.subr.mxu0 0.0
        %3233 = vmatpush1.msra.mxu0 0.0
        %3234 = vmatprep.subr.mxu0 0.0
        %3235 = vmatpush1.msra.mxu0 0.0
        %3236 = vmatprep.subr.mxu0 0.0
        %3237 = vmatpush1.msra.mxu0 0.0
        %3238 = vmatprep.subr.mxu0 0.0
        %3239 = vmatpush1.msra.mxu0 0.0
        %3240 = vmatprep.subr.mxu0 0.0
        %3241 = vmatpush1.msra.mxu0 0.0
        %3242 = vmatprep.subr.mxu0 0.0
        %3243 = vmatpush1.msra.mxu0 0.0
        %3244 = vmatprep.subr.mxu0 0.0
        %3245 = vmatpush1.msra.mxu0 0.0
        %3246 = vmatprep.subr.mxu0 0.0
        %3247 = vmatpush1.msra.mxu0 0.0
        %3248 = vmatprep.subr.mxu0 0.0
        %3249 = vmatpush1.msra.mxu0 0.0
        %3250 = vmatprep.subr.mxu0 0.0
        %3251 = vmatpush1.msra.mxu0 0.0
        %3252 = vmatprep.subr.mxu0 0.0
        %3253 = vmatpush1.msra.mxu0 0.0
        %3254 = vmatprep.subr.mxu0 0.0
        %3255 = vmatpush1.msra.mxu0 0.0
        %3256 = vmatprep.subr.mxu0 0.0
        %3257 = vmatpush1.msra.mxu0 0.0
        %3258 = vmatprep.subr.mxu0 0.0
        %3259 = vmatpush1.msra.mxu0 0.0
        %3260 = vmatprep.subr.mxu0 0.0
        %3261 = vmatpush1.msra.mxu0 0.0
        %3262 = vmatprep.subr.mxu0 0.0
        %3263 = vmatpush1.msra.mxu0 0.0
        %3264 = vmatprep.subr.mxu0 0.0
        %3265 = vmatpush1.msra.mxu0 0.0
        %3266 = vmatprep.subr.mxu0 0.0
        %3267 = vmatpush1.msra.mxu0 0.0
        %3268 = vmatprep.subr.mxu0 0.0
        %3269 = vmatpush1.msra.mxu0 0.0
        %3270 = vmatprep.subr.mxu0 0.0
        %3271 = vmatpush1.msra.mxu0 0.0
        %3272 = vmatprep.subr.mxu0 0.0
        %3273 = vmatpush1.msra.mxu0 0.0
        %3274 = vmatprep.subr.mxu0 0.0
        %3275 = vmatpush1.msra.mxu0 0.0
        %3276 = vmatprep.subr.mxu0 0.0
        %3277 = vmatpush1.msra.mxu0 0.0
        %3278 = vmatprep.subr.mxu0 0.0
        %3279 = vmatpush1.msra.mxu0 0.0
        %3280 = vmatprep.subr.mxu0 0.0
        %3281 = vmatpush1.msra.mxu0 0.0
        %3282 = vmatprep.subr.mxu0 0.0
        %3283 = vmatpush1.msra.mxu0 0.0
        %3284 = vmatprep.subr.mxu0 0.0
        %3285 = vmatpush1.msra.mxu0 0.0
        %3286 = vmatprep.subr.mxu0 0.0
        %3287 = vmatpush1.msra.mxu0 0.0
        %3288 = vmatprep.subr.mxu0 0.0
        %3289 = vmatpush1.msra.mxu0 0.0
        %3290 = vmatprep.subr.mxu0 0.0
        %3291 = vmatpush1.msra.mxu0 0.0
        %3292 = vmatprep.mubr.f32.mxu0 0.0
        %v3293 = vand.u32 %v3226, 4294901760
        %v3294 = vsub.f32 %v3226, %v3293
        %v3295 = vand.u32 %v3294, 4294901760
        %v3296 = vsub.f32 %v3294, %v3295
        %v3297 = vand.u32 %v3296, 4294901760
        %3298 = vmatmul.mubr.f32.gmra.mrb[0].mxu0 %v3297
        %v3299 = vpop.f32.mrb[0].mxu0
        %v3300 = vadd.f32 0.0, %v3299
        %v3301 = vpop.f32.mrb[0].mxu0
        %v3302 = vadd.f32 0.0, %v3301
        %3303 = vdwg.mxu0
        %v3304 = vsub.f32 %v399, %v399
        %v3305 = vand.u32 %v3304, 4294901760
        %v3306 = vsub.f32 %v3304, %v3305
        %v3307 = vand.u32 %v3306, 4294901760
        %3308 = vmatprep.subr.mxu0 %v3307
        %v3309 = vsub.f32 %v398, %v398
        %v3310 = vand.u32 %v3309, 4294901760
        %v3311 = vsub.f32 %v3309, %v3310
        %v3312 = vand.u32 %v3311, 4294901760
        %3313 = vmatpush1.msra.mxu0 %v3312
        %v3314 = vsub.f32 %v402, %v402
        %v3315 = vand.u32 %v3314, 4294901760
        %v3316 = vsub.f32 %v3314, %v3315
        %v3317 = vand.u32 %v3316, 4294901760
        %3318 = vmatprep.subr.mxu0 %v3317
        %v3319 = vsub.f32 %v401, %v401
        %v3320 = vand.u32 %v3319, 4294901760
        %v3321 = vsub.f32 %v3319, %v3320
        %v3322 = vand.u32 %v3321, 4294901760
        %3323 = vmatpush1.msra.mxu0 %v3322
        %3324 = vmatprep.subr.mxu0 0.0
        %3325 = vmatpush1.msra.mxu0 0.0
        %3326 = vmatprep.subr.mxu0 0.0
        %3327 = vmatpush1.msra.mxu0 0.0
        %3328 = vmatprep.subr.mxu0 0.0
        %3329 = vmatpush1.msra.mxu0 0.0
        %3330 = vmatprep.subr.mxu0 0.0
        %3331 = vmatpush1.msra.mxu0 0.0
        %3332 = vmatprep.subr.mxu0 0.0
        %3333 = vmatpush1.msra.mxu0 0.0
        %3334 = vmatprep.subr.mxu0 0.0
        %3335 = vmatpush1.msra.mxu0 0.0
        %3336 = vmatprep.subr.mxu0 0.0
        %3337 = vmatpush1.msra.mxu0 0.0
        %3338 = vmatprep.subr.mxu0 0.0
        %3339 = vmatpush1.msra.mxu0 0.0
        %3340 = vmatprep.subr.mxu0 0.0
        %3341 = vmatpush1.msra.mxu0 0.0
        %3342 = vmatprep.subr.mxu0 0.0
        %3343 = vmatpush1.msra.mxu0 0.0
        %3344 = vmatprep.subr.mxu0 0.0
        %3345 = vmatpush1.msra.mxu0 0.0
        %3346 = vmatprep.subr.mxu0 0.0
        %3347 = vmatpush1.msra.mxu0 0.0
        %3348 = vmatprep.subr.mxu0 0.0
        %3349 = vmatpush1.msra.mxu0 0.0
        %3350 = vmatprep.subr.mxu0 0.0
        %3351 = vmatpush1.msra.mxu0 0.0
        %3352 = vmatprep.subr.mxu0 0.0
        %3353 = vmatpush1.msra.mxu0 0.0
        %3354 = vmatprep.subr.mxu0 0.0
        %3355 = vmatpush1.msra.mxu0 0.0
        %3356 = vmatprep.subr.mxu0 0.0
        %3357 = vmatpush1.msra.mxu0 0.0
        %3358 = vmatprep.subr.mxu0 0.0
        %3359 = vmatpush1.msra.mxu0 0.0
        %3360 = vmatprep.subr.mxu0 0.0
        %3361 = vmatpush1.msra.mxu0 0.0
        %3362 = vmatprep.subr.mxu0 0.0
        %3363 = vmatpush1.msra.mxu0 0.0
        %3364 = vmatprep.subr.mxu0 0.0
        %3365 = vmatpush1.msra.mxu0 0.0
        %3366 = vmatprep.subr.mxu0 0.0
        %3367 = vmatpush1.msra.mxu0 0.0
        %3368 = vmatprep.subr.mxu0 0.0
        %3369 = vmatpush1.msra.mxu0 0.0
        %3370 = vmatprep.subr.mxu0 0.0
        %3371 = vmatpush1.msra.mxu0 0.0
        %3372 = vmatprep.subr.mxu0 0.0
        %3373 = vmatpush1.msra.mxu0 0.0
        %3374 = vmatprep.subr.mxu0 0.0
        %3375 = vmatpush1.msra.mxu0 0.0
        %3376 = vmatprep.subr.mxu0 0.0
        %3377 = vmatpush1.msra.mxu0 0.0
        %3378 = vmatprep.subr.mxu0 0.0
        %3379 = vmatpush1.msra.mxu0 0.0
        %3380 = vmatprep.subr.mxu0 0.0
        %3381 = vmatpush1.msra.mxu0 0.0
        %3382 = vmatprep.subr.mxu0 0.0
        %3383 = vmatpush1.msra.mxu0 0.0
        %3384 = vmatprep.mubr.f32.mxu0 0.0
        %v3385 = vand.u32 %v3226, 4294901760
        %3386 = vmatmul.mubr.f32.gmra.mrb[0].mxu0 %v3385
        %v3387 = vpop.f32.mrb[0].mxu0
        %v3388 = vadd.f32 %v3300, %v3387
        %v3389 = vpop.f32.mrb[0].mxu0
        %v3390 = vadd.f32 %v3302, %v3389
        %3391 = vdwg.mxu0
        %v3392 = vsub.f32 %v399, %v399
        %3393 = vmatprep.subr.mxu0 %v3392
        %v3394 = vsub.f32 %v398, %v398
        %3395 = vmatpush1.msra.mxu0 %v3394
        %v3396 = vsub.f32 %v402, %v402
        %3397 = vmatprep.subr.mxu0 %v3396
        %v3398 = vsub.f32 %v401, %v401
        %3399 = vmatpush1.msra.mxu0 %v3398
        %3400 = vmatprep.subr.mxu0 0.0
        %3401 = vmatpush1.msra.mxu0 0.0
        %3402 = vmatprep.subr.mxu0 0.0
        %3403 = vmatpush1.msra.mxu0 0.0
        %3404 = vmatprep.subr.mxu0 0.0
        %3405 = vmatpush1.msra.mxu0 0.0
        %3406 = vmatprep.subr.mxu0 0.0
        %3407 = vmatpush1.msra.mxu0 0.0
        %3408 = vmatprep.subr.mxu0 0.0
        %3409 = vmatpush1.msra.mxu0 0.0
        %3410 = vmatprep.subr.mxu0 0.0
        %3411 = vmatpush1.msra.mxu0 0.0
        %3412 = vmatprep.subr.mxu0 0.0
        %3413 = vmatpush1.msra.mxu0 0.0
        %3414 = vmatprep.subr.mxu0 0.0
        %3415 = vmatpush1.msra.mxu0 0.0
        %3416 = vmatprep.subr.mxu0 0.0
        %3417 = vmatpush1.msra.mxu0 0.0
        %3418 = vmatprep.subr.mxu0 0.0
        %3419 = vmatpush1.msra.mxu0 0.0
        %3420 = vmatprep.subr.mxu0 0.0
        %3421 = vmatpush1.msra.mxu0 0.0
        %3422 = vmatprep.subr.mxu0 0.0
        %3423 = vmatpush1.msra.mxu0 0.0
        %3424 = vmatprep.subr.mxu0 0.0
        %3425 = vmatpush1.msra.mxu0 0.0
        %3426 = vmatprep.subr.mxu0 0.0
        %3427 = vmatpush1.msra.mxu0 0.0
        %3428 = vmatprep.subr.mxu0 0.0
        %3429 = vmatpush1.msra.mxu0 0.0
        %3430 = vmatprep.subr.mxu0 0.0
        %3431 = vmatpush1.msra.mxu0 0.0
        %3432 = vmatprep.subr.mxu0 0.0
        %3433 = vmatpush1.msra.mxu0 0.0
        %3434 = vmatprep.subr.mxu0 0.0
        %3435 = vmatpush1.msra.mxu0 0.0
        %3436 = vmatprep.subr.mxu0 0.0
        %3437 = vmatpush1.msra.mxu0 0.0
        %3438 = vmatprep.subr.mxu0 0.0
        %3439 = vmatpush1.msra.mxu0 0.0
        %3440 = vmatprep.subr.mxu0 0.0
        %3441 = vmatpush1.msra.mxu0 0.0
        %3442 = vmatprep.subr.mxu0 0.0
        %3443 = vmatpush1.msra.mxu0 0.0
        %3444 = vmatprep.subr.mxu0 0.0
        %3445 = vmatpush1.msra.mxu0 0.0
        %3446 = vmatprep.subr.mxu0 0.0
        %3447 = vmatpush1.msra.mxu0 0.0
        %3448 = vmatprep.subr.mxu0 0.0
        %3449 = vmatpush1.msra.mxu0 0.0
        %3450 = vmatprep.subr.mxu0 0.0
        %3451 = vmatpush1.msra.mxu0 0.0
        %3452 = vmatprep.subr.mxu0 0.0
        %3453 = vmatpush1.msra.mxu0 0.0
        %3454 = vmatprep.subr.mxu0 0.0
        %3455 = vmatpush1.msra.mxu0 0.0
        %3456 = vmatprep.subr.mxu0 0.0
        %3457 = vmatpush1.msra.mxu0 0.0
        %3458 = vmatprep.subr.mxu0 0.0
        %3459 = vmatpush1.msra.mxu0 0.0
        %3460 = vmatprep.mubr.f32.mxu0 0.0
        %v3461 = vand.u32 %v3226, 4294901760
        %v3462 = vsub.f32 %v3226, %v3461
        %3463 = vmatmul.mubr.f32.gmra.mrb[0].mxu0 %v3462
        %v3464 = vpop.f32.mrb[0].mxu0
        %v3465 = vadd.f32 %v3388, %v3464
        %v3466 = vpop.f32.mrb[0].mxu0
        %v3467 = vadd.f32 %v3390, %v3466
        %3468 = vdwg.mxu0
        %3469 = vmatprep.subr.mxu0 %v399
        %3470 = vmatpush1.msra.mxu0 %v398
        %3471 = vmatprep.subr.mxu0 %v402
        %3472 = vmatpush1.msra.mxu0 %v401
        %3473 = vmatprep.subr.mxu0 0.0
        %3474 = vmatpush1.msra.mxu0 0.0
        %3475 = vmatprep.subr.mxu0 0.0
        %3476 = vmatpush1.msra.mxu0 0.0
        %3477 = vmatprep.subr.mxu0 0.0
        %3478 = vmatpush1.msra.mxu0 0.0
        %3479 = vmatprep.subr.mxu0 0.0
        %3480 = vmatpush1.msra.mxu0 0.0
        %3481 = vmatprep.subr.mxu0 0.0
        %3482 = vmatpush1.msra.mxu0 0.0
        %3483 = vmatprep.subr.mxu0 0.0
        %3484 = vmatpush1.msra.mxu0 0.0
        %3485 = vmatprep.subr.mxu0 0.0
        %3486 = vmatpush1.msra.mxu0 0.0
        %3487 = vmatprep.subr.mxu0 0.0
        %3488 = vmatpush1.msra.mxu0 0.0
        %3489 = vmatprep.subr.mxu0 0.0
        %3490 = vmatpush1.msra.mxu0 0.0
        %3491 = vmatprep.subr.mxu0 0.0
        %3492 = vmatpush1.msra.mxu0 0.0
        %3493 = vmatprep.subr.mxu0 0.0
        %3494 = vmatpush1.msra.mxu0 0.0
        %3495 = vmatprep.subr.mxu0 0.0
        %3496 = vmatpush1.msra.mxu0 0.0
        %3497 = vmatprep.subr.mxu0 0.0
        %3498 = vmatpush1.msra.mxu0 0.0
        %3499 = vmatprep.subr.mxu0 0.0
        %3500 = vmatpush1.msra.mxu0 0.0
        %3501 = vmatprep.subr.mxu0 0.0
        %3502 = vmatpush1.msra.mxu0 0.0
        %3503 = vmatprep.subr.mxu0 0.0
        %3504 = vmatpush1.msra.mxu0 0.0
        %3505 = vmatprep.subr.mxu0 0.0
        %3506 = vmatpush1.msra.mxu0 0.0
        %3507 = vmatprep.subr.mxu0 0.0
        %3508 = vmatpush1.msra.mxu0 0.0
        %3509 = vmatprep.subr.mxu0 0.0
        %3510 = vmatpush1.msra.mxu0 0.0
        %3511 = vmatprep.subr.mxu0 0.0
        %3512 = vmatpush1.msra.mxu0 0.0
        %3513 = vmatprep.subr.mxu0 0.0
        %3514 = vmatpush1.msra.mxu0 0.0
        %3515 = vmatprep.subr.mxu0 0.0
        %3516 = vmatpush1.msra.mxu0 0.0
        %3517 = vmatprep.subr.mxu0 0.0
        %3518 = vmatpush1.msra.mxu0 0.0
        %3519 = vmatprep.subr.mxu0 0.0
        %3520 = vmatpush1.msra.mxu0 0.0
        %3521 = vmatprep.subr.mxu0 0.0
        %3522 = vmatpush1.msra.mxu0 0.0
        %3523 = vmatprep.subr.mxu0 0.0
        %3524 = vmatpush1.msra.mxu0 0.0
        %3525 = vmatprep.subr.mxu0 0.0
        %3526 = vmatpush1.msra.mxu0 0.0
        %3527 = vmatprep.subr.mxu0 0.0
        %3528 = vmatpush1.msra.mxu0 0.0
        %3529 = vmatprep.subr.mxu0 0.0
        %3530 = vmatpush1.msra.mxu0 0.0
        %3531 = vmatprep.subr.mxu0 0.0
        %3532 = vmatpush1.msra.mxu0 0.0
        %3533 = vmatprep.mubr.f32.mxu0 0.0
        %v3534 = vand.u32 %v3226, 4294901760
        %v3535 = vsub.f32 %v3226, %v3534
        %v3536 = vand.u32 %v3535, 4294901760
        %3537 = vmatmul.mubr.f32.gmra.mrb[0].mxu0 %v3536
        %v3538 = vpop.f32.mrb[0].mxu0
        %v3539 = vadd.f32 %v3465, %v3538
        %v3540 = vpop.f32.mrb[0].mxu0
        %v3541 = vadd.f32 %v3467, %v3540
        %3542 = vdwg.mxu0
        %v3543 = vsub.f32 %v399, %v399
        %v3544 = vand.u32 %v3543, 4294901760
        %3545 = vmatprep.subr.mxu0 %v3544
        %v3546 = vsub.f32 %v398, %v398
        %v3547 = vand.u32 %v3546, 4294901760
        %3548 = vmatpush1.msra.mxu0 %v3547
        %v3549 = vsub.f32 %v402, %v402
        %v3550 = vand.u32 %v3549, 4294901760
        %3551 = vmatprep.subr.mxu0 %v3550
        %v3552 = vsub.f32 %v401, %v401
        %v3553 = vand.u32 %v3552, 4294901760
        %3554 = vmatpush1.msra.mxu0 %v3553
        %3555 = vmatprep.subr.mxu0 0.0
        %3556 = vmatpush1.msra.mxu0 0.0
        %3557 = vmatprep.subr.mxu0 0.0
        %3558 = vmatpush1.msra.mxu0 0.0
        %3559 = vmatprep.subr.mxu0 0.0
        %3560 = vmatpush1.msra.mxu0 0.0
        %3561 = vmatprep.subr.mxu0 0.0
        %3562 = vmatpush1.msra.mxu0 0.0
        %3563 = vmatprep.subr.mxu0 0.0
        %3564 = vmatpush1.msra.mxu0 0.0
        %3565 = vmatprep.subr.mxu0 0.0
        %3566 = vmatpush1.msra.mxu0 0.0
        %3567 = vmatprep.subr.mxu0 0.0
        %3568 = vmatpush1.msra.mxu0 0.0
        %3569 = vmatprep.subr.mxu0 0.0
        %3570 = vmatpush1.msra.mxu0 0.0
        %3571 = vmatprep.subr.mxu0 0.0
        %3572 = vmatpush1.msra.mxu0 0.0
        %3573 = vmatprep.subr.mxu0 0.0
        %3574 = vmatpush1.msra.mxu0 0.0
        %3575 = vmatprep.subr.mxu0 0.0
        %3576 = vmatpush1.msra.mxu0 0.0
        %3577 = vmatprep.subr.mxu0 0.0
        %3578 = vmatpush1.msra.mxu0 0.0
        %3579 = vmatprep.subr.mxu0 0.0
        %3580 = vmatpush1.msra.mxu0 0.0
        %3581 = vmatprep.subr.mxu0 0.0
        %3582 = vmatpush1.msra.mxu0 0.0
        %3583 = vmatprep.subr.mxu0 0.0
        %3584 = vmatpush1.msra.mxu0 0.0
        %3585 = vmatprep.subr.mxu0 0.0
        %3586 = vmatpush1.msra.mxu0 0.0
        %3587 = vmatprep.subr.mxu0 0.0
        %3588 = vmatpush1.msra.mxu0 0.0
        %3589 = vmatprep.subr.mxu0 0.0
        %3590 = vmatpush1.msra.mxu0 0.0
        %3591 = vmatprep.subr.mxu0 0.0
        %3592 = vmatpush1.msra.mxu0 0.0
        %3593 = vmatprep.subr.mxu0 0.0
        %3594 = vmatpush1.msra.mxu0 0.0
        %3595 = vmatprep.subr.mxu0 0.0
        %3596 = vmatpush1.msra.mxu0 0.0
        %3597 = vmatprep.subr.mxu0 0.0
        %3598 = vmatpush1.msra.mxu0 0.0
        %3599 = vmatprep.subr.mxu0 0.0
        %3600 = vmatpush1.msra.mxu0 0.0
        %3601 = vmatprep.subr.mxu0 0.0
        %3602 = vmatpush1.msra.mxu0 0.0
        %3603 = vmatprep.subr.mxu0 0.0
        %3604 = vmatpush1.msra.mxu0 0.0
        %3605 = vmatprep.subr.mxu0 0.0
        %3606 = vmatpush1.msra.mxu0 0.0
        %3607 = vmatprep.subr.mxu0 0.0
        %3608 = vmatpush1.msra.mxu0 0.0
        %3609 = vmatprep.subr.mxu0 0.0
        %3610 = vmatpush1.msra.mxu0 0.0
        %3611 = vmatprep.subr.mxu0 0.0
        %3612 = vmatpush1.msra.mxu0 0.0
        %3613 = vmatprep.subr.mxu0 0.0
        %3614 = vmatpush1.msra.mxu0 0.0
        %3615 = vmatprep.mubr.f32.mxu0 0.0
        %v3616 = vand.u32 %v3226, 4294901760
        %3617 = vmatmul.mubr.f32.gmra.mrb[0].mxu0 %v3616
        %v3618 = vpop.f32.mrb[0].mxu0
        %v3619 = vadd.f32 %v3539, %v3618
        %v3620 = vpop.f32.mrb[0].mxu0
        %v3621 = vadd.f32 %v3541, %v3620
        %3622 = vdwg.mxu0
        %3623 = vmatprep.subr.mxu0 %v399
        %3624 = vmatpush1.msra.mxu0 %v398
        %3625 = vmatprep.subr.mxu0 %v402
        %3626 = vmatpush1.msra.mxu0 %v401
        %3627 = vmatprep.subr.mxu0 0.0
        %3628 = vmatpush1.msra.mxu0 0.0
        %3629 = vmatprep.subr.mxu0 0.0
        %3630 = vmatpush1.msra.mxu0 0.0
        %3631 = vmatprep.subr.mxu0 0.0
        %3632 = vmatpush1.msra.mxu0 0.0
        %3633 = vmatprep.subr.mxu0 0.0
        %3634 = vmatpush1.msra.mxu0 0.0
        %3635 = vmatprep.subr.mxu0 0.0
        %3636 = vmatpush1.msra.mxu0 0.0
        %3637 = vmatprep.subr.mxu0 0.0
        %3638 = vmatpush1.msra.mxu0 0.0
        %3639 = vmatprep.subr.mxu0 0.0
        %3640 = vmatpush1.msra.mxu0 0.0
        %3641 = vmatprep.subr.mxu0 0.0
        %3642 = vmatpush1.msra.mxu0 0.0
        %3643 = vmatprep.subr.mxu0 0.0
        %3644 = vmatpush1.msra.mxu0 0.0
        %3645 = vmatprep.subr.mxu0 0.0
        %3646 = vmatpush1.msra.mxu0 0.0
        %3647 = vmatprep.subr.mxu0 0.0
        %3648 = vmatpush1.msra.mxu0 0.0
        %3649 = vmatprep.subr.mxu0 0.0
        %3650 = vmatpush1.msra.mxu0 0.0
        %3651 = vmatprep.subr.mxu0 0.0
        %3652 = vmatpush1.msra.mxu0 0.0
        %3653 = vmatprep.subr.mxu0 0.0
        %3654 = vmatpush1.msra.mxu0 0.0
        %3655 = vmatprep.subr.mxu0 0.0
        %3656 = vmatpush1.msra.mxu0 0.0
        %3657 = vmatprep.subr.mxu0 0.0
        %3658 = vmatpush1.msra.mxu0 0.0
        %3659 = vmatprep.subr.mxu0 0.0
        %3660 = vmatpush1.msra.mxu0 0.0
        %3661 = vmatprep.subr.mxu0 0.0
        %3662 = vmatpush1.msra.mxu0 0.0
        %3663 = vmatprep.subr.mxu0 0.0
        %3664 = vmatpush1.msra.mxu0 0.0
        %3665 = vmatprep.subr.mxu0 0.0
        %3666 = vmatpush1.msra.mxu0 0.0
        %3667 = vmatprep.subr.mxu0 0.0
        %3668 = vmatpush1.msra.mxu0 0.0
        %3669 = vmatprep.subr.mxu0 0.0
        %3670 = vmatpush1.msra.mxu0 0.0
        %3671 = vmatprep.subr.mxu0 0.0
        %3672 = vmatpush1.msra.mxu0 0.0
        %3673 = vmatprep.subr.mxu0 0.0
        %3674 = vmatpush1.msra.mxu0 0.0
        %3675 = vmatprep.subr.mxu0 0.0
        %3676 = vmatpush1.msra.mxu0 0.0
        %3677 = vmatprep.subr.mxu0 0.0
        %3678 = vmatpush1.msra.mxu0 0.0
        %3679 = vmatprep.subr.mxu0 0.0
        %3680 = vmatpush1.msra.mxu0 0.0
        %3681 = vmatprep.subr.mxu0 0.0
        %3682 = vmatpush1.msra.mxu0 0.0
        %3683 = vmatprep.subr.mxu0 0.0
        %3684 = vmatpush1.msra.mxu0 0.0
        %3685 = vmatprep.subr.mxu0 0.0
        %3686 = vmatpush1.msra.mxu0 0.0
        %3687 = vmatprep.mubr.f32.mxu0 0.0
        %v3688 = vand.u32 %v3226, 4294901760
        %3689 = vmatmul.mubr.f32.gmra.mrb[0].mxu0 %v3688
        %v3690 = vpop.f32.mrb[0].mxu0
        %v3691 = vadd.f32 %v3619, %v3690
        %v3692 = vpop.f32.mrb[0].mxu0
        %v3693 = vadd.f32 %v3621, %v3692
        %3694 = vdwg.mxu0
        %3695 = vmatprep.subr.mxu0 0.0
        %3696 = vmatpush1.msra.mxu0 %v400
        %3697 = vmatprep.subr.mxu0 0.0
        %3698 = vmatpush1.msra.mxu0 %v403
        %3699 = vmatprep.subr.mxu0 0.0
        %3700 = vmatpush1.msra.mxu0 0.0
        %3701 = vmatprep.subr.mxu0 0.0
        %3702 = vmatpush1.msra.mxu0 0.0
        %3703 = vmatprep.subr.mxu0 0.0
        %3704 = vmatpush1.msra.mxu0 0.0
        %3705 = vmatprep.subr.mxu0 0.0
        %3706 = vmatpush1.msra.mxu0 0.0
        %3707 = vmatprep.subr.mxu0 0.0
        %3708 = vmatpush1.msra.mxu0 0.0
        %3709 = vmatprep.subr.mxu0 0.0
        %3710 = vmatpush1.msra.mxu0 0.0
        %3711 = vmatprep.subr.mxu0 0.0
        %3712 = vmatpush1.msra.mxu0 0.0
        %3713 = vmatprep.subr.mxu0 0.0
        %3714 = vmatpush1.msra.mxu0 0.0
        %3715 = vmatprep.subr.mxu0 0.0
        %3716 = vmatpush1.msra.mxu0 0.0
        %3717 = vmatprep.subr.mxu0 0.0
        %3718 = vmatpush1.msra.mxu0 0.0
        %3719 = vmatprep.subr.mxu0 0.0
        %3720 = vmatpush1.msra.mxu0 0.0
        %3721 = vmatprep.subr.mxu0 0.0
        %3722 = vmatpush1.msra.mxu0 0.0
        %3723 = vmatprep.subr.mxu0 0.0
        %3724 = vmatpush1.msra.mxu0 0.0
        %3725 = vmatprep.subr.mxu0 0.0
        %3726 = vmatpush1.msra.mxu0 0.0
        %3727 = vmatprep.subr.mxu0 0.0
        %3728 = vmatpush1.msra.mxu0 0.0
        %3729 = vmatprep.subr.mxu0 0.0
        %3730 = vmatpush1.msra.mxu0 0.0
        %3731 = vmatprep.subr.mxu0 0.0
        %3732 = vmatpush1.msra.mxu0 0.0
        %3733 = vmatprep.subr.mxu0 0.0
        %3734 = vmatpush1.msra.mxu0 0.0
        %3735 = vmatprep.subr.mxu0 0.0
        %3736 = vmatpush1.msra.mxu0 0.0
        %3737 = vmatprep.subr.mxu0 0.0
        %3738 = vmatpush1.msra.mxu0 0.0
        %3739 = vmatprep.subr.mxu0 0.0
        %3740 = vmatpush1.msra.mxu0 0.0
        %3741 = vmatprep.subr.mxu0 0.0
        %3742 = vmatpush1.msra.mxu0 0.0
        %3743 = vmatprep.subr.mxu0 0.0
        %3744 = vmatpush1.msra.mxu0 0.0
        %3745 = vmatprep.subr.mxu0 0.0
        %3746 = vmatpush1.msra.mxu0 0.0
        %3747 = vmatprep.subr.mxu0 0.0
        %3748 = vmatpush1.msra.mxu0 0.0
        %3749 = vmatprep.subr.mxu0 0.0
        %3750 = vmatpush1.msra.mxu0 0.0
        %3751 = vmatprep.subr.mxu0 0.0
        %3752 = vmatpush1.msra.mxu0 0.0
        %3753 = vmatprep.subr.mxu0 0.0
        %3754 = vmatpush1.msra.mxu0 0.0
        %3755 = vmatprep.subr.mxu0 0.0
        %3756 = vmatpush1.msra.mxu0 0.0
        %3757 = vmatprep.subr.mxu0 0.0
        %3758 = vmatpush1.msra.mxu0 0.0
        %3759 = vmatprep.mubr.f32.mxu0 0.0
        %v3760 = vand.u32 %v3226, 4294901760
        %v3761 = vsub.f32 %v3226, %v3760
        %v3762 = vand.u32 %v3761, 4294901760
        %v3763 = vsub.f32 %v3761, %v3762
        %v3764 = vand.u32 %v3763, 4294901760
        %3765 = vmatmul.mubr.f32.gmra.mrb[0].mxu0 %v3764
        %v3766 = vpop.f32.mrb[0].mxu0
        %v3767 = vadd.f32 0.0, %v3766
        %v3768 = vpop.f32.mrb[0].mxu0
        %3769 = vdwg.mxu0
        %3770 = vmatprep.subr.mxu0 0.0
        %v3771 = vsub.f32 %v400, %v400
        %v3772 = vand.u32 %v3771, 4294901760
        %v3773 = vsub.f32 %v3771, %v3772
        %v3774 = vand.u32 %v3773, 4294901760
        %3775 = vmatpush1.msra.mxu0 %v3774
        %3776 = vmatprep.subr.mxu0 0.0
        %v3777 = vsub.f32 %v403, %v403
        %v3778 = vand.u32 %v3777, 4294901760
        %v3779 = vsub.f32 %v3777, %v3778
        %v3780 = vand.u32 %v3779, 4294901760
        %3781 = vmatpush1.msra.mxu0 %v3780
        %3782 = vmatprep.subr.mxu0 0.0
        %3783 = vmatpush1.msra.mxu0 0.0
        %3784 = vmatprep.subr.mxu0 0.0
        %3785 = vmatpush1.msra.mxu0 0.0
        %3786 = vmatprep.subr.mxu0 0.0
        %3787 = vmatpush1.msra.mxu0 0.0
        %3788 = vmatprep.subr.mxu0 0.0
        %3789 = vmatpush1.msra.mxu0 0.0
        %3790 = vmatprep.subr.mxu0 0.0
        %3791 = vmatpush1.msra.mxu0 0.0
        %3792 = vmatprep.subr.mxu0 0.0
        %3793 = vmatpush1.msra.mxu0 0.0
        %3794 = vmatprep.subr.mxu0 0.0
        %3795 = vmatpush1.msra.mxu0 0.0
        %3796 = vmatprep.subr.mxu0 0.0
        %3797 = vmatpush1.msra.mxu0 0.0
        %3798 = vmatprep.subr.mxu0 0.0
        %3799 = vmatpush1.msra.mxu0 0.0
        %3800 = vmatprep.subr.mxu0 0.0
        %3801 = vmatpush1.msra.mxu0 0.0
        %3802 = vmatprep.subr.mxu0 0.0
        %3803 = vmatpush1.msra.mxu0 0.0
        %3804 = vmatprep.subr.mxu0 0.0
        %3805 = vmatpush1.msra.mxu0 0.0
        %3806 = vmatprep.subr.mxu0 0.0
        %3807 = vmatpush1.msra.mxu0 0.0
        %3808 = vmatprep.subr.mxu0 0.0
        %3809 = vmatpush1.msra.mxu0 0.0
        %3810 = vmatprep.subr.mxu0 0.0
        %3811 = vmatpush1.msra.mxu0 0.0
        %3812 = vmatprep.subr.mxu0 0.0
        %3813 = vmatpush1.msra.mxu0 0.0
        %3814 = vmatprep.subr.mxu0 0.0
        %3815 = vmatpush1.msra.mxu0 0.0
        %3816 = vmatprep.subr.mxu0 0.0
        %3817 = vmatpush1.msra.mxu0 0.0
        %3818 = vmatprep.subr.mxu0 0.0
        %3819 = vmatpush1.msra.mxu0 0.0
        %3820 = vmatprep.subr.mxu0 0.0
        %3821 = vmatpush1.msra.mxu0 0.0
        %3822 = vmatprep.subr.mxu0 0.0
        %3823 = vmatpush1.msra.mxu0 0.0
        %3824 = vmatprep.subr.mxu0 0.0
        %3825 = vmatpush1.msra.mxu0 0.0
        %3826 = vmatprep.subr.mxu0 0.0
        %3827 = vmatpush1.msra.mxu0 0.0
        %3828 = vmatprep.subr.mxu0 0.0
        %3829 = vmatpush1.msra.mxu0 0.0
        %3830 = vmatprep.subr.mxu0 0.0
        %3831 = vmatpush1.msra.mxu0 0.0
        %3832 = vmatprep.subr.mxu0 0.0
        %3833 = vmatpush1.msra.mxu0 0.0
        %3834 = vmatprep.subr.mxu0 0.0
        %3835 = vmatpush1.msra.mxu0 0.0
        %3836 = vmatprep.subr.mxu0 0.0
        %3837 = vmatpush1.msra.mxu0 0.0
        %3838 = vmatprep.subr.mxu0 0.0
        %3839 = vmatpush1.msra.mxu0 0.0
        %3840 = vmatprep.subr.mxu0 0.0
        %3841 = vmatpush1.msra.mxu0 0.0
        %3842 = vmatprep.mubr.f32.mxu0 0.0
        %v3843 = vand.u32 %v3226, 4294901760
        %3844 = vmatmul.mubr.f32.gmra.mrb[0].mxu0 %v3843
        %v3845 = vpop.f32.mrb[0].mxu0
        %v3846 = vadd.f32 %v3767, %v3845
        %v3847 = vpop.f32.mrb[0].mxu0
        %3848 = vdwg.mxu0
        %3849 = vmatprep.subr.mxu0 0.0
        %v3850 = vsub.f32 %v400, %v400
        %3851 = vmatpush1.msra.mxu0 %v3850
        %3852 = vmatprep.subr.mxu0 0.0
        %v3853 = vsub.f32 %v403, %v403
        %3854 = vmatpush1.msra.mxu0 %v3853
        %3855 = vmatprep.subr.mxu0 0.0
        %3856 = vmatpush1.msra.mxu0 0.0
        %3857 = vmatprep.subr.mxu0 0.0
        %3858 = vmatpush1.msra.mxu0 0.0
        %3859 = vmatprep.subr.mxu0 0.0
        %3860 = vmatpush1.msra.mxu0 0.0
        %3861 = vmatprep.subr.mxu0 0.0
        %3862 = vmatpush1.msra.mxu0 0.0
        %3863 = vmatprep.subr.mxu0 0.0
        %3864 = vmatpush1.msra.mxu0 0.0
        %3865 = vmatprep.subr.mxu0 0.0
        %3866 = vmatpush1.msra.mxu0 0.0
        %3867 = vmatprep.subr.mxu0 0.0
        %3868 = vmatpush1.msra.mxu0 0.0
        %3869 = vmatprep.subr.mxu0 0.0
        %3870 = vmatpush1.msra.mxu0 0.0
        %3871 = vmatprep.subr.mxu0 0.0
        %3872 = vmatpush1.msra.mxu0 0.0
        %3873 = vmatprep.subr.mxu0 0.0
        %3874 = vmatpush1.msra.mxu0 0.0
        %3875 = vmatprep.subr.mxu0 0.0
        %3876 = vmatpush1.msra.mxu0 0.0
        %3877 = vmatprep.subr.mxu0 0.0
        %3878 = vmatpush1.msra.mxu0 0.0
        %3879 = vmatprep.subr.mxu0 0.0
        %3880 = vmatpush1.msra.mxu0 0.0
        %3881 = vmatprep.subr.mxu0 0.0
        %3882 = vmatpush1.msra.mxu0 0.0
        %3883 = vmatprep.subr.mxu0 0.0
        %3884 = vmatpush1.msra.mxu0 0.0
        %3885 = vmatprep.subr.mxu0 0.0
        %3886 = vmatpush1.msra.mxu0 0.0
        %3887 = vmatprep.subr.mxu0 0.0
        %3888 = vmatpush1.msra.mxu0 0.0
        %3889 = vmatprep.subr.mxu0 0.0
        %3890 = vmatpush1.msra.mxu0 0.0
        %3891 = vmatprep.subr.mxu0 0.0
        %3892 = vmatpush1.msra.mxu0 0.0
        %3893 = vmatprep.subr.mxu0 0.0
        %3894 = vmatpush1.msra.mxu0 0.0
        %3895 = vmatprep.subr.mxu0 0.0
        %3896 = vmatpush1.msra.mxu0 0.0
        %3897 = vmatprep.subr.mxu0 0.0
        %3898 = vmatpush1.msra.mxu0 0.0
        %3899 = vmatprep.subr.mxu0 0.0
        %3900 = vmatpush1.msra.mxu0 0.0
        %3901 = vmatprep.subr.mxu0 0.0
        %3902 = vmatpush1.msra.mxu0 0.0
        %3903 = vmatprep.subr.mxu0 0.0
        %3904 = vmatpush1.msra.mxu0 0.0
        %3905 = vmatprep.subr.mxu0 0.0
        %3906 = vmatpush1.msra.mxu0 0.0
        %3907 = vmatprep.subr.mxu0 0.0
        %3908 = vmatpush1.msra.mxu0 0.0
        %3909 = vmatprep.subr.mxu0 0.0
        %3910 = vmatpush1.msra.mxu0 0.0
        %3911 = vmatprep.subr.mxu0 0.0
        %3912 = vmatpush1.msra.mxu0 0.0
        %3913 = vmatprep.subr.mxu0 0.0
        %3914 = vmatpush1.msra.mxu0 0.0
        %3915 = vmatprep.mubr.f32.mxu0 0.0
        %v3916 = vand.u32 %v3226, 4294901760
        %v3917 = vsub.f32 %v3226, %v3916
        %3918 = vmatmul.mubr.f32.gmra.mrb[0].mxu0 %v3917
        %v3919 = vpop.f32.mrb[0].mxu0
        %v3920 = vadd.f32 %v3846, %v3919
        %v3921 = vpop.f32.mrb[0].mxu0
        %3922 = vdwg.mxu0
        %3923 = vmatprep.subr.mxu0 0.0
        %3924 = vmatpush1.msra.mxu0 %v400
        %3925 = vmatprep.subr.mxu0 0.0
        %3926 = vmatpush1.msra.mxu0 %v403
        %3927 = vmatprep.subr.mxu0 0.0
        %3928 = vmatpush1.msra.mxu0 0.0
        %3929 = vmatprep.subr.mxu0 0.0
        %3930 = vmatpush1.msra.mxu0 0.0
        %3931 = vmatprep.subr.mxu0 0.0
        %3932 = vmatpush1.msra.mxu0 0.0
        %3933 = vmatprep.subr.mxu0 0.0
        %3934 = vmatpush1.msra.mxu0 0.0
        %3935 = vmatprep.subr.mxu0 0.0
        %3936 = vmatpush1.msra.mxu0 0.0
        %3937 = vmatprep.subr.mxu0 0.0
        %3938 = vmatpush1.msra.mxu0 0.0
        %3939 = vmatprep.subr.mxu0 0.0
        %3940 = vmatpush1.msra.mxu0 0.0
        %3941 = vmatprep.subr.mxu0 0.0
        %3942 = vmatpush1.msra.mxu0 0.0
        %3943 = vmatprep.subr.mxu0 0.0
        %3944 = vmatpush1.msra.mxu0 0.0
        %3945 = vmatprep.subr.mxu0 0.0
        %3946 = vmatpush1.msra.mxu0 0.0
        %3947 = vmatprep.subr.mxu0 0.0
        %3948 = vmatpush1.msra.mxu0 0.0
        %3949 = vmatprep.subr.mxu0 0.0
        %3950 = vmatpush1.msra.mxu0 0.0
        %3951 = vmatprep.subr.mxu0 0.0
        %3952 = vmatpush1.msra.mxu0 0.0
        %3953 = vmatprep.subr.mxu0 0.0
        %3954 = vmatpush1.msra.mxu0 0.0
        %3955 = vmatprep.subr.mxu0 0.0
        %3956 = vmatpush1.msra.mxu0 0.0
        %3957 = vmatprep.subr.mxu0 0.0
        %3958 = vmatpush1.msra.mxu0 0.0
        %3959 = vmatprep.subr.mxu0 0.0
        %3960 = vmatpush1.msra.mxu0 0.0
        %3961 = vmatprep.subr.mxu0 0.0
        %3962 = vmatpush1.msra.mxu0 0.0
        %3963 = vmatprep.subr.mxu0 0.0
        %3964 = vmatpush1.msra.mxu0 0.0
        %3965 = vmatprep.subr.mxu0 0.0
        %3966 = vmatpush1.msra.mxu0 0.0
        %3967 = vmatprep.subr.mxu0 0.0
        %3968 = vmatpush1.msra.mxu0 0.0
        %3969 = vmatprep.subr.mxu0 0.0
        %3970 = vmatpush1.msra.mxu0 0.0
        %3971 = vmatprep.subr.mxu0 0.0
        %3972 = vmatpush1.msra.mxu0 0.0
        %3973 = vmatprep.subr.mxu0 0.0
        %3974 = vmatpush1.msra.mxu0 0.0
        %3975 = vmatprep.subr.mxu0 0.0
        %3976 = vmatpush1.msra.mxu0 0.0
        %3977 = vmatprep.subr.mxu0 0.0
        %3978 = vmatpush1.msra.mxu0 0.0
        %3979 = vmatprep.subr.mxu0 0.0
        %3980 = vmatpush1.msra.mxu0 0.0
        %3981 = vmatprep.subr.mxu0 0.0
        %3982 = vmatpush1.msra.mxu0 0.0
        %3983 = vmatprep.subr.mxu0 0.0
        %3984 = vmatpush1.msra.mxu0 0.0
        %3985 = vmatprep.subr.mxu0 0.0
        %3986 = vmatpush1.msra.mxu0 0.0
        %3987 = vmatprep.mubr.f32.mxu0 0.0
        %v3988 = vand.u32 %v3226, 4294901760
        %v3989 = vsub.f32 %v3226, %v3988
        %v3990 = vand.u32 %v3989, 4294901760
        %3991 = vmatmul.mubr.f32.gmra.mrb[0].mxu0 %v3990
        %v3992 = vpop.f32.mrb[0].mxu0
        %v3993 = vadd.f32 %v3920, %v3992
        %v3994 = vpop.f32.mrb[0].mxu0
        %3995 = vdwg.mxu0
        %3996 = vmatprep.subr.mxu0 0.0
        %v3997 = vsub.f32 %v400, %v400
        %v3998 = vand.u32 %v3997, 4294901760
        %3999 = vmatpush1.msra.mxu0 %v3998
        %4000 = vmatprep.subr.mxu0 0.0
        %v4001 = vsub.f32 %v403, %v403
        %v4002 = vand.u32 %v4001, 4294901760
        %4003 = vmatpush1.msra.mxu0 %v4002
        %4004 = vmatprep.subr.mxu0 0.0
        %4005 = vmatpush1.msra.mxu0 0.0
        %4006 = vmatprep.subr.mxu0 0.0
        %4007 = vmatpush1.msra.mxu0 0.0
        %4008 = vmatprep.subr.mxu0 0.0
        %4009 = vmatpush1.msra.mxu0 0.0
        %4010 = vmatprep.subr.mxu0 0.0
        %4011 = vmatpush1.msra.mxu0 0.0
        %4012 = vmatprep.subr.mxu0 0.0
        %4013 = vmatpush1.msra.mxu0 0.0
        %4014 = vmatprep.subr.mxu0 0.0
        %4015 = vmatpush1.msra.mxu0 0.0
        %4016 = vmatprep.subr.mxu0 0.0
        %4017 = vmatpush1.msra.mxu0 0.0
        %4018 = vmatprep.subr.mxu0 0.0
        %4019 = vmatpush1.msra.mxu0 0.0
        %4020 = vmatprep.subr.mxu0 0.0
        %4021 = vmatpush1.msra.mxu0 0.0
        %4022 = vmatprep.subr.mxu0 0.0
        %4023 = vmatpush1.msra.mxu0 0.0
        %4024 = vmatprep.subr.mxu0 0.0
        %4025 = vmatpush1.msra.mxu0 0.0
        %4026 = vmatprep.subr.mxu0 0.0
        %4027 = vmatpush1.msra.mxu0 0.0
        %4028 = vmatprep.subr.mxu0 0.0
        %4029 = vmatpush1.msra.mxu0 0.0
        %4030 = vmatprep.subr.mxu0 0.0
        %4031 = vmatpush1.msra.mxu0 0.0
        %4032 = vmatprep.subr.mxu0 0.0
        %4033 = vmatpush1.msra.mxu0 0.0
        %4034 = vmatprep.subr.mxu0 0.0
        %4035 = vmatpush1.msra.mxu0 0.0
        %4036 = vmatprep.subr.mxu0 0.0
        %4037 = vmatpush1.msra.mxu0 0.0
        %4038 = vmatprep.subr.mxu0 0.0
        %4039 = vmatpush1.msra.mxu0 0.0
        %4040 = vmatprep.subr.mxu0 0.0
        %4041 = vmatpush1.msra.mxu0 0.0
        %4042 = vmatprep.subr.mxu0 0.0
        %4043 = vmatpush1.msra.mxu0 0.0
        %4044 = vmatprep.subr.mxu0 0.0
        %4045 = vmatpush1.msra.mxu0 0.0
        %4046 = vmatprep.subr.mxu0 0.0
        %4047 = vmatpush1.msra.mxu0 0.0
        %4048 = vmatprep.subr.mxu0 0.0
        %4049 = vmatpush1.msra.mxu0 0.0
        %4050 = vmatprep.subr.mxu0 0.0
        %4051 = vmatpush1.msra.mxu0 0.0
        %4052 = vmatprep.subr.mxu0 0.0
        %4053 = vmatpush1.msra.mxu0 0.0
        %4054 = vmatprep.subr.mxu0 0.0
        %4055 = vmatpush1.msra.mxu0 0.0
        %4056 = vmatprep.subr.mxu0 0.0
        %4057 = vmatpush1.msra.mxu0 0.0
        %4058 = vmatprep.subr.mxu0 0.0
        %4059 = vmatpush1.msra.mxu0 0.0
        %4060 = vmatprep.subr.mxu0 0.0
        %4061 = vmatpush1.msra.mxu0 0.0
        %4062 = vmatprep.subr.mxu0 0.0
        %4063 = vmatpush1.msra.mxu0 0.0
        %4064 = vmatprep.mubr.f32.mxu0 0.0
        %v4065 = vand.u32 %v3226, 4294901760
        %4066 = vmatmul.mubr.f32.gmra.mrb[0].mxu0 %v4065
        %v4067 = vpop.f32.mrb[0].mxu0
        %v4068 = vadd.f32 %v3993, %v4067
        %v4069 = vpop.f32.mrb[0].mxu0
        %4070 = vdwg.mxu0
        %4071 = vmatprep.subr.mxu0 0.0
        %4072 = vmatpush1.msra.mxu0 %v400
        %4073 = vmatprep.subr.mxu0 0.0
        %4074 = vmatpush1.msra.mxu0 %v403
        %4075 = vmatprep.subr.mxu0 0.0
        %4076 = vmatpush1.msra.mxu0 0.0
        %4077 = vmatprep.subr.mxu0 0.0
        %4078 = vmatpush1.msra.mxu0 0.0
        %4079 = vmatprep.subr.mxu0 0.0
        %4080 = vmatpush1.msra.mxu0 0.0
        %4081 = vmatprep.subr.mxu0 0.0
        %4082 = vmatpush1.msra.mxu0 0.0
        %4083 = vmatprep.subr.mxu0 0.0
        %4084 = vmatpush1.msra.mxu0 0.0
        %4085 = vmatprep.subr.mxu0 0.0
        %4086 = vmatpush1.msra.mxu0 0.0
        %4087 = vmatprep.subr.mxu0 0.0
        %4088 = vmatpush1.msra.mxu0 0.0
        %4089 = vmatprep.subr.mxu0 0.0
        %4090 = vmatpush1.msra.mxu0 0.0
        %4091 = vmatprep.subr.mxu0 0.0
        %4092 = vmatpush1.msra.mxu0 0.0
        %4093 = vmatprep.subr.mxu0 0.0
        %4094 = vmatpush1.msra.mxu0 0.0
        %4095 = vmatprep.subr.mxu0 0.0
        %4096 = vmatpush1.msra.mxu0 0.0
        %4097 = vmatprep.subr.mxu0 0.0
        %4098 = vmatpush1.msra.mxu0 0.0
        %4099 = vmatprep.subr.mxu0 0.0
        %4100 = vmatpush1.msra.mxu0 0.0
        %4101 = vmatprep.subr.mxu0 0.0
        %4102 = vmatpush1.msra.mxu0 0.0
        %4103 = vmatprep.subr.mxu0 0.0
        %4104 = vmatpush1.msra.mxu0 0.0
        %4105 = vmatprep.subr.mxu0 0.0
        %4106 = vmatpush1.msra.mxu0 0.0
        %4107 = vmatprep.subr.mxu0 0.0
        %4108 = vmatpush1.msra.mxu0 0.0
        %4109 = vmatprep.subr.mxu0 0.0
        %4110 = vmatpush1.msra.mxu0 0.0
        %4111 = vmatprep.subr.mxu0 0.0
        %4112 = vmatpush1.msra.mxu0 0.0
        %4113 = vmatprep.subr.mxu0 0.0
        %4114 = vmatpush1.msra.mxu0 0.0
        %4115 = vmatprep.subr.mxu0 0.0
        %4116 = vmatpush1.msra.mxu0 0.0
        %4117 = vmatprep.subr.mxu0 0.0
        %4118 = vmatpush1.msra.mxu0 0.0
        %4119 = vmatprep.subr.mxu0 0.0
        %4120 = vmatpush1.msra.mxu0 0.0
        %4121 = vmatprep.subr.mxu0 0.0
        %4122 = vmatpush1.msra.mxu0 0.0
        %4123 = vmatprep.subr.mxu0 0.0
        %4124 = vmatpush1.msra.mxu0 0.0
        %4125 = vmatprep.subr.mxu0 0.0
        %4126 = vmatpush1.msra.mxu0 0.0
        %4127 = vmatprep.subr.mxu0 0.0
        %4128 = vmatpush1.msra.mxu0 0.0
        %4129 = vmatprep.subr.mxu0 0.0
        %4130 = vmatpush1.msra.mxu0 0.0
        %4131 = vmatprep.subr.mxu0 0.0
        %4132 = vmatpush1.msra.mxu0 0.0
        %4133 = vmatprep.subr.mxu0 0.0
        %4134 = vmatpush1.msra.mxu0 0.0
        %4135 = vmatprep.mubr.f32.mxu0 0.0
        %v4136 = vand.u32 %v3226, 4294901760
        %4137 = vmatmul.mubr.f32.gmra.mrb[0].mxu0 %v4136
        %v4138 = vpop.f32.mrb[0].mxu0
        %v4139 = vadd.f32 %v4068, %v4138
        %v4140 = vpop.f32.mrb[0].mxu0
        %4141 = vdwg.mxu0
        %v4142 = vsel %vm342, %v459, 0
        %4144 = vmatprep.subr.mxu0 %v405
        %4145 = vmatpush1.msra.mxu0 %v404
        %4146 = vmatprep.subr.mxu0 %v408
        %4147 = vmatpush1.msra.mxu0 %v407
        %4148 = vmatprep.subr.mxu0 0.0
        %4149 = vmatpush1.msra.mxu0 0.0
        %4150 = vmatprep.subr.mxu0 0.0
        %4151 = vmatpush1.msra.mxu0 0.0
        %4152 = vmatprep.subr.mxu0 0.0
        %4153 = vmatpush1.msra.mxu0 0.0
        %4154 = vmatprep.subr.mxu0 0.0
        %4155 = vmatpush1.msra.mxu0 0.0
        %4156 = vmatprep.subr.mxu0 0.0
        %4157 = vmatpush1.msra.mxu0 0.0
        %4158 = vmatprep.subr.mxu0 0.0
        %4159 = vmatpush1.msra.mxu0 0.0
        %4160 = vmatprep.subr.mxu0 0.0
        %4161 = vmatpush1.msra.mxu0 0.0
        %4162 = vmatprep.subr.mxu0 0.0
        %4163 = vmatpush1.msra.mxu0 0.0
        %4164 = vmatprep.subr.mxu0 0.0
        %4165 = vmatpush1.msra.mxu0 0.0
        %4166 = vmatprep.subr.mxu0 0.0
        %4167 = vmatpush1.msra.mxu0 0.0
        %4168 = vmatprep.subr.mxu0 0.0
        %4169 = vmatpush1.msra.mxu0 0.0
        %4170 = vmatprep.subr.mxu0 0.0
        %4171 = vmatpush1.msra.mxu0 0.0
        %4172 = vmatprep.subr.mxu0 0.0
        %4173 = vmatpush1.msra.mxu0 0.0
        %4174 = vmatprep.subr.mxu0 0.0
        %4175 = vmatpush1.msra.mxu0 0.0
        %4176 = vmatprep.subr.mxu0 0.0
        %4177 = vmatpush1.msra.mxu0 0.0
        %4178 = vmatprep.subr.mxu0 0.0
        %4179 = vmatpush1.msra.mxu0 0.0
        %4180 = vmatprep.subr.mxu0 0.0
        %4181 = vmatpush1.msra.mxu0 0.0
        %4182 = vmatprep.subr.mxu0 0.0
        %4183 = vmatpush1.msra.mxu0 0.0
        %4184 = vmatprep.subr.mxu0 0.0
        %4185 = vmatpush1.msra.mxu0 0.0
        %4186 = vmatprep.subr.mxu0 0.0
        %4187 = vmatpush1.msra.mxu0 0.0
        %4188 = vmatprep.subr.mxu0 0.0
        %4189 = vmatpush1.msra.mxu0 0.0
        %4190 = vmatprep.subr.mxu0 0.0
        %4191 = vmatpush1.msra.mxu0 0.0
        %4192 = vmatprep.subr.mxu0 0.0
        %4193 = vmatpush1.msra.mxu0 0.0
        %4194 = vmatprep.subr.mxu0 0.0
        %4195 = vmatpush1.msra.mxu0 0.0
        %4196 = vmatprep.subr.mxu0 0.0
        %4197 = vmatpush1.msra.mxu0 0.0
        %4198 = vmatprep.subr.mxu0 0.0
        %4199 = vmatpush1.msra.mxu0 0.0
        %4200 = vmatprep.subr.mxu0 0.0
        %4201 = vmatpush1.msra.mxu0 0.0
        %4202 = vmatprep.subr.mxu0 0.0
        %4203 = vmatpush1.msra.mxu0 0.0
        %4204 = vmatprep.subr.mxu0 0.0
        %4205 = vmatpush1.msra.mxu0 0.0
        %4206 = vmatprep.subr.mxu0 0.0
        %4207 = vmatpush1.msra.mxu0 0.0
        %4208 = vmatprep.mubr.f32.mxu0 0.0
        %v4209 = vand.u32 %v4142, 4294901760
        %v4210 = vsub.f32 %v4142, %v4209
        %v4211 = vand.u32 %v4210, 4294901760
        %v4212 = vsub.f32 %v4210, %v4211
        %v4213 = vand.u32 %v4212, 4294901760
        %4214 = vmatmul.mubr.f32.gmra.mrb[0].mxu0 %v4213
        %v4215 = vpop.f32.mrb[0].mxu0
        %v4216 = vadd.f32 0.0, %v4215
        %v4217 = vpop.f32.mrb[0].mxu0
        %v4218 = vadd.f32 0.0, %v4217
        %4219 = vdwg.mxu0
        %v4220 = vsub.f32 %v405, %v405
        %v4221 = vand.u32 %v4220, 4294901760
        %v4222 = vsub.f32 %v4220, %v4221
        %v4223 = vand.u32 %v4222, 4294901760
        %4224 = vmatprep.subr.mxu0 %v4223
        %v4225 = vsub.f32 %v404, %v404
        %v4226 = vand.u32 %v4225, 4294901760
        %v4227 = vsub.f32 %v4225, %v4226
        %v4228 = vand.u32 %v4227, 4294901760
        %4229 = vmatpush1.msra.mxu0 %v4228
        %v4230 = vsub.f32 %v408, %v408
        %v4231 = vand.u32 %v4230, 4294901760
        %v4232 = vsub.f32 %v4230, %v4231
        %v4233 = vand.u32 %v4232, 4294901760
        %4234 = vmatprep.subr.mxu0 %v4233
        %v4235 = vsub.f32 %v407, %v407
        %v4236 = vand.u32 %v4235, 4294901760
        %v4237 = vsub.f32 %v4235, %v4236
        %v4238 = vand.u32 %v4237, 4294901760
        %4239 = vmatpush1.msra.mxu0 %v4238
        %4240 = vmatprep.subr.mxu0 0.0
        %4241 = vmatpush1.msra.mxu0 0.0
        %4242 = vmatprep.subr.mxu0 0.0
        %4243 = vmatpush1.msra.mxu0 0.0
        %4244 = vmatprep.subr.mxu0 0.0
        %4245 = vmatpush1.msra.mxu0 0.0
        %4246 = vmatprep.subr.mxu0 0.0
        %4247 = vmatpush1.msra.mxu0 0.0
        %4248 = vmatprep.subr.mxu0 0.0
        %4249 = vmatpush1.msra.mxu0 0.0
        %4250 = vmatprep.subr.mxu0 0.0
        %4251 = vmatpush1.msra.mxu0 0.0
        %4252 = vmatprep.subr.mxu0 0.0
        %4253 = vmatpush1.msra.mxu0 0.0
        %4254 = vmatprep.subr.mxu0 0.0
        %4255 = vmatpush1.msra.mxu0 0.0
        %4256 = vmatprep.subr.mxu0 0.0
        %4257 = vmatpush1.msra.mxu0 0.0
        %4258 = vmatprep.subr.mxu0 0.0
        %4259 = vmatpush1.msra.mxu0 0.0
        %4260 = vmatprep.subr.mxu0 0.0
        %4261 = vmatpush1.msra.mxu0 0.0
        %4262 = vmatprep.subr.mxu0 0.0
        %4263 = vmatpush1.msra.mxu0 0.0
        %4264 = vmatprep.subr.mxu0 0.0
        %4265 = vmatpush1.msra.mxu0 0.0
        %4266 = vmatprep.subr.mxu0 0.0
        %4267 = vmatpush1.msra.mxu0 0.0
        %4268 = vmatprep.subr.mxu0 0.0
        %4269 = vmatpush1.msra.mxu0 0.0
        %4270 = vmatprep.subr.mxu0 0.0
        %4271 = vmatpush1.msra.mxu0 0.0
        %4272 = vmatprep.subr.mxu0 0.0
        %4273 = vmatpush1.msra.mxu0 0.0
        %4274 = vmatprep.subr.mxu0 0.0
        %4275 = vmatpush1.msra.mxu0 0.0
        %4276 = vmatprep.subr.mxu0 0.0
        %4277 = vmatpush1.msra.mxu0 0.0
        %4278 = vmatprep.subr.mxu0 0.0
        %4279 = vmatpush1.msra.mxu0 0.0
        %4280 = vmatprep.subr.mxu0 0.0
        %4281 = vmatpush1.msra.mxu0 0.0
        %4282 = vmatprep.subr.mxu0 0.0
        %4283 = vmatpush1.msra.mxu0 0.0
        %4284 = vmatprep.subr.mxu0 0.0
        %4285 = vmatpush1.msra.mxu0 0.0
        %4286 = vmatprep.subr.mxu0 0.0
        %4287 = vmatpush1.msra.mxu0 0.0
        %4288 = vmatprep.subr.mxu0 0.0
        %4289 = vmatpush1.msra.mxu0 0.0
        %4290 = vmatprep.subr.mxu0 0.0
        %4291 = vmatpush1.msra.mxu0 0.0
        %4292 = vmatprep.subr.mxu0 0.0
        %4293 = vmatpush1.msra.mxu0 0.0
        %4294 = vmatprep.subr.mxu0 0.0
        %4295 = vmatpush1.msra.mxu0 0.0
        %4296 = vmatprep.subr.mxu0 0.0
        %4297 = vmatpush1.msra.mxu0 0.0
        %4298 = vmatprep.subr.mxu0 0.0
        %4299 = vmatpush1.msra.mxu0 0.0
        %4300 = vmatprep.mubr.f32.mxu0 0.0
        %v4301 = vand.u32 %v4142, 4294901760
        %4302 = vmatmul.mubr.f32.gmra.mrb[0].mxu0 %v4301
        %v4303 = vpop.f32.mrb[0].mxu0
        %v4304 = vadd.f32 %v4216, %v4303
        %v4305 = vpop.f32.mrb[0].mxu0
        %v4306 = vadd.f32 %v4218, %v4305
        %4307 = vdwg.mxu0
        %v4308 = vsub.f32 %v405, %v405
        %4309 = vmatprep.subr.mxu0 %v4308
        %v4310 = vsub.f32 %v404, %v404
        %4311 = vmatpush1.msra.mxu0 %v4310
        %v4312 = vsub.f32 %v408, %v408
        %4313 = vmatprep.subr.mxu0 %v4312
        %v4314 = vsub.f32 %v407, %v407
        %4315 = vmatpush1.msra.mxu0 %v4314
        %4316 = vmatprep.subr.mxu0 0.0
        %4317 = vmatpush1.msra.mxu0 0.0
        %4318 = vmatprep.subr.mxu0 0.0
        %4319 = vmatpush1.msra.mxu0 0.0
        %4320 = vmatprep.subr.mxu0 0.0
        %4321 = vmatpush1.msra.mxu0 0.0
        %4322 = vmatprep.subr.mxu0 0.0
        %4323 = vmatpush1.msra.mxu0 0.0
        %4324 = vmatprep.subr.mxu0 0.0
        %4325 = vmatpush1.msra.mxu0 0.0
        %4326 = vmatprep.subr.mxu0 0.0
        %4327 = vmatpush1.msra.mxu0 0.0
        %4328 = vmatprep.subr.mxu0 0.0
        %4329 = vmatpush1.msra.mxu0 0.0
        %4330 = vmatprep.subr.mxu0 0.0
        %4331 = vmatpush1.msra.mxu0 0.0
        %4332 = vmatprep.subr.mxu0 0.0
        %4333 = vmatpush1.msra.mxu0 0.0
        %4334 = vmatprep.subr.mxu0 0.0
        %4335 = vmatpush1.msra.mxu0 0.0
        %4336 = vmatprep.subr.mxu0 0.0
        %4337 = vmatpush1.msra.mxu0 0.0
        %4338 = vmatprep.subr.mxu0 0.0
        %4339 = vmatpush1.msra.mxu0 0.0
        %4340 = vmatprep.subr.mxu0 0.0
        %4341 = vmatpush1.msra.mxu0 0.0
        %4342 = vmatprep.subr.mxu0 0.0
        %4343 = vmatpush1.msra.mxu0 0.0
        %4344 = vmatprep.subr.mxu0 0.0
        %4345 = vmatpush1.msra.mxu0 0.0
        %4346 = vmatprep.subr.mxu0 0.0
        %4347 = vmatpush1.msra.mxu0 0.0
        %4348 = vmatprep.subr.mxu0 0.0
        %4349 = vmatpush1.msra.mxu0 0.0
        %4350 = vmatprep.subr.mxu0 0.0
        %4351 = vmatpush1.msra.mxu0 0.0
        %4352 = vmatprep.subr.mxu0 0.0
        %4353 = vmatpush1.msra.mxu0 0.0
        %4354 = vmatprep.subr.mxu0 0.0
        %4355 = vmatpush1.msra.mxu0 0.0
        %4356 = vmatprep.subr.mxu0 0.0
        %4357 = vmatpush1.msra.mxu0 0.0
        %4358 = vmatprep.subr.mxu0 0.0
        %4359 = vmatpush1.msra.mxu0 0.0
        %4360 = vmatprep.subr.mxu0 0.0
        %4361 = vmatpush1.msra.mxu0 0.0
        %4362 = vmatprep.subr.mxu0 0.0
        %4363 = vmatpush1.msra.mxu0 0.0
        %4364 = vmatprep.subr.mxu0 0.0
        %4365 = vmatpush1.msra.mxu0 0.0
        %4366 = vmatprep.subr.mxu0 0.0
        %4367 = vmatpush1.msra.mxu0 0.0
        %4368 = vmatprep.subr.mxu0 0.0
        %4369 = vmatpush1.msra.mxu0 0.0
        %4370 = vmatprep.subr.mxu0 0.0
        %4371 = vmatpush1.msra.mxu0 0.0
        %4372 = vmatprep.subr.mxu0 0.0
        %4373 = vmatpush1.msra.mxu0 0.0
        %4374 = vmatprep.subr.mxu0 0.0
        %4375 = vmatpush1.msra.mxu0 0.0
        %4376 = vmatprep.mubr.f32.mxu0 0.0
        %v4377 = vand.u32 %v4142, 4294901760
        %v4378 = vsub.f32 %v4142, %v4377
        %4379 = vmatmul.mubr.f32.gmra.mrb[0].mxu0 %v4378
        %v4380 = vpop.f32.mrb[0].mxu0
        %v4381 = vadd.f32 %v4304, %v4380
        %v4382 = vpop.f32.mrb[0].mxu0
        %v4383 = vadd.f32 %v4306, %v4382
        %4384 = vdwg.mxu0
        %4385 = vmatprep.subr.mxu0 %v405
        %4386 = vmatpush1.msra.mxu0 %v404
        %4387 = vmatprep.subr.mxu0 %v408
        %4388 = vmatpush1.msra.mxu0 %v407
        %4389 = vmatprep.subr.mxu0 0.0
        %4390 = vmatpush1.msra.mxu0 0.0
        %4391 = vmatprep.subr.mxu0 0.0
        %4392 = vmatpush1.msra.mxu0 0.0
        %4393 = vmatprep.subr.mxu0 0.0
        %4394 = vmatpush1.msra.mxu0 0.0
        %4395 = vmatprep.subr.mxu0 0.0
        %4396 = vmatpush1.msra.mxu0 0.0
        %4397 = vmatprep.subr.mxu0 0.0
        %4398 = vmatpush1.msra.mxu0 0.0
        %4399 = vmatprep.subr.mxu0 0.0
        %4400 = vmatpush1.msra.mxu0 0.0
        %4401 = vmatprep.subr.mxu0 0.0
        %4402 = vmatpush1.msra.mxu0 0.0
        %4403 = vmatprep.subr.mxu0 0.0
        %4404 = vmatpush1.msra.mxu0 0.0
        %4405 = vmatprep.subr.mxu0 0.0
        %4406 = vmatpush1.msra.mxu0 0.0
        %4407 = vmatprep.subr.mxu0 0.0
        %4408 = vmatpush1.msra.mxu0 0.0
        %4409 = vmatprep.subr.mxu0 0.0
        %4410 = vmatpush1.msra.mxu0 0.0
        %4411 = vmatprep.subr.mxu0 0.0
        %4412 = vmatpush1.msra.mxu0 0.0
        %4413 = vmatprep.subr.mxu0 0.0
        %4414 = vmatpush1.msra.mxu0 0.0
        %4415 = vmatprep.subr.mxu0 0.0
        %4416 = vmatpush1.msra.mxu0 0.0
        %4417 = vmatprep.subr.mxu0 0.0
        %4418 = vmatpush1.msra.mxu0 0.0
        %4419 = vmatprep.subr.mxu0 0.0
        %4420 = vmatpush1.msra.mxu0 0.0
        %4421 = vmatprep.subr.mxu0 0.0
        %4422 = vmatpush1.msra.mxu0 0.0
        %4423 = vmatprep.subr.mxu0 0.0
        %4424 = vmatpush1.msra.mxu0 0.0
        %4425 = vmatprep.subr.mxu0 0.0
        %4426 = vmatpush1.msra.mxu0 0.0
        %4427 = vmatprep.subr.mxu0 0.0
        %4428 = vmatpush1.msra.mxu0 0.0
        %4429 = vmatprep.subr.mxu0 0.0
        %4430 = vmatpush1.msra.mxu0 0.0
        %4431 = vmatprep.subr.mxu0 0.0
        %4432 = vmatpush1.msra.mxu0 0.0
        %4433 = vmatprep.subr.mxu0 0.0
        %4434 = vmatpush1.msra.mxu0 0.0
        %4435 = vmatprep.subr.mxu0 0.0
        %4436 = vmatpush1.msra.mxu0 0.0
        %4437 = vmatprep.subr.mxu0 0.0
        %4438 = vmatpush1.msra.mxu0 0.0
        %4439 = vmatprep.subr.mxu0 0.0
        %4440 = vmatpush1.msra.mxu0 0.0
        %4441 = vmatprep.subr.mxu0 0.0
        %4442 = vmatpush1.msra.mxu0 0.0
        %4443 = vmatprep.subr.mxu0 0.0
        %4444 = vmatpush1.msra.mxu0 0.0
        %4445 = vmatprep.subr.mxu0 0.0
        %4446 = vmatpush1.msra.mxu0 0.0
        %4447 = vmatprep.subr.mxu0 0.0
        %4448 = vmatpush1.msra.mxu0 0.0
        %4449 = vmatprep.mubr.f32.mxu0 0.0
        %v4450 = vand.u32 %v4142, 4294901760
        %v4451 = vsub.f32 %v4142, %v4450
        %v4452 = vand.u32 %v4451, 4294901760
        %4453 = vmatmul.mubr.f32.gmra.mrb[0].mxu0 %v4452
        %v4454 = vpop.f32.mrb[0].mxu0
        %v4455 = vadd.f32 %v4381, %v4454
        %v4456 = vpop.f32.mrb[0].mxu0
        %v4457 = vadd.f32 %v4383, %v4456
        %4458 = vdwg.mxu0
        %v4459 = vsub.f32 %v405, %v405
        %v4460 = vand.u32 %v4459, 4294901760
        %4461 = vmatprep.subr.mxu0 %v4460
        %v4462 = vsub.f32 %v404, %v404
        %v4463 = vand.u32 %v4462, 4294901760
        %4464 = vmatpush1.msra.mxu0 %v4463
        %v4465 = vsub.f32 %v408, %v408
        %v4466 = vand.u32 %v4465, 4294901760
        %4467 = vmatprep.subr.mxu0 %v4466
        %v4468 = vsub.f32 %v407, %v407
        %v4469 = vand.u32 %v4468, 4294901760
        %4470 = vmatpush1.msra.mxu0 %v4469
        %4471 = vmatprep.subr.mxu0 0.0
        %4472 = vmatpush1.msra.mxu0 0.0
        %4473 = vmatprep.subr.mxu0 0.0
        %4474 = vmatpush1.msra.mxu0 0.0
        %4475 = vmatprep.subr.mxu0 0.0
        %4476 = vmatpush1.msra.mxu0 0.0
        %4477 = vmatprep.subr.mxu0 0.0
        %4478 = vmatpush1.msra.mxu0 0.0
        %4479 = vmatprep.subr.mxu0 0.0
        %4480 = vmatpush1.msra.mxu0 0.0
        %4481 = vmatprep.subr.mxu0 0.0
        %4482 = vmatpush1.msra.mxu0 0.0
        %4483 = vmatprep.subr.mxu0 0.0
        %4484 = vmatpush1.msra.mxu0 0.0
        %4485 = vmatprep.subr.mxu0 0.0
        %4486 = vmatpush1.msra.mxu0 0.0
        %4487 = vmatprep.subr.mxu0 0.0
        %4488 = vmatpush1.msra.mxu0 0.0
        %4489 = vmatprep.subr.mxu0 0.0
        %4490 = vmatpush1.msra.mxu0 0.0
        %4491 = vmatprep.subr.mxu0 0.0
        %4492 = vmatpush1.msra.mxu0 0.0
        %4493 = vmatprep.subr.mxu0 0.0
        %4494 = vmatpush1.msra.mxu0 0.0
        %4495 = vmatprep.subr.mxu0 0.0
        %4496 = vmatpush1.msra.mxu0 0.0
        %4497 = vmatprep.subr.mxu0 0.0
        %4498 = vmatpush1.msra.mxu0 0.0
        %4499 = vmatprep.subr.mxu0 0.0
        %4500 = vmatpush1.msra.mxu0 0.0
        %4501 = vmatprep.subr.mxu0 0.0
        %4502 = vmatpush1.msra.mxu0 0.0
        %4503 = vmatprep.subr.mxu0 0.0
        %4504 = vmatpush1.msra.mxu0 0.0
        %4505 = vmatprep.subr.mxu0 0.0
        %4506 = vmatpush1.msra.mxu0 0.0
        %4507 = vmatprep.subr.mxu0 0.0
        %4508 = vmatpush1.msra.mxu0 0.0
        %4509 = vmatprep.subr.mxu0 0.0
        %4510 = vmatpush1.msra.mxu0 0.0
        %4511 = vmatprep.subr.mxu0 0.0
        %4512 = vmatpush1.msra.mxu0 0.0
        %4513 = vmatprep.subr.mxu0 0.0
        %4514 = vmatpush1.msra.mxu0 0.0
        %4515 = vmatprep.subr.mxu0 0.0
        %4516 = vmatpush1.msra.mxu0 0.0
        %4517 = vmatprep.subr.mxu0 0.0
        %4518 = vmatpush1.msra.mxu0 0.0
        %4519 = vmatprep.subr.mxu0 0.0
        %4520 = vmatpush1.msra.mxu0 0.0
        %4521 = vmatprep.subr.mxu0 0.0
        %4522 = vmatpush1.msra.mxu0 0.0
        %4523 = vmatprep.subr.mxu0 0.0
        %4524 = vmatpush1.msra.mxu0 0.0
        %4525 = vmatprep.subr.mxu0 0.0
        %4526 = vmatpush1.msra.mxu0 0.0
        %4527 = vmatprep.subr.mxu0 0.0
        %4528 = vmatpush1.msra.mxu0 0.0
        %4529 = vmatprep.subr.mxu0 0.0
        %4530 = vmatpush1.msra.mxu0 0.0
        %4531 = vmatprep.mubr.f32.mxu0 0.0
        %v4532 = vand.u32 %v4142, 4294901760
        %4533 = vmatmul.mubr.f32.gmra.mrb[0].mxu0 %v4532
        %v4534 = vpop.f32.mrb[0].mxu0
        %v4535 = vadd.f32 %v4455, %v4534
        %v4536 = vpop.f32.mrb[0].mxu0
        %v4537 = vadd.f32 %v4457, %v4536
        %4538 = vdwg.mxu0
        %4539 = vmatprep.subr.mxu0 %v405
        %4540 = vmatpush1.msra.mxu0 %v404
        %4541 = vmatprep.subr.mxu0 %v408
        %4542 = vmatpush1.msra.mxu0 %v407
        %4543 = vmatprep.subr.mxu0 0.0
        %4544 = vmatpush1.msra.mxu0 0.0
        %4545 = vmatprep.subr.mxu0 0.0
        %4546 = vmatpush1.msra.mxu0 0.0
        %4547 = vmatprep.subr.mxu0 0.0
        %4548 = vmatpush1.msra.mxu0 0.0
        %4549 = vmatprep.subr.mxu0 0.0
        %4550 = vmatpush1.msra.mxu0 0.0
        %4551 = vmatprep.subr.mxu0 0.0
        %4552 = vmatpush1.msra.mxu0 0.0
        %4553 = vmatprep.subr.mxu0 0.0
        %4554 = vmatpush1.msra.mxu0 0.0
        %4555 = vmatprep.subr.mxu0 0.0
        %4556 = vmatpush1.msra.mxu0 0.0
        %4557 = vmatprep.subr.mxu0 0.0
        %4558 = vmatpush1.msra.mxu0 0.0
        %4559 = vmatprep.subr.mxu0 0.0
        %4560 = vmatpush1.msra.mxu0 0.0
        %4561 = vmatprep.subr.mxu0 0.0
        %4562 = vmatpush1.msra.mxu0 0.0
        %4563 = vmatprep.subr.mxu0 0.0
        %4564 = vmatpush1.msra.mxu0 0.0
        %4565 = vmatprep.subr.mxu0 0.0
        %4566 = vmatpush1.msra.mxu0 0.0
        %4567 = vmatprep.subr.mxu0 0.0
        %4568 = vmatpush1.msra.mxu0 0.0
        %4569 = vmatprep.subr.mxu0 0.0
        %4570 = vmatpush1.msra.mxu0 0.0
        %4571 = vmatprep.subr.mxu0 0.0
        %4572 = vmatpush1.msra.mxu0 0.0
        %4573 = vmatprep.subr.mxu0 0.0
        %4574 = vmatpush1.msra.mxu0 0.0
        %4575 = vmatprep.subr.mxu0 0.0
        %4576 = vmatpush1.msra.mxu0 0.0
        %4577 = vmatprep.subr.mxu0 0.0
        %4578 = vmatpush1.msra.mxu0 0.0
        %4579 = vmatprep.subr.mxu0 0.0
        %4580 = vmatpush1.msra.mxu0 0.0
        %4581 = vmatprep.subr.mxu0 0.0
        %4582 = vmatpush1.msra.mxu0 0.0
        %4583 = vmatprep.subr.mxu0 0.0
        %4584 = vmatpush1.msra.mxu0 0.0
        %4585 = vmatprep.subr.mxu0 0.0
        %4586 = vmatpush1.msra.mxu0 0.0
        %4587 = vmatprep.subr.mxu0 0.0
        %4588 = vmatpush1.msra.mxu0 0.0
        %4589 = vmatprep.subr.mxu0 0.0
        %4590 = vmatpush1.msra.mxu0 0.0
        %4591 = vmatprep.subr.mxu0 0.0
        %4592 = vmatpush1.msra.mxu0 0.0
        %4593 = vmatprep.subr.mxu0 0.0
        %4594 = vmatpush1.msra.mxu0 0.0
        %4595 = vmatprep.subr.mxu0 0.0
        %4596 = vmatpush1.msra.mxu0 0.0
        %4597 = vmatprep.subr.mxu0 0.0
        %4598 = vmatpush1.msra.mxu0 0.0
        %4599 = vmatprep.subr.mxu0 0.0
        %4600 = vmatpush1.msra.mxu0 0.0
        %4601 = vmatprep.subr.mxu0 0.0
        %4602 = vmatpush1.msra.mxu0 0.0
        %4603 = vmatprep.mubr.f32.mxu0 0.0
        %v4604 = vand.u32 %v4142, 4294901760
        %4605 = vmatmul.mubr.f32.gmra.mrb[0].mxu0 %v4604
        %v4606 = vpop.f32.mrb[0].mxu0
        %v4607 = vadd.f32 %v4535, %v4606
        %v4608 = vpop.f32.mrb[0].mxu0
        %v4609 = vadd.f32 %v4537, %v4608
        %4610 = vdwg.mxu0
        %4611 = vmatprep.subr.mxu0 0.0
        %4612 = vmatpush1.msra.mxu0 %v406
        %4613 = vmatprep.subr.mxu0 0.0
        %4614 = vmatpush1.msra.mxu0 %v409
        %4615 = vmatprep.subr.mxu0 0.0
        %4616 = vmatpush1.msra.mxu0 0.0
        %4617 = vmatprep.subr.mxu0 0.0
        %4618 = vmatpush1.msra.mxu0 0.0
        %4619 = vmatprep.subr.mxu0 0.0
        %4620 = vmatpush1.msra.mxu0 0.0
        %4621 = vmatprep.subr.mxu0 0.0
        %4622 = vmatpush1.msra.mxu0 0.0
        %4623 = vmatprep.subr.mxu0 0.0
        %4624 = vmatpush1.msra.mxu0 0.0
        %4625 = vmatprep.subr.mxu0 0.0
        %4626 = vmatpush1.msra.mxu0 0.0
        %4627 = vmatprep.subr.mxu0 0.0
        %4628 = vmatpush1.msra.mxu0 0.0
        %4629 = vmatprep.subr.mxu0 0.0
        %4630 = vmatpush1.msra.mxu0 0.0
        %4631 = vmatprep.subr.mxu0 0.0
        %4632 = vmatpush1.msra.mxu0 0.0
        %4633 = vmatprep.subr.mxu0 0.0
        %4634 = vmatpush1.msra.mxu0 0.0
        %4635 = vmatprep.subr.mxu0 0.0
        %4636 = vmatpush1.msra.mxu0 0.0
        %4637 = vmatprep.subr.mxu0 0.0
        %4638 = vmatpush1.msra.mxu0 0.0
        %4639 = vmatprep.subr.mxu0 0.0
        %4640 = vmatpush1.msra.mxu0 0.0
        %4641 = vmatprep.subr.mxu0 0.0
        %4642 = vmatpush1.msra.mxu0 0.0
        %4643 = vmatprep.subr.mxu0 0.0
        %4644 = vmatpush1.msra.mxu0 0.0
        %4645 = vmatprep.subr.mxu0 0.0
        %4646 = vmatpush1.msra.mxu0 0.0
        %4647 = vmatprep.subr.mxu0 0.0
        %4648 = vmatpush1.msra.mxu0 0.0
        %4649 = vmatprep.subr.mxu0 0.0
        %4650 = vmatpush1.msra.mxu0 0.0
        %4651 = vmatprep.subr.mxu0 0.0
        %4652 = vmatpush1.msra.mxu0 0.0
        %4653 = vmatprep.subr.mxu0 0.0
        %4654 = vmatpush1.msra.mxu0 0.0
        %4655 = vmatprep.subr.mxu0 0.0
        %4656 = vmatpush1.msra.mxu0 0.0
        %4657 = vmatprep.subr.mxu0 0.0
        %4658 = vmatpush1.msra.mxu0 0.0
        %4659 = vmatprep.subr.mxu0 0.0
        %4660 = vmatpush1.msra.mxu0 0.0
        %4661 = vmatprep.subr.mxu0 0.0
        %4662 = vmatpush1.msra.mxu0 0.0
        %4663 = vmatprep.subr.mxu0 0.0
        %4664 = vmatpush1.msra.mxu0 0.0
        %4665 = vmatprep.subr.mxu0 0.0
        %4666 = vmatpush1.msra.mxu0 0.0
        %4667 = vmatprep.subr.mxu0 0.0
        %4668 = vmatpush1.msra.mxu0 0.0
        %4669 = vmatprep.subr.mxu0 0.0
        %4670 = vmatpush1.msra.mxu0 0.0
        %4671 = vmatprep.subr.mxu0 0.0
        %4672 = vmatpush1.msra.mxu0 0.0
        %4673 = vmatprep.subr.mxu0 0.0
        %4674 = vmatpush1.msra.mxu0 0.0
        %4675 = vmatprep.mubr.f32.mxu0 0.0
        %v4676 = vand.u32 %v4142, 4294901760
        %v4677 = vsub.f32 %v4142, %v4676
        %v4678 = vand.u32 %v4677, 4294901760
        %v4679 = vsub.f32 %v4677, %v4678
        %v4680 = vand.u32 %v4679, 4294901760
        %4681 = vmatmul.mubr.f32.gmra.mrb[0].mxu0 %v4680
        %v4682 = vpop.f32.mrb[0].mxu0
        %v4683 = vadd.f32 0.0, %v4682
        %v4684 = vpop.f32.mrb[0].mxu0
        %4685 = vdwg.mxu0
        %4686 = vmatprep.subr.mxu0 0.0
        %v4687 = vsub.f32 %v406, %v406
        %v4688 = vand.u32 %v4687, 4294901760
        %v4689 = vsub.f32 %v4687, %v4688
        %v4690 = vand.u32 %v4689, 4294901760
        %4691 = vmatpush1.msra.mxu0 %v4690
        %4692 = vmatprep.subr.mxu0 0.0
        %v4693 = vsub.f32 %v409, %v409
        %v4694 = vand.u32 %v4693, 4294901760
        %v4695 = vsub.f32 %v4693, %v4694
        %v4696 = vand.u32 %v4695, 4294901760
        %4697 = vmatpush1.msra.mxu0 %v4696
        %4698 = vmatprep.subr.mxu0 0.0
        %4699 = vmatpush1.msra.mxu0 0.0
        %4700 = vmatprep.subr.mxu0 0.0
        %4701 = vmatpush1.msra.mxu0 0.0
        %4702 = vmatprep.subr.mxu0 0.0
        %4703 = vmatpush1.msra.mxu0 0.0
        %4704 = vmatprep.subr.mxu0 0.0
        %4705 = vmatpush1.msra.mxu0 0.0
        %4706 = vmatprep.subr.mxu0 0.0
        %4707 = vmatpush1.msra.mxu0 0.0
        %4708 = vmatprep.subr.mxu0 0.0
        %4709 = vmatpush1.msra.mxu0 0.0
        %4710 = vmatprep.subr.mxu0 0.0
        %4711 = vmatpush1.msra.mxu0 0.0
        %4712 = vmatprep.subr.mxu0 0.0
        %4713 = vmatpush1.msra.mxu0 0.0
        %4714 = vmatprep.subr.mxu0 0.0
        %4715 = vmatpush1.msra.mxu0 0.0
        %4716 = vmatprep.subr.mxu0 0.0
        %4717 = vmatpush1.msra.mxu0 0.0
        %4718 = vmatprep.subr.mxu0 0.0
        %4719 = vmatpush1.msra.mxu0 0.0
        %4720 = vmatprep.subr.mxu0 0.0
        %4721 = vmatpush1.msra.mxu0 0.0
        %4722 = vmatprep.subr.mxu0 0.0
        %4723 = vmatpush1.msra.mxu0 0.0
        %4724 = vmatprep.subr.mxu0 0.0
        %4725 = vmatpush1.msra.mxu0 0.0
        %4726 = vmatprep.subr.mxu0 0.0
        %4727 = vmatpush1.msra.mxu0 0.0
        %4728 = vmatprep.subr.mxu0 0.0
        %4729 = vmatpush1.msra.mxu0 0.0
        %4730 = vmatprep.subr.mxu0 0.0
        %4731 = vmatpush1.msra.mxu0 0.0
        %4732 = vmatprep.subr.mxu0 0.0
        %4733 = vmatpush1.msra.mxu0 0.0
        %4734 = vmatprep.subr.mxu0 0.0
        %4735 = vmatpush1.msra.mxu0 0.0
        %4736 = vmatprep.subr.mxu0 0.0
        %4737 = vmatpush1.msra.mxu0 0.0
        %4738 = vmatprep.subr.mxu0 0.0
        %4739 = vmatpush1.msra.mxu0 0.0
        %4740 = vmatprep.subr.mxu0 0.0
        %4741 = vmatpush1.msra.mxu0 0.0
        %4742 = vmatprep.subr.mxu0 0.0
        %4743 = vmatpush1.msra.mxu0 0.0
        %4744 = vmatprep.subr.mxu0 0.0
        %4745 = vmatpush1.msra.mxu0 0.0
        %4746 = vmatprep.subr.mxu0 0.0
        %4747 = vmatpush1.msra.mxu0 0.0
        %4748 = vmatprep.subr.mxu0 0.0
        %4749 = vmatpush1.msra.mxu0 0.0
        %4750 = vmatprep.subr.mxu0 0.0
        %4751 = vmatpush1.msra.mxu0 0.0
        %4752 = vmatprep.subr.mxu0 0.0
        %4753 = vmatpush1.msra.mxu0 0.0
        %4754 = vmatprep.subr.mxu0 0.0
        %4755 = vmatpush1.msra.mxu0 0.0
        %4756 = vmatprep.subr.mxu0 0.0
        %4757 = vmatpush1.msra.mxu0 0.0
        %4758 = vmatprep.mubr.f32.mxu0 0.0
        %v4759 = vand.u32 %v4142, 4294901760
        %4760 = vmatmul.mubr.f32.gmra.mrb[0].mxu0 %v4759
        %v4761 = vpop.f32.mrb[0].mxu0
        %v4762 = vadd.f32 %v4683, %v4761
        %v4763 = vpop.f32.mrb[0].mxu0
        %4764 = vdwg.mxu0
        %4765 = vmatprep.subr.mxu0 0.0
        %v4766 = vsub.f32 %v406, %v406
        %4767 = vmatpush1.msra.mxu0 %v4766
        %4768 = vmatprep.subr.mxu0 0.0
        %v4769 = vsub.f32 %v409, %v409
        %4770 = vmatpush1.msra.mxu0 %v4769
        %4771 = vmatprep.subr.mxu0 0.0
        %4772 = vmatpush1.msra.mxu0 0.0
        %4773 = vmatprep.subr.mxu0 0.0
        %4774 = vmatpush1.msra.mxu0 0.0
        %4775 = vmatprep.subr.mxu0 0.0
        %4776 = vmatpush1.msra.mxu0 0.0
        %4777 = vmatprep.subr.mxu0 0.0
        %4778 = vmatpush1.msra.mxu0 0.0
        %4779 = vmatprep.subr.mxu0 0.0
        %4780 = vmatpush1.msra.mxu0 0.0
        %4781 = vmatprep.subr.mxu0 0.0
        %4782 = vmatpush1.msra.mxu0 0.0
        %4783 = vmatprep.subr.mxu0 0.0
        %4784 = vmatpush1.msra.mxu0 0.0
        %4785 = vmatprep.subr.mxu0 0.0
        %4786 = vmatpush1.msra.mxu0 0.0
        %4787 = vmatprep.subr.mxu0 0.0
        %4788 = vmatpush1.msra.mxu0 0.0
        %4789 = vmatprep.subr.mxu0 0.0
        %4790 = vmatpush1.msra.mxu0 0.0
        %4791 = vmatprep.subr.mxu0 0.0
        %4792 = vmatpush1.msra.mxu0 0.0
        %4793 = vmatprep.subr.mxu0 0.0
        %4794 = vmatpush1.msra.mxu0 0.0
        %4795 = vmatprep.subr.mxu0 0.0
        %4796 = vmatpush1.msra.mxu0 0.0
        %4797 = vmatprep.subr.mxu0 0.0
        %4798 = vmatpush1.msra.mxu0 0.0
        %4799 = vmatprep.subr.mxu0 0.0
        %4800 = vmatpush1.msra.mxu0 0.0
        %4801 = vmatprep.subr.mxu0 0.0
        %4802 = vmatpush1.msra.mxu0 0.0
        %4803 = vmatprep.subr.mxu0 0.0
        %4804 = vmatpush1.msra.mxu0 0.0
        %4805 = vmatprep.subr.mxu0 0.0
        %4806 = vmatpush1.msra.mxu0 0.0
        %4807 = vmatprep.subr.mxu0 0.0
        %4808 = vmatpush1.msra.mxu0 0.0
        %4809 = vmatprep.subr.mxu0 0.0
        %4810 = vmatpush1.msra.mxu0 0.0
        %4811 = vmatprep.subr.mxu0 0.0
        %4812 = vmatpush1.msra.mxu0 0.0
        %4813 = vmatprep.subr.mxu0 0.0
        %4814 = vmatpush1.msra.mxu0 0.0
        %4815 = vmatprep.subr.mxu0 0.0
        %4816 = vmatpush1.msra.mxu0 0.0
        %4817 = vmatprep.subr.mxu0 0.0
        %4818 = vmatpush1.msra.mxu0 0.0
        %4819 = vmatprep.subr.mxu0 0.0
        %4820 = vmatpush1.msra.mxu0 0.0
        %4821 = vmatprep.subr.mxu0 0.0
        %4822 = vmatpush1.msra.mxu0 0.0
        %4823 = vmatprep.subr.mxu0 0.0
        %4824 = vmatpush1.msra.mxu0 0.0
        %4825 = vmatprep.subr.mxu0 0.0
        %4826 = vmatpush1.msra.mxu0 0.0
        %4827 = vmatprep.subr.mxu0 0.0
        %4828 = vmatpush1.msra.mxu0 0.0
        %4829 = vmatprep.subr.mxu0 0.0
        %4830 = vmatpush1.msra.mxu0 0.0
        %4831 = vmatprep.mubr.f32.mxu0 0.0
        %v4832 = vand.u32 %v4142, 4294901760
        %v4833 = vsub.f32 %v4142, %v4832
        %4834 = vmatmul.mubr.f32.gmra.mrb[0].mxu0 %v4833
        %v4835 = vpop.f32.mrb[0].mxu0
        %v4836 = vadd.f32 %v4762, %v4835
        %v4837 = vpop.f32.mrb[0].mxu0
        %4838 = vdwg.mxu0
        %4839 = vmatprep.subr.mxu0 0.0
        %4840 = vmatpush1.msra.mxu0 %v406
        %4841 = vmatprep.subr.mxu0 0.0
        %4842 = vmatpush1.msra.mxu0 %v409
        %4843 = vmatprep.subr.mxu0 0.0
        %4844 = vmatpush1.msra.mxu0 0.0
        %4845 = vmatprep.subr.mxu0 0.0
        %4846 = vmatpush1.msra.mxu0 0.0
        %4847 = vmatprep.subr.mxu0 0.0
        %4848 = vmatpush1.msra.mxu0 0.0
        %4849 = vmatprep.subr.mxu0 0.0
        %4850 = vmatpush1.msra.mxu0 0.0
        %4851 = vmatprep.subr.mxu0 0.0
        %4852 = vmatpush1.msra.mxu0 0.0
        %4853 = vmatprep.subr.mxu0 0.0
        %4854 = vmatpush1.msra.mxu0 0.0
        %4855 = vmatprep.subr.mxu0 0.0
        %4856 = vmatpush1.msra.mxu0 0.0
        %4857 = vmatprep.subr.mxu0 0.0
        %4858 = vmatpush1.msra.mxu0 0.0
        %4859 = vmatprep.subr.mxu0 0.0
        %4860 = vmatpush1.msra.mxu0 0.0
        %4861 = vmatprep.subr.mxu0 0.0
        %4862 = vmatpush1.msra.mxu0 0.0
        %4863 = vmatprep.subr.mxu0 0.0
        %4864 = vmatpush1.msra.mxu0 0.0
        %4865 = vmatprep.subr.mxu0 0.0
        %4866 = vmatpush1.msra.mxu0 0.0
        %4867 = vmatprep.subr.mxu0 0.0
        %4868 = vmatpush1.msra.mxu0 0.0
        %4869 = vmatprep.subr.mxu0 0.0
        %4870 = vmatpush1.msra.mxu0 0.0
        %4871 = vmatprep.subr.mxu0 0.0
        %4872 = vmatpush1.msra.mxu0 0.0
        %4873 = vmatprep.subr.mxu0 0.0
        %4874 = vmatpush1.msra.mxu0 0.0
        %4875 = vmatprep.subr.mxu0 0.0
        %4876 = vmatpush1.msra.mxu0 0.0
        %4877 = vmatprep.subr.mxu0 0.0
        %4878 = vmatpush1.msra.mxu0 0.0
        %4879 = vmatprep.subr.mxu0 0.0
        %4880 = vmatpush1.msra.mxu0 0.0
        %4881 = vmatprep.subr.mxu0 0.0
        %4882 = vmatpush1.msra.mxu0 0.0
        %4883 = vmatprep.subr.mxu0 0.0
        %4884 = vmatpush1.msra.mxu0 0.0
        %4885 = vmatprep.subr.mxu0 0.0
        %4886 = vmatpush1.msra.mxu0 0.0
        %4887 = vmatprep.subr.mxu0 0.0
        %4888 = vmatpush1.msra.mxu0 0.0
        %4889 = vmatprep.subr.mxu0 0.0
        %4890 = vmatpush1.msra.mxu0 0.0
        %4891 = vmatprep.subr.mxu0 0.0
        %4892 = vmatpush1.msra.mxu0 0.0
        %4893 = vmatprep.subr.mxu0 0.0
        %4894 = vmatpush1.msra.mxu0 0.0
        %4895 = vmatprep.subr.mxu0 0.0
        %4896 = vmatpush1.msra.mxu0 0.0
        %4897 = vmatprep.subr.mxu0 0.0
        %4898 = vmatpush1.msra.mxu0 0.0
        %4899 = vmatprep.subr.mxu0 0.0
        %4900 = vmatpush1.msra.mxu0 0.0
        %4901 = vmatprep.subr.mxu0 0.0
        %4902 = vmatpush1.msra.mxu0 0.0
        %4903 = vmatprep.mubr.f32.mxu0 0.0
        %v4904 = vand.u32 %v4142, 4294901760
        %v4905 = vsub.f32 %v4142, %v4904
        %v4906 = vand.u32 %v4905, 4294901760
        %4907 = vmatmul.mubr.f32.gmra.mrb[0].mxu0 %v4906
        %v4908 = vpop.f32.mrb[0].mxu0
        %v4909 = vadd.f32 %v4836, %v4908
        %v4910 = vpop.f32.mrb[0].mxu0
        %4911 = vdwg.mxu0
        %4912 = vmatprep.subr.mxu0 0.0
        %v4913 = vsub.f32 %v406, %v406
        %v4914 = vand.u32 %v4913, 4294901760
        %4915 = vmatpush1.msra.mxu0 %v4914
        %4916 = vmatprep.subr.mxu0 0.0
        %v4917 = vsub.f32 %v409, %v409
        %v4918 = vand.u32 %v4917, 4294901760
        %4919 = vmatpush1.msra.mxu0 %v4918
        %4920 = vmatprep.subr.mxu0 0.0
        %4921 = vmatpush1.msra.mxu0 0.0
        %4922 = vmatprep.subr.mxu0 0.0
        %4923 = vmatpush1.msra.mxu0 0.0
        %4924 = vmatprep.subr.mxu0 0.0
        %4925 = vmatpush1.msra.mxu0 0.0
        %4926 = vmatprep.subr.mxu0 0.0
        %4927 = vmatpush1.msra.mxu0 0.0
        %4928 = vmatprep.subr.mxu0 0.0
        %4929 = vmatpush1.msra.mxu0 0.0
        %4930 = vmatprep.subr.mxu0 0.0
        %4931 = vmatpush1.msra.mxu0 0.0
        %4932 = vmatprep.subr.mxu0 0.0
        %4933 = vmatpush1.msra.mxu0 0.0
        %4934 = vmatprep.subr.mxu0 0.0
        %4935 = vmatpush1.msra.mxu0 0.0
        %4936 = vmatprep.subr.mxu0 0.0
        %4937 = vmatpush1.msra.mxu0 0.0
        %4938 = vmatprep.subr.mxu0 0.0
        %4939 = vmatpush1.msra.mxu0 0.0
        %4940 = vmatprep.subr.mxu0 0.0
        %4941 = vmatpush1.msra.mxu0 0.0
        %4942 = vmatprep.subr.mxu0 0.0
        %4943 = vmatpush1.msra.mxu0 0.0
        %4944 = vmatprep.subr.mxu0 0.0
        %4945 = vmatpush1.msra.mxu0 0.0
        %4946 = vmatprep.subr.mxu0 0.0
        %4947 = vmatpush1.msra.mxu0 0.0
        %4948 = vmatprep.subr.mxu0 0.0
        %4949 = vmatpush1.msra.mxu0 0.0
        %4950 = vmatprep.subr.mxu0 0.0
        %4951 = vmatpush1.msra.mxu0 0.0
        %4952 = vmatprep.subr.mxu0 0.0
        %4953 = vmatpush1.msra.mxu0 0.0
        %4954 = vmatprep.subr.mxu0 0.0
        %4955 = vmatpush1.msra.mxu0 0.0
        %4956 = vmatprep.subr.mxu0 0.0
        %4957 = vmatpush1.msra.mxu0 0.0
        %4958 = vmatprep.subr.mxu0 0.0
        %4959 = vmatpush1.msra.mxu0 0.0
        %4960 = vmatprep.subr.mxu0 0.0
        %4961 = vmatpush1.msra.mxu0 0.0
        %4962 = vmatprep.subr.mxu0 0.0
        %4963 = vmatpush1.msra.mxu0 0.0
        %4964 = vmatprep.subr.mxu0 0.0
        %4965 = vmatpush1.msra.mxu0 0.0
        %4966 = vmatprep.subr.mxu0 0.0
        %4967 = vmatpush1.msra.mxu0 0.0
        %4968 = vmatprep.subr.mxu0 0.0
        %4969 = vmatpush1.msra.mxu0 0.0
        %4970 = vmatprep.subr.mxu0 0.0
        %4971 = vmatpush1.msra.mxu0 0.0
        %4972 = vmatprep.subr.mxu0 0.0
        %4973 = vmatpush1.msra.mxu0 0.0
        %4974 = vmatprep.subr.mxu0 0.0
        %4975 = vmatpush1.msra.mxu0 0.0
        %4976 = vmatprep.subr.mxu0 0.0
        %4977 = vmatpush1.msra.mxu0 0.0
        %4978 = vmatprep.subr.mxu0 0.0
        %4979 = vmatpush1.msra.mxu0 0.0
        %4980 = vmatprep.mubr.f32.mxu0 0.0
        %v4981 = vand.u32 %v4142, 4294901760
        %4982 = vmatmul.mubr.f32.gmra.mrb[0].mxu0 %v4981
        %v4983 = vpop.f32.mrb[0].mxu0
        %v4984 = vadd.f32 %v4909, %v4983
        %v4985 = vpop.f32.mrb[0].mxu0
        %4986 = vdwg.mxu0
        %4987 = vmatprep.subr.mxu0 0.0
        %4988 = vmatpush1.msra.mxu0 %v406
        %4989 = vmatprep.subr.mxu0 0.0
        %4990 = vmatpush1.msra.mxu0 %v409
        %4991 = vmatprep.subr.mxu0 0.0
        %4992 = vmatpush1.msra.mxu0 0.0
        %4993 = vmatprep.subr.mxu0 0.0
        %4994 = vmatpush1.msra.mxu0 0.0
        %4995 = vmatprep.subr.mxu0 0.0
        %4996 = vmatpush1.msra.mxu0 0.0
        %4997 = vmatprep.subr.mxu0 0.0
        %4998 = vmatpush1.msra.mxu0 0.0
        %4999 = vmatprep.subr.mxu0 0.0
        %5000 = vmatpush1.msra.mxu0 0.0
        %5001 = vmatprep.subr.mxu0 0.0
        %5002 = vmatpush1.msra.mxu0 0.0
        %5003 = vmatprep.subr.mxu0 0.0
        %5004 = vmatpush1.msra.mxu0 0.0
        %5005 = vmatprep.subr.mxu0 0.0
        %5006 = vmatpush1.msra.mxu0 0.0
        %5007 = vmatprep.subr.mxu0 0.0
        %5008 = vmatpush1.msra.mxu0 0.0
        %5009 = vmatprep.subr.mxu0 0.0
        %5010 = vmatpush1.msra.mxu0 0.0
        %5011 = vmatprep.subr.mxu0 0.0
        %5012 = vmatpush1.msra.mxu0 0.0
        %5013 = vmatprep.subr.mxu0 0.0
        %5014 = vmatpush1.msra.mxu0 0.0
        %5015 = vmatprep.subr.mxu0 0.0
        %5016 = vmatpush1.msra.mxu0 0.0
        %5017 = vmatprep.subr.mxu0 0.0
        %5018 = vmatpush1.msra.mxu0 0.0
        %5019 = vmatprep.subr.mxu0 0.0
        %5020 = vmatpush1.msra.mxu0 0.0
        %5021 = vmatprep.subr.mxu0 0.0
        %5022 = vmatpush1.msra.mxu0 0.0
        %5023 = vmatprep.subr.mxu0 0.0
        %5024 = vmatpush1.msra.mxu0 0.0
        %5025 = vmatprep.subr.mxu0 0.0
        %5026 = vmatpush1.msra.mxu0 0.0
        %5027 = vmatprep.subr.mxu0 0.0
        %5028 = vmatpush1.msra.mxu0 0.0
        %5029 = vmatprep.subr.mxu0 0.0
        %5030 = vmatpush1.msra.mxu0 0.0
        %5031 = vmatprep.subr.mxu0 0.0
        %5032 = vmatpush1.msra.mxu0 0.0
        %5033 = vmatprep.subr.mxu0 0.0
        %5034 = vmatpush1.msra.mxu0 0.0
        %5035 = vmatprep.subr.mxu0 0.0
        %5036 = vmatpush1.msra.mxu0 0.0
        %5037 = vmatprep.subr.mxu0 0.0
        %5038 = vmatpush1.msra.mxu0 0.0
        %5039 = vmatprep.subr.mxu0 0.0
        %5040 = vmatpush1.msra.mxu0 0.0
        %5041 = vmatprep.subr.mxu0 0.0
        %5042 = vmatpush1.msra.mxu0 0.0
        %5043 = vmatprep.subr.mxu0 0.0
        %5044 = vmatpush1.msra.mxu0 0.0
        %5045 = vmatprep.subr.mxu0 0.0
        %5046 = vmatpush1.msra.mxu0 0.0
        %5047 = vmatprep.subr.mxu0 0.0
        %5048 = vmatpush1.msra.mxu0 0.0
        %5049 = vmatprep.subr.mxu0 0.0
        %5050 = vmatpush1.msra.mxu0 0.0
        %5051 = vmatprep.mubr.f32.mxu0 0.0
        %v5052 = vand.u32 %v4142, 4294901760
        %5053 = vmatmul.mubr.f32.gmra.mrb[0].mxu0 %v5052
        %v5054 = vpop.f32.mrb[0].mxu0
        %v5055 = vadd.f32 %v4984, %v5054
        %v5056 = vpop.f32.mrb[0].mxu0
        %5057 = vdwg.mxu0
        %v5058 = vsel %vm342, %v473, 0
        %5060 = vmatprep.subr.mxu0 %v411
        %5061 = vmatpush1.msra.mxu0 %v410
        %5062 = vmatprep.subr.mxu0 %v414
        %5063 = vmatpush1.msra.mxu0 %v413
        %5064 = vmatprep.subr.mxu0 0.0
        %5065 = vmatpush1.msra.mxu0 0.0
        %5066 = vmatprep.subr.mxu0 0.0
        %5067 = vmatpush1.msra.mxu0 0.0
        %5068 = vmatprep.subr.mxu0 0.0
        %5069 = vmatpush1.msra.mxu0 0.0
        %5070 = vmatprep.subr.mxu0 0.0
        %5071 = vmatpush1.msra.mxu0 0.0
        %5072 = vmatprep.subr.mxu0 0.0
        %5073 = vmatpush1.msra.mxu0 0.0
        %5074 = vmatprep.subr.mxu0 0.0
        %5075 = vmatpush1.msra.mxu0 0.0
        %5076 = vmatprep.subr.mxu0 0.0
        %5077 = vmatpush1.msra.mxu0 0.0
        %5078 = vmatprep.subr.mxu0 0.0
        %5079 = vmatpush1.msra.mxu0 0.0
        %5080 = vmatprep.subr.mxu0 0.0
        %5081 = vmatpush1.msra.mxu0 0.0
        %5082 = vmatprep.subr.mxu0 0.0
        %5083 = vmatpush1.msra.mxu0 0.0
        %5084 = vmatprep.subr.mxu0 0.0
        %5085 = vmatpush1.msra.mxu0 0.0
        %5086 = vmatprep.subr.mxu0 0.0
        %5087 = vmatpush1.msra.mxu0 0.0
        %5088 = vmatprep.subr.mxu0 0.0
        %5089 = vmatpush1.msra.mxu0 0.0
        %5090 = vmatprep.subr.mxu0 0.0
        %5091 = vmatpush1.msra.mxu0 0.0
        %5092 = vmatprep.subr.mxu0 0.0
        %5093 = vmatpush1.msra.mxu0 0.0
        %5094 = vmatprep.subr.mxu0 0.0
        %5095 = vmatpush1.msra.mxu0 0.0
        %5096 = vmatprep.subr.mxu0 0.0
        %5097 = vmatpush1.msra.mxu0 0.0
        %5098 = vmatprep.subr.mxu0 0.0
        %5099 = vmatpush1.msra.mxu0 0.0
        %5100 = vmatprep.subr.mxu0 0.0
        %5101 = vmatpush1.msra.mxu0 0.0
        %5102 = vmatprep.subr.mxu0 0.0
        %5103 = vmatpush1.msra.mxu0 0.0
        %5104 = vmatprep.subr.mxu0 0.0
        %5105 = vmatpush1.msra.mxu0 0.0
        %5106 = vmatprep.subr.mxu0 0.0
        %5107 = vmatpush1.msra.mxu0 0.0
        %5108 = vmatprep.subr.mxu0 0.0
        %5109 = vmatpush1.msra.mxu0 0.0
        %5110 = vmatprep.subr.mxu0 0.0
        %5111 = vmatpush1.msra.mxu0 0.0
        %5112 = vmatprep.subr.mxu0 0.0
        %5113 = vmatpush1.msra.mxu0 0.0
        %5114 = vmatprep.subr.mxu0 0.0
        %5115 = vmatpush1.msra.mxu0 0.0
        %5116 = vmatprep.subr.mxu0 0.0
        %5117 = vmatpush1.msra.mxu0 0.0
        %5118 = vmatprep.subr.mxu0 0.0
        %5119 = vmatpush1.msra.mxu0 0.0
        %5120 = vmatprep.subr.mxu0 0.0
        %5121 = vmatpush1.msra.mxu0 0.0
        %5122 = vmatprep.subr.mxu0 0.0
        %5123 = vmatpush1.msra.mxu0 0.0
        %5124 = vmatprep.mubr.f32.mxu0 0.0
        %v5125 = vand.u32 %v5058, 4294901760
        %v5126 = vsub.f32 %v5058, %v5125
        %v5127 = vand.u32 %v5126, 4294901760
        %v5128 = vsub.f32 %v5126, %v5127
        %v5129 = vand.u32 %v5128, 4294901760
        %5130 = vmatmul.mubr.f32.gmra.mrb[0].mxu0 %v5129
        %v5131 = vpop.f32.mrb[0].mxu0
        %v5132 = vadd.f32 0.0, %v5131
        %v5133 = vpop.f32.mrb[0].mxu0
        %v5134 = vadd.f32 0.0, %v5133
        %5135 = vdwg.mxu0
        %v5136 = vsub.f32 %v411, %v411
        %v5137 = vand.u32 %v5136, 4294901760
        %v5138 = vsub.f32 %v5136, %v5137
        %v5139 = vand.u32 %v5138, 4294901760
        %5140 = vmatprep.subr.mxu0 %v5139
        %v5141 = vsub.f32 %v410, %v410
        %v5142 = vand.u32 %v5141, 4294901760
        %v5143 = vsub.f32 %v5141, %v5142
        %v5144 = vand.u32 %v5143, 4294901760
        %5145 = vmatpush1.msra.mxu0 %v5144
        %v5146 = vsub.f32 %v414, %v414
        %v5147 = vand.u32 %v5146, 4294901760
        %v5148 = vsub.f32 %v5146, %v5147
        %v5149 = vand.u32 %v5148, 4294901760
        %5150 = vmatprep.subr.mxu0 %v5149
        %v5151 = vsub.f32 %v413, %v413
        %v5152 = vand.u32 %v5151, 4294901760
        %v5153 = vsub.f32 %v5151, %v5152
        %v5154 = vand.u32 %v5153, 4294901760
        %5155 = vmatpush1.msra.mxu0 %v5154
        %5156 = vmatprep.subr.mxu0 0.0
        %5157 = vmatpush1.msra.mxu0 0.0
        %5158 = vmatprep.subr.mxu0 0.0
        %5159 = vmatpush1.msra.mxu0 0.0
        %5160 = vmatprep.subr.mxu0 0.0
        %5161 = vmatpush1.msra.mxu0 0.0
        %5162 = vmatprep.subr.mxu0 0.0
        %5163 = vmatpush1.msra.mxu0 0.0
        %5164 = vmatprep.subr.mxu0 0.0
        %5165 = vmatpush1.msra.mxu0 0.0
        %5166 = vmatprep.subr.mxu0 0.0
        %5167 = vmatpush1.msra.mxu0 0.0
        %5168 = vmatprep.subr.mxu0 0.0
        %5169 = vmatpush1.msra.mxu0 0.0
        %5170 = vmatprep.subr.mxu0 0.0
        %5171 = vmatpush1.msra.mxu0 0.0
        %5172 = vmatprep.subr.mxu0 0.0
        %5173 = vmatpush1.msra.mxu0 0.0
        %5174 = vmatprep.subr.mxu0 0.0
        %5175 = vmatpush1.msra.mxu0 0.0
        %5176 = vmatprep.subr.mxu0 0.0
        %5177 = vmatpush1.msra.mxu0 0.0
        %5178 = vmatprep.subr.mxu0 0.0
        %5179 = vmatpush1.msra.mxu0 0.0
        %5180 = vmatprep.subr.mxu0 0.0
        %5181 = vmatpush1.msra.mxu0 0.0
        %5182 = vmatprep.subr.mxu0 0.0
        %5183 = vmatpush1.msra.mxu0 0.0
        %5184 = vmatprep.subr.mxu0 0.0
        %5185 = vmatpush1.msra.mxu0 0.0
        %5186 = vmatprep.subr.mxu0 0.0
        %5187 = vmatpush1.msra.mxu0 0.0
        %5188 = vmatprep.subr.mxu0 0.0
        %5189 = vmatpush1.msra.mxu0 0.0
        %5190 = vmatprep.subr.mxu0 0.0
        %5191 = vmatpush1.msra.mxu0 0.0
        %5192 = vmatprep.subr.mxu0 0.0
        %5193 = vmatpush1.msra.mxu0 0.0
        %5194 = vmatprep.subr.mxu0 0.0
        %5195 = vmatpush1.msra.mxu0 0.0
        %5196 = vmatprep.subr.mxu0 0.0
        %5197 = vmatpush1.msra.mxu0 0.0
        %5198 = vmatprep.subr.mxu0 0.0
        %5199 = vmatpush1.msra.mxu0 0.0
        %5200 = vmatprep.subr.mxu0 0.0
        %5201 = vmatpush1.msra.mxu0 0.0
        %5202 = vmatprep.subr.mxu0 0.0
        %5203 = vmatpush1.msra.mxu0 0.0
        %5204 = vmatprep.subr.mxu0 0.0
        %5205 = vmatpush1.msra.mxu0 0.0
        %5206 = vmatprep.subr.mxu0 0.0
        %5207 = vmatpush1.msra.mxu0 0.0
        %5208 = vmatprep.subr.mxu0 0.0
        %5209 = vmatpush1.msra.mxu0 0.0
        %5210 = vmatprep.subr.mxu0 0.0
        %5211 = vmatpush1.msra.mxu0 0.0
        %5212 = vmatprep.subr.mxu0 0.0
        %5213 = vmatpush1.msra.mxu0 0.0
        %5214 = vmatprep.subr.mxu0 0.0
        %5215 = vmatpush1.msra.mxu0 0.0
        %5216 = vmatprep.mubr.f32.mxu0 0.0
        %v5217 = vand.u32 %v5058, 4294901760
        %5218 = vmatmul.mubr.f32.gmra.mrb[0].mxu0 %v5217
        %v5219 = vpop.f32.mrb[0].mxu0
        %v5220 = vadd.f32 %v5132, %v5219
        %v5221 = vpop.f32.mrb[0].mxu0
        %v5222 = vadd.f32 %v5134, %v5221
        %5223 = vdwg.mxu0
        %v5224 = vsub.f32 %v411, %v411
        %5225 = vmatprep.subr.mxu0 %v5224
        %v5226 = vsub.f32 %v410, %v410
        %5227 = vmatpush1.msra.mxu0 %v5226
        %v5228 = vsub.f32 %v414, %v414
        %5229 = vmatprep.subr.mxu0 %v5228
        %v5230 = vsub.f32 %v413, %v413
        %5231 = vmatpush1.msra.mxu0 %v5230
        %5232 = vmatprep.subr.mxu0 0.0
        %5233 = vmatpush1.msra.mxu0 0.0
        %5234 = vmatprep.subr.mxu0 0.0
        %5235 = vmatpush1.msra.mxu0 0.0
        %5236 = vmatprep.subr.mxu0 0.0
        %5237 = vmatpush1.msra.mxu0 0.0
        %5238 = vmatprep.subr.mxu0 0.0
        %5239 = vmatpush1.msra.mxu0 0.0
        %5240 = vmatprep.subr.mxu0 0.0
        %5241 = vmatpush1.msra.mxu0 0.0
        %5242 = vmatprep.subr.mxu0 0.0
        %5243 = vmatpush1.msra.mxu0 0.0
        %5244 = vmatprep.subr.mxu0 0.0
        %5245 = vmatpush1.msra.mxu0 0.0
        %5246 = vmatprep.subr.mxu0 0.0
        %5247 = vmatpush1.msra.mxu0 0.0
        %5248 = vmatprep.subr.mxu0 0.0
        %5249 = vmatpush1.msra.mxu0 0.0
        %5250 = vmatprep.subr.mxu0 0.0
        %5251 = vmatpush1.msra.mxu0 0.0
        %5252 = vmatprep.subr.mxu0 0.0
        %5253 = vmatpush1.msra.mxu0 0.0
        %5254 = vmatprep.subr.mxu0 0.0
        %5255 = vmatpush1.msra.mxu0 0.0
        %5256 = vmatprep.subr.mxu0 0.0
        %5257 = vmatpush1.msra.mxu0 0.0
        %5258 = vmatprep.subr.mxu0 0.0
        %5259 = vmatpush1.msra.mxu0 0.0
        %5260 = vmatprep.subr.mxu0 0.0
        %5261 = vmatpush1.msra.mxu0 0.0
        %5262 = vmatprep.subr.mxu0 0.0
        %5263 = vmatpush1.msra.mxu0 0.0
        %5264 = vmatprep.subr.mxu0 0.0
        %5265 = vmatpush1.msra.mxu0 0.0
        %5266 = vmatprep.subr.mxu0 0.0
        %5267 = vmatpush1.msra.mxu0 0.0
        %5268 = vmatprep.subr.mxu0 0.0
        %5269 = vmatpush1.msra.mxu0 0.0
        %5270 = vmatprep.subr.mxu0 0.0
        %5271 = vmatpush1.msra.mxu0 0.0
        %5272 = vmatprep.subr.mxu0 0.0
        %5273 = vmatpush1.msra.mxu0 0.0
        %5274 = vmatprep.subr.mxu0 0.0
        %5275 = vmatpush1.msra.mxu0 0.0
        %5276 = vmatprep.subr.mxu0 0.0
        %5277 = vmatpush1.msra.mxu0 0.0
        %5278 = vmatprep.subr.mxu0 0.0
        %5279 = vmatpush1.msra.mxu0 0.0
        %5280 = vmatprep.subr.mxu0 0.0
        %5281 = vmatpush1.msra.mxu0 0.0
        %5282 = vmatprep.subr.mxu0 0.0
        %5283 = vmatpush1.msra.mxu0 0.0
        %5284 = vmatprep.subr.mxu0 0.0
        %5285 = vmatpush1.msra.mxu0 0.0
        %5286 = vmatprep.subr.mxu0 0.0
        %5287 = vmatpush1.msra.mxu0 0.0
        %5288 = vmatprep.subr.mxu0 0.0
        %5289 = vmatpush1.msra.mxu0 0.0
        %5290 = vmatprep.subr.mxu0 0.0
        %5291 = vmatpush1.msra.mxu0 0.0
        %5292 = vmatprep.mubr.f32.mxu0 0.0
        %v5293 = vand.u32 %v5058, 4294901760
        %v5294 = vsub.f32 %v5058, %v5293
        %5295 = vmatmul.mubr.f32.gmra.mrb[0].mxu0 %v5294
        %v5296 = vpop.f32.mrb[0].mxu0
        %v5297 = vadd.f32 %v5220, %v5296
        %v5298 = vpop.f32.mrb[0].mxu0
        %v5299 = vadd.f32 %v5222, %v5298
        %5300 = vdwg.mxu0
        %5301 = vmatprep.subr.mxu0 %v411
        %5302 = vmatpush1.msra.mxu0 %v410
        %5303 = vmatprep.subr.mxu0 %v414
        %5304 = vmatpush1.msra.mxu0 %v413
        %5305 = vmatprep.subr.mxu0 0.0
        %5306 = vmatpush1.msra.mxu0 0.0
        %5307 = vmatprep.subr.mxu0 0.0
        %5308 = vmatpush1.msra.mxu0 0.0
        %5309 = vmatprep.subr.mxu0 0.0
        %5310 = vmatpush1.msra.mxu0 0.0
        %5311 = vmatprep.subr.mxu0 0.0
        %5312 = vmatpush1.msra.mxu0 0.0
        %5313 = vmatprep.subr.mxu0 0.0
        %5314 = vmatpush1.msra.mxu0 0.0
        %5315 = vmatprep.subr.mxu0 0.0
        %5316 = vmatpush1.msra.mxu0 0.0
        %5317 = vmatprep.subr.mxu0 0.0
        %5318 = vmatpush1.msra.mxu0 0.0
        %5319 = vmatprep.subr.mxu0 0.0
        %5320 = vmatpush1.msra.mxu0 0.0
        %5321 = vmatprep.subr.mxu0 0.0
        %5322 = vmatpush1.msra.mxu0 0.0
        %5323 = vmatprep.subr.mxu0 0.0
        %5324 = vmatpush1.msra.mxu0 0.0
        %5325 = vmatprep.subr.mxu0 0.0
        %5326 = vmatpush1.msra.mxu0 0.0
        %5327 = vmatprep.subr.mxu0 0.0
        %5328 = vmatpush1.msra.mxu0 0.0
        %5329 = vmatprep.subr.mxu0 0.0
        %5330 = vmatpush1.msra.mxu0 0.0
        %5331 = vmatprep.subr.mxu0 0.0
        %5332 = vmatpush1.msra.mxu0 0.0
        %5333 = vmatprep.subr.mxu0 0.0
        %5334 = vmatpush1.msra.mxu0 0.0
        %5335 = vmatprep.subr.mxu0 0.0
        %5336 = vmatpush1.msra.mxu0 0.0
        %5337 = vmatprep.subr.mxu0 0.0
        %5338 = vmatpush1.msra.mxu0 0.0
        %5339 = vmatprep.subr.mxu0 0.0
        %5340 = vmatpush1.msra.mxu0 0.0
        %5341 = vmatprep.subr.mxu0 0.0
        %5342 = vmatpush1.msra.mxu0 0.0
        %5343 = vmatprep.subr.mxu0 0.0
        %5344 = vmatpush1.msra.mxu0 0.0
        %5345 = vmatprep.subr.mxu0 0.0
        %5346 = vmatpush1.msra.mxu0 0.0
        %5347 = vmatprep.subr.mxu0 0.0
        %5348 = vmatpush1.msra.mxu0 0.0
        %5349 = vmatprep.subr.mxu0 0.0
        %5350 = vmatpush1.msra.mxu0 0.0
        %5351 = vmatprep.subr.mxu0 0.0
        %5352 = vmatpush1.msra.mxu0 0.0
        %5353 = vmatprep.subr.mxu0 0.0
        %5354 = vmatpush1.msra.mxu0 0.0
        %5355 = vmatprep.subr.mxu0 0.0
        %5356 = vmatpush1.msra.mxu0 0.0
        %5357 = vmatprep.subr.mxu0 0.0
        %5358 = vmatpush1.msra.mxu0 0.0
        %5359 = vmatprep.subr.mxu0 0.0
        %5360 = vmatpush1.msra.mxu0 0.0
        %5361 = vmatprep.subr.mxu0 0.0
        %5362 = vmatpush1.msra.mxu0 0.0
        %5363 = vmatprep.subr.mxu0 0.0
        %5364 = vmatpush1.msra.mxu0 0.0
        %5365 = vmatprep.mubr.f32.mxu0 0.0
        %v5366 = vand.u32 %v5058, 4294901760
        %v5367 = vsub.f32 %v5058, %v5366
        %v5368 = vand.u32 %v5367, 4294901760
        %5369 = vmatmul.mubr.f32.gmra.mrb[0].mxu0 %v5368
        %v5370 = vpop.f32.mrb[0].mxu0
        %v5371 = vadd.f32 %v5297, %v5370
        %v5372 = vpop.f32.mrb[0].mxu0
        %v5373 = vadd.f32 %v5299, %v5372
        %5374 = vdwg.mxu0
        %v5375 = vsub.f32 %v411, %v411
        %v5376 = vand.u32 %v5375, 4294901760
        %5377 = vmatprep.subr.mxu0 %v5376
        %v5378 = vsub.f32 %v410, %v410
        %v5379 = vand.u32 %v5378, 4294901760
        %5380 = vmatpush1.msra.mxu0 %v5379
        %v5381 = vsub.f32 %v414, %v414
        %v5382 = vand.u32 %v5381, 4294901760
        %5383 = vmatprep.subr.mxu0 %v5382
        %v5384 = vsub.f32 %v413, %v413
        %v5385 = vand.u32 %v5384, 4294901760
        %5386 = vmatpush1.msra.mxu0 %v5385
        %5387 = vmatprep.subr.mxu0 0.0
        %5388 = vmatpush1.msra.mxu0 0.0
        %5389 = vmatprep.subr.mxu0 0.0
        %5390 = vmatpush1.msra.mxu0 0.0
        %5391 = vmatprep.subr.mxu0 0.0
        %5392 = vmatpush1.msra.mxu0 0.0
        %5393 = vmatprep.subr.mxu0 0.0
        %5394 = vmatpush1.msra.mxu0 0.0
        %5395 = vmatprep.subr.mxu0 0.0
        %5396 = vmatpush1.msra.mxu0 0.0
        %5397 = vmatprep.subr.mxu0 0.0
        %5398 = vmatpush1.msra.mxu0 0.0
        %5399 = vmatprep.subr.mxu0 0.0
        %5400 = vmatpush1.msra.mxu0 0.0
        %5401 = vmatprep.subr.mxu0 0.0
        %5402 = vmatpush1.msra.mxu0 0.0
        %5403 = vmatprep.subr.mxu0 0.0
        %5404 = vmatpush1.msra.mxu0 0.0
        %5405 = vmatprep.subr.mxu0 0.0
        %5406 = vmatpush1.msra.mxu0 0.0
        %5407 = vmatprep.subr.mxu0 0.0
        %5408 = vmatpush1.msra.mxu0 0.0
        %5409 = vmatprep.subr.mxu0 0.0
        %5410 = vmatpush1.msra.mxu0 0.0
        %5411 = vmatprep.subr.mxu0 0.0
        %5412 = vmatpush1.msra.mxu0 0.0
        %5413 = vmatprep.subr.mxu0 0.0
        %5414 = vmatpush1.msra.mxu0 0.0
        %5415 = vmatprep.subr.mxu0 0.0
        %5416 = vmatpush1.msra.mxu0 0.0
        %5417 = vmatprep.subr.mxu0 0.0
        %5418 = vmatpush1.msra.mxu0 0.0
        %5419 = vmatprep.subr.mxu0 0.0
        %5420 = vmatpush1.msra.mxu0 0.0
        %5421 = vmatprep.subr.mxu0 0.0
        %5422 = vmatpush1.msra.mxu0 0.0
        %5423 = vmatprep.subr.mxu0 0.0
        %5424 = vmatpush1.msra.mxu0 0.0
        %5425 = vmatprep.subr.mxu0 0.0
        %5426 = vmatpush1.msra.mxu0 0.0
        %5427 = vmatprep.subr.mxu0 0.0
        %5428 = vmatpush1.msra.mxu0 0.0
        %5429 = vmatprep.subr.mxu0 0.0
        %5430 = vmatpush1.msra.mxu0 0.0
        %5431 = vmatprep.subr.mxu0 0.0
        %5432 = vmatpush1.msra.mxu0 0.0
        %5433 = vmatprep.subr.mxu0 0.0
        %5434 = vmatpush1.msra.mxu0 0.0
        %5435 = vmatprep.subr.mxu0 0.0
        %5436 = vmatpush1.msra.mxu0 0.0
        %5437 = vmatprep.subr.mxu0 0.0
        %5438 = vmatpush1.msra.mxu0 0.0
        %5439 = vmatprep.subr.mxu0 0.0
        %5440 = vmatpush1.msra.mxu0 0.0
        %5441 = vmatprep.subr.mxu0 0.0
        %5442 = vmatpush1.msra.mxu0 0.0
        %5443 = vmatprep.subr.mxu0 0.0
        %5444 = vmatpush1.msra.mxu0 0.0
        %5445 = vmatprep.subr.mxu0 0.0
        %5446 = vmatpush1.msra.mxu0 0.0
        %5447 = vmatprep.mubr.f32.mxu0 0.0
        %v5448 = vand.u32 %v5058, 4294901760
        %5449 = vmatmul.mubr.f32.gmra.mrb[0].mxu0 %v5448
        %v5450 = vpop.f32.mrb[0].mxu0
        %v5451 = vadd.f32 %v5371, %v5450
        %v5452 = vpop.f32.mrb[0].mxu0
        %v5453 = vadd.f32 %v5373, %v5452
        %5454 = vdwg.mxu0
        %5455 = vmatprep.subr.mxu0 %v411
        %5456 = vmatpush1.msra.mxu0 %v410
        %5457 = vmatprep.subr.mxu0 %v414
        %5458 = vmatpush1.msra.mxu0 %v413
        %5459 = vmatprep.subr.mxu0 0.0
        %5460 = vmatpush1.msra.mxu0 0.0
        %5461 = vmatprep.subr.mxu0 0.0
        %5462 = vmatpush1.msra.mxu0 0.0
        %5463 = vmatprep.subr.mxu0 0.0
        %5464 = vmatpush1.msra.mxu0 0.0
        %5465 = vmatprep.subr.mxu0 0.0
        %5466 = vmatpush1.msra.mxu0 0.0
        %5467 = vmatprep.subr.mxu0 0.0
        %5468 = vmatpush1.msra.mxu0 0.0
        %5469 = vmatprep.subr.mxu0 0.0
        %5470 = vmatpush1.msra.mxu0 0.0
        %5471 = vmatprep.subr.mxu0 0.0
        %5472 = vmatpush1.msra.mxu0 0.0
        %5473 = vmatprep.subr.mxu0 0.0
        %5474 = vmatpush1.msra.mxu0 0.0
        %5475 = vmatprep.subr.mxu0 0.0
        %5476 = vmatpush1.msra.mxu0 0.0
        %5477 = vmatprep.subr.mxu0 0.0
        %5478 = vmatpush1.msra.mxu0 0.0
        %5479 = vmatprep.subr.mxu0 0.0
        %5480 = vmatpush1.msra.mxu0 0.0
        %5481 = vmatprep.subr.mxu0 0.0
        %5482 = vmatpush1.msra.mxu0 0.0
        %5483 = vmatprep.subr.mxu0 0.0
        %5484 = vmatpush1.msra.mxu0 0.0
        %5485 = vmatprep.subr.mxu0 0.0
        %5486 = vmatpush1.msra.mxu0 0.0
        %5487 = vmatprep.subr.mxu0 0.0
        %5488 = vmatpush1.msra.mxu0 0.0
        %5489 = vmatprep.subr.mxu0 0.0
        %5490 = vmatpush1.msra.mxu0 0.0
        %5491 = vmatprep.subr.mxu0 0.0
        %5492 = vmatpush1.msra.mxu0 0.0
        %5493 = vmatprep.subr.mxu0 0.0
        %5494 = vmatpush1.msra.mxu0 0.0
        %5495 = vmatprep.subr.mxu0 0.0
        %5496 = vmatpush1.msra.mxu0 0.0
        %5497 = vmatprep.subr.mxu0 0.0
        %5498 = vmatpush1.msra.mxu0 0.0
        %5499 = vmatprep.subr.mxu0 0.0
        %5500 = vmatpush1.msra.mxu0 0.0
        %5501 = vmatprep.subr.mxu0 0.0
        %5502 = vmatpush1.msra.mxu0 0.0
        %5503 = vmatprep.subr.mxu0 0.0
        %5504 = vmatpush1.msra.mxu0 0.0
        %5505 = vmatprep.subr.mxu0 0.0
        %5506 = vmatpush1.msra.mxu0 0.0
        %5507 = vmatprep.subr.mxu0 0.0
        %5508 = vmatpush1.msra.mxu0 0.0
        %5509 = vmatprep.subr.mxu0 0.0
        %5510 = vmatpush1.msra.mxu0 0.0
        %5511 = vmatprep.subr.mxu0 0.0
        %5512 = vmatpush1.msra.mxu0 0.0
        %5513 = vmatprep.subr.mxu0 0.0
        %5514 = vmatpush1.msra.mxu0 0.0
        %5515 = vmatprep.subr.mxu0 0.0
        %5516 = vmatpush1.msra.mxu0 0.0
        %5517 = vmatprep.subr.mxu0 0.0
        %5518 = vmatpush1.msra.mxu0 0.0
        %5519 = vmatprep.mubr.f32.mxu0 0.0
        %v5520 = vand.u32 %v5058, 4294901760
        %5521 = vmatmul.mubr.f32.gmra.mrb[0].mxu0 %v5520
        %v5522 = vpop.f32.mrb[0].mxu0
        %v5523 = vadd.f32 %v5451, %v5522
        %v5524 = vpop.f32.mrb[0].mxu0
        %v5525 = vadd.f32 %v5453, %v5524
        %5526 = vdwg.mxu0
        %5527 = vmatprep.subr.mxu0 0.0
        %5528 = vmatpush1.msra.mxu0 %v412
        %5529 = vmatprep.subr.mxu0 0.0
        %5530 = vmatpush1.msra.mxu0 %v415
        %5531 = vmatprep.subr.mxu0 0.0
        %5532 = vmatpush1.msra.mxu0 0.0
        %5533 = vmatprep.subr.mxu0 0.0
        %5534 = vmatpush1.msra.mxu0 0.0
        %5535 = vmatprep.subr.mxu0 0.0
        %5536 = vmatpush1.msra.mxu0 0.0
        %5537 = vmatprep.subr.mxu0 0.0
        %5538 = vmatpush1.msra.mxu0 0.0
        %5539 = vmatprep.subr.mxu0 0.0
        %5540 = vmatpush1.msra.mxu0 0.0
        %5541 = vmatprep.subr.mxu0 0.0
        %5542 = vmatpush1.msra.mxu0 0.0
        %5543 = vmatprep.subr.mxu0 0.0
        %5544 = vmatpush1.msra.mxu0 0.0
        %5545 = vmatprep.subr.mxu0 0.0
        %5546 = vmatpush1.msra.mxu0 0.0
        %5547 = vmatprep.subr.mxu0 0.0
        %5548 = vmatpush1.msra.mxu0 0.0
        %5549 = vmatprep.subr.mxu0 0.0
        %5550 = vmatpush1.msra.mxu0 0.0
        %5551 = vmatprep.subr.mxu0 0.0
        %5552 = vmatpush1.msra.mxu0 0.0
        %5553 = vmatprep.subr.mxu0 0.0
        %5554 = vmatpush1.msra.mxu0 0.0
        %5555 = vmatprep.subr.mxu0 0.0
        %5556 = vmatpush1.msra.mxu0 0.0
        %5557 = vmatprep.subr.mxu0 0.0
        %5558 = vmatpush1.msra.mxu0 0.0
        %5559 = vmatprep.subr.mxu0 0.0
        %5560 = vmatpush1.msra.mxu0 0.0
        %5561 = vmatprep.subr.mxu0 0.0
        %5562 = vmatpush1.msra.mxu0 0.0
        %5563 = vmatprep.subr.mxu0 0.0
        %5564 = vmatpush1.msra.mxu0 0.0
        %5565 = vmatprep.subr.mxu0 0.0
        %5566 = vmatpush1.msra.mxu0 0.0
        %5567 = vmatprep.subr.mxu0 0.0
        %5568 = vmatpush1.msra.mxu0 0.0
        %5569 = vmatprep.subr.mxu0 0.0
        %5570 = vmatpush1.msra.mxu0 0.0
        %5571 = vmatprep.subr.mxu0 0.0
        %5572 = vmatpush1.msra.mxu0 0.0
        %5573 = vmatprep.subr.mxu0 0.0
        %5574 = vmatpush1.msra.mxu0 0.0
        %5575 = vmatprep.subr.mxu0 0.0
        %5576 = vmatpush1.msra.mxu0 0.0
        %5577 = vmatprep.subr.mxu0 0.0
        %5578 = vmatpush1.msra.mxu0 0.0
        %5579 = vmatprep.subr.mxu0 0.0
        %5580 = vmatpush1.msra.mxu0 0.0
        %5581 = vmatprep.subr.mxu0 0.0
        %5582 = vmatpush1.msra.mxu0 0.0
        %5583 = vmatprep.subr.mxu0 0.0
        %5584 = vmatpush1.msra.mxu0 0.0
        %5585 = vmatprep.subr.mxu0 0.0
        %5586 = vmatpush1.msra.mxu0 0.0
        %5587 = vmatprep.subr.mxu0 0.0
        %5588 = vmatpush1.msra.mxu0 0.0
        %5589 = vmatprep.subr.mxu0 0.0
        %5590 = vmatpush1.msra.mxu0 0.0
        %5591 = vmatprep.mubr.f32.mxu0 0.0
        %v5592 = vand.u32 %v5058, 4294901760
        %v5593 = vsub.f32 %v5058, %v5592
        %v5594 = vand.u32 %v5593, 4294901760
        %v5595 = vsub.f32 %v5593, %v5594
        %v5596 = vand.u32 %v5595, 4294901760
        %5597 = vmatmul.mubr.f32.gmra.mrb[0].mxu0 %v5596
        %v5598 = vpop.f32.mrb[0].mxu0
        %v5599 = vadd.f32 0.0, %v5598
        %v5600 = vpop.f32.mrb[0].mxu0
        %5601 = vdwg.mxu0
        %5602 = vmatprep.subr.mxu0 0.0
        %v5603 = vsub.f32 %v412, %v412
        %v5604 = vand.u32 %v5603, 4294901760
        %v5605 = vsub.f32 %v5603, %v5604
        %v5606 = vand.u32 %v5605, 4294901760
        %5607 = vmatpush1.msra.mxu0 %v5606
        %5608 = vmatprep.subr.mxu0 0.0
        %v5609 = vsub.f32 %v415, %v415
        %v5610 = vand.u32 %v5609, 4294901760
        %v5611 = vsub.f32 %v5609, %v5610
        %v5612 = vand.u32 %v5611, 4294901760
        %5613 = vmatpush1.msra.mxu0 %v5612
        %5614 = vmatprep.subr.mxu0 0.0
        %5615 = vmatpush1.msra.mxu0 0.0
        %5616 = vmatprep.subr.mxu0 0.0
        %5617 = vmatpush1.msra.mxu0 0.0
        %5618 = vmatprep.subr.mxu0 0.0
        %5619 = vmatpush1.msra.mxu0 0.0
        %5620 = vmatprep.subr.mxu0 0.0
        %5621 = vmatpush1.msra.mxu0 0.0
        %5622 = vmatprep.subr.mxu0 0.0
        %5623 = vmatpush1.msra.mxu0 0.0
        %5624 = vmatprep.subr.mxu0 0.0
        %5625 = vmatpush1.msra.mxu0 0.0
        %5626 = vmatprep.subr.mxu0 0.0
        %5627 = vmatpush1.msra.mxu0 0.0
        %5628 = vmatprep.subr.mxu0 0.0
        %5629 = vmatpush1.msra.mxu0 0.0
        %5630 = vmatprep.subr.mxu0 0.0
        %5631 = vmatpush1.msra.mxu0 0.0
        %5632 = vmatprep.subr.mxu0 0.0
        %5633 = vmatpush1.msra.mxu0 0.0
        %5634 = vmatprep.subr.mxu0 0.0
        %5635 = vmatpush1.msra.mxu0 0.0
        %5636 = vmatprep.subr.mxu0 0.0
        %5637 = vmatpush1.msra.mxu0 0.0
        %5638 = vmatprep.subr.mxu0 0.0
        %5639 = vmatpush1.msra.mxu0 0.0
        %5640 = vmatprep.subr.mxu0 0.0
        %5641 = vmatpush1.msra.mxu0 0.0
        %5642 = vmatprep.subr.mxu0 0.0
        %5643 = vmatpush1.msra.mxu0 0.0
        %5644 = vmatprep.subr.mxu0 0.0
        %5645 = vmatpush1.msra.mxu0 0.0
        %5646 = vmatprep.subr.mxu0 0.0
        %5647 = vmatpush1.msra.mxu0 0.0
        %5648 = vmatprep.subr.mxu0 0.0
        %5649 = vmatpush1.msra.mxu0 0.0
        %5650 = vmatprep.subr.mxu0 0.0
        %5651 = vmatpush1.msra.mxu0 0.0
        %5652 = vmatprep.subr.mxu0 0.0
        %5653 = vmatpush1.msra.mxu0 0.0
        %5654 = vmatprep.subr.mxu0 0.0
        %5655 = vmatpush1.msra.mxu0 0.0
        %5656 = vmatprep.subr.mxu0 0.0
        %5657 = vmatpush1.msra.mxu0 0.0
        %5658 = vmatprep.subr.mxu0 0.0
        %5659 = vmatpush1.msra.mxu0 0.0
        %5660 = vmatprep.subr.mxu0 0.0
        %5661 = vmatpush1.msra.mxu0 0.0
        %5662 = vmatprep.subr.mxu0 0.0
        %5663 = vmatpush1.msra.mxu0 0.0
        %5664 = vmatprep.subr.mxu0 0.0
        %5665 = vmatpush1.msra.mxu0 0.0
        %5666 = vmatprep.subr.mxu0 0.0
        %5667 = vmatpush1.msra.mxu0 0.0
        %5668 = vmatprep.subr.mxu0 0.0
        %5669 = vmatpush1.msra.mxu0 0.0
        %5670 = vmatprep.subr.mxu0 0.0
        %5671 = vmatpush1.msra.mxu0 0.0
        %5672 = vmatprep.subr.mxu0 0.0
        %5673 = vmatpush1.msra.mxu0 0.0
        %5674 = vmatprep.mubr.f32.mxu0 0.0
        %v5675 = vand.u32 %v5058, 4294901760
        %5676 = vmatmul.mubr.f32.gmra.mrb[0].mxu0 %v5675
        %v5677 = vpop.f32.mrb[0].mxu0
        %v5678 = vadd.f32 %v5599, %v5677
        %v5679 = vpop.f32.mrb[0].mxu0
        %5680 = vdwg.mxu0
        %5681 = vmatprep.subr.mxu0 0.0
        %v5682 = vsub.f32 %v412, %v412
        %5683 = vmatpush1.msra.mxu0 %v5682
        %5684 = vmatprep.subr.mxu0 0.0
        %v5685 = vsub.f32 %v415, %v415
        %5686 = vmatpush1.msra.mxu0 %v5685
        %5687 = vmatprep.subr.mxu0 0.0
        %5688 = vmatpush1.msra.mxu0 0.0
        %5689 = vmatprep.subr.mxu0 0.0
        %5690 = vmatpush1.msra.mxu0 0.0
        %5691 = vmatprep.subr.mxu0 0.0
        %5692 = vmatpush1.msra.mxu0 0.0
        %5693 = vmatprep.subr.mxu0 0.0
        %5694 = vmatpush1.msra.mxu0 0.0
        %5695 = vmatprep.subr.mxu0 0.0
        %5696 = vmatpush1.msra.mxu0 0.0
        %5697 = vmatprep.subr.mxu0 0.0
        %5698 = vmatpush1.msra.mxu0 0.0
        %5699 = vmatprep.subr.mxu0 0.0
        %5700 = vmatpush1.msra.mxu0 0.0
        %5701 = vmatprep.subr.mxu0 0.0
        %5702 = vmatpush1.msra.mxu0 0.0
        %5703 = vmatprep.subr.mxu0 0.0
        %5704 = vmatpush1.msra.mxu0 0.0
        %5705 = vmatprep.subr.mxu0 0.0
        %5706 = vmatpush1.msra.mxu0 0.0
        %5707 = vmatprep.subr.mxu0 0.0
        %5708 = vmatpush1.msra.mxu0 0.0
        %5709 = vmatprep.subr.mxu0 0.0
        %5710 = vmatpush1.msra.mxu0 0.0
        %5711 = vmatprep.subr.mxu0 0.0
        %5712 = vmatpush1.msra.mxu0 0.0
        %5713 = vmatprep.subr.mxu0 0.0
        %5714 = vmatpush1.msra.mxu0 0.0
        %5715 = vmatprep.subr.mxu0 0.0
        %5716 = vmatpush1.msra.mxu0 0.0
        %5717 = vmatprep.subr.mxu0 0.0
        %5718 = vmatpush1.msra.mxu0 0.0
        %5719 = vmatprep.subr.mxu0 0.0
        %5720 = vmatpush1.msra.mxu0 0.0
        %5721 = vmatprep.subr.mxu0 0.0
        %5722 = vmatpush1.msra.mxu0 0.0
        %5723 = vmatprep.subr.mxu0 0.0
        %5724 = vmatpush1.msra.mxu0 0.0
        %5725 = vmatprep.subr.mxu0 0.0
        %5726 = vmatpush1.msra.mxu0 0.0
        %5727 = vmatprep.subr.mxu0 0.0
        %5728 = vmatpush1.msra.mxu0 0.0
        %5729 = vmatprep.subr.mxu0 0.0
        %5730 = vmatpush1.msra.mxu0 0.0
        %5731 = vmatprep.subr.mxu0 0.0
        %5732 = vmatpush1.msra.mxu0 0.0
        %5733 = vmatprep.subr.mxu0 0.0
        %5734 = vmatpush1.msra.mxu0 0.0
        %5735 = vmatprep.subr.mxu0 0.0
        %5736 = vmatpush1.msra.mxu0 0.0
        %5737 = vmatprep.subr.mxu0 0.0
        %5738 = vmatpush1.msra.mxu0 0.0
        %5739 = vmatprep.subr.mxu0 0.0
        %5740 = vmatpush1.msra.mxu0 0.0
        %5741 = vmatprep.subr.mxu0 0.0
        %5742 = vmatpush1.msra.mxu0 0.0
        %5743 = vmatprep.subr.mxu0 0.0
        %5744 = vmatpush1.msra.mxu0 0.0
        %5745 = vmatprep.subr.mxu0 0.0
        %5746 = vmatpush1.msra.mxu0 0.0
        %5747 = vmatprep.mubr.f32.mxu0 0.0
        %v5748 = vand.u32 %v5058, 4294901760
        %v5749 = vsub.f32 %v5058, %v5748
        %5750 = vmatmul.mubr.f32.gmra.mrb[0].mxu0 %v5749
        %v5751 = vpop.f32.mrb[0].mxu0
        %v5752 = vadd.f32 %v5678, %v5751
        %v5753 = vpop.f32.mrb[0].mxu0
        %5754 = vdwg.mxu0
        %5755 = vmatprep.subr.mxu0 0.0
        %5756 = vmatpush1.msra.mxu0 %v412
        %5757 = vmatprep.subr.mxu0 0.0
        %5758 = vmatpush1.msra.mxu0 %v415
        %5759 = vmatprep.subr.mxu0 0.0
        %5760 = vmatpush1.msra.mxu0 0.0
        %5761 = vmatprep.subr.mxu0 0.0
        %5762 = vmatpush1.msra.mxu0 0.0
        %5763 = vmatprep.subr.mxu0 0.0
        %5764 = vmatpush1.msra.mxu0 0.0
        %5765 = vmatprep.subr.mxu0 0.0
        %5766 = vmatpush1.msra.mxu0 0.0
        %5767 = vmatprep.subr.mxu0 0.0
        %5768 = vmatpush1.msra.mxu0 0.0
        %5769 = vmatprep.subr.mxu0 0.0
        %5770 = vmatpush1.msra.mxu0 0.0
        %5771 = vmatprep.subr.mxu0 0.0
        %5772 = vmatpush1.msra.mxu0 0.0
        %5773 = vmatprep.subr.mxu0 0.0
        %5774 = vmatpush1.msra.mxu0 0.0
        %5775 = vmatprep.subr.mxu0 0.0
        %5776 = vmatpush1.msra.mxu0 0.0
        %5777 = vmatprep.subr.mxu0 0.0
        %5778 = vmatpush1.msra.mxu0 0.0
        %5779 = vmatprep.subr.mxu0 0.0
        %5780 = vmatpush1.msra.mxu0 0.0
        %5781 = vmatprep.subr.mxu0 0.0
        %5782 = vmatpush1.msra.mxu0 0.0
        %5783 = vmatprep.subr.mxu0 0.0
        %5784 = vmatpush1.msra.mxu0 0.0
        %5785 = vmatprep.subr.mxu0 0.0
        %5786 = vmatpush1.msra.mxu0 0.0
        %5787 = vmatprep.subr.mxu0 0.0
        %5788 = vmatpush1.msra.mxu0 0.0
        %5789 = vmatprep.subr.mxu0 0.0
        %5790 = vmatpush1.msra.mxu0 0.0
        %5791 = vmatprep.subr.mxu0 0.0
        %5792 = vmatpush1.msra.mxu0 0.0
        %5793 = vmatprep.subr.mxu0 0.0
        %5794 = vmatpush1.msra.mxu0 0.0
        %5795 = vmatprep.subr.mxu0 0.0
        %5796 = vmatpush1.msra.mxu0 0.0
        %5797 = vmatprep.subr.mxu0 0.0
        %5798 = vmatpush1.msra.mxu0 0.0
        %5799 = vmatprep.subr.mxu0 0.0
        %5800 = vmatpush1.msra.mxu0 0.0
        %5801 = vmatprep.subr.mxu0 0.0
        %5802 = vmatpush1.msra.mxu0 0.0
        %5803 = vmatprep.subr.mxu0 0.0
        %5804 = vmatpush1.msra.mxu0 0.0
        %5805 = vmatprep.subr.mxu0 0.0
        %5806 = vmatpush1.msra.mxu0 0.0
        %5807 = vmatprep.subr.mxu0 0.0
        %5808 = vmatpush1.msra.mxu0 0.0
        %5809 = vmatprep.subr.mxu0 0.0
        %5810 = vmatpush1.msra.mxu0 0.0
        %5811 = vmatprep.subr.mxu0 0.0
        %5812 = vmatpush1.msra.mxu0 0.0
        %5813 = vmatprep.subr.mxu0 0.0
        %5814 = vmatpush1.msra.mxu0 0.0
        %5815 = vmatprep.subr.mxu0 0.0
        %5816 = vmatpush1.msra.mxu0 0.0
        %5817 = vmatprep.subr.mxu0 0.0
        %5818 = vmatpush1.msra.mxu0 0.0
        %5819 = vmatprep.mubr.f32.mxu0 0.0
        %v5820 = vand.u32 %v5058, 4294901760
        %v5821 = vsub.f32 %v5058, %v5820
        %v5822 = vand.u32 %v5821, 4294901760
        %5823 = vmatmul.mubr.f32.gmra.mrb[0].mxu0 %v5822
        %v5824 = vpop.f32.mrb[0].mxu0
        %v5825 = vadd.f32 %v5752, %v5824
        %v5826 = vpop.f32.mrb[0].mxu0
        %5827 = vdwg.mxu0
        %5828 = vmatprep.subr.mxu0 0.0
        %v5829 = vsub.f32 %v412, %v412
        %v5830 = vand.u32 %v5829, 4294901760
        %5831 = vmatpush1.msra.mxu0 %v5830
        %5832 = vmatprep.subr.mxu0 0.0
        %v5833 = vsub.f32 %v415, %v415
        %v5834 = vand.u32 %v5833, 4294901760
        %5835 = vmatpush1.msra.mxu0 %v5834
        %5836 = vmatprep.subr.mxu0 0.0
        %5837 = vmatpush1.msra.mxu0 0.0
        %5838 = vmatprep.subr.mxu0 0.0
        %5839 = vmatpush1.msra.mxu0 0.0
        %5840 = vmatprep.subr.mxu0 0.0
        %5841 = vmatpush1.msra.mxu0 0.0
        %5842 = vmatprep.subr.mxu0 0.0
        %5843 = vmatpush1.msra.mxu0 0.0
        %5844 = vmatprep.subr.mxu0 0.0
        %5845 = vmatpush1.msra.mxu0 0.0
        %5846 = vmatprep.subr.mxu0 0.0
        %5847 = vmatpush1.msra.mxu0 0.0
        %5848 = vmatprep.subr.mxu0 0.0
        %5849 = vmatpush1.msra.mxu0 0.0
        %5850 = vmatprep.subr.mxu0 0.0
        %5851 = vmatpush1.msra.mxu0 0.0
        %5852 = vmatprep.subr.mxu0 0.0
        %5853 = vmatpush1.msra.mxu0 0.0
        %5854 = vmatprep.subr.mxu0 0.0
        %5855 = vmatpush1.msra.mxu0 0.0
        %5856 = vmatprep.subr.mxu0 0.0
        %5857 = vmatpush1.msra.mxu0 0.0
        %5858 = vmatprep.subr.mxu0 0.0
        %5859 = vmatpush1.msra.mxu0 0.0
        %5860 = vmatprep.subr.mxu0 0.0
        %5861 = vmatpush1.msra.mxu0 0.0
        %5862 = vmatprep.subr.mxu0 0.0
        %5863 = vmatpush1.msra.mxu0 0.0
        %5864 = vmatprep.subr.mxu0 0.0
        %5865 = vmatpush1.msra.mxu0 0.0
        %5866 = vmatprep.subr.mxu0 0.0
        %5867 = vmatpush1.msra.mxu0 0.0
        %5868 = vmatprep.subr.mxu0 0.0
        %5869 = vmatpush1.msra.mxu0 0.0
        %5870 = vmatprep.subr.mxu0 0.0
        %5871 = vmatpush1.msra.mxu0 0.0
        %5872 = vmatprep.subr.mxu0 0.0
        %5873 = vmatpush1.msra.mxu0 0.0
        %5874 = vmatprep.subr.mxu0 0.0
        %5875 = vmatpush1.msra.mxu0 0.0
        %5876 = vmatprep.subr.mxu0 0.0
        %5877 = vmatpush1.msra.mxu0 0.0
        %5878 = vmatprep.subr.mxu0 0.0
        %5879 = vmatpush1.msra.mxu0 0.0
        %5880 = vmatprep.subr.mxu0 0.0
        %5881 = vmatpush1.msra.mxu0 0.0
        %5882 = vmatprep.subr.mxu0 0.0
        %5883 = vmatpush1.msra.mxu0 0.0
        %5884 = vmatprep.subr.mxu0 0.0
        %5885 = vmatpush1.msra.mxu0 0.0
        %5886 = vmatprep.subr.mxu0 0.0
        %5887 = vmatpush1.msra.mxu0 0.0
        %5888 = vmatprep.subr.mxu0 0.0
        %5889 = vmatpush1.msra.mxu0 0.0
        %5890 = vmatprep.subr.mxu0 0.0
        %5891 = vmatpush1.msra.mxu0 0.0
        %5892 = vmatprep.subr.mxu0 0.0
        %5893 = vmatpush1.msra.mxu0 0.0
        %5894 = vmatprep.subr.mxu0 0.0
        %5895 = vmatpush1.msra.mxu0 0.0
        %5896 = vmatprep.mubr.f32.mxu0 0.0
        %v5897 = vand.u32 %v5058, 4294901760
        %5898 = vmatmul.mubr.f32.gmra.mrb[0].mxu0 %v5897
        %v5899 = vpop.f32.mrb[0].mxu0
        %v5900 = vadd.f32 %v5825, %v5899
        %v5901 = vpop.f32.mrb[0].mxu0
        %5902 = vdwg.mxu0
        %5903 = vmatprep.subr.mxu0 0.0
        %5904 = vmatpush1.msra.mxu0 %v412
        %5905 = vmatprep.subr.mxu0 0.0
        %5906 = vmatpush1.msra.mxu0 %v415
        %5907 = vmatprep.subr.mxu0 0.0
        %5908 = vmatpush1.msra.mxu0 0.0
        %5909 = vmatprep.subr.mxu0 0.0
        %5910 = vmatpush1.msra.mxu0 0.0
        %5911 = vmatprep.subr.mxu0 0.0
        %5912 = vmatpush1.msra.mxu0 0.0
        %5913 = vmatprep.subr.mxu0 0.0
        %5914 = vmatpush1.msra.mxu0 0.0
        %5915 = vmatprep.subr.mxu0 0.0
        %5916 = vmatpush1.msra.mxu0 0.0
        %5917 = vmatprep.subr.mxu0 0.0
        %5918 = vmatpush1.msra.mxu0 0.0
        %5919 = vmatprep.subr.mxu0 0.0
        %5920 = vmatpush1.msra.mxu0 0.0
        %5921 = vmatprep.subr.mxu0 0.0
        %5922 = vmatpush1.msra.mxu0 0.0
        %5923 = vmatprep.subr.mxu0 0.0
        %5924 = vmatpush1.msra.mxu0 0.0
        %5925 = vmatprep.subr.mxu0 0.0
        %5926 = vmatpush1.msra.mxu0 0.0
        %5927 = vmatprep.subr.mxu0 0.0
        %5928 = vmatpush1.msra.mxu0 0.0
        %5929 = vmatprep.subr.mxu0 0.0
        %5930 = vmatpush1.msra.mxu0 0.0
        %5931 = vmatprep.subr.mxu0 0.0
        %5932 = vmatpush1.msra.mxu0 0.0
        %5933 = vmatprep.subr.mxu0 0.0
        %5934 = vmatpush1.msra.mxu0 0.0
        %5935 = vmatprep.subr.mxu0 0.0
        %5936 = vmatpush1.msra.mxu0 0.0
        %5937 = vmatprep.subr.mxu0 0.0
        %5938 = vmatpush1.msra.mxu0 0.0
        %5939 = vmatprep.subr.mxu0 0.0
        %5940 = vmatpush1.msra.mxu0 0.0
        %5941 = vmatprep.subr.mxu0 0.0
        %5942 = vmatpush1.msra.mxu0 0.0
        %5943 = vmatprep.subr.mxu0 0.0
        %5944 = vmatpush1.msra.mxu0 0.0
        %5945 = vmatprep.subr.mxu0 0.0
        %5946 = vmatpush1.msra.mxu0 0.0
        %5947 = vmatprep.subr.mxu0 0.0
        %5948 = vmatpush1.msra.mxu0 0.0
        %5949 = vmatprep.subr.mxu0 0.0
        %5950 = vmatpush1.msra.mxu0 0.0
        %5951 = vmatprep.subr.mxu0 0.0
        %5952 = vmatpush1.msra.mxu0 0.0
        %5953 = vmatprep.subr.mxu0 0.0
        %5954 = vmatpush1.msra.mxu0 0.0
        %5955 = vmatprep.subr.mxu0 0.0
        %5956 = vmatpush1.msra.mxu0 0.0
        %5957 = vmatprep.subr.mxu0 0.0
        %5958 = vmatpush1.msra.mxu0 0.0
        %5959 = vmatprep.subr.mxu0 0.0
        %5960 = vmatpush1.msra.mxu0 0.0
        %5961 = vmatprep.subr.mxu0 0.0
        %5962 = vmatpush1.msra.mxu0 0.0
        %5963 = vmatprep.subr.mxu0 0.0
        %5964 = vmatpush1.msra.mxu0 0.0
        %5965 = vmatprep.subr.mxu0 0.0
        %5966 = vmatpush1.msra.mxu0 0.0
        %5967 = vmatprep.mubr.f32.mxu0 0.0
        %v5968 = vand.u32 %v5058, 4294901760
        %5969 = vmatmul.mubr.f32.gmra.mrb[0].mxu0 %v5968
        %v5970 = vpop.f32.mrb[0].mxu0
        %v5971 = vadd.f32 %v5900, %v5970
        %v5972 = vpop.f32.mrb[0].mxu0
        %5973 = vdwg.mxu0
        %v5974 = vsel %vm342, %v475, 0
        %5976 = vmatprep.subr.mxu0 %v417
        %5977 = vmatpush1.msra.mxu0 %v416
        %5978 = vmatprep.subr.mxu0 %v420
        %5979 = vmatpush1.msra.mxu0 %v419
        %5980 = vmatprep.subr.mxu0 0.0
        %5981 = vmatpush1.msra.mxu0 0.0
        %5982 = vmatprep.subr.mxu0 0.0
        %5983 = vmatpush1.msra.mxu0 0.0
        %5984 = vmatprep.subr.mxu0 0.0
        %5985 = vmatpush1.msra.mxu0 0.0
        %5986 = vmatprep.subr.mxu0 0.0
        %5987 = vmatpush1.msra.mxu0 0.0
        %5988 = vmatprep.subr.mxu0 0.0
        %5989 = vmatpush1.msra.mxu0 0.0
        %5990 = vmatprep.subr.mxu0 0.0
        %5991 = vmatpush1.msra.mxu0 0.0
        %5992 = vmatprep.subr.mxu0 0.0
        %5993 = vmatpush1.msra.mxu0 0.0
        %5994 = vmatprep.subr.mxu0 0.0
        %5995 = vmatpush1.msra.mxu0 0.0
        %5996 = vmatprep.subr.mxu0 0.0
        %5997 = vmatpush1.msra.mxu0 0.0
        %5998 = vmatprep.subr.mxu0 0.0
        %5999 = vmatpush1.msra.mxu0 0.0
        %6000 = vmatprep.subr.mxu0 0.0
        %6001 = vmatpush1.msra.mxu0 0.0
        %6002 = vmatprep.subr.mxu0 0.0
        %6003 = vmatpush1.msra.mxu0 0.0
        %6004 = vmatprep.subr.mxu0 0.0
        %6005 = vmatpush1.msra.mxu0 0.0
        %6006 = vmatprep.subr.mxu0 0.0
        %6007 = vmatpush1.msra.mxu0 0.0
        %6008 = vmatprep.subr.mxu0 0.0
        %6009 = vmatpush1.msra.mxu0 0.0
        %6010 = vmatprep.subr.mxu0 0.0
        %6011 = vmatpush1.msra.mxu0 0.0
        %6012 = vmatprep.subr.mxu0 0.0
        %6013 = vmatpush1.msra.mxu0 0.0
        %6014 = vmatprep.subr.mxu0 0.0
        %6015 = vmatpush1.msra.mxu0 0.0
        %6016 = vmatprep.subr.mxu0 0.0
        %6017 = vmatpush1.msra.mxu0 0.0
        %6018 = vmatprep.subr.mxu0 0.0
        %6019 = vmatpush1.msra.mxu0 0.0
        %6020 = vmatprep.subr.mxu0 0.0
        %6021 = vmatpush1.msra.mxu0 0.0
        %6022 = vmatprep.subr.mxu0 0.0
        %6023 = vmatpush1.msra.mxu0 0.0
        %6024 = vmatprep.subr.mxu0 0.0
        %6025 = vmatpush1.msra.mxu0 0.0
        %6026 = vmatprep.subr.mxu0 0.0
        %6027 = vmatpush1.msra.mxu0 0.0
        %6028 = vmatprep.subr.mxu0 0.0
        %6029 = vmatpush1.msra.mxu0 0.0
        %6030 = vmatprep.subr.mxu0 0.0
        %6031 = vmatpush1.msra.mxu0 0.0
        %6032 = vmatprep.subr.mxu0 0.0
        %6033 = vmatpush1.msra.mxu0 0.0
        %6034 = vmatprep.subr.mxu0 0.0
        %6035 = vmatpush1.msra.mxu0 0.0
        %6036 = vmatprep.subr.mxu0 0.0
        %6037 = vmatpush1.msra.mxu0 0.0
        %6038 = vmatprep.subr.mxu0 0.0
        %6039 = vmatpush1.msra.mxu0 0.0
        %6040 = vmatprep.mubr.f32.mxu0 0.0
        %v6041 = vand.u32 %v5974, 4294901760
        %v6042 = vsub.f32 %v5974, %v6041
        %v6043 = vand.u32 %v6042, 4294901760
        %v6044 = vsub.f32 %v6042, %v6043
        %v6045 = vand.u32 %v6044, 4294901760
        %6046 = vmatmul.mubr.f32.gmra.mrb[0].mxu0 %v6045
        %v6047 = vpop.f32.mrb[0].mxu0
        %v6048 = vadd.f32 0.0, %v6047
        %v6049 = vpop.f32.mrb[0].mxu0
        %v6050 = vadd.f32 0.0, %v6049
        %6051 = vdwg.mxu0
        %v6052 = vsub.f32 %v417, %v417
        %v6053 = vand.u32 %v6052, 4294901760
        %v6054 = vsub.f32 %v6052, %v6053
        %v6055 = vand.u32 %v6054, 4294901760
        %6056 = vmatprep.subr.mxu0 %v6055
        %v6057 = vsub.f32 %v416, %v416
        %v6058 = vand.u32 %v6057, 4294901760
        %v6059 = vsub.f32 %v6057, %v6058
        %v6060 = vand.u32 %v6059, 4294901760
        %6061 = vmatpush1.msra.mxu0 %v6060
        %v6062 = vsub.f32 %v420, %v420
        %v6063 = vand.u32 %v6062, 4294901760
        %v6064 = vsub.f32 %v6062, %v6063
        %v6065 = vand.u32 %v6064, 4294901760
        %6066 = vmatprep.subr.mxu0 %v6065
        %v6067 = vsub.f32 %v419, %v419
        %v6068 = vand.u32 %v6067, 4294901760
        %v6069 = vsub.f32 %v6067, %v6068
        %v6070 = vand.u32 %v6069, 4294901760
        %6071 = vmatpush1.msra.mxu0 %v6070
        %6072 = vmatprep.subr.mxu0 0.0
        %6073 = vmatpush1.msra.mxu0 0.0
        %6074 = vmatprep.subr.mxu0 0.0
        %6075 = vmatpush1.msra.mxu0 0.0
        %6076 = vmatprep.subr.mxu0 0.0
        %6077 = vmatpush1.msra.mxu0 0.0
        %6078 = vmatprep.subr.mxu0 0.0
        %6079 = vmatpush1.msra.mxu0 0.0
        %6080 = vmatprep.subr.mxu0 0.0
        %6081 = vmatpush1.msra.mxu0 0.0
        %6082 = vmatprep.subr.mxu0 0.0
        %6083 = vmatpush1.msra.mxu0 0.0
        %6084 = vmatprep.subr.mxu0 0.0
        %6085 = vmatpush1.msra.mxu0 0.0
        %6086 = vmatprep.subr.mxu0 0.0
        %6087 = vmatpush1.msra.mxu0 0.0
        %6088 = vmatprep.subr.mxu0 0.0
        %6089 = vmatpush1.msra.mxu0 0.0
        %6090 = vmatprep.subr.mxu0 0.0
        %6091 = vmatpush1.msra.mxu0 0.0
        %6092 = vmatprep.subr.mxu0 0.0
        %6093 = vmatpush1.msra.mxu0 0.0
        %6094 = vmatprep.subr.mxu0 0.0
        %6095 = vmatpush1.msra.mxu0 0.0
        %6096 = vmatprep.subr.mxu0 0.0
        %6097 = vmatpush1.msra.mxu0 0.0
        %6098 = vmatprep.subr.mxu0 0.0
        %6099 = vmatpush1.msra.mxu0 0.0
        %6100 = vmatprep.subr.mxu0 0.0
        %6101 = vmatpush1.msra.mxu0 0.0
        %6102 = vmatprep.subr.mxu0 0.0
        %6103 = vmatpush1.msra.mxu0 0.0
        %6104 = vmatprep.subr.mxu0 0.0
        %6105 = vmatpush1.msra.mxu0 0.0
        %6106 = vmatprep.subr.mxu0 0.0
        %6107 = vmatpush1.msra.mxu0 0.0
        %6108 = vmatprep.subr.mxu0 0.0
        %6109 = vmatpush1.msra.mxu0 0.0
        %6110 = vmatprep.subr.mxu0 0.0
        %6111 = vmatpush1.msra.mxu0 0.0
        %6112 = vmatprep.subr.mxu0 0.0
        %6113 = vmatpush1.msra.mxu0 0.0
        %6114 = vmatprep.subr.mxu0 0.0
        %6115 = vmatpush1.msra.mxu0 0.0
        %6116 = vmatprep.subr.mxu0 0.0
        %6117 = vmatpush1.msra.mxu0 0.0
        %6118 = vmatprep.subr.mxu0 0.0
        %6119 = vmatpush1.msra.mxu0 0.0
        %6120 = vmatprep.subr.mxu0 0.0
        %6121 = vmatpush1.msra.mxu0 0.0
        %6122 = vmatprep.subr.mxu0 0.0
        %6123 = vmatpush1.msra.mxu0 0.0
        %6124 = vmatprep.subr.mxu0 0.0
        %6125 = vmatpush1.msra.mxu0 0.0
        %6126 = vmatprep.subr.mxu0 0.0
        %6127 = vmatpush1.msra.mxu0 0.0
        %6128 = vmatprep.subr.mxu0 0.0
        %6129 = vmatpush1.msra.mxu0 0.0
        %6130 = vmatprep.subr.mxu0 0.0
        %6131 = vmatpush1.msra.mxu0 0.0
        %6132 = vmatprep.mubr.f32.mxu0 0.0
        %v6133 = vand.u32 %v5974, 4294901760
        %6134 = vmatmul.mubr.f32.gmra.mrb[0].mxu0 %v6133
        %v6135 = vpop.f32.mrb[0].mxu0
        %v6136 = vadd.f32 %v6048, %v6135
        %v6137 = vpop.f32.mrb[0].mxu0
        %v6138 = vadd.f32 %v6050, %v6137
        %6139 = vdwg.mxu0
        %v6140 = vsub.f32 %v417, %v417
        %6141 = vmatprep.subr.mxu0 %v6140
        %v6142 = vsub.f32 %v416, %v416
        %6143 = vmatpush1.msra.mxu0 %v6142
        %v6144 = vsub.f32 %v420, %v420
        %6145 = vmatprep.subr.mxu0 %v6144
        %v6146 = vsub.f32 %v419, %v419
        %6147 = vmatpush1.msra.mxu0 %v6146
        %6148 = vmatprep.subr.mxu0 0.0
        %6149 = vmatpush1.msra.mxu0 0.0
        %6150 = vmatprep.subr.mxu0 0.0
        %6151 = vmatpush1.msra.mxu0 0.0
        %6152 = vmatprep.subr.mxu0 0.0
        %6153 = vmatpush1.msra.mxu0 0.0
        %6154 = vmatprep.subr.mxu0 0.0
        %6155 = vmatpush1.msra.mxu0 0.0
        %6156 = vmatprep.subr.mxu0 0.0
        %6157 = vmatpush1.msra.mxu0 0.0
        %6158 = vmatprep.subr.mxu0 0.0
        %6159 = vmatpush1.msra.mxu0 0.0
        %6160 = vmatprep.subr.mxu0 0.0
        %6161 = vmatpush1.msra.mxu0 0.0
        %6162 = vmatprep.subr.mxu0 0.0
        %6163 = vmatpush1.msra.mxu0 0.0
        %6164 = vmatprep.subr.mxu0 0.0
        %6165 = vmatpush1.msra.mxu0 0.0
        %6166 = vmatprep.subr.mxu0 0.0
        %6167 = vmatpush1.msra.mxu0 0.0
        %6168 = vmatprep.subr.mxu0 0.0
        %6169 = vmatpush1.msra.mxu0 0.0
        %6170 = vmatprep.subr.mxu0 0.0
        %6171 = vmatpush1.msra.mxu0 0.0
        %6172 = vmatprep.subr.mxu0 0.0
        %6173 = vmatpush1.msra.mxu0 0.0
        %6174 = vmatprep.subr.mxu0 0.0
        %6175 = vmatpush1.msra.mxu0 0.0
        %6176 = vmatprep.subr.mxu0 0.0
        %6177 = vmatpush1.msra.mxu0 0.0
        %6178 = vmatprep.subr.mxu0 0.0
        %6179 = vmatpush1.msra.mxu0 0.0
        %6180 = vmatprep.subr.mxu0 0.0
        %6181 = vmatpush1.msra.mxu0 0.0
        %6182 = vmatprep.subr.mxu0 0.0
        %6183 = vmatpush1.msra.mxu0 0.0
        %6184 = vmatprep.subr.mxu0 0.0
        %6185 = vmatpush1.msra.mxu0 0.0
        %6186 = vmatprep.subr.mxu0 0.0
        %6187 = vmatpush1.msra.mxu0 0.0
        %6188 = vmatprep.subr.mxu0 0.0
        %6189 = vmatpush1.msra.mxu0 0.0
        %6190 = vmatprep.subr.mxu0 0.0
        %6191 = vmatpush1.msra.mxu0 0.0
        %6192 = vmatprep.subr.mxu0 0.0
        %6193 = vmatpush1.msra.mxu0 0.0
        %6194 = vmatprep.subr.mxu0 0.0
        %6195 = vmatpush1.msra.mxu0 0.0
        %6196 = vmatprep.subr.mxu0 0.0
        %6197 = vmatpush1.msra.mxu0 0.0
        %6198 = vmatprep.subr.mxu0 0.0
        %6199 = vmatpush1.msra.mxu0 0.0
        %6200 = vmatprep.subr.mxu0 0.0
        %6201 = vmatpush1.msra.mxu0 0.0
        %6202 = vmatprep.subr.mxu0 0.0
        %6203 = vmatpush1.msra.mxu0 0.0
        %6204 = vmatprep.subr.mxu0 0.0
        %6205 = vmatpush1.msra.mxu0 0.0
        %6206 = vmatprep.subr.mxu0 0.0
        %6207 = vmatpush1.msra.mxu0 0.0
        %6208 = vmatprep.mubr.f32.mxu0 0.0
        %v6209 = vand.u32 %v5974, 4294901760
        %v6210 = vsub.f32 %v5974, %v6209
        %6211 = vmatmul.mubr.f32.gmra.mrb[0].mxu0 %v6210
        %v6212 = vpop.f32.mrb[0].mxu0
        %v6213 = vadd.f32 %v6136, %v6212
        %v6214 = vpop.f32.mrb[0].mxu0
        %v6215 = vadd.f32 %v6138, %v6214
        %6216 = vdwg.mxu0
        %6217 = vmatprep.subr.mxu0 %v417
        %6218 = vmatpush1.msra.mxu0 %v416
        %6219 = vmatprep.subr.mxu0 %v420
        %6220 = vmatpush1.msra.mxu0 %v419
        %6221 = vmatprep.subr.mxu0 0.0
        %6222 = vmatpush1.msra.mxu0 0.0
        %6223 = vmatprep.subr.mxu0 0.0
        %6224 = vmatpush1.msra.mxu0 0.0
        %6225 = vmatprep.subr.mxu0 0.0
        %6226 = vmatpush1.msra.mxu0 0.0
        %6227 = vmatprep.subr.mxu0 0.0
        %6228 = vmatpush1.msra.mxu0 0.0
        %6229 = vmatprep.subr.mxu0 0.0
        %6230 = vmatpush1.msra.mxu0 0.0
        %6231 = vmatprep.subr.mxu0 0.0
        %6232 = vmatpush1.msra.mxu0 0.0
        %6233 = vmatprep.subr.mxu0 0.0
        %6234 = vmatpush1.msra.mxu0 0.0
        %6235 = vmatprep.subr.mxu0 0.0
        %6236 = vmatpush1.msra.mxu0 0.0
        %6237 = vmatprep.subr.mxu0 0.0
        %6238 = vmatpush1.msra.mxu0 0.0
        %6239 = vmatprep.subr.mxu0 0.0
        %6240 = vmatpush1.msra.mxu0 0.0
        %6241 = vmatprep.subr.mxu0 0.0
        %6242 = vmatpush1.msra.mxu0 0.0
        %6243 = vmatprep.subr.mxu0 0.0
        %6244 = vmatpush1.msra.mxu0 0.0
        %6245 = vmatprep.subr.mxu0 0.0
        %6246 = vmatpush1.msra.mxu0 0.0
        %6247 = vmatprep.subr.mxu0 0.0
        %6248 = vmatpush1.msra.mxu0 0.0
        %6249 = vmatprep.subr.mxu0 0.0
        %6250 = vmatpush1.msra.mxu0 0.0
        %6251 = vmatprep.subr.mxu0 0.0
        %6252 = vmatpush1.msra.mxu0 0.0
        %6253 = vmatprep.subr.mxu0 0.0
        %6254 = vmatpush1.msra.mxu0 0.0
        %6255 = vmatprep.subr.mxu0 0.0
        %6256 = vmatpush1.msra.mxu0 0.0
        %6257 = vmatprep.subr.mxu0 0.0
        %6258 = vmatpush1.msra.mxu0 0.0
        %6259 = vmatprep.subr.mxu0 0.0
        %6260 = vmatpush1.msra.mxu0 0.0
        %6261 = vmatprep.subr.mxu0 0.0
        %6262 = vmatpush1.msra.mxu0 0.0
        %6263 = vmatprep.subr.mxu0 0.0
        %6264 = vmatpush1.msra.mxu0 0.0
        %6265 = vmatprep.subr.mxu0 0.0
        %6266 = vmatpush1.msra.mxu0 0.0
        %6267 = vmatprep.subr.mxu0 0.0
        %6268 = vmatpush1.msra.mxu0 0.0
        %6269 = vmatprep.subr.mxu0 0.0
        %6270 = vmatpush1.msra.mxu0 0.0
        %6271 = vmatprep.subr.mxu0 0.0
        %6272 = vmatpush1.msra.mxu0 0.0
        %6273 = vmatprep.subr.mxu0 0.0
        %6274 = vmatpush1.msra.mxu0 0.0
        %6275 = vmatprep.subr.mxu0 0.0
        %6276 = vmatpush1.msra.mxu0 0.0
        %6277 = vmatprep.subr.mxu0 0.0
        %6278 = vmatpush1.msra.mxu0 0.0
        %6279 = vmatprep.subr.mxu0 0.0
        %6280 = vmatpush1.msra.mxu0 0.0
        %6281 = vmatprep.mubr.f32.mxu0 0.0
        %v6282 = vand.u32 %v5974, 4294901760
        %v6283 = vsub.f32 %v5974, %v6282
        %v6284 = vand.u32 %v6283, 4294901760
        %6285 = vmatmul.mubr.f32.gmra.mrb[0].mxu0 %v6284
        %v6286 = vpop.f32.mrb[0].mxu0
        %v6287 = vadd.f32 %v6213, %v6286
        %v6288 = vpop.f32.mrb[0].mxu0
        %v6289 = vadd.f32 %v6215, %v6288
        %6290 = vdwg.mxu0
        %v6291 = vsub.f32 %v417, %v417
        %v6292 = vand.u32 %v6291, 4294901760
        %6293 = vmatprep.subr.mxu0 %v6292
        %v6294 = vsub.f32 %v416, %v416
        %v6295 = vand.u32 %v6294, 4294901760
        %6296 = vmatpush1.msra.mxu0 %v6295
        %v6297 = vsub.f32 %v420, %v420
        %v6298 = vand.u32 %v6297, 4294901760
        %6299 = vmatprep.subr.mxu0 %v6298
        %v6300 = vsub.f32 %v419, %v419
        %v6301 = vand.u32 %v6300, 4294901760
        %6302 = vmatpush1.msra.mxu0 %v6301
        %6303 = vmatprep.subr.mxu0 0.0
        %6304 = vmatpush1.msra.mxu0 0.0
        %6305 = vmatprep.subr.mxu0 0.0
        %6306 = vmatpush1.msra.mxu0 0.0
        %6307 = vmatprep.subr.mxu0 0.0
        %6308 = vmatpush1.msra.mxu0 0.0
        %6309 = vmatprep.subr.mxu0 0.0
        %6310 = vmatpush1.msra.mxu0 0.0
        %6311 = vmatprep.subr.mxu0 0.0
        %6312 = vmatpush1.msra.mxu0 0.0
        %6313 = vmatprep.subr.mxu0 0.0
        %6314 = vmatpush1.msra.mxu0 0.0
        %6315 = vmatprep.subr.mxu0 0.0
        %6316 = vmatpush1.msra.mxu0 0.0
        %6317 = vmatprep.subr.mxu0 0.0
        %6318 = vmatpush1.msra.mxu0 0.0
        %6319 = vmatprep.subr.mxu0 0.0
        %6320 = vmatpush1.msra.mxu0 0.0
        %6321 = vmatprep.subr.mxu0 0.0
        %6322 = vmatpush1.msra.mxu0 0.0
        %6323 = vmatprep.subr.mxu0 0.0
        %6324 = vmatpush1.msra.mxu0 0.0
        %6325 = vmatprep.subr.mxu0 0.0
        %6326 = vmatpush1.msra.mxu0 0.0
        %6327 = vmatprep.subr.mxu0 0.0
        %6328 = vmatpush1.msra.mxu0 0.0
        %6329 = vmatprep.subr.mxu0 0.0
        %6330 = vmatpush1.msra.mxu0 0.0
        %6331 = vmatprep.subr.mxu0 0.0
        %6332 = vmatpush1.msra.mxu0 0.0
        %6333 = vmatprep.subr.mxu0 0.0
        %6334 = vmatpush1.msra.mxu0 0.0
        %6335 = vmatprep.subr.mxu0 0.0
        %6336 = vmatpush1.msra.mxu0 0.0
        %6337 = vmatprep.subr.mxu0 0.0
        %6338 = vmatpush1.msra.mxu0 0.0
        %6339 = vmatprep.subr.mxu0 0.0
        %6340 = vmatpush1.msra.mxu0 0.0
        %6341 = vmatprep.subr.mxu0 0.0
        %6342 = vmatpush1.msra.mxu0 0.0
        %6343 = vmatprep.subr.mxu0 0.0
        %6344 = vmatpush1.msra.mxu0 0.0
        %6345 = vmatprep.subr.mxu0 0.0
        %6346 = vmatpush1.msra.mxu0 0.0
        %6347 = vmatprep.subr.mxu0 0.0
        %6348 = vmatpush1.msra.mxu0 0.0
        %6349 = vmatprep.subr.mxu0 0.0
        %6350 = vmatpush1.msra.mxu0 0.0
        %6351 = vmatprep.subr.mxu0 0.0
        %6352 = vmatpush1.msra.mxu0 0.0
        %6353 = vmatprep.subr.mxu0 0.0
        %6354 = vmatpush1.msra.mxu0 0.0
        %6355 = vmatprep.subr.mxu0 0.0
        %6356 = vmatpush1.msra.mxu0 0.0
        %6357 = vmatprep.subr.mxu0 0.0
        %6358 = vmatpush1.msra.mxu0 0.0
        %6359 = vmatprep.subr.mxu0 0.0
        %6360 = vmatpush1.msra.mxu0 0.0
        %6361 = vmatprep.subr.mxu0 0.0
        %6362 = vmatpush1.msra.mxu0 0.0
        %6363 = vmatprep.mubr.f32.mxu0 0.0
        %v6364 = vand.u32 %v5974, 4294901760
        %6365 = vmatmul.mubr.f32.gmra.mrb[0].mxu0 %v6364
        %v6366 = vpop.f32.mrb[0].mxu0
        %v6367 = vadd.f32 %v6287, %v6366
        %v6368 = vpop.f32.mrb[0].mxu0
        %v6369 = vadd.f32 %v6289, %v6368
        %6370 = vdwg.mxu0
        %6371 = vmatprep.subr.mxu0 %v417
        %6372 = vmatpush1.msra.mxu0 %v416
        %6373 = vmatprep.subr.mxu0 %v420
        %6374 = vmatpush1.msra.mxu0 %v419
        %6375 = vmatprep.subr.mxu0 0.0
        %6376 = vmatpush1.msra.mxu0 0.0
        %6377 = vmatprep.subr.mxu0 0.0
        %6378 = vmatpush1.msra.mxu0 0.0
        %6379 = vmatprep.subr.mxu0 0.0
        %6380 = vmatpush1.msra.mxu0 0.0
        %6381 = vmatprep.subr.mxu0 0.0
        %6382 = vmatpush1.msra.mxu0 0.0
        %6383 = vmatprep.subr.mxu0 0.0
        %6384 = vmatpush1.msra.mxu0 0.0
        %6385 = vmatprep.subr.mxu0 0.0
        %6386 = vmatpush1.msra.mxu0 0.0
        %6387 = vmatprep.subr.mxu0 0.0
        %6388 = vmatpush1.msra.mxu0 0.0
        %6389 = vmatprep.subr.mxu0 0.0
        %6390 = vmatpush1.msra.mxu0 0.0
        %6391 = vmatprep.subr.mxu0 0.0
        %6392 = vmatpush1.msra.mxu0 0.0
        %6393 = vmatprep.subr.mxu0 0.0
        %6394 = vmatpush1.msra.mxu0 0.0
        %6395 = vmatprep.subr.mxu0 0.0
        %6396 = vmatpush1.msra.mxu0 0.0
        %6397 = vmatprep.subr.mxu0 0.0
        %6398 = vmatpush1.msra.mxu0 0.0
        %6399 = vmatprep.subr.mxu0 0.0
        %6400 = vmatpush1.msra.mxu0 0.0
        %6401 = vmatprep.subr.mxu0 0.0
        %6402 = vmatpush1.msra.mxu0 0.0
        %6403 = vmatprep.subr.mxu0 0.0
        %6404 = vmatpush1.msra.mxu0 0.0
        %6405 = vmatprep.subr.mxu0 0.0
        %6406 = vmatpush1.msra.mxu0 0.0
        %6407 = vmatprep.subr.mxu0 0.0
        %6408 = vmatpush1.msra.mxu0 0.0
        %6409 = vmatprep.subr.mxu0 0.0
        %6410 = vmatpush1.msra.mxu0 0.0
        %6411 = vmatprep.subr.mxu0 0.0
        %6412 = vmatpush1.msra.mxu0 0.0
        %6413 = vmatprep.subr.mxu0 0.0
        %6414 = vmatpush1.msra.mxu0 0.0
        %6415 = vmatprep.subr.mxu0 0.0
        %6416 = vmatpush1.msra.mxu0 0.0
        %6417 = vmatprep.subr.mxu0 0.0
        %6418 = vmatpush1.msra.mxu0 0.0
        %6419 = vmatprep.subr.mxu0 0.0
        %6420 = vmatpush1.msra.mxu0 0.0
        %6421 = vmatprep.subr.mxu0 0.0
        %6422 = vmatpush1.msra.mxu0 0.0
        %6423 = vmatprep.subr.mxu0 0.0
        %6424 = vmatpush1.msra.mxu0 0.0
        %6425 = vmatprep.subr.mxu0 0.0
        %6426 = vmatpush1.msra.mxu0 0.0
        %6427 = vmatprep.subr.mxu0 0.0
        %6428 = vmatpush1.msra.mxu0 0.0
        %6429 = vmatprep.subr.mxu0 0.0
        %6430 = vmatpush1.msra.mxu0 0.0
        %6431 = vmatprep.subr.mxu0 0.0
        %6432 = vmatpush1.msra.mxu0 0.0
        %6433 = vmatprep.subr.mxu0 0.0
        %6434 = vmatpush1.msra.mxu0 0.0
        %6435 = vmatprep.mubr.f32.mxu0 0.0
        %v6436 = vand.u32 %v5974, 4294901760
        %6437 = vmatmul.mubr.f32.gmra.mrb[0].mxu0 %v6436
        %v6438 = vpop.f32.mrb[0].mxu0
        %v6439 = vadd.f32 %v6367, %v6438
        %v6440 = vpop.f32.mrb[0].mxu0
        %v6441 = vadd.f32 %v6369, %v6440
        %6442 = vdwg.mxu0
        %6443 = vmatprep.subr.mxu0 0.0
        %6444 = vmatpush1.msra.mxu0 %v418
        %6445 = vmatprep.subr.mxu0 0.0
        %6446 = vmatpush1.msra.mxu0 %v421
        %6447 = vmatprep.subr.mxu0 0.0
        %6448 = vmatpush1.msra.mxu0 0.0
        %6449 = vmatprep.subr.mxu0 0.0
        %6450 = vmatpush1.msra.mxu0 0.0
        %6451 = vmatprep.subr.mxu0 0.0
        %6452 = vmatpush1.msra.mxu0 0.0
        %6453 = vmatprep.subr.mxu0 0.0
        %6454 = vmatpush1.msra.mxu0 0.0
        %6455 = vmatprep.subr.mxu0 0.0
        %6456 = vmatpush1.msra.mxu0 0.0
        %6457 = vmatprep.subr.mxu0 0.0
        %6458 = vmatpush1.msra.mxu0 0.0
        %6459 = vmatprep.subr.mxu0 0.0
        %6460 = vmatpush1.msra.mxu0 0.0
        %6461 = vmatprep.subr.mxu0 0.0
        %6462 = vmatpush1.msra.mxu0 0.0
        %6463 = vmatprep.subr.mxu0 0.0
        %6464 = vmatpush1.msra.mxu0 0.0
        %6465 = vmatprep.subr.mxu0 0.0
        %6466 = vmatpush1.msra.mxu0 0.0
        %6467 = vmatprep.subr.mxu0 0.0
        %6468 = vmatpush1.msra.mxu0 0.0
        %6469 = vmatprep.subr.mxu0 0.0
        %6470 = vmatpush1.msra.mxu0 0.0
        %6471 = vmatprep.subr.mxu0 0.0
        %6472 = vmatpush1.msra.mxu0 0.0
        %6473 = vmatprep.subr.mxu0 0.0
        %6474 = vmatpush1.msra.mxu0 0.0
        %6475 = vmatprep.subr.mxu0 0.0
        %6476 = vmatpush1.msra.mxu0 0.0
        %6477 = vmatprep.subr.mxu0 0.0
        %6478 = vmatpush1.msra.mxu0 0.0
        %6479 = vmatprep.subr.mxu0 0.0
        %6480 = vmatpush1.msra.mxu0 0.0
        %6481 = vmatprep.subr.mxu0 0.0
        %6482 = vmatpush1.msra.mxu0 0.0
        %6483 = vmatprep.subr.mxu0 0.0
        %6484 = vmatpush1.msra.mxu0 0.0
        %6485 = vmatprep.subr.mxu0 0.0
        %6486 = vmatpush1.msra.mxu0 0.0
        %6487 = vmatprep.subr.mxu0 0.0
        %6488 = vmatpush1.msra.mxu0 0.0
        %6489 = vmatprep.subr.mxu0 0.0
        %6490 = vmatpush1.msra.mxu0 0.0
        %6491 = vmatprep.subr.mxu0 0.0
        %6492 = vmatpush1.msra.mxu0 0.0
        %6493 = vmatprep.subr.mxu0 0.0
        %6494 = vmatpush1.msra.mxu0 0.0
        %6495 = vmatprep.subr.mxu0 0.0
        %6496 = vmatpush1.msra.mxu0 0.0
        %6497 = vmatprep.subr.mxu0 0.0
        %6498 = vmatpush1.msra.mxu0 0.0
        %6499 = vmatprep.subr.mxu0 0.0
        %6500 = vmatpush1.msra.mxu0 0.0
        %6501 = vmatprep.subr.mxu0 0.0
        %6502 = vmatpush1.msra.mxu0 0.0
        %6503 = vmatprep.subr.mxu0 0.0
        %6504 = vmatpush1.msra.mxu0 0.0
        %6505 = vmatprep.subr.mxu0 0.0
        %6506 = vmatpush1.msra.mxu0 0.0
        %6507 = vmatprep.mubr.f32.mxu0 0.0
        %v6508 = vand.u32 %v5974, 4294901760
        %v6509 = vsub.f32 %v5974, %v6508
        %v6510 = vand.u32 %v6509, 4294901760
        %v6511 = vsub.f32 %v6509, %v6510
        %v6512 = vand.u32 %v6511, 4294901760
        %6513 = vmatmul.mubr.f32.gmra.mrb[0].mxu0 %v6512
        %v6514 = vpop.f32.mrb[0].mxu0
        %v6515 = vadd.f32 0.0, %v6514
        %v6516 = vpop.f32.mrb[0].mxu0
        %6517 = vdwg.mxu0
        %6518 = vmatprep.subr.mxu0 0.0
        %v6519 = vsub.f32 %v418, %v418
        %v6520 = vand.u32 %v6519, 4294901760
        %v6521 = vsub.f32 %v6519, %v6520
        %v6522 = vand.u32 %v6521, 4294901760
        %6523 = vmatpush1.msra.mxu0 %v6522
        %6524 = vmatprep.subr.mxu0 0.0
        %v6525 = vsub.f32 %v421, %v421
        %v6526 = vand.u32 %v6525, 4294901760
        %v6527 = vsub.f32 %v6525, %v6526
        %v6528 = vand.u32 %v6527, 4294901760
        %6529 = vmatpush1.msra.mxu0 %v6528
        %6530 = vmatprep.subr.mxu0 0.0
        %6531 = vmatpush1.msra.mxu0 0.0
        %6532 = vmatprep.subr.mxu0 0.0
        %6533 = vmatpush1.msra.mxu0 0.0
        %6534 = vmatprep.subr.mxu0 0.0
        %6535 = vmatpush1.msra.mxu0 0.0
        %6536 = vmatprep.subr.mxu0 0.0
        %6537 = vmatpush1.msra.mxu0 0.0
        %6538 = vmatprep.subr.mxu0 0.0
        %6539 = vmatpush1.msra.mxu0 0.0
        %6540 = vmatprep.subr.mxu0 0.0
        %6541 = vmatpush1.msra.mxu0 0.0
        %6542 = vmatprep.subr.mxu0 0.0
        %6543 = vmatpush1.msra.mxu0 0.0
        %6544 = vmatprep.subr.mxu0 0.0
        %6545 = vmatpush1.msra.mxu0 0.0
        %6546 = vmatprep.subr.mxu0 0.0
        %6547 = vmatpush1.msra.mxu0 0.0
        %6548 = vmatprep.subr.mxu0 0.0
        %6549 = vmatpush1.msra.mxu0 0.0
        %6550 = vmatprep.subr.mxu0 0.0
        %6551 = vmatpush1.msra.mxu0 0.0
        %6552 = vmatprep.subr.mxu0 0.0
        %6553 = vmatpush1.msra.mxu0 0.0
        %6554 = vmatprep.subr.mxu0 0.0
        %6555 = vmatpush1.msra.mxu0 0.0
        %6556 = vmatprep.subr.mxu0 0.0
        %6557 = vmatpush1.msra.mxu0 0.0
        %6558 = vmatprep.subr.mxu0 0.0
        %6559 = vmatpush1.msra.mxu0 0.0
        %6560 = vmatprep.subr.mxu0 0.0
        %6561 = vmatpush1.msra.mxu0 0.0
        %6562 = vmatprep.subr.mxu0 0.0
        %6563 = vmatpush1.msra.mxu0 0.0
        %6564 = vmatprep.subr.mxu0 0.0
        %6565 = vmatpush1.msra.mxu0 0.0
        %6566 = vmatprep.subr.mxu0 0.0
        %6567 = vmatpush1.msra.mxu0 0.0
        %6568 = vmatprep.subr.mxu0 0.0
        %6569 = vmatpush1.msra.mxu0 0.0
        %6570 = vmatprep.subr.mxu0 0.0
        %6571 = vmatpush1.msra.mxu0 0.0
        %6572 = vmatprep.subr.mxu0 0.0
        %6573 = vmatpush1.msra.mxu0 0.0
        %6574 = vmatprep.subr.mxu0 0.0
        %6575 = vmatpush1.msra.mxu0 0.0
        %6576 = vmatprep.subr.mxu0 0.0
        %6577 = vmatpush1.msra.mxu0 0.0
        %6578 = vmatprep.subr.mxu0 0.0
        %6579 = vmatpush1.msra.mxu0 0.0
        %6580 = vmatprep.subr.mxu0 0.0
        %6581 = vmatpush1.msra.mxu0 0.0
        %6582 = vmatprep.subr.mxu0 0.0
        %6583 = vmatpush1.msra.mxu0 0.0
        %6584 = vmatprep.subr.mxu0 0.0
        %6585 = vmatpush1.msra.mxu0 0.0
        %6586 = vmatprep.subr.mxu0 0.0
        %6587 = vmatpush1.msra.mxu0 0.0
        %6588 = vmatprep.subr.mxu0 0.0
        %6589 = vmatpush1.msra.mxu0 0.0
        %6590 = vmatprep.mubr.f32.mxu0 0.0
        %v6591 = vand.u32 %v5974, 4294901760
        %6592 = vmatmul.mubr.f32.gmra.mrb[0].mxu0 %v6591
        %v6593 = vpop.f32.mrb[0].mxu0
        %v6594 = vadd.f32 %v6515, %v6593
        %v6595 = vpop.f32.mrb[0].mxu0
        %6596 = vdwg.mxu0
        %6597 = vmatprep.subr.mxu0 0.0
        %v6598 = vsub.f32 %v418, %v418
        %6599 = vmatpush1.msra.mxu0 %v6598
        %6600 = vmatprep.subr.mxu0 0.0
        %v6601 = vsub.f32 %v421, %v421
        %6602 = vmatpush1.msra.mxu0 %v6601
        %6603 = vmatprep.subr.mxu0 0.0
        %6604 = vmatpush1.msra.mxu0 0.0
        %6605 = vmatprep.subr.mxu0 0.0
        %6606 = vmatpush1.msra.mxu0 0.0
        %6607 = vmatprep.subr.mxu0 0.0
        %6608 = vmatpush1.msra.mxu0 0.0
        %6609 = vmatprep.subr.mxu0 0.0
        %6610 = vmatpush1.msra.mxu0 0.0
        %6611 = vmatprep.subr.mxu0 0.0
        %6612 = vmatpush1.msra.mxu0 0.0
        %6613 = vmatprep.subr.mxu0 0.0
        %6614 = vmatpush1.msra.mxu0 0.0
        %6615 = vmatprep.subr.mxu0 0.0
        %6616 = vmatpush1.msra.mxu0 0.0
        %6617 = vmatprep.subr.mxu0 0.0
        %6618 = vmatpush1.msra.mxu0 0.0
        %6619 = vmatprep.subr.mxu0 0.0
        %6620 = vmatpush1.msra.mxu0 0.0
        %6621 = vmatprep.subr.mxu0 0.0
        %6622 = vmatpush1.msra.mxu0 0.0
        %6623 = vmatprep.subr.mxu0 0.0
        %6624 = vmatpush1.msra.mxu0 0.0
        %6625 = vmatprep.subr.mxu0 0.0
        %6626 = vmatpush1.msra.mxu0 0.0
        %6627 = vmatprep.subr.mxu0 0.0
        %6628 = vmatpush1.msra.mxu0 0.0
        %6629 = vmatprep.subr.mxu0 0.0
        %6630 = vmatpush1.msra.mxu0 0.0
        %6631 = vmatprep.subr.mxu0 0.0
        %6632 = vmatpush1.msra.mxu0 0.0
        %6633 = vmatprep.subr.mxu0 0.0
        %6634 = vmatpush1.msra.mxu0 0.0
        %6635 = vmatprep.subr.mxu0 0.0
        %6636 = vmatpush1.msra.mxu0 0.0
        %6637 = vmatprep.subr.mxu0 0.0
        %6638 = vmatpush1.msra.mxu0 0.0
        %6639 = vmatprep.subr.mxu0 0.0
        %6640 = vmatpush1.msra.mxu0 0.0
        %6641 = vmatprep.subr.mxu0 0.0
        %6642 = vmatpush1.msra.mxu0 0.0
        %6643 = vmatprep.subr.mxu0 0.0
        %6644 = vmatpush1.msra.mxu0 0.0
        %6645 = vmatprep.subr.mxu0 0.0
        %6646 = vmatpush1.msra.mxu0 0.0
        %6647 = vmatprep.subr.mxu0 0.0
        %6648 = vmatpush1.msra.mxu0 0.0
        %6649 = vmatprep.subr.mxu0 0.0
        %6650 = vmatpush1.msra.mxu0 0.0
        %6651 = vmatprep.subr.mxu0 0.0
        %6652 = vmatpush1.msra.mxu0 0.0
        %6653 = vmatprep.subr.mxu0 0.0
        %6654 = vmatpush1.msra.mxu0 0.0
        %6655 = vmatprep.subr.mxu0 0.0
        %6656 = vmatpush1.msra.mxu0 0.0
        %6657 = vmatprep.subr.mxu0 0.0
        %6658 = vmatpush1.msra.mxu0 0.0
        %6659 = vmatprep.subr.mxu0 0.0
        %6660 = vmatpush1.msra.mxu0 0.0
        %6661 = vmatprep.subr.mxu0 0.0
        %6662 = vmatpush1.msra.mxu0 0.0
        %6663 = vmatprep.mubr.f32.mxu0 0.0
        %v6664 = vand.u32 %v5974, 4294901760
        %v6665 = vsub.f32 %v5974, %v6664
        %6666 = vmatmul.mubr.f32.gmra.mrb[0].mxu0 %v6665
        %v6667 = vpop.f32.mrb[0].mxu0
        %v6668 = vadd.f32 %v6594, %v6667
        %v6669 = vpop.f32.mrb[0].mxu0
        %6670 = vdwg.mxu0
        %6671 = vmatprep.subr.mxu0 0.0
        %6672 = vmatpush1.msra.mxu0 %v418
        %6673 = vmatprep.subr.mxu0 0.0
        %6674 = vmatpush1.msra.mxu0 %v421
        %6675 = vmatprep.subr.mxu0 0.0
        %6676 = vmatpush1.msra.mxu0 0.0
        %6677 = vmatprep.subr.mxu0 0.0
        %6678 = vmatpush1.msra.mxu0 0.0
        %6679 = vmatprep.subr.mxu0 0.0
        %6680 = vmatpush1.msra.mxu0 0.0
        %6681 = vmatprep.subr.mxu0 0.0
        %6682 = vmatpush1.msra.mxu0 0.0
        %6683 = vmatprep.subr.mxu0 0.0
        %6684 = vmatpush1.msra.mxu0 0.0
        %6685 = vmatprep.subr.mxu0 0.0
        %6686 = vmatpush1.msra.mxu0 0.0
        %6687 = vmatprep.subr.mxu0 0.0
        %6688 = vmatpush1.msra.mxu0 0.0
        %6689 = vmatprep.subr.mxu0 0.0
        %6690 = vmatpush1.msra.mxu0 0.0
        %6691 = vmatprep.subr.mxu0 0.0
        %6692 = vmatpush1.msra.mxu0 0.0
        %6693 = vmatprep.subr.mxu0 0.0
        %6694 = vmatpush1.msra.mxu0 0.0
        %6695 = vmatprep.subr.mxu0 0.0
        %6696 = vmatpush1.msra.mxu0 0.0
        %6697 = vmatprep.subr.mxu0 0.0
        %6698 = vmatpush1.msra.mxu0 0.0
        %6699 = vmatprep.subr.mxu0 0.0
        %6700 = vmatpush1.msra.mxu0 0.0
        %6701 = vmatprep.subr.mxu0 0.0
        %6702 = vmatpush1.msra.mxu0 0.0
        %6703 = vmatprep.subr.mxu0 0.0
        %6704 = vmatpush1.msra.mxu0 0.0
        %6705 = vmatprep.subr.mxu0 0.0
        %6706 = vmatpush1.msra.mxu0 0.0
        %6707 = vmatprep.subr.mxu0 0.0
        %6708 = vmatpush1.msra.mxu0 0.0
        %6709 = vmatprep.subr.mxu0 0.0
        %6710 = vmatpush1.msra.mxu0 0.0
        %6711 = vmatprep.subr.mxu0 0.0
        %6712 = vmatpush1.msra.mxu0 0.0
        %6713 = vmatprep.subr.mxu0 0.0
        %6714 = vmatpush1.msra.mxu0 0.0
        %6715 = vmatprep.subr.mxu0 0.0
        %6716 = vmatpush1.msra.mxu0 0.0
        %6717 = vmatprep.subr.mxu0 0.0
        %6718 = vmatpush1.msra.mxu0 0.0
        %6719 = vmatprep.subr.mxu0 0.0
        %6720 = vmatpush1.msra.mxu0 0.0
        %6721 = vmatprep.subr.mxu0 0.0
        %6722 = vmatpush1.msra.mxu0 0.0
        %6723 = vmatprep.subr.mxu0 0.0
        %6724 = vmatpush1.msra.mxu0 0.0
        %6725 = vmatprep.subr.mxu0 0.0
        %6726 = vmatpush1.msra.mxu0 0.0
        %6727 = vmatprep.subr.mxu0 0.0
        %6728 = vmatpush1.msra.mxu0 0.0
        %6729 = vmatprep.subr.mxu0 0.0
        %6730 = vmatpush1.msra.mxu0 0.0
        %6731 = vmatprep.subr.mxu0 0.0
        %6732 = vmatpush1.msra.mxu0 0.0
        %6733 = vmatprep.subr.mxu0 0.0
        %6734 = vmatpush1.msra.mxu0 0.0
        %6735 = vmatprep.mubr.f32.mxu0 0.0
        %v6736 = vand.u32 %v5974, 4294901760
        %v6737 = vsub.f32 %v5974, %v6736
        %v6738 = vand.u32 %v6737, 4294901760
        %6739 = vmatmul.mubr.f32.gmra.mrb[0].mxu0 %v6738
        %v6740 = vpop.f32.mrb[0].mxu0
        %v6741 = vadd.f32 %v6668, %v6740
        %v6742 = vpop.f32.mrb[0].mxu0
        %6743 = vdwg.mxu0
        %6744 = vmatprep.subr.mxu0 0.0
        %v6745 = vsub.f32 %v418, %v418
        %v6746 = vand.u32 %v6745, 4294901760
        %6747 = vmatpush1.msra.mxu0 %v6746
        %6748 = vmatprep.subr.mxu0 0.0
        %v6749 = vsub.f32 %v421, %v421
        %v6750 = vand.u32 %v6749, 4294901760
        %6751 = vmatpush1.msra.mxu0 %v6750
        %6752 = vmatprep.subr.mxu0 0.0
        %6753 = vmatpush1.msra.mxu0 0.0
        %6754 = vmatprep.subr.mxu0 0.0
        %6755 = vmatpush1.msra.mxu0 0.0
        %6756 = vmatprep.subr.mxu0 0.0
        %6757 = vmatpush1.msra.mxu0 0.0
        %6758 = vmatprep.subr.mxu0 0.0
        %6759 = vmatpush1.msra.mxu0 0.0
        %6760 = vmatprep.subr.mxu0 0.0
        %6761 = vmatpush1.msra.mxu0 0.0
        %6762 = vmatprep.subr.mxu0 0.0
        %6763 = vmatpush1.msra.mxu0 0.0
        %6764 = vmatprep.subr.mxu0 0.0
        %6765 = vmatpush1.msra.mxu0 0.0
        %6766 = vmatprep.subr.mxu0 0.0
        %6767 = vmatpush1.msra.mxu0 0.0
        %6768 = vmatprep.subr.mxu0 0.0
        %6769 = vmatpush1.msra.mxu0 0.0
        %6770 = vmatprep.subr.mxu0 0.0
        %6771 = vmatpush1.msra.mxu0 0.0
        %6772 = vmatprep.subr.mxu0 0.0
        %6773 = vmatpush1.msra.mxu0 0.0
        %6774 = vmatprep.subr.mxu0 0.0
        %6775 = vmatpush1.msra.mxu0 0.0
        %6776 = vmatprep.subr.mxu0 0.0
        %6777 = vmatpush1.msra.mxu0 0.0
        %6778 = vmatprep.subr.mxu0 0.0
        %6779 = vmatpush1.msra.mxu0 0.0
        %6780 = vmatprep.subr.mxu0 0.0
        %6781 = vmatpush1.msra.mxu0 0.0
        %6782 = vmatprep.subr.mxu0 0.0
        %6783 = vmatpush1.msra.mxu0 0.0
        %6784 = vmatprep.subr.mxu0 0.0
        %6785 = vmatpush1.msra.mxu0 0.0
        %6786 = vmatprep.subr.mxu0 0.0
        %6787 = vmatpush1.msra.mxu0 0.0
        %6788 = vmatprep.subr.mxu0 0.0
        %6789 = vmatpush1.msra.mxu0 0.0
        %6790 = vmatprep.subr.mxu0 0.0
        %6791 = vmatpush1.msra.mxu0 0.0
        %6792 = vmatprep.subr.mxu0 0.0
        %6793 = vmatpush1.msra.mxu0 0.0
        %6794 = vmatprep.subr.mxu0 0.0
        %6795 = vmatpush1.msra.mxu0 0.0
        %6796 = vmatprep.subr.mxu0 0.0
        %6797 = vmatpush1.msra.mxu0 0.0
        %6798 = vmatprep.subr.mxu0 0.0
        %6799 = vmatpush1.msra.mxu0 0.0
        %6800 = vmatprep.subr.mxu0 0.0
        %6801 = vmatpush1.msra.mxu0 0.0
        %6802 = vmatprep.subr.mxu0 0.0
        %6803 = vmatpush1.msra.mxu0 0.0
        %6804 = vmatprep.subr.mxu0 0.0
        %6805 = vmatpush1.msra.mxu0 0.0
        %6806 = vmatprep.subr.mxu0 0.0
        %6807 = vmatpush1.msra.mxu0 0.0
        %6808 = vmatprep.subr.mxu0 0.0
        %6809 = vmatpush1.msra.mxu0 0.0
        %6810 = vmatprep.subr.mxu0 0.0
        %6811 = vmatpush1.msra.mxu0 0.0
        %6812 = vmatprep.mubr.f32.mxu0 0.0
        %v6813 = vand.u32 %v5974, 4294901760
        %6814 = vmatmul.mubr.f32.gmra.mrb[0].mxu0 %v6813
        %v6815 = vpop.f32.mrb[0].mxu0
        %v6816 = vadd.f32 %v6741, %v6815
        %v6817 = vpop.f32.mrb[0].mxu0
        %6818 = vdwg.mxu0
        %6819 = vmatprep.subr.mxu0 0.0
        %6820 = vmatpush1.msra.mxu0 %v418
        %6821 = vmatprep.subr.mxu0 0.0
        %6822 = vmatpush1.msra.mxu0 %v421
        %6823 = vmatprep.subr.mxu0 0.0
        %6824 = vmatpush1.msra.mxu0 0.0
        %6825 = vmatprep.subr.mxu0 0.0
        %6826 = vmatpush1.msra.mxu0 0.0
        %6827 = vmatprep.subr.mxu0 0.0
        %6828 = vmatpush1.msra.mxu0 0.0
        %6829 = vmatprep.subr.mxu0 0.0
        %6830 = vmatpush1.msra.mxu0 0.0
        %6831 = vmatprep.subr.mxu0 0.0
        %6832 = vmatpush1.msra.mxu0 0.0
        %6833 = vmatprep.subr.mxu0 0.0
        %6834 = vmatpush1.msra.mxu0 0.0
        %6835 = vmatprep.subr.mxu0 0.0
        %6836 = vmatpush1.msra.mxu0 0.0
        %6837 = vmatprep.subr.mxu0 0.0
        %6838 = vmatpush1.msra.mxu0 0.0
        %6839 = vmatprep.subr.mxu0 0.0
        %6840 = vmatpush1.msra.mxu0 0.0
        %6841 = vmatprep.subr.mxu0 0.0
        %6842 = vmatpush1.msra.mxu0 0.0
        %6843 = vmatprep.subr.mxu0 0.0
        %6844 = vmatpush1.msra.mxu0 0.0
        %6845 = vmatprep.subr.mxu0 0.0
        %6846 = vmatpush1.msra.mxu0 0.0
        %6847 = vmatprep.subr.mxu0 0.0
        %6848 = vmatpush1.msra.mxu0 0.0
        %6849 = vmatprep.subr.mxu0 0.0
        %6850 = vmatpush1.msra.mxu0 0.0
        %6851 = vmatprep.subr.mxu0 0.0
        %6852 = vmatpush1.msra.mxu0 0.0
        %6853 = vmatprep.subr.mxu0 0.0
        %6854 = vmatpush1.msra.mxu0 0.0
        %6855 = vmatprep.subr.mxu0 0.0
        %6856 = vmatpush1.msra.mxu0 0.0
        %6857 = vmatprep.subr.mxu0 0.0
        %6858 = vmatpush1.msra.mxu0 0.0
        %6859 = vmatprep.subr.mxu0 0.0
        %6860 = vmatpush1.msra.mxu0 0.0
        %6861 = vmatprep.subr.mxu0 0.0
        %6862 = vmatpush1.msra.mxu0 0.0
        %6863 = vmatprep.subr.mxu0 0.0
        %6864 = vmatpush1.msra.mxu0 0.0
        %6865 = vmatprep.subr.mxu0 0.0
        %6866 = vmatpush1.msra.mxu0 0.0
        %6867 = vmatprep.subr.mxu0 0.0
        %6868 = vmatpush1.msra.mxu0 0.0
        %6869 = vmatprep.subr.mxu0 0.0
        %6870 = vmatpush1.msra.mxu0 0.0
        %6871 = vmatprep.subr.mxu0 0.0
        %6872 = vmatpush1.msra.mxu0 0.0
        %6873 = vmatprep.subr.mxu0 0.0
        %6874 = vmatpush1.msra.mxu0 0.0
        %6875 = vmatprep.subr.mxu0 0.0
        %6876 = vmatpush1.msra.mxu0 0.0
        %6877 = vmatprep.subr.mxu0 0.0
        %6878 = vmatpush1.msra.mxu0 0.0
        %6879 = vmatprep.subr.mxu0 0.0
        %6880 = vmatpush1.msra.mxu0 0.0
        %6881 = vmatprep.subr.mxu0 0.0
        %6882 = vmatpush1.msra.mxu0 0.0
        %6883 = vmatprep.mubr.f32.mxu0 0.0
        %v6884 = vand.u32 %v5974, 4294901760
        %6885 = vmatmul.mubr.f32.gmra.mrb[0].mxu0 %v6884
        %v6886 = vpop.f32.mrb[0].mxu0
        %v6887 = vadd.f32 %v6816, %v6886
        %v6888 = vpop.f32.mrb[0].mxu0
        %6889 = vdwg.mxu0
        %v6890 = vsel %vm342, %v477, 0
        %6892 = vmatprep.subr.mxu0 %v423
        %6893 = vmatpush1.msra.mxu0 %v422
        %6894 = vmatprep.subr.mxu0 %v426
        %6895 = vmatpush1.msra.mxu0 %v425
        %6896 = vmatprep.subr.mxu0 0.0
        %6897 = vmatpush1.msra.mxu0 0.0
        %6898 = vmatprep.subr.mxu0 0.0
        %6899 = vmatpush1.msra.mxu0 0.0
        %6900 = vmatprep.subr.mxu0 0.0
        %6901 = vmatpush1.msra.mxu0 0.0
        %6902 = vmatprep.subr.mxu0 0.0
        %6903 = vmatpush1.msra.mxu0 0.0
        %6904 = vmatprep.subr.mxu0 0.0
        %6905 = vmatpush1.msra.mxu0 0.0
        %6906 = vmatprep.subr.mxu0 0.0
        %6907 = vmatpush1.msra.mxu0 0.0
        %6908 = vmatprep.subr.mxu0 0.0
        %6909 = vmatpush1.msra.mxu0 0.0
        %6910 = vmatprep.subr.mxu0 0.0
        %6911 = vmatpush1.msra.mxu0 0.0
        %6912 = vmatprep.subr.mxu0 0.0
        %6913 = vmatpush1.msra.mxu0 0.0
        %6914 = vmatprep.subr.mxu0 0.0
        %6915 = vmatpush1.msra.mxu0 0.0
        %6916 = vmatprep.subr.mxu0 0.0
        %6917 = vmatpush1.msra.mxu0 0.0
        %6918 = vmatprep.subr.mxu0 0.0
        %6919 = vmatpush1.msra.mxu0 0.0
        %6920 = vmatprep.subr.mxu0 0.0
        %6921 = vmatpush1.msra.mxu0 0.0
        %6922 = vmatprep.subr.mxu0 0.0
        %6923 = vmatpush1.msra.mxu0 0.0
        %6924 = vmatprep.subr.mxu0 0.0
        %6925 = vmatpush1.msra.mxu0 0.0
        %6926 = vmatprep.subr.mxu0 0.0
        %6927 = vmatpush1.msra.mxu0 0.0
        %6928 = vmatprep.subr.mxu0 0.0
        %6929 = vmatpush1.msra.mxu0 0.0
        %6930 = vmatprep.subr.mxu0 0.0
        %6931 = vmatpush1.msra.mxu0 0.0
        %6932 = vmatprep.subr.mxu0 0.0
        %6933 = vmatpush1.msra.mxu0 0.0
        %6934 = vmatprep.subr.mxu0 0.0
        %6935 = vmatpush1.msra.mxu0 0.0
        %6936 = vmatprep.subr.mxu0 0.0
        %6937 = vmatpush1.msra.mxu0 0.0
        %6938 = vmatprep.subr.mxu0 0.0
        %6939 = vmatpush1.msra.mxu0 0.0
        %6940 = vmatprep.subr.mxu0 0.0
        %6941 = vmatpush1.msra.mxu0 0.0
        %6942 = vmatprep.subr.mxu0 0.0
        %6943 = vmatpush1.msra.mxu0 0.0
        %6944 = vmatprep.subr.mxu0 0.0
        %6945 = vmatpush1.msra.mxu0 0.0
        %6946 = vmatprep.subr.mxu0 0.0
        %6947 = vmatpush1.msra.mxu0 0.0
        %6948 = vmatprep.subr.mxu0 0.0
        %6949 = vmatpush1.msra.mxu0 0.0
        %6950 = vmatprep.subr.mxu0 0.0
        %6951 = vmatpush1.msra.mxu0 0.0
        %6952 = vmatprep.subr.mxu0 0.0
        %6953 = vmatpush1.msra.mxu0 0.0
        %6954 = vmatprep.subr.mxu0 0.0
        %6955 = vmatpush1.msra.mxu0 0.0
        %6956 = vmatprep.mubr.f32.mxu0 0.0
        %v6957 = vand.u32 %v6890, 4294901760
        %v6958 = vsub.f32 %v6890, %v6957
        %v6959 = vand.u32 %v6958, 4294901760
        %v6960 = vsub.f32 %v6958, %v6959
        %v6961 = vand.u32 %v6960, 4294901760
        %6962 = vmatmul.mubr.f32.gmra.mrb[0].mxu0 %v6961
        %v6963 = vpop.f32.mrb[0].mxu0
        %v6964 = vadd.f32 0.0, %v6963
        %v6965 = vpop.f32.mrb[0].mxu0
        %v6966 = vadd.f32 0.0, %v6965
        %6967 = vdwg.mxu0
        %v6968 = vsub.f32 %v423, %v423
        %v6969 = vand.u32 %v6968, 4294901760
        %v6970 = vsub.f32 %v6968, %v6969
        %v6971 = vand.u32 %v6970, 4294901760
        %6972 = vmatprep.subr.mxu0 %v6971
        %v6973 = vsub.f32 %v422, %v422
        %v6974 = vand.u32 %v6973, 4294901760
        %v6975 = vsub.f32 %v6973, %v6974
        %v6976 = vand.u32 %v6975, 4294901760
        %6977 = vmatpush1.msra.mxu0 %v6976
        %v6978 = vsub.f32 %v426, %v426
        %v6979 = vand.u32 %v6978, 4294901760
        %v6980 = vsub.f32 %v6978, %v6979
        %v6981 = vand.u32 %v6980, 4294901760
        %6982 = vmatprep.subr.mxu0 %v6981
        %v6983 = vsub.f32 %v425, %v425
        %v6984 = vand.u32 %v6983, 4294901760
        %v6985 = vsub.f32 %v6983, %v6984
        %v6986 = vand.u32 %v6985, 4294901760
        %6987 = vmatpush1.msra.mxu0 %v6986
        %6988 = vmatprep.subr.mxu0 0.0
        %6989 = vmatpush1.msra.mxu0 0.0
        %6990 = vmatprep.subr.mxu0 0.0
        %6991 = vmatpush1.msra.mxu0 0.0
        %6992 = vmatprep.subr.mxu0 0.0
        %6993 = vmatpush1.msra.mxu0 0.0
        %6994 = vmatprep.subr.mxu0 0.0
        %6995 = vmatpush1.msra.mxu0 0.0
        %6996 = vmatprep.subr.mxu0 0.0
        %6997 = vmatpush1.msra.mxu0 0.0
        %6998 = vmatprep.subr.mxu0 0.0
        %6999 = vmatpush1.msra.mxu0 0.0
        %7000 = vmatprep.subr.mxu0 0.0
        %7001 = vmatpush1.msra.mxu0 0.0
        %7002 = vmatprep.subr.mxu0 0.0
        %7003 = vmatpush1.msra.mxu0 0.0
        %7004 = vmatprep.subr.mxu0 0.0
        %7005 = vmatpush1.msra.mxu0 0.0
        %7006 = vmatprep.subr.mxu0 0.0
        %7007 = vmatpush1.msra.mxu0 0.0
        %7008 = vmatprep.subr.mxu0 0.0
        %7009 = vmatpush1.msra.mxu0 0.0
        %7010 = vmatprep.subr.mxu0 0.0
        %7011 = vmatpush1.msra.mxu0 0.0
        %7012 = vmatprep.subr.mxu0 0.0
        %7013 = vmatpush1.msra.mxu0 0.0
        %7014 = vmatprep.subr.mxu0 0.0
        %7015 = vmatpush1.msra.mxu0 0.0
        %7016 = vmatprep.subr.mxu0 0.0
        %7017 = vmatpush1.msra.mxu0 0.0
        %7018 = vmatprep.subr.mxu0 0.0
        %7019 = vmatpush1.msra.mxu0 0.0
        %7020 = vmatprep.subr.mxu0 0.0
        %7021 = vmatpush1.msra.mxu0 0.0
        %7022 = vmatprep.subr.mxu0 0.0
        %7023 = vmatpush1.msra.mxu0 0.0
        %7024 = vmatprep.subr.mxu0 0.0
        %7025 = vmatpush1.msra.mxu0 0.0
        %7026 = vmatprep.subr.mxu0 0.0
        %7027 = vmatpush1.msra.mxu0 0.0
        %7028 = vmatprep.subr.mxu0 0.0
        %7029 = vmatpush1.msra.mxu0 0.0
        %7030 = vmatprep.subr.mxu0 0.0
        %7031 = vmatpush1.msra.mxu0 0.0
        %7032 = vmatprep.subr.mxu0 0.0
        %7033 = vmatpush1.msra.mxu0 0.0
        %7034 = vmatprep.subr.mxu0 0.0
        %7035 = vmatpush1.msra.mxu0 0.0
        %7036 = vmatprep.subr.mxu0 0.0
        %7037 = vmatpush1.msra.mxu0 0.0
        %7038 = vmatprep.subr.mxu0 0.0
        %7039 = vmatpush1.msra.mxu0 0.0
        %7040 = vmatprep.subr.mxu0 0.0
        %7041 = vmatpush1.msra.mxu0 0.0
        %7042 = vmatprep.subr.mxu0 0.0
        %7043 = vmatpush1.msra.mxu0 0.0
        %7044 = vmatprep.subr.mxu0 0.0
        %7045 = vmatpush1.msra.mxu0 0.0
        %7046 = vmatprep.subr.mxu0 0.0
        %7047 = vmatpush1.msra.mxu0 0.0
        %7048 = vmatprep.mubr.f32.mxu0 0.0
        %v7049 = vand.u32 %v6890, 4294901760
        %7050 = vmatmul.mubr.f32.gmra.mrb[0].mxu0 %v7049
        %v7051 = vpop.f32.mrb[0].mxu0
        %v7052 = vadd.f32 %v6964, %v7051
        %v7053 = vpop.f32.mrb[0].mxu0
        %v7054 = vadd.f32 %v6966, %v7053
        %7055 = vdwg.mxu0
        %v7056 = vsub.f32 %v423, %v423
        %7057 = vmatprep.subr.mxu0 %v7056
        %v7058 = vsub.f32 %v422, %v422
        %7059 = vmatpush1.msra.mxu0 %v7058
        %v7060 = vsub.f32 %v426, %v426
        %7061 = vmatprep.subr.mxu0 %v7060
        %v7062 = vsub.f32 %v425, %v425
        %7063 = vmatpush1.msra.mxu0 %v7062
        %7064 = vmatprep.subr.mxu0 0.0
        %7065 = vmatpush1.msra.mxu0 0.0
        %7066 = vmatprep.subr.mxu0 0.0
        %7067 = vmatpush1.msra.mxu0 0.0
        %7068 = vmatprep.subr.mxu0 0.0
        %7069 = vmatpush1.msra.mxu0 0.0
        %7070 = vmatprep.subr.mxu0 0.0
        %7071 = vmatpush1.msra.mxu0 0.0
        %7072 = vmatprep.subr.mxu0 0.0
        %7073 = vmatpush1.msra.mxu0 0.0
        %7074 = vmatprep.subr.mxu0 0.0
        %7075 = vmatpush1.msra.mxu0 0.0
        %7076 = vmatprep.subr.mxu0 0.0
        %7077 = vmatpush1.msra.mxu0 0.0
        %7078 = vmatprep.subr.mxu0 0.0
        %7079 = vmatpush1.msra.mxu0 0.0
        %7080 = vmatprep.subr.mxu0 0.0
        %7081 = vmatpush1.msra.mxu0 0.0
        %7082 = vmatprep.subr.mxu0 0.0
        %7083 = vmatpush1.msra.mxu0 0.0
        %7084 = vmatprep.subr.mxu0 0.0
        %7085 = vmatpush1.msra.mxu0 0.0
        %7086 = vmatprep.subr.mxu0 0.0
        %7087 = vmatpush1.msra.mxu0 0.0
        %7088 = vmatprep.subr.mxu0 0.0
        %7089 = vmatpush1.msra.mxu0 0.0
        %7090 = vmatprep.subr.mxu0 0.0
        %7091 = vmatpush1.msra.mxu0 0.0
        %7092 = vmatprep.subr.mxu0 0.0
        %7093 = vmatpush1.msra.mxu0 0.0
        %7094 = vmatprep.subr.mxu0 0.0
        %7095 = vmatpush1.msra.mxu0 0.0
        %7096 = vmatprep.subr.mxu0 0.0
        %7097 = vmatpush1.msra.mxu0 0.0
        %7098 = vmatprep.subr.mxu0 0.0
        %7099 = vmatpush1.msra.mxu0 0.0
        %7100 = vmatprep.subr.mxu0 0.0
        %7101 = vmatpush1.msra.mxu0 0.0
        %7102 = vmatprep.subr.mxu0 0.0
        %7103 = vmatpush1.msra.mxu0 0.0
        %7104 = vmatprep.subr.mxu0 0.0
        %7105 = vmatpush1.msra.mxu0 0.0
        %7106 = vmatprep.subr.mxu0 0.0
        %7107 = vmatpush1.msra.mxu0 0.0
        %7108 = vmatprep.subr.mxu0 0.0
        %7109 = vmatpush1.msra.mxu0 0.0
        %7110 = vmatprep.subr.mxu0 0.0
        %7111 = vmatpush1.msra.mxu0 0.0
        %7112 = vmatprep.subr.mxu0 0.0
        %7113 = vmatpush1.msra.mxu0 0.0
        %7114 = vmatprep.subr.mxu0 0.0
        %7115 = vmatpush1.msra.mxu0 0.0
        %7116 = vmatprep.subr.mxu0 0.0
        %7117 = vmatpush1.msra.mxu0 0.0
        %7118 = vmatprep.subr.mxu0 0.0
        %7119 = vmatpush1.msra.mxu0 0.0
        %7120 = vmatprep.subr.mxu0 0.0
        %7121 = vmatpush1.msra.mxu0 0.0
        %7122 = vmatprep.subr.mxu0 0.0
        %7123 = vmatpush1.msra.mxu0 0.0
        %7124 = vmatprep.mubr.f32.mxu0 0.0
        %v7125 = vand.u32 %v6890, 4294901760
        %v7126 = vsub.f32 %v6890, %v7125
        %7127 = vmatmul.mubr.f32.gmra.mrb[0].mxu0 %v7126
        %v7128 = vpop.f32.mrb[0].mxu0
        %v7129 = vadd.f32 %v7052, %v7128
        %v7130 = vpop.f32.mrb[0].mxu0
        %v7131 = vadd.f32 %v7054, %v7130
        %7132 = vdwg.mxu0
        %7133 = vmatprep.subr.mxu0 %v423
        %7134 = vmatpush1.msra.mxu0 %v422
        %7135 = vmatprep.subr.mxu0 %v426
        %7136 = vmatpush1.msra.mxu0 %v425
        %7137 = vmatprep.subr.mxu0 0.0
        %7138 = vmatpush1.msra.mxu0 0.0
        %7139 = vmatprep.subr.mxu0 0.0
        %7140 = vmatpush1.msra.mxu0 0.0
        %7141 = vmatprep.subr.mxu0 0.0
        %7142 = vmatpush1.msra.mxu0 0.0
        %7143 = vmatprep.subr.mxu0 0.0
        %7144 = vmatpush1.msra.mxu0 0.0
        %7145 = vmatprep.subr.mxu0 0.0
        %7146 = vmatpush1.msra.mxu0 0.0
        %7147 = vmatprep.subr.mxu0 0.0
        %7148 = vmatpush1.msra.mxu0 0.0
        %7149 = vmatprep.subr.mxu0 0.0
        %7150 = vmatpush1.msra.mxu0 0.0
        %7151 = vmatprep.subr.mxu0 0.0
        %7152 = vmatpush1.msra.mxu0 0.0
        %7153 = vmatprep.subr.mxu0 0.0
        %7154 = vmatpush1.msra.mxu0 0.0
        %7155 = vmatprep.subr.mxu0 0.0
        %7156 = vmatpush1.msra.mxu0 0.0
        %7157 = vmatprep.subr.mxu0 0.0
        %7158 = vmatpush1.msra.mxu0 0.0
        %7159 = vmatprep.subr.mxu0 0.0
        %7160 = vmatpush1.msra.mxu0 0.0
        %7161 = vmatprep.subr.mxu0 0.0
        %7162 = vmatpush1.msra.mxu0 0.0
        %7163 = vmatprep.subr.mxu0 0.0
        %7164 = vmatpush1.msra.mxu0 0.0
        %7165 = vmatprep.subr.mxu0 0.0
        %7166 = vmatpush1.msra.mxu0 0.0
        %7167 = vmatprep.subr.mxu0 0.0
        %7168 = vmatpush1.msra.mxu0 0.0
        %7169 = vmatprep.subr.mxu0 0.0
        %7170 = vmatpush1.msra.mxu0 0.0
        %7171 = vmatprep.subr.mxu0 0.0
        %7172 = vmatpush1.msra.mxu0 0.0
        %7173 = vmatprep.subr.mxu0 0.0
        %7174 = vmatpush1.msra.mxu0 0.0
        %7175 = vmatprep.subr.mxu0 0.0
        %7176 = vmatpush1.msra.mxu0 0.0
        %7177 = vmatprep.subr.mxu0 0.0
        %7178 = vmatpush1.msra.mxu0 0.0
        %7179 = vmatprep.subr.mxu0 0.0
        %7180 = vmatpush1.msra.mxu0 0.0
        %7181 = vmatprep.subr.mxu0 0.0
        %7182 = vmatpush1.msra.mxu0 0.0
        %7183 = vmatprep.subr.mxu0 0.0
        %7184 = vmatpush1.msra.mxu0 0.0
        %7185 = vmatprep.subr.mxu0 0.0
        %7186 = vmatpush1.msra.mxu0 0.0
        %7187 = vmatprep.subr.mxu0 0.0
        %7188 = vmatpush1.msra.mxu0 0.0
        %7189 = vmatprep.subr.mxu0 0.0
        %7190 = vmatpush1.msra.mxu0 0.0
        %7191 = vmatprep.subr.mxu0 0.0
        %7192 = vmatpush1.msra.mxu0 0.0
        %7193 = vmatprep.subr.mxu0 0.0
        %7194 = vmatpush1.msra.mxu0 0.0
        %7195 = vmatprep.subr.mxu0 0.0
        %7196 = vmatpush1.msra.mxu0 0.0
        %7197 = vmatprep.mubr.f32.mxu0 0.0
        %v7198 = vand.u32 %v6890, 4294901760
        %v7199 = vsub.f32 %v6890, %v7198
        %v7200 = vand.u32 %v7199, 4294901760
        %7201 = vmatmul.mubr.f32.gmra.mrb[0].mxu0 %v7200
        %v7202 = vpop.f32.mrb[0].mxu0
        %v7203 = vadd.f32 %v7129, %v7202
        %v7204 = vpop.f32.mrb[0].mxu0
        %v7205 = vadd.f32 %v7131, %v7204
        %7206 = vdwg.mxu0
        %v7207 = vsub.f32 %v423, %v423
        %v7208 = vand.u32 %v7207, 4294901760
        %7209 = vmatprep.subr.mxu0 %v7208
        %v7210 = vsub.f32 %v422, %v422
        %v7211 = vand.u32 %v7210, 4294901760
        %7212 = vmatpush1.msra.mxu0 %v7211
        %v7213 = vsub.f32 %v426, %v426
        %v7214 = vand.u32 %v7213, 4294901760
        %7215 = vmatprep.subr.mxu0 %v7214
        %v7216 = vsub.f32 %v425, %v425
        %v7217 = vand.u32 %v7216, 4294901760
        %7218 = vmatpush1.msra.mxu0 %v7217
        %7219 = vmatprep.subr.mxu0 0.0
        %7220 = vmatpush1.msra.mxu0 0.0
        %7221 = vmatprep.subr.mxu0 0.0
        %7222 = vmatpush1.msra.mxu0 0.0
        %7223 = vmatprep.subr.mxu0 0.0
        %7224 = vmatpush1.msra.mxu0 0.0
        %7225 = vmatprep.subr.mxu0 0.0
        %7226 = vmatpush1.msra.mxu0 0.0
        %7227 = vmatprep.subr.mxu0 0.0
        %7228 = vmatpush1.msra.mxu0 0.0
        %7229 = vmatprep.subr.mxu0 0.0
        %7230 = vmatpush1.msra.mxu0 0.0
        %7231 = vmatprep.subr.mxu0 0.0
        %7232 = vmatpush1.msra.mxu0 0.0
        %7233 = vmatprep.subr.mxu0 0.0
        %7234 = vmatpush1.msra.mxu0 0.0
        %7235 = vmatprep.subr.mxu0 0.0
        %7236 = vmatpush1.msra.mxu0 0.0
        %7237 = vmatprep.subr.mxu0 0.0
        %7238 = vmatpush1.msra.mxu0 0.0
        %7239 = vmatprep.subr.mxu0 0.0
        %7240 = vmatpush1.msra.mxu0 0.0
        %7241 = vmatprep.subr.mxu0 0.0
        %7242 = vmatpush1.msra.mxu0 0.0
        %7243 = vmatprep.subr.mxu0 0.0
        %7244 = vmatpush1.msra.mxu0 0.0
        %7245 = vmatprep.subr.mxu0 0.0
        %7246 = vmatpush1.msra.mxu0 0.0
        %7247 = vmatprep.subr.mxu0 0.0
        %7248 = vmatpush1.msra.mxu0 0.0
        %7249 = vmatprep.subr.mxu0 0.0
        %7250 = vmatpush1.msra.mxu0 0.0
        %7251 = vmatprep.subr.mxu0 0.0
        %7252 = vmatpush1.msra.mxu0 0.0
        %7253 = vmatprep.subr.mxu0 0.0
        %7254 = vmatpush1.msra.mxu0 0.0
        %7255 = vmatprep.subr.mxu0 0.0
        %7256 = vmatpush1.msra.mxu0 0.0
        %7257 = vmatprep.subr.mxu0 0.0
        %7258 = vmatpush1.msra.mxu0 0.0
        %7259 = vmatprep.subr.mxu0 0.0
        %7260 = vmatpush1.msra.mxu0 0.0
        %7261 = vmatprep.subr.mxu0 0.0
        %7262 = vmatpush1.msra.mxu0 0.0
        %7263 = vmatprep.subr.mxu0 0.0
        %7264 = vmatpush1.msra.mxu0 0.0
        %7265 = vmatprep.subr.mxu0 0.0
        %7266 = vmatpush1.msra.mxu0 0.0
        %7267 = vmatprep.subr.mxu0 0.0
        %7268 = vmatpush1.msra.mxu0 0.0
        %7269 = vmatprep.subr.mxu0 0.0
        %7270 = vmatpush1.msra.mxu0 0.0
        %7271 = vmatprep.subr.mxu0 0.0
        %7272 = vmatpush1.msra.mxu0 0.0
        %7273 = vmatprep.subr.mxu0 0.0
        %7274 = vmatpush1.msra.mxu0 0.0
        %7275 = vmatprep.subr.mxu0 0.0
        %7276 = vmatpush1.msra.mxu0 0.0
        %7277 = vmatprep.subr.mxu0 0.0
        %7278 = vmatpush1.msra.mxu0 0.0
        %7279 = vmatprep.mubr.f32.mxu0 0.0
        %v7280 = vand.u32 %v6890, 4294901760
        %7281 = vmatmul.mubr.f32.gmra.mrb[0].mxu0 %v7280
        %v7282 = vpop.f32.mrb[0].mxu0
        %v7283 = vadd.f32 %v7203, %v7282
        %v7284 = vpop.f32.mrb[0].mxu0
        %v7285 = vadd.f32 %v7205, %v7284
        %7286 = vdwg.mxu0
        %7287 = vmatprep.subr.mxu0 %v423
        %7288 = vmatpush1.msra.mxu0 %v422
        %7289 = vmatprep.subr.mxu0 %v426
        %7290 = vmatpush1.msra.mxu0 %v425
        %7291 = vmatprep.subr.mxu0 0.0
        %7292 = vmatpush1.msra.mxu0 0.0
        %7293 = vmatprep.subr.mxu0 0.0
        %7294 = vmatpush1.msra.mxu0 0.0
        %7295 = vmatprep.subr.mxu0 0.0
        %7296 = vmatpush1.msra.mxu0 0.0
        %7297 = vmatprep.subr.mxu0 0.0
        %7298 = vmatpush1.msra.mxu0 0.0
        %7299 = vmatprep.subr.mxu0 0.0
        %7300 = vmatpush1.msra.mxu0 0.0
        %7301 = vmatprep.subr.mxu0 0.0
        %7302 = vmatpush1.msra.mxu0 0.0
        %7303 = vmatprep.subr.mxu0 0.0
        %7304 = vmatpush1.msra.mxu0 0.0
        %7305 = vmatprep.subr.mxu0 0.0
        %7306 = vmatpush1.msra.mxu0 0.0
        %7307 = vmatprep.subr.mxu0 0.0
        %7308 = vmatpush1.msra.mxu0 0.0
        %7309 = vmatprep.subr.mxu0 0.0
        %7310 = vmatpush1.msra.mxu0 0.0
        %7311 = vmatprep.subr.mxu0 0.0
        %7312 = vmatpush1.msra.mxu0 0.0
        %7313 = vmatprep.subr.mxu0 0.0
        %7314 = vmatpush1.msra.mxu0 0.0
        %7315 = vmatprep.subr.mxu0 0.0
        %7316 = vmatpush1.msra.mxu0 0.0
        %7317 = vmatprep.subr.mxu0 0.0
        %7318 = vmatpush1.msra.mxu0 0.0
        %7319 = vmatprep.subr.mxu0 0.0
        %7320 = vmatpush1.msra.mxu0 0.0
        %7321 = vmatprep.subr.mxu0 0.0
        %7322 = vmatpush1.msra.mxu0 0.0
        %7323 = vmatprep.subr.mxu0 0.0
        %7324 = vmatpush1.msra.mxu0 0.0
        %7325 = vmatprep.subr.mxu0 0.0
        %7326 = vmatpush1.msra.mxu0 0.0
        %7327 = vmatprep.subr.mxu0 0.0
        %7328 = vmatpush1.msra.mxu0 0.0
        %7329 = vmatprep.subr.mxu0 0.0
        %7330 = vmatpush1.msra.mxu0 0.0
        %7331 = vmatprep.subr.mxu0 0.0
        %7332 = vmatpush1.msra.mxu0 0.0
        %7333 = vmatprep.subr.mxu0 0.0
        %7334 = vmatpush1.msra.mxu0 0.0
        %7335 = vmatprep.subr.mxu0 0.0
        %7336 = vmatpush1.msra.mxu0 0.0
        %7337 = vmatprep.subr.mxu0 0.0
        %7338 = vmatpush1.msra.mxu0 0.0
        %7339 = vmatprep.subr.mxu0 0.0
        %7340 = vmatpush1.msra.mxu0 0.0
        %7341 = vmatprep.subr.mxu0 0.0
        %7342 = vmatpush1.msra.mxu0 0.0
        %7343 = vmatprep.subr.mxu0 0.0
        %7344 = vmatpush1.msra.mxu0 0.0
        %7345 = vmatprep.subr.mxu0 0.0
        %7346 = vmatpush1.msra.mxu0 0.0
        %7347 = vmatprep.subr.mxu0 0.0
        %7348 = vmatpush1.msra.mxu0 0.0
        %7349 = vmatprep.subr.mxu0 0.0
        %7350 = vmatpush1.msra.mxu0 0.0
        %7351 = vmatprep.mubr.f32.mxu0 0.0
        %v7352 = vand.u32 %v6890, 4294901760
        %7353 = vmatmul.mubr.f32.gmra.mrb[0].mxu0 %v7352
        %v7354 = vpop.f32.mrb[0].mxu0
        %v7355 = vadd.f32 %v7283, %v7354
        %v7356 = vpop.f32.mrb[0].mxu0
        %v7357 = vadd.f32 %v7285, %v7356
        %7358 = vdwg.mxu0
        %7359 = vmatprep.subr.mxu0 0.0
        %7360 = vmatpush1.msra.mxu0 %v424
        %7361 = vmatprep.subr.mxu0 0.0
        %7362 = vmatpush1.msra.mxu0 %v427
        %7363 = vmatprep.subr.mxu0 0.0
        %7364 = vmatpush1.msra.mxu0 0.0
        %7365 = vmatprep.subr.mxu0 0.0
        %7366 = vmatpush1.msra.mxu0 0.0
        %7367 = vmatprep.subr.mxu0 0.0
        %7368 = vmatpush1.msra.mxu0 0.0
        %7369 = vmatprep.subr.mxu0 0.0
        %7370 = vmatpush1.msra.mxu0 0.0
        %7371 = vmatprep.subr.mxu0 0.0
        %7372 = vmatpush1.msra.mxu0 0.0
        %7373 = vmatprep.subr.mxu0 0.0
        %7374 = vmatpush1.msra.mxu0 0.0
        %7375 = vmatprep.subr.mxu0 0.0
        %7376 = vmatpush1.msra.mxu0 0.0
        %7377 = vmatprep.subr.mxu0 0.0
        %7378 = vmatpush1.msra.mxu0 0.0
        %7379 = vmatprep.subr.mxu0 0.0
        %7380 = vmatpush1.msra.mxu0 0.0
        %7381 = vmatprep.subr.mxu0 0.0
        %7382 = vmatpush1.msra.mxu0 0.0
        %7383 = vmatprep.subr.mxu0 0.0
        %7384 = vmatpush1.msra.mxu0 0.0
        %7385 = vmatprep.subr.mxu0 0.0
        %7386 = vmatpush1.msra.mxu0 0.0
        %7387 = vmatprep.subr.mxu0 0.0
        %7388 = vmatpush1.msra.mxu0 0.0
        %7389 = vmatprep.subr.mxu0 0.0
        %7390 = vmatpush1.msra.mxu0 0.0
        %7391 = vmatprep.subr.mxu0 0.0
        %7392 = vmatpush1.msra.mxu0 0.0
        %7393 = vmatprep.subr.mxu0 0.0
        %7394 = vmatpush1.msra.mxu0 0.0
        %7395 = vmatprep.subr.mxu0 0.0
        %7396 = vmatpush1.msra.mxu0 0.0
        %7397 = vmatprep.subr.mxu0 0.0
        %7398 = vmatpush1.msra.mxu0 0.0
        %7399 = vmatprep.subr.mxu0 0.0
        %7400 = vmatpush1.msra.mxu0 0.0
        %7401 = vmatprep.subr.mxu0 0.0
        %7402 = vmatpush1.msra.mxu0 0.0
        %7403 = vmatprep.subr.mxu0 0.0
        %7404 = vmatpush1.msra.mxu0 0.0
        %7405 = vmatprep.subr.mxu0 0.0
        %7406 = vmatpush1.msra.mxu0 0.0
        %7407 = vmatprep.subr.mxu0 0.0
        %7408 = vmatpush1.msra.mxu0 0.0
        %7409 = vmatprep.subr.mxu0 0.0
        %7410 = vmatpush1.msra.mxu0 0.0
        %7411 = vmatprep.subr.mxu0 0.0
        %7412 = vmatpush1.msra.mxu0 0.0
        %7413 = vmatprep.subr.mxu0 0.0
        %7414 = vmatpush1.msra.mxu0 0.0
        %7415 = vmatprep.subr.mxu0 0.0
        %7416 = vmatpush1.msra.mxu0 0.0
        %7417 = vmatprep.subr.mxu0 0.0
        %7418 = vmatpush1.msra.mxu0 0.0
        %7419 = vmatprep.subr.mxu0 0.0
        %7420 = vmatpush1.msra.mxu0 0.0
        %7421 = vmatprep.subr.mxu0 0.0
        %7422 = vmatpush1.msra.mxu0 0.0
        %7423 = vmatprep.mubr.f32.mxu0 0.0
        %v7424 = vand.u32 %v6890, 4294901760
        %v7425 = vsub.f32 %v6890, %v7424
        %v7426 = vand.u32 %v7425, 4294901760
        %v7427 = vsub.f32 %v7425, %v7426
        %v7428 = vand.u32 %v7427, 4294901760
        %7429 = vmatmul.mubr.f32.gmra.mrb[0].mxu0 %v7428
        %v7430 = vpop.f32.mrb[0].mxu0
        %v7431 = vadd.f32 0.0, %v7430
        %v7432 = vpop.f32.mrb[0].mxu0
        %7433 = vdwg.mxu0
        %7434 = vmatprep.subr.mxu0 0.0
        %v7435 = vsub.f32 %v424, %v424
        %v7436 = vand.u32 %v7435, 4294901760
        %v7437 = vsub.f32 %v7435, %v7436
        %v7438 = vand.u32 %v7437, 4294901760
        %7439 = vmatpush1.msra.mxu0 %v7438
        %7440 = vmatprep.subr.mxu0 0.0
        %v7441 = vsub.f32 %v427, %v427
        %v7442 = vand.u32 %v7441, 4294901760
        %v7443 = vsub.f32 %v7441, %v7442
        %v7444 = vand.u32 %v7443, 4294901760
        %7445 = vmatpush1.msra.mxu0 %v7444
        %7446 = vmatprep.subr.mxu0 0.0
        %7447 = vmatpush1.msra.mxu0 0.0
        %7448 = vmatprep.subr.mxu0 0.0
        %7449 = vmatpush1.msra.mxu0 0.0
        %7450 = vmatprep.subr.mxu0 0.0
        %7451 = vmatpush1.msra.mxu0 0.0
        %7452 = vmatprep.subr.mxu0 0.0
        %7453 = vmatpush1.msra.mxu0 0.0
        %7454 = vmatprep.subr.mxu0 0.0
        %7455 = vmatpush1.msra.mxu0 0.0
        %7456 = vmatprep.subr.mxu0 0.0
        %7457 = vmatpush1.msra.mxu0 0.0
        %7458 = vmatprep.subr.mxu0 0.0
        %7459 = vmatpush1.msra.mxu0 0.0
        %7460 = vmatprep.subr.mxu0 0.0
        %7461 = vmatpush1.msra.mxu0 0.0
        %7462 = vmatprep.subr.mxu0 0.0
        %7463 = vmatpush1.msra.mxu0 0.0
        %7464 = vmatprep.subr.mxu0 0.0
        %7465 = vmatpush1.msra.mxu0 0.0
        %7466 = vmatprep.subr.mxu0 0.0
        %7467 = vmatpush1.msra.mxu0 0.0
        %7468 = vmatprep.subr.mxu0 0.0
        %7469 = vmatpush1.msra.mxu0 0.0
        %7470 = vmatprep.subr.mxu0 0.0
        %7471 = vmatpush1.msra.mxu0 0.0
        %7472 = vmatprep.subr.mxu0 0.0
        %7473 = vmatpush1.msra.mxu0 0.0
        %7474 = vmatprep.subr.mxu0 0.0
        %7475 = vmatpush1.msra.mxu0 0.0
        %7476 = vmatprep.subr.mxu0 0.0
        %7477 = vmatpush1.msra.mxu0 0.0
        %7478 = vmatprep.subr.mxu0 0.0
        %7479 = vmatpush1.msra.mxu0 0.0
        %7480 = vmatprep.subr.mxu0 0.0
        %7481 = vmatpush1.msra.mxu0 0.0
        %7482 = vmatprep.subr.mxu0 0.0
        %7483 = vmatpush1.msra.mxu0 0.0
        %7484 = vmatprep.subr.mxu0 0.0
        %7485 = vmatpush1.msra.mxu0 0.0
        %7486 = vmatprep.subr.mxu0 0.0
        %7487 = vmatpush1.msra.mxu0 0.0
        %7488 = vmatprep.subr.mxu0 0.0
        %7489 = vmatpush1.msra.mxu0 0.0
        %7490 = vmatprep.subr.mxu0 0.0
        %7491 = vmatpush1.msra.mxu0 0.0
        %7492 = vmatprep.subr.mxu0 0.0
        %7493 = vmatpush1.msra.mxu0 0.0
        %7494 = vmatprep.subr.mxu0 0.0
        %7495 = vmatpush1.msra.mxu0 0.0
        %7496 = vmatprep.subr.mxu0 0.0
        %7497 = vmatpush1.msra.mxu0 0.0
        %7498 = vmatprep.subr.mxu0 0.0
        %7499 = vmatpush1.msra.mxu0 0.0
        %7500 = vmatprep.subr.mxu0 0.0
        %7501 = vmatpush1.msra.mxu0 0.0
        %7502 = vmatprep.subr.mxu0 0.0
        %7503 = vmatpush1.msra.mxu0 0.0
        %7504 = vmatprep.subr.mxu0 0.0
        %7505 = vmatpush1.msra.mxu0 0.0
        %7506 = vmatprep.mubr.f32.mxu0 0.0
        %v7507 = vand.u32 %v6890, 4294901760
        %7508 = vmatmul.mubr.f32.gmra.mrb[0].mxu0 %v7507
        %v7509 = vpop.f32.mrb[0].mxu0
        %v7510 = vadd.f32 %v7431, %v7509
        %v7511 = vpop.f32.mrb[0].mxu0
        %7512 = vdwg.mxu0
        %7513 = vmatprep.subr.mxu0 0.0
        %v7514 = vsub.f32 %v424, %v424
        %7515 = vmatpush1.msra.mxu0 %v7514
        %7516 = vmatprep.subr.mxu0 0.0
        %v7517 = vsub.f32 %v427, %v427
        %7518 = vmatpush1.msra.mxu0 %v7517
        %7519 = vmatprep.subr.mxu0 0.0
        %7520 = vmatpush1.msra.mxu0 0.0
        %7521 = vmatprep.subr.mxu0 0.0
        %7522 = vmatpush1.msra.mxu0 0.0
        %7523 = vmatprep.subr.mxu0 0.0
        %7524 = vmatpush1.msra.mxu0 0.0
        %7525 = vmatprep.subr.mxu0 0.0
        %7526 = vmatpush1.msra.mxu0 0.0
        %7527 = vmatprep.subr.mxu0 0.0
        %7528 = vmatpush1.msra.mxu0 0.0
        %7529 = vmatprep.subr.mxu0 0.0
        %7530 = vmatpush1.msra.mxu0 0.0
        %7531 = vmatprep.subr.mxu0 0.0
        %7532 = vmatpush1.msra.mxu0 0.0
        %7533 = vmatprep.subr.mxu0 0.0
        %7534 = vmatpush1.msra.mxu0 0.0
        %7535 = vmatprep.subr.mxu0 0.0
        %7536 = vmatpush1.msra.mxu0 0.0
        %7537 = vmatprep.subr.mxu0 0.0
        %7538 = vmatpush1.msra.mxu0 0.0
        %7539 = vmatprep.subr.mxu0 0.0
        %7540 = vmatpush1.msra.mxu0 0.0
        %7541 = vmatprep.subr.mxu0 0.0
        %7542 = vmatpush1.msra.mxu0 0.0
        %7543 = vmatprep.subr.mxu0 0.0
        %7544 = vmatpush1.msra.mxu0 0.0
        %7545 = vmatprep.subr.mxu0 0.0
        %7546 = vmatpush1.msra.mxu0 0.0
        %7547 = vmatprep.subr.mxu0 0.0
        %7548 = vmatpush1.msra.mxu0 0.0
        %7549 = vmatprep.subr.mxu0 0.0
        %7550 = vmatpush1.msra.mxu0 0.0
        %7551 = vmatprep.subr.mxu0 0.0
        %7552 = vmatpush1.msra.mxu0 0.0
        %7553 = vmatprep.subr.mxu0 0.0
        %7554 = vmatpush1.msra.mxu0 0.0
        %7555 = vmatprep.subr.mxu0 0.0
        %7556 = vmatpush1.msra.mxu0 0.0
        %7557 = vmatprep.subr.mxu0 0.0
        %7558 = vmatpush1.msra.mxu0 0.0
        %7559 = vmatprep.subr.mxu0 0.0
        %7560 = vmatpush1.msra.mxu0 0.0
        %7561 = vmatprep.subr.mxu0 0.0
        %7562 = vmatpush1.msra.mxu0 0.0
        %7563 = vmatprep.subr.mxu0 0.0
        %7564 = vmatpush1.msra.mxu0 0.0
        %7565 = vmatprep.subr.mxu0 0.0
        %7566 = vmatpush1.msra.mxu0 0.0
        %7567 = vmatprep.subr.mxu0 0.0
        %7568 = vmatpush1.msra.mxu0 0.0
        %7569 = vmatprep.subr.mxu0 0.0
        %7570 = vmatpush1.msra.mxu0 0.0
        %7571 = vmatprep.subr.mxu0 0.0
        %7572 = vmatpush1.msra.mxu0 0.0
        %7573 = vmatprep.subr.mxu0 0.0
        %7574 = vmatpush1.msra.mxu0 0.0
        %7575 = vmatprep.subr.mxu0 0.0
        %7576 = vmatpush1.msra.mxu0 0.0
        %7577 = vmatprep.subr.mxu0 0.0
        %7578 = vmatpush1.msra.mxu0 0.0
        %7579 = vmatprep.mubr.f32.mxu0 0.0
        %v7580 = vand.u32 %v6890, 4294901760
        %v7581 = vsub.f32 %v6890, %v7580
        %7582 = vmatmul.mubr.f32.gmra.mrb[0].mxu0 %v7581
        %v7583 = vpop.f32.mrb[0].mxu0
        %v7584 = vadd.f32 %v7510, %v7583
        %v7585 = vpop.f32.mrb[0].mxu0
        %7586 = vdwg.mxu0
        %7587 = vmatprep.subr.mxu0 0.0
        %7588 = vmatpush1.msra.mxu0 %v424
        %7589 = vmatprep.subr.mxu0 0.0
        %7590 = vmatpush1.msra.mxu0 %v427
        %7591 = vmatprep.subr.mxu0 0.0
        %7592 = vmatpush1.msra.mxu0 0.0
        %7593 = vmatprep.subr.mxu0 0.0
        %7594 = vmatpush1.msra.mxu0 0.0
        %7595 = vmatprep.subr.mxu0 0.0
        %7596 = vmatpush1.msra.mxu0 0.0
        %7597 = vmatprep.subr.mxu0 0.0
        %7598 = vmatpush1.msra.mxu0 0.0
        %7599 = vmatprep.subr.mxu0 0.0
        %7600 = vmatpush1.msra.mxu0 0.0
        %7601 = vmatprep.subr.mxu0 0.0
        %7602 = vmatpush1.msra.mxu0 0.0
        %7603 = vmatprep.subr.mxu0 0.0
        %7604 = vmatpush1.msra.mxu0 0.0
        %7605 = vmatprep.subr.mxu0 0.0
        %7606 = vmatpush1.msra.mxu0 0.0
        %7607 = vmatprep.subr.mxu0 0.0
        %7608 = vmatpush1.msra.mxu0 0.0
        %7609 = vmatprep.subr.mxu0 0.0
        %7610 = vmatpush1.msra.mxu0 0.0
        %7611 = vmatprep.subr.mxu0 0.0
        %7612 = vmatpush1.msra.mxu0 0.0
        %7613 = vmatprep.subr.mxu0 0.0
        %7614 = vmatpush1.msra.mxu0 0.0
        %7615 = vmatprep.subr.mxu0 0.0
        %7616 = vmatpush1.msra.mxu0 0.0
        %7617 = vmatprep.subr.mxu0 0.0
        %7618 = vmatpush1.msra.mxu0 0.0
        %7619 = vmatprep.subr.mxu0 0.0
        %7620 = vmatpush1.msra.mxu0 0.0
        %7621 = vmatprep.subr.mxu0 0.0
        %7622 = vmatpush1.msra.mxu0 0.0
        %7623 = vmatprep.subr.mxu0 0.0
        %7624 = vmatpush1.msra.mxu0 0.0
        %7625 = vmatprep.subr.mxu0 0.0
        %7626 = vmatpush1.msra.mxu0 0.0
        %7627 = vmatprep.subr.mxu0 0.0
        %7628 = vmatpush1.msra.mxu0 0.0
        %7629 = vmatprep.subr.mxu0 0.0
        %7630 = vmatpush1.msra.mxu0 0.0
        %7631 = vmatprep.subr.mxu0 0.0
        %7632 = vmatpush1.msra.mxu0 0.0
        %7633 = vmatprep.subr.mxu0 0.0
        %7634 = vmatpush1.msra.mxu0 0.0
        %7635 = vmatprep.subr.mxu0 0.0
        %7636 = vmatpush1.msra.mxu0 0.0
        %7637 = vmatprep.subr.mxu0 0.0
        %7638 = vmatpush1.msra.mxu0 0.0
        %7639 = vmatprep.subr.mxu0 0.0
        %7640 = vmatpush1.msra.mxu0 0.0
        %7641 = vmatprep.subr.mxu0 0.0
        %7642 = vmatpush1.msra.mxu0 0.0
        %7643 = vmatprep.subr.mxu0 0.0
        %7644 = vmatpush1.msra.mxu0 0.0
        %7645 = vmatprep.subr.mxu0 0.0
        %7646 = vmatpush1.msra.mxu0 0.0
        %7647 = vmatprep.subr.mxu0 0.0
        %7648 = vmatpush1.msra.mxu0 0.0
        %7649 = vmatprep.subr.mxu0 0.0
        %7650 = vmatpush1.msra.mxu0 0.0
        %7651 = vmatprep.mubr.f32.mxu0 0.0
        %v7652 = vand.u32 %v6890, 4294901760
        %v7653 = vsub.f32 %v6890, %v7652
        %v7654 = vand.u32 %v7653, 4294901760
        %7655 = vmatmul.mubr.f32.gmra.mrb[0].mxu0 %v7654
        %v7656 = vpop.f32.mrb[0].mxu0
        %v7657 = vadd.f32 %v7584, %v7656
        %v7658 = vpop.f32.mrb[0].mxu0
        %7659 = vdwg.mxu0
        %7660 = vmatprep.subr.mxu0 0.0
        %v7661 = vsub.f32 %v424, %v424
        %v7662 = vand.u32 %v7661, 4294901760
        %7663 = vmatpush1.msra.mxu0 %v7662
        %7664 = vmatprep.subr.mxu0 0.0
        %v7665 = vsub.f32 %v427, %v427
        %v7666 = vand.u32 %v7665, 4294901760
        %7667 = vmatpush1.msra.mxu0 %v7666
        %7668 = vmatprep.subr.mxu0 0.0
        %7669 = vmatpush1.msra.mxu0 0.0
        %7670 = vmatprep.subr.mxu0 0.0
        %7671 = vmatpush1.msra.mxu0 0.0
        %7672 = vmatprep.subr.mxu0 0.0
        %7673 = vmatpush1.msra.mxu0 0.0
        %7674 = vmatprep.subr.mxu0 0.0
        %7675 = vmatpush1.msra.mxu0 0.0
        %7676 = vmatprep.subr.mxu0 0.0
        %7677 = vmatpush1.msra.mxu0 0.0
        %7678 = vmatprep.subr.mxu0 0.0
        %7679 = vmatpush1.msra.mxu0 0.0
        %7680 = vmatprep.subr.mxu0 0.0
        %7681 = vmatpush1.msra.mxu0 0.0
        %7682 = vmatprep.subr.mxu0 0.0
        %7683 = vmatpush1.msra.mxu0 0.0
        %7684 = vmatprep.subr.mxu0 0.0
        %7685 = vmatpush1.msra.mxu0 0.0
        %7686 = vmatprep.subr.mxu0 0.0
        %7687 = vmatpush1.msra.mxu0 0.0
        %7688 = vmatprep.subr.mxu0 0.0
        %7689 = vmatpush1.msra.mxu0 0.0
        %7690 = vmatprep.subr.mxu0 0.0
        %7691 = vmatpush1.msra.mxu0 0.0
        %7692 = vmatprep.subr.mxu0 0.0
        %7693 = vmatpush1.msra.mxu0 0.0
        %7694 = vmatprep.subr.mxu0 0.0
        %7695 = vmatpush1.msra.mxu0 0.0
        %7696 = vmatprep.subr.mxu0 0.0
        %7697 = vmatpush1.msra.mxu0 0.0
        %7698 = vmatprep.subr.mxu0 0.0
        %7699 = vmatpush1.msra.mxu0 0.0
        %7700 = vmatprep.subr.mxu0 0.0
        %7701 = vmatpush1.msra.mxu0 0.0
        %7702 = vmatprep.subr.mxu0 0.0
        %7703 = vmatpush1.msra.mxu0 0.0
        %7704 = vmatprep.subr.mxu0 0.0
        %7705 = vmatpush1.msra.mxu0 0.0
        %7706 = vmatprep.subr.mxu0 0.0
        %7707 = vmatpush1.msra.mxu0 0.0
        %7708 = vmatprep.subr.mxu0 0.0
        %7709 = vmatpush1.msra.mxu0 0.0
        %7710 = vmatprep.subr.mxu0 0.0
        %7711 = vmatpush1.msra.mxu0 0.0
        %7712 = vmatprep.subr.mxu0 0.0
        %7713 = vmatpush1.msra.mxu0 0.0
        %7714 = vmatprep.subr.mxu0 0.0
        %7715 = vmatpush1.msra.mxu0 0.0
        %7716 = vmatprep.subr.mxu0 0.0
        %7717 = vmatpush1.msra.mxu0 0.0
        %7718 = vmatprep.subr.mxu0 0.0
        %7719 = vmatpush1.msra.mxu0 0.0
        %7720 = vmatprep.subr.mxu0 0.0
        %7721 = vmatpush1.msra.mxu0 0.0
        %7722 = vmatprep.subr.mxu0 0.0
        %7723 = vmatpush1.msra.mxu0 0.0
        %7724 = vmatprep.subr.mxu0 0.0
        %7725 = vmatpush1.msra.mxu0 0.0
        %7726 = vmatprep.subr.mxu0 0.0
        %7727 = vmatpush1.msra.mxu0 0.0
        %7728 = vmatprep.mubr.f32.mxu0 0.0
        %v7729 = vand.u32 %v6890, 4294901760
        %7730 = vmatmul.mubr.f32.gmra.mrb[0].mxu0 %v7729
        %v7731 = vpop.f32.mrb[0].mxu0
        %v7732 = vadd.f32 %v7657, %v7731
        %v7733 = vpop.f32.mrb[0].mxu0
        %7734 = vdwg.mxu0
        %7735 = vmatprep.subr.mxu0 0.0
        %7736 = vmatpush1.msra.mxu0 %v424
        %7737 = vmatprep.subr.mxu0 0.0
        %7738 = vmatpush1.msra.mxu0 %v427
        %7739 = vmatprep.subr.mxu0 0.0
        %7740 = vmatpush1.msra.mxu0 0.0
        %7741 = vmatprep.subr.mxu0 0.0
        %7742 = vmatpush1.msra.mxu0 0.0
        %7743 = vmatprep.subr.mxu0 0.0
        %7744 = vmatpush1.msra.mxu0 0.0
        %7745 = vmatprep.subr.mxu0 0.0
        %7746 = vmatpush1.msra.mxu0 0.0
        %7747 = vmatprep.subr.mxu0 0.0
        %7748 = vmatpush1.msra.mxu0 0.0
        %7749 = vmatprep.subr.mxu0 0.0
        %7750 = vmatpush1.msra.mxu0 0.0
        %7751 = vmatprep.subr.mxu0 0.0
        %7752 = vmatpush1.msra.mxu0 0.0
        %7753 = vmatprep.subr.mxu0 0.0
        %7754 = vmatpush1.msra.mxu0 0.0
        %7755 = vmatprep.subr.mxu0 0.0
        %7756 = vmatpush1.msra.mxu0 0.0
        %7757 = vmatprep.subr.mxu0 0.0
        %7758 = vmatpush1.msra.mxu0 0.0
        %7759 = vmatprep.subr.mxu0 0.0
        %7760 = vmatpush1.msra.mxu0 0.0
        %7761 = vmatprep.subr.mxu0 0.0
        %7762 = vmatpush1.msra.mxu0 0.0
        %7763 = vmatprep.subr.mxu0 0.0
        %7764 = vmatpush1.msra.mxu0 0.0
        %7765 = vmatprep.subr.mxu0 0.0
        %7766 = vmatpush1.msra.mxu0 0.0
        %7767 = vmatprep.subr.mxu0 0.0
        %7768 = vmatpush1.msra.mxu0 0.0
        %7769 = vmatprep.subr.mxu0 0.0
        %7770 = vmatpush1.msra.mxu0 0.0
        %7771 = vmatprep.subr.mxu0 0.0
        %7772 = vmatpush1.msra.mxu0 0.0
        %7773 = vmatprep.subr.mxu0 0.0
        %7774 = vmatpush1.msra.mxu0 0.0
        %7775 = vmatprep.subr.mxu0 0.0
        %7776 = vmatpush1.msra.mxu0 0.0
        %7777 = vmatprep.subr.mxu0 0.0
        %7778 = vmatpush1.msra.mxu0 0.0
        %7779 = vmatprep.subr.mxu0 0.0
        %7780 = vmatpush1.msra.mxu0 0.0
        %7781 = vmatprep.subr.mxu0 0.0
        %7782 = vmatpush1.msra.mxu0 0.0
        %7783 = vmatprep.subr.mxu0 0.0
        %7784 = vmatpush1.msra.mxu0 0.0
        %7785 = vmatprep.subr.mxu0 0.0
        %7786 = vmatpush1.msra.mxu0 0.0
        %7787 = vmatprep.subr.mxu0 0.0
        %7788 = vmatpush1.msra.mxu0 0.0
        %7789 = vmatprep.subr.mxu0 0.0
        %7790 = vmatpush1.msra.mxu0 0.0
        %7791 = vmatprep.subr.mxu0 0.0
        %7792 = vmatpush1.msra.mxu0 0.0
        %7793 = vmatprep.subr.mxu0 0.0
        %7794 = vmatpush1.msra.mxu0 0.0
        %7795 = vmatprep.subr.mxu0 0.0
        %7796 = vmatpush1.msra.mxu0 0.0
        %7797 = vmatprep.subr.mxu0 0.0
        %7798 = vmatpush1.msra.mxu0 0.0
        %7799 = vmatprep.mubr.f32.mxu0 0.0
        %v7800 = vand.u32 %v6890, 4294901760
        %7801 = vmatmul.mubr.f32.gmra.mrb[0].mxu0 %v7800
        %v7802 = vpop.f32.mrb[0].mxu0
        %v7803 = vadd.f32 %v7732, %v7802
        %v7804 = vpop.f32.mrb[0].mxu0
        %7805 = vdwg.mxu0
        %v7807 = vrot.slane %v347, 1
        %v7808 = vrot.slane %v347, 2
        %v7809 = vrot.slane %v347, 3
        %v7810 = vrot.slane %v347, 4
        %v7811 = vrot.slane %v347, 5
        %v7812 = vrot.slane %v347, 6
        %v7813 = vrot.slane %v347, 7
        %v7822 = vrcp.pop %v347
        %v7823 = vmul.f32 %v943, %v7822
        %v7824 = vmul.f32 %v945, %v7822
        %v7825 = vmul.f32 %v1391, %v7822
        %v7826 = vrcp.pop %v7807
        %v7827 = vmul.f32 %v1859, %v7826
        %v7828 = vmul.f32 %v1861, %v7826
        %v7829 = vmul.f32 %v2307, %v7826
        %v7830 = vrcp.pop %v7808
        %v7831 = vmul.f32 %v2775, %v7830
        %v7832 = vmul.f32 %v2777, %v7830
        %v7833 = vmul.f32 %v3223, %v7830
        %v7834 = vrcp.pop %v7809
        %v7835 = vmul.f32 %v3691, %v7834
        %v7836 = vmul.f32 %v3693, %v7834
        %v7837 = vmul.f32 %v4139, %v7834
        %v7838 = vrcp.pop %v7810
        %v7839 = vmul.f32 %v4607, %v7838
        %v7840 = vmul.f32 %v4609, %v7838
        %v7841 = vmul.f32 %v5055, %v7838
        %v7842 = vrcp.pop %v7811
        %v7843 = vmul.f32 %v5523, %v7842
        %v7844 = vmul.f32 %v5525, %v7842
        %v7845 = vmul.f32 %v5971, %v7842
        %v7846 = vrcp.pop %v7812
        %v7847 = vmul.f32 %v6439, %v7846
        %v7848 = vmul.f32 %v6441, %v7846
        %v7849 = vmul.f32 %v6887, %v7846
        %v7850 = vrcp.pop %v7813
        %v7851 = vmul.f32 %v7355, %v7850
        %v7852 = vmul.f32 %v7357, %v7850
        %v7853 = vmul.f32 %v7803, %v7850
        %v7854 = vld [vmem:[%s249] sm:$0xff]
        %v7855 = vld [vmem:[%s249 + $0x8] sm:$0xf]
        %v7856 = vunpack.c.l.bf16 %v7854
        %v7857 = vunpack.c.h.bf16 %v7854
        %v7858 = vunpack.c.l.bf16 %v7855
        %s7859 = ssub.f32 1.0, %s333
        %v7860 = vstv %s7859
        %v7861 = vmul.f32 %v7860, %v7856
        %v7862 = vmul.f32 %v7860, %v7857
        %v7863 = vmul.f32 %v7860, %v7858
        %v7864 = vstv %s333
        %v7865 = vmul.f32 %v7864, %v7823
        %v7866 = vmul.f32 %v7864, %v7824
        %v7867 = vmul.f32 %v7864, %v7825
        %v7868 = vmul.f32 %v7864, %v7827
        %v7869 = vmul.f32 %v7864, %v7828
        %v7870 = vmul.f32 %v7864, %v7829
        %v7871 = vmul.f32 %v7864, %v7831
        %v7872 = vmul.f32 %v7864, %v7832
        %v7873 = vmul.f32 %v7864, %v7833
        %v7874 = vmul.f32 %v7864, %v7835
        %v7875 = vmul.f32 %v7864, %v7836
        %v7876 = vmul.f32 %v7864, %v7837
        %v7877 = vmul.f32 %v7864, %v7839
        %v7878 = vmul.f32 %v7864, %v7840
        %v7879 = vmul.f32 %v7864, %v7841
        %v7880 = vmul.f32 %v7864, %v7843
        %v7881 = vmul.f32 %v7864, %v7844
        %v7882 = vmul.f32 %v7864, %v7845
        %v7883 = vmul.f32 %v7864, %v7847
        %v7884 = vmul.f32 %v7864, %v7848
        %v7885 = vmul.f32 %v7864, %v7849
        %v7886 = vmul.f32 %v7864, %v7851
        %v7887 = vmul.f32 %v7864, %v7852
        %v7888 = vmul.f32 %v7864, %v7853
        %v7913 = vrot.slane %v7868, 7
        %vm7914 = vcmask 1041409
        %v7915 = vsel %vm7914, %v7913, %v7865
        %v7916 = vrot.slane %v7871, 6
        %vm7917 = vcmask 1042434
        %v7918 = vsel %vm7917, %v7916, %v7915
        %v7919 = vrot.slane %v7874, 5
        %vm7920 = vcmask 1043459
        %v7921 = vsel %vm7920, %v7919, %v7918
        %v7922 = vrot.slane %v7877, 4
        %vm7923 = vcmask 1044484
        %v7924 = vsel %vm7923, %v7922, %v7921
        %v7925 = vrot.slane %v7880, 3
        %vm7926 = vcmask 1045509
        %v7927 = vsel %vm7926, %v7925, %v7924
        %v7928 = vrot.slane %v7883, 2
        %vm7929 = vcmask 1046534
        %v7930 = vsel %vm7929, %v7928, %v7927
        %v7931 = vrot.slane %v7886, 1
        %vm7932 = vcmask 1047559
        %v7933 = vsel %vm7932, %v7931, %v7930
        %v7934 = vrot.slane %v7869, 7
        %v7935 = vsel %vm7914, %v7934, %v7866
        %v7936 = vrot.slane %v7872, 6
        %v7937 = vsel %vm7917, %v7936, %v7935
        %v7938 = vrot.slane %v7875, 5
        %v7939 = vsel %vm7920, %v7938, %v7937
        %v7940 = vrot.slane %v7878, 4
        %v7941 = vsel %vm7923, %v7940, %v7939
        %v7942 = vrot.slane %v7881, 3
        %v7943 = vsel %vm7926, %v7942, %v7941
        %v7944 = vrot.slane %v7884, 2
        %v7945 = vsel %vm7929, %v7944, %v7943
        %v7946 = vrot.slane %v7887, 1
        %v7947 = vsel %vm7932, %v7946, %v7945
        %v7948 = vrot.slane %v7870, 7
        %v7949 = vsel %vm7914, %v7948, %v7867
        %v7950 = vrot.slane %v7873, 6
        %v7951 = vsel %vm7917, %v7950, %v7949
        %v7952 = vrot.slane %v7876, 5
        %v7953 = vsel %vm7920, %v7952, %v7951
        %v7954 = vrot.slane %v7879, 4
        %v7955 = vsel %vm7923, %v7954, %v7953
        %v7956 = vrot.slane %v7882, 3
        %v7957 = vsel %vm7926, %v7956, %v7955
        %v7958 = vrot.slane %v7885, 2
        %v7959 = vsel %vm7929, %v7958, %v7957
        %v7960 = vrot.slane %v7888, 1
        %v7961 = vsel %vm7932, %v7960, %v7959
        %v7965 = vadd.f32 %v7861, %v7933
        %v7966 = vadd.f32 %v7862, %v7947
        %v7967 = vadd.f32 %v7863, %v7961
        %7968 = vst [vmem:[%s302] sm:$0xff] %v7965
        %7969 = vst [vmem:[%s302 + $0x8] sm:$0xff] %v7966
        %7970 = vst [vmem:[%s302 + $0x10] sm:$0xff] %v7967
        %s7971 = sand.u32 %s132, 1
        %s7972 = scalar_lea.sflag [#allocation4], %s7971
        %s7973 = sand.u32 %s132, 1
        %s7974 = smul.addr %s7973, 24
        %s7975 = scalar_lea.vmem [#allocation10], %s7974
        // Predicated region
        $region53: #{tpu_custom_call.1} parent=35 // pred_check
          %p7976 = pneg %p142
        $region54: #{tpu_custom_call.1} parent=35 // pred_check_branch
          %7978 = sbr.rel (%p7976) target = $region56
        $region55: #{tpu_custom_call.1} parent=35 // pred_region
          %s7980 = ssub.s32 384, 384
          %7981 = vsyncadd %s7972, %s7980
          %s7982 = smul.addr %s25, 3
          %s7983 = smul.addr %s7982, 128
          %s7984 = scalar_lea.hbm %s4, %s7983
          %s7986 = sshll.u32 %s7975, 4
          %s7987 = int_to_ptr.vmem [resolvable:$true] %s7986
          %7989 = dma.vmem_to_hbm [thread:$0]  %s7987, 384, %s7984, %s7972
        $region56: #{tpu_custom_call.1} parent=35 // pred_fallthru
          _
      $region36: #{tpu_custom_call.1} parent=5 // pred_fallthru
        _
      %p7990 = scmp.le.s32.totalorder 2, %s20
      // Predicated region
      $region57: #{tpu_custom_call.1} parent=5 // pred_check
        %p7991 = pneg %p7990
      $region58: #{tpu_custom_call.1} parent=5 // pred_check_branch
        %7993 = sbr.rel (%p7991) target = $region60
      $region59: #{tpu_custom_call.1} parent=5 // pred_region
        %s7994 = ssub.s32 %s20, 2
        // Predicated region
        $region61: #{tpu_custom_call.1} parent=59 // pred_check
          %p7995 = pneg %p148
        $region62: #{tpu_custom_call.1} parent=59 // pred_check_branch
          %7997 = sbr.rel (%p7995) target = $region64
        $region63: #{tpu_custom_call.1} parent=59 // pred_region
          %s7998 = sand.u32 %s133, 1
          %s7999 = scalar_lea.sflag [#allocation4], %s7998
          %s8000 = sand.u32 %s133, 1
          %s8001 = smul.addr %s8000, 24
          %s8002 = scalar_lea.vmem [#allocation10], %s8001
          %8003 = dma.done %s7999, 384
        $region64: #{tpu_custom_call.1} parent=59 // pred_fallthru
          _
      $region60: #{tpu_custom_call.1} parent=5 // pred_fallthru
        _
    $region6: #{tpu_custom_call.1} parent=1 // loop_footer
      %s24 = sadd.s32 1, %s20
    $region7: #{tpu_custom_call.1} parent=1 // loop_footer_branch
      %19 = sbr.rel target = $region3
    $region8: #{tpu_custom_call.1} parent=1 // loop_exit
      _
    %8004 = vsyncpa [#allocation3], 1
    %s8005 = scalar_lea.sflag [#allocation3], 1
    %8006 = vsyncpa %s8005, 1
    %8007 = vsyncpa [#allocation8], 1
    %s8008 = scalar_lea.sflag [#allocation8], 1
    %8009 = vsyncpa %s8008, 1
    %8010 = vsyncpa [#allocation4], 1
    %s8011 = scalar_lea.sflag [#allocation4], 1
    %8012 = vsyncpa %s8011, 1
    %8013 = vsyncpa [#allocation5], 1
    %s8014 = scalar_lea.sflag [#allocation5], 1
    %8015 = vsyncpa %s8014, 1

</llo_original>
